<compile_context>
chip_gen: v7x
topology: tpu7x:2x2x1
jax: 0.10.0
libtpu: 0.0.40
codegen_flags: <defaults>
</compile_context>

<pallas_src>
import numpy as np
import jax
import jax.numpy as jnp
from jax import lax
from jax.experimental import pallas as pl
from jax.experimental.pallas import tpu as pltpu


# --------------------------------------------------------------------------
# Fused forward pass (one pallas_call for the whole residual block)
# --------------------------------------------------------------------------
def resblock_sft_forward(fea_nchw, cond_nchw, packed):
    N, _, H, W = fea_nchw.shape
    Hp, Wp = H + 4, W + 4              # 2-pixel zero halo per side
    Mp = Hp * Wp                       # flattened padded pixels per image
    LB = (H + 2) * Wp - 2              # conv0-output / SFT1 slab (1-px-halo region)
    LC = H * Wp - 4                    # conv1-output / residual slab (real image rows)
    OFF_B = Wp + 1                     # flat offset of the conv0 output slab
    OFF_C = 2 * Wp + 2                 # flat offset of the conv1 output slab
    inv_wp = float(1.0 / Wp)

    # pad the batch to an even size for the 2-image channel packing
    if N % 2:
        fea_nchw = jnp.concatenate([fea_nchw, jnp.zeros_like(fea_nchw[:1])], 0)
        cond_nchw = jnp.concatenate([cond_nchw, jnp.zeros_like(cond_nchw[:1])], 0)
    G = fea_nchw.shape[0] // 2         # image pairs == grid steps

    def kernel(fea_ref, cond_ref,
               s0w0, s0b0, s0w1, s0b1, c0w, c0b,
               s1w0, s1b0, s1w1, s1b1, c1w, c1b,
               out_ref):
        fea = fea_ref[0]               # (Mp, 128) f32   [img0 | img1]
        cond = cond_ref[0]             # (Mp, 64)  bf16  [img0 | img1]

        # ---- zero-pad mask, computed in-kernel (no vector integer divide) ----
        r = lax.broadcasted_iota(jnp.int32, (Mp, 1), 0)
        row = (r.astype(jnp.float32) * inv_wp).astype(jnp.int32)   # estimate
        col = r - row * Wp
        row = row + (col >= Wp).astype(jnp.int32) - (col < 0).astype(jnp.int32)
        col = r - row * Wp
        inside = ((row >= 2) & (row < 2 + H) & (col >= 2) & (col < 2 + W))
        mask = inside.astype(jnp.float32)                          # (Mp, 1)

        def sft_relu(x_f32, c_bf16, m_f32, w0, b0, w1, b1):
            # packed SFT layer + ReLU: two lane-dense bf16 MXU dots, f32 tail.
            h = jnp.dot(c_bf16, w0[...],
                        preferred_element_type=jnp.float32) + b0[...]
            h = jnp.where(h > 0, h, 0.01 * h)        # leaky_relu(0.01) per spec
            ss = jnp.dot(h.astype(jnp.bfloat16), w1[...],
                         preferred_element_type=jnp.float32) + b1[...]  # (rows,256)
            y = jnp.maximum(x_f32 * ss[:, :128] + ss[:, 128:], 0.0)
            # zero the conv zero-pad ring (SFT of a padded pixel is not zero)
            return (y * m_f32).astype(jnp.bfloat16)

        def conv3x3(s_bf16, length, w3, b):
            # 3x3 "same" conv on the flat padded layout: for each vertical tap
            # the 3 horizontal taps are lane-concatenated, so each MXU dot is a
            # single (length,384)x(384,128) with f32 accumulation.
            acc = None
            for dy in range(3):
                off = dy * Wp
                s_cat = jnp.concatenate(
                    [s_bf16[off:off + length, :],
                     s_bf16[off + 1:off + 1 + length, :],
                     s_bf16[off + 2:off + 2 + length, :]], axis=1)   # (len, 384)
                d = jnp.dot(s_cat, w3[dy], preferred_element_type=jnp.float32)
                acc = d if acc is None else acc + d
            return acc + b[...]

        # stage 1: conv0(relu(sft0(fea, cond)))
        s0 = sft_relu(fea, cond, mask, s0w0, s0b0, s0w1, s0b1)       # (Mp,128) bf16
        c0 = conv3x3(s0, LB, c0w, c0b)                               # (LB,128) f32

        # stage 2: out = fea + conv1(relu(sft1(conv0_out, cond)))
        s1 = sft_relu(c0, cond[OFF_B:OFF_B + LB, :],
                      mask[OFF_B:OFF_B + LB, :],
                      s1w0, s1b0, s1w1, s1b1)                        # (LB,128) bf16
        c1 = conv3x3(s1, LC, c1w, c1b)                               # (LC,128) f32
        out_ref[0, :, :] = fea[OFF_C:OFF_C + LC, :] + c1             # f32 residual

    # ---- wrapper glue: NCHW pairs -> padded, flattened 128-channel rows ----
    def pack_pairs(x_nchw, dtype):
        _, C, _, _ = x_nchw.shape
        x = x_nchw.reshape(G, 2, C, H, W)
        x = jnp.transpose(x, (0, 3, 4, 1, 2)).reshape(G, H, W, 2 * C)
        x = jnp.pad(x, ((0, 0), (2, 2), (2, 2), (0, 0)))
        return x.reshape(G, Mp, 2 * C).astype(dtype)

    fea_p = pack_pairs(fea_nchw, jnp.float32)      # (G, Mp, 128) f32
    cond_p = pack_pairs(cond_nchw, jnp.bfloat16)   # (G, Mp, 64)  bf16

    s0w0, s0b0, s0w1, s0b1 = packed["sft0"]
    s1w0, s1b0, s1w1, s1b1 = packed["sft1"]
    c0w, c0b = packed["conv0"]
    c1w, c1b = packed["conv1"]

    full = lambda shp: pl.BlockSpec(shp, lambda n: (0,) * len(shp))

    flops = G * (2 * Mp * (64 * 128 + 128 * 256)
                 + 2 * LB * (64 * 128 + 128 * 256)
                 + 2 * 3 * 384 * 128 * (LB + LC))
    bytes_accessed = (G * Mp * (128 * 4 + 64 * 2) + G * LC * 128 * 4
                      + 2 * (64 * 128 * 2 + 128 * 4 + 128 * 256 * 2 + 256 * 4)
                      + 2 * (3 * 384 * 128 * 2 + 128 * 4))

    out_flat = pl.pallas_call(
        kernel,
        out_shape=jax.ShapeDtypeStruct((G, LC, 128), jnp.float32),
        grid=(G,),
        in_specs=[
            pl.BlockSpec((1, Mp, 128), lambda n: (n, 0, 0)),
            pl.BlockSpec((1, Mp, 64), lambda n: (n, 0, 0)),
            full((64, 128)), full((1, 128)), full((128, 256)), full((1, 256)),
            full((3, 384, 128)), full((1, 128)),
            full((64, 128)), full((1, 128)), full((128, 256)), full((1, 256)),
            full((3, 384, 128)), full((1, 128)),
        ],
        out_specs=pl.BlockSpec((1, LC, 128), lambda n: (n, 0, 0)),
        compiler_params=pltpu.CompilerParams(
            dimension_semantics=("parallel",),
            vmem_limit_bytes=64 * 1024 * 1024),
        cost_estimate=pl.CostEstimate(flops=int(flops), transcendentals=0,
                                      bytes_accessed=int(bytes_accessed)),
    )(fea_p, cond_p,
      s0w0, s0b0, s0w1, s0b1, c0w, c0b,
      s1w0, s1b0, s1w1, s1b1, c1w, c1b)

    # unpack: (G, LC, 128) -> (N, 64, H, W)
    out = jnp.pad(out_flat, ((0, 0), (2, 2), (0, 0)))        # -> (G, H*Wp, 128)
    out = out.reshape(G, H, Wp, 2, 64)[:, :, 2:2 + W]        # drop pad columns
    out = jnp.transpose(out, (0, 3, 4, 1, 2)).reshape(2 * G, 64, H, W)
    return out[:N], cond_nchw[:N]


# --------------------------------------------------------------------------
# Deterministic parameters (PyTorch-style init) + kernel-side packing
# --------------------------------------------------------------------------
def _conv_params(key, kh, kw, cin, cout):
    bound = 1.0 / np.sqrt(cin * kh * kw)
    kw_, kb_ = jax.random.split(key)
    w = jax.random.uniform(kw_, (kh * kw * cin, cout), jnp.float32, -bound, bound)
    b = jax.random.uniform(kb_, (1, cout), jnp.float32, -bound, bound)
    return w, b


def make_params(key):
    keys = jax.random.split(key, 10)

    def sft(k4):
        ws0, bs0 = _conv_params(k4[0], 1, 1, 32, 32)
        ws1, bs1 = _conv_params(k4[1], 1, 1, 32, 64)
        wt0, bt0 = _conv_params(k4[2], 1, 1, 32, 32)
        wt1, bt1 = _conv_params(k4[3], 1, 1, 32, 64)
        return (ws0, bs0, ws1, bs1, wt0, bt0, wt1, bt1)

    params = {"sft0": sft(keys[0:4]), "sft1": sft(keys[4:8])}
    params["conv0_w"], params["conv0_b"] = _conv_params(keys[8], 3, 3, 64, 64)
    params["conv1_w"], params["conv1_b"] = _conv_params(keys[9], 3, 3, 64, 64)
    return params


def _blockdiag2(w):
    a, b = w.shape
    z = jnp.zeros((a, b), w.dtype)
    return jnp.concatenate([jnp.concatenate([w, z], 1),
                            jnp.concatenate([z, w], 1)], 0)


def pack_params(params):
    """Pack per-image weights for the 2-image (128-lane) channel layout."""
    def pack_sft(p):
        ws0, bs0, ws1, bs1, wt0, bt0, wt1, bt1 = p
        # hidden layout (128 lanes): [hs_img0 | ht_img0 | hs_img1 | ht_img1]
        w0 = _blockdiag2(jnp.concatenate([ws0, wt0], axis=1)).astype(jnp.bfloat16)
        b0 = jnp.tile(jnp.concatenate([bs0, bt0], axis=1), (1, 2))       # (1,128)
        # output layout (256 lanes): [scale0 | scale1 | shift0 | shift1]
        w1 = jnp.zeros((128, 256), jnp.float32)
        w1 = w1.at[0:32, 0:64].set(ws1)          # hs_img0 -> scale_img0
        w1 = w1.at[32:64, 128:192].set(wt1)      # ht_img0 -> shift_img0
        w1 = w1.at[64:96, 64:128].set(ws1)       # hs_img1 -> scale_img1
        w1 = w1.at[96:128, 192:256].set(wt1)     # ht_img1 -> shift_img1
        b1 = jnp.concatenate([bs1, bs1, bt1, bt1], axis=1)               # (1,256)
        return (w0, b0, w1.astype(jnp.bfloat16), b1)

    def pack_conv(w, b):
        # (9*64,64) -> (3, 384, 128): per vertical tap, the 3 horizontal taps
        # stacked along K, each block-diag replicated for the 2 packed images.
        w9 = w.reshape(9, 64, 64)
        taps = [jnp.concatenate([_blockdiag2(w9[dy * 3 + dx]) for dx in range(3)],
                                axis=0) for dy in range(3)]
        return (jnp.stack(taps, 0).astype(jnp.bfloat16),                 # (3,384,128)
                jnp.tile(b, (1, 2)))                                     # (1,128) f32

    return {
        "sft0": pack_sft(params["sft0"]),
        "sft1": pack_sft(params["sft1"]),
        "conv0": pack_conv(params["conv0_w"], params["conv0_b"]),
        "conv1": pack_conv(params["conv1_w"], params["conv1_b"]),
    }


# --------------------------------------------------------------------------
# Pure-JAX reference (unpacked weights).  lp=True mirrors the kernel numerics
# (bf16 MXU operands, f32 accumulation, f32 features); lp=False is full f32.
# --------------------------------------------------------------------------
def _leaky_relu(x):
    return jnp.where(x > 0, x, 0.01 * x)


def _sft_relu_ref(x, c, p, lp):
    ws0, bs0, ws1, bs1, wt0, bt0, wt1, bt1 = p
    cvt = (lambda a: a.astype(jnp.bfloat16)) if lp else (lambda a: a)
    mm = lambda a, b: jnp.dot(cvt(a), cvt(b), preferred_element_type=jnp.float32)
    scale = mm(_leaky_relu(mm(c, ws0) + bs0), ws1) + bs1
    shift = mm(_leaky_relu(mm(c, wt0) + bt0), wt1) + bt1
    return jnp.maximum(x * scale + shift, 0.0)


def _conv3x3_ref(x, w, b, N, H, W, lp):
    cvt = (lambda a: a.astype(jnp.bfloat16)) if lp else (lambda a: a)
    xp = jnp.pad(x.reshape(N, H, W, 64), ((0, 0), (1, 1), (1, 1), (0, 0)))
    w9 = w.reshape(9, 64, 64)
    acc = jnp.zeros((N, H, W, 64), jnp.float32)
    for k in range(9):
        dy, dx = k // 3, k % 3
        acc = acc + jnp.einsum("nhwc,co->nhwo",
                               cvt(xp[:, dy:dy + H, dx:dx + W, :]), cvt(w9[k]),
                               preferred_element_type=jnp.float32)
    return acc.reshape(N * H * W, 64) + b


def reference_forward(fea_nchw, cond_nchw, params, lp):
    N, _, H, W = fea_nchw.shape
    M = N * H * W
    fea = jnp.transpose(fea_nchw, (0, 2, 3, 1)).reshape(M, 64)
    cond = jnp.transpose(cond_nchw, (0, 2, 3, 1)).reshape(M, 32)
    if lp:  # mirror the kernel's bf16 storage of the cond input (fea stays f32)
        cond = cond.astype(jnp.bfloat16).astype(jnp.float32)
    s0 = _sft_relu_ref(fea, cond, params["sft0"], lp)
    c0 = _conv3x3_ref(s0, params["conv0_w"], params["conv0_b"], N, H, W, lp)
    s1 = _sft_relu_ref(c0, cond, params["sft1"], lp)
    c1 = _conv3x3_ref(s1, params["conv1_w"], params["conv1_b"], N, H, W, lp)
    out = (fea + c1).reshape(N, H, W, 64)
    return jnp.transpose(out, (0, 3, 1, 2)), cond_nchw


# --------------------------------------------------------------------------
if __name__ == "__main__":
    key = jax.random.PRNGKey(0)
    kx0, kx1, kp = jax.random.split(key, 3)

    N, H, W = 2, 16, 16
    x0 = jax.random.normal(kx0, (N, 64, H, W), jnp.float32)   # features (NCHW)
    x1 = jax.random.normal(kx1, (N, 32, H, W), jnp.float32)   # SFT condition (NCHW)
    params = make_params(kp)
    packed = pack_params(params)

    fwd = jax.jit(resblock_sft_forward)
    out0, out1 = fwd(x0, x1, packed)
    out0 = jax.block_until_ready(out0)
    out1 = jax.block_until_ready(out1)

    # Tight check against a reference with identical precision choices
    # (bf16 MXU operands, f32 accumulation, f32 features/residual) --
    # validates layout, 2-image packing, block-diag weights and conv taps.
    ref0, ref1 = reference_forward(x0, x1, params, lp=True)
    np.testing.assert_allclose(np.asarray(out0), np.asarray(ref0),
                               rtol=1e-2, atol=1e-2)
    np.testing.assert_allclose(np.asarray(out1), np.asarray(ref1), rtol=0, atol=0)

    # Loose sanity check against the full-f32 module math (difference is only
    # the bf16 storage of conv/SFT matmul operands).
    reff0, _ = reference_forward(x0, x1, params, lp=False)
    np.testing.assert_allclose(np.asarray(out0), np.asarray(reff0),
                               rtol=1e-1, atol=1e-1)

    assert out0.shape == (N, 64, H, W) and out1.shape == (N, 32, H, W)
    assert out0.dtype == jnp.float32

    print("KERNEL_OK")
</pallas_src>

<mosaic_0001>
module attributes {stable_mosaic.version = 11 : i64} {
  func.func @kernel(%arg0: i32, %arg1: memref<1x400x128xf32, #tpu.memory_space<vmem>>, %arg2: memref<1x400x64xbf16, #tpu.memory_space<vmem>>, %arg3: memref<64x128xbf16, #tpu.memory_space<vmem>>, %arg4: memref<1x128xf32, #tpu.memory_space<vmem>>, %arg5: memref<128x256xbf16, #tpu.memory_space<vmem>>, %arg6: memref<1x256xf32, #tpu.memory_space<vmem>>, %arg7: memref<3x384x128xbf16, #tpu.memory_space<vmem>>, %arg8: memref<1x128xf32, #tpu.memory_space<vmem>>, %arg9: memref<64x128xbf16, #tpu.memory_space<vmem>>, %arg10: memref<1x128xf32, #tpu.memory_space<vmem>>, %arg11: memref<128x256xbf16, #tpu.memory_space<vmem>>, %arg12: memref<1x256xf32, #tpu.memory_space<vmem>>, %arg13: memref<3x384x128xbf16, #tpu.memory_space<vmem>>, %arg14: memref<1x128xf32, #tpu.memory_space<vmem>>, %arg15: memref<1x316x128xf32, #tpu.memory_space<vmem>>) attributes {dimension_semantics = [#tpu.dimension_semantics<parallel>], iteration_bounds = array<i64: 1>, scalar_prefetch = 0 : i64, scratch_operands = 0 : i64, tpu.core_type = #tpu.core_type<tc>, window_params = [{transform_indices = @transform_0, window_bounds = array<i64: 1, 400, 128>}, {transform_indices = @transform_1, window_bounds = array<i64: 1, 400, 64>}, {pipeline_mode = #tpu.pipeline_mode<synchronous>, transform_indices = @transform_2, window_bounds = array<i64: 64, 128>}, {pipeline_mode = #tpu.pipeline_mode<synchronous>, transform_indices = @transform_3, window_bounds = array<i64: 1, 128>}, {pipeline_mode = #tpu.pipeline_mode<synchronous>, transform_indices = @transform_4, window_bounds = array<i64: 128, 256>}, {pipeline_mode = #tpu.pipeline_mode<synchronous>, transform_indices = @transform_5, window_bounds = array<i64: 1, 256>}, {pipeline_mode = #tpu.pipeline_mode<synchronous>, transform_indices = @transform_6, window_bounds = array<i64: 3, 384, 128>}, {pipeline_mode = #tpu.pipeline_mode<synchronous>, transform_indices = @transform_7, window_bounds = array<i64: 1, 128>}, {pipeline_mode = #tpu.pipeline_mode<synchronous>, transform_indices = @transform_8, window_bounds = array<i64: 64, 128>}, {pipeline_mode = #tpu.pipeline_mode<synchronous>, transform_indices = @transform_9, window_bounds = array<i64: 1, 128>}, {pipeline_mode = #tpu.pipeline_mode<synchronous>, transform_indices = @transform_10, window_bounds = array<i64: 128, 256>}, {pipeline_mode = #tpu.pipeline_mode<synchronous>, transform_indices = @transform_11, window_bounds = array<i64: 1, 256>}, {pipeline_mode = #tpu.pipeline_mode<synchronous>, transform_indices = @transform_12, window_bounds = array<i64: 3, 384, 128>}, {pipeline_mode = #tpu.pipeline_mode<synchronous>, transform_indices = @transform_13, window_bounds = array<i64: 1, 128>}, {transform_indices = @transform_14, window_bounds = array<i64: 1, 316, 128>}]} {
    %c0 = arith.constant 0 : index
    %c0_0 = arith.constant 0 : index
    %c0_1 = arith.constant 0 : index
    %0 = vector.load %arg1[%c0, %c0_0, %c0_1] : memref<1x400x128xf32, #tpu.memory_space<vmem>>, vector<1x400x128xf32>
    %1 = vector.shape_cast %0 : vector<1x400x128xf32> to vector<400x128xf32>
    %c0_2 = arith.constant 0 : index
    %c0_3 = arith.constant 0 : index
    %c0_4 = arith.constant 0 : index
    %2 = vector.load %arg2[%c0_2, %c0_3, %c0_4] : memref<1x400x64xbf16, #tpu.memory_space<vmem>>, vector<1x400x64xbf16>
    %3 = vector.shape_cast %2 : vector<1x400x64xbf16> to vector<400x64xbf16>
    %4 = tpu.iota {dimensions = array<i32: 0>} : vector<400x1xi32>
    %5 = arith.sitofp %4 : vector<400x1xi32> to vector<400x1xf32>
    %cst = arith.constant 5.000000e-02 : f32
    %6 = vector.broadcast %cst : f32 to vector<400x1xf32>
    %7 = arith.mulf %5, %6 : vector<400x1xf32>
    %8 = arith.fptosi %7 : vector<400x1xf32> to vector<400x1xi32>
    %c20_i32 = arith.constant 20 : i32
    %9 = vector.broadcast %c20_i32 : i32 to vector<400x1xi32>
    %10 = arith.muli %8, %9 : vector<400x1xi32>
    %11 = arith.subi %4, %10 : vector<400x1xi32>
    %c20_i32_5 = arith.constant 20 : i32
    %12 = vector.broadcast %c20_i32_5 : i32 to vector<400x1xi32>
    %13 = arith.cmpi sge, %11, %12 : vector<400x1xi32>
    %14 = arith.extui %13 : vector<400x1xi1> to vector<400x1xi32>
    %15 = arith.addi %8, %14 : vector<400x1xi32>
    %c0_i32 = arith.constant 0 : i32
    %16 = vector.broadcast %c0_i32 : i32 to vector<400x1xi32>
    %17 = arith.cmpi slt, %11, %16 : vector<400x1xi32>
    %18 = arith.extui %17 : vector<400x1xi1> to vector<400x1xi32>
    %19 = arith.subi %15, %18 : vector<400x1xi32>
    %c20_i32_6 = arith.constant 20 : i32
    %20 = vector.broadcast %c20_i32_6 : i32 to vector<400x1xi32>
    %21 = arith.muli %19, %20 : vector<400x1xi32>
    %22 = arith.subi %4, %21 : vector<400x1xi32>
    %c2_i32 = arith.constant 2 : i32
    %23 = vector.broadcast %c2_i32 : i32 to vector<400x1xi32>
    %24 = arith.cmpi sge, %19, %23 : vector<400x1xi32>
    %c18_i32 = arith.constant 18 : i32
    %25 = vector.broadcast %c18_i32 : i32 to vector<400x1xi32>
    %26 = arith.cmpi slt, %19, %25 : vector<400x1xi32>
    %27 = arith.andi %24, %26 : vector<400x1xi1>
    %c2_i32_7 = arith.constant 2 : i32
    %28 = vector.broadcast %c2_i32_7 : i32 to vector<400x1xi32>
    %29 = arith.cmpi sge, %22, %28 : vector<400x1xi32>
    %30 = arith.andi %27, %29 : vector<400x1xi1>
    %c18_i32_8 = arith.constant 18 : i32
    %31 = vector.broadcast %c18_i32_8 : i32 to vector<400x1xi32>
    %32 = arith.cmpi slt, %22, %31 : vector<400x1xi32>
    %33 = arith.andi %30, %32 : vector<400x1xi1>
    %34 = arith.extui %33 : vector<400x1xi1> to vector<400x1xi32>
    %35 = arith.sitofp %34 : vector<400x1xi32> to vector<400x1xf32>
    %c0_9 = arith.constant 0 : index
    %c0_10 = arith.constant 0 : index
    %36 = vector.load %arg3[%c0_9, %c0_10] : memref<64x128xbf16, #tpu.memory_space<vmem>>, vector<64x128xbf16>
    %cst_11 = arith.constant dense<0.000000e+00> : vector<400x128xf32>
    %37 = tpu.matmul %3, %36, %cst_11 {dimension_numbers = #tpu.dot_dimension_numbers<[1], [0], [0], [1], [0, 0, 1, 1], [], []>} : vector<400x64xbf16>, vector<64x128xbf16>, vector<400x128xf32> -> vector<400x128xf32>
    %c0_12 = arith.constant 0 : index
    %c0_13 = arith.constant 0 : index
    %38 = vector.load %arg4[%c0_12, %c0_13] : memref<1x128xf32, #tpu.memory_space<vmem>>, vector<1x128xf32>
    %39 = vector.broadcast %38 : vector<1x128xf32> to vector<400x128xf32>
    %40 = arith.addf %37, %39 : vector<400x128xf32>
    %cst_14 = arith.constant 0.000000e+00 : f32
    %41 = vector.broadcast %cst_14 : f32 to vector<400x128xf32>
    %42 = arith.cmpf ogt, %40, %41 : vector<400x128xf32>
    %cst_15 = arith.constant 0.00999999977 : f32
    %43 = vector.broadcast %cst_15 : f32 to vector<400x128xf32>
    %44 = arith.mulf %43, %40 : vector<400x128xf32>
    %45 = arith.select %42, %40, %44 : vector<400x128xi1>, vector<400x128xf32>
    %46 = arith.truncf %45 : vector<400x128xf32> to vector<400x128xbf16>
    %c0_16 = arith.constant 0 : index
    %c0_17 = arith.constant 0 : index
    %47 = vector.load %arg5[%c0_16, %c0_17] : memref<128x256xbf16, #tpu.memory_space<vmem>>, vector<128x256xbf16>
    %cst_18 = arith.constant dense<0.000000e+00> : vector<400x256xf32>
    %48 = tpu.matmul %46, %47, %cst_18 {dimension_numbers = #tpu.dot_dimension_numbers<[1], [0], [0], [1], [0, 0, 1, 1], [], []>} : vector<400x128xbf16>, vector<128x256xbf16>, vector<400x256xf32> -> vector<400x256xf32>
    %c0_19 = arith.constant 0 : index
    %c0_20 = arith.constant 0 : index
    %49 = vector.load %arg6[%c0_19, %c0_20] : memref<1x256xf32, #tpu.memory_space<vmem>>, vector<1x256xf32>
    %50 = vector.broadcast %49 : vector<1x256xf32> to vector<400x256xf32>
    %51 = arith.addf %48, %50 : vector<400x256xf32>
    %52 = vector.extract_strided_slice %51 {offsets = [0, 0], sizes = [400, 128], strides = [1, 1]} : vector<400x256xf32> to vector<400x128xf32>
    %53 = arith.mulf %1, %52 : vector<400x128xf32>
    %54 = vector.extract_strided_slice %51 {offsets = [0, 128], sizes = [400, 128], strides = [1, 1]} : vector<400x256xf32> to vector<400x128xf32>
    %55 = arith.addf %53, %54 : vector<400x128xf32>
    %cst_21 = arith.constant 0.000000e+00 : f32
    %56 = vector.broadcast %cst_21 : f32 to vector<400x128xf32>
    %57 = arith.maximumf %55, %56 : vector<400x128xf32>
    %58 = vector.broadcast %35 : vector<400x1xf32> to vector<400x128xf32>
    %59 = arith.mulf %57, %58 : vector<400x128xf32>
    %60 = arith.truncf %59 : vector<400x128xf32> to vector<400x128xbf16>
    %61 = vector.extract_strided_slice %60 {offsets = [0, 0], sizes = [358, 128], strides = [1, 1]} : vector<400x128xbf16> to vector<358x128xbf16>
    %62 = vector.extract_strided_slice %60 {offsets = [1, 0], sizes = [358, 128], strides = [1, 1]} : vector<400x128xbf16> to vector<358x128xbf16>
    %63 = vector.extract_strided_slice %60 {offsets = [2, 0], sizes = [358, 128], strides = [1, 1]} : vector<400x128xbf16> to vector<358x128xbf16>
    %64 = tpu.concatenate %61, %62, %63 in 1 : vector<358x128xbf16>, vector<358x128xbf16>, vector<358x128xbf16> -> vector<358x384xbf16>
    %c0_22 = arith.constant 0 : index
    %c0_23 = arith.constant 0 : index
    %c0_24 = arith.constant 0 : index
    %65 = vector.load %arg7[%c0_22, %c0_23, %c0_24] : memref<3x384x128xbf16, #tpu.memory_space<vmem>>, vector<1x384x128xbf16>
    %66 = vector.shape_cast %65 : vector<1x384x128xbf16> to vector<384x128xbf16>
    %cst_25 = arith.constant dense<0.000000e+00> : vector<358x128xf32>
    %67 = tpu.matmul %64, %66, %cst_25 {dimension_numbers = #tpu.dot_dimension_numbers<[1], [0], [0], [1], [0, 0, 1, 1], [], []>} : vector<358x384xbf16>, vector<384x128xbf16>, vector<358x128xf32> -> vector<358x128xf32>
    %68 = vector.extract_strided_slice %60 {offsets = [20, 0], sizes = [358, 128], strides = [1, 1]} : vector<400x128xbf16> to vector<358x128xbf16>
    %69 = vector.extract_strided_slice %60 {offsets = [21, 0], sizes = [358, 128], strides = [1, 1]} : vector<400x128xbf16> to vector<358x128xbf16>
    %70 = vector.extract_strided_slice %60 {offsets = [22, 0], sizes = [358, 128], strides = [1, 1]} : vector<400x128xbf16> to vector<358x128xbf16>
    %71 = tpu.concatenate %68, %69, %70 in 1 : vector<358x128xbf16>, vector<358x128xbf16>, vector<358x128xbf16> -> vector<358x384xbf16>
    %c1 = arith.constant 1 : index
    %c0_26 = arith.constant 0 : index
    %c0_27 = arith.constant 0 : index
    %72 = vector.load %arg7[%c1, %c0_26, %c0_27] : memref<3x384x128xbf16, #tpu.memory_space<vmem>>, vector<1x384x128xbf16>
    %73 = vector.shape_cast %72 : vector<1x384x128xbf16> to vector<384x128xbf16>
    %cst_28 = arith.constant dense<0.000000e+00> : vector<358x128xf32>
    %74 = tpu.matmul %71, %73, %cst_28 {dimension_numbers = #tpu.dot_dimension_numbers<[1], [0], [0], [1], [0, 0, 1, 1], [], []>} : vector<358x384xbf16>, vector<384x128xbf16>, vector<358x128xf32> -> vector<358x128xf32>
    %75 = arith.addf %67, %74 : vector<358x128xf32>
    %76 = vector.extract_strided_slice %60 {offsets = [40, 0], sizes = [358, 128], strides = [1, 1]} : vector<400x128xbf16> to vector<358x128xbf16>
    %77 = vector.extract_strided_slice %60 {offsets = [41, 0], sizes = [358, 128], strides = [1, 1]} : vector<400x128xbf16> to vector<358x128xbf16>
    %78 = vector.extract_strided_slice %60 {offsets = [42, 0], sizes = [358, 128], strides = [1, 1]} : vector<400x128xbf16> to vector<358x128xbf16>
    %79 = tpu.concatenate %76, %77, %78 in 1 : vector<358x128xbf16>, vector<358x128xbf16>, vector<358x128xbf16> -> vector<358x384xbf16>
    %c2 = arith.constant 2 : index
    %c0_29 = arith.constant 0 : index
    %c0_30 = arith.constant 0 : index
    %80 = vector.load %arg7[%c2, %c0_29, %c0_30] : memref<3x384x128xbf16, #tpu.memory_space<vmem>>, vector<1x384x128xbf16>
    %81 = vector.shape_cast %80 : vector<1x384x128xbf16> to vector<384x128xbf16>
    %cst_31 = arith.constant dense<0.000000e+00> : vector<358x128xf32>
    %82 = tpu.matmul %79, %81, %cst_31 {dimension_numbers = #tpu.dot_dimension_numbers<[1], [0], [0], [1], [0, 0, 1, 1], [], []>} : vector<358x384xbf16>, vector<384x128xbf16>, vector<358x128xf32> -> vector<358x128xf32>
    %83 = arith.addf %75, %82 : vector<358x128xf32>
    %c0_32 = arith.constant 0 : index
    %c0_33 = arith.constant 0 : index
    %84 = vector.load %arg8[%c0_32, %c0_33] : memref<1x128xf32, #tpu.memory_space<vmem>>, vector<1x128xf32>
    %85 = vector.broadcast %84 : vector<1x128xf32> to vector<358x128xf32>
    %86 = arith.addf %83, %85 : vector<358x128xf32>
    %87 = vector.extract_strided_slice %3 {offsets = [21, 0], sizes = [358, 64], strides = [1, 1]} : vector<400x64xbf16> to vector<358x64xbf16>
    %88 = vector.extract_strided_slice %35 {offsets = [21, 0], sizes = [358, 1], strides = [1, 1]} : vector<400x1xf32> to vector<358x1xf32>
    %c0_34 = arith.constant 0 : index
    %c0_35 = arith.constant 0 : index
    %89 = vector.load %arg9[%c0_34, %c0_35] : memref<64x128xbf16, #tpu.memory_space<vmem>>, vector<64x128xbf16>
    %cst_36 = arith.constant dense<0.000000e+00> : vector<358x128xf32>
    %90 = tpu.matmul %87, %89, %cst_36 {dimension_numbers = #tpu.dot_dimension_numbers<[1], [0], [0], [1], [0, 0, 1, 1], [], []>} : vector<358x64xbf16>, vector<64x128xbf16>, vector<358x128xf32> -> vector<358x128xf32>
    %c0_37 = arith.constant 0 : index
    %c0_38 = arith.constant 0 : index
    %91 = vector.load %arg10[%c0_37, %c0_38] : memref<1x128xf32, #tpu.memory_space<vmem>>, vector<1x128xf32>
    %92 = vector.broadcast %91 : vector<1x128xf32> to vector<358x128xf32>
    %93 = arith.addf %90, %92 : vector<358x128xf32>
    %cst_39 = arith.constant 0.000000e+00 : f32
    %94 = vector.broadcast %cst_39 : f32 to vector<358x128xf32>
    %95 = arith.cmpf ogt, %93, %94 : vector<358x128xf32>
    %cst_40 = arith.constant 0.00999999977 : f32
    %96 = vector.broadcast %cst_40 : f32 to vector<358x128xf32>
    %97 = arith.mulf %96, %93 : vector<358x128xf32>
    %98 = arith.select %95, %93, %97 : vector<358x128xi1>, vector<358x128xf32>
    %99 = arith.truncf %98 : vector<358x128xf32> to vector<358x128xbf16>
    %c0_41 = arith.constant 0 : index
    %c0_42 = arith.constant 0 : index
    %100 = vector.load %arg11[%c0_41, %c0_42] : memref<128x256xbf16, #tpu.memory_space<vmem>>, vector<128x256xbf16>
    %cst_43 = arith.constant dense<0.000000e+00> : vector<358x256xf32>
    %101 = tpu.matmul %99, %100, %cst_43 {dimension_numbers = #tpu.dot_dimension_numbers<[1], [0], [0], [1], [0, 0, 1, 1], [], []>} : vector<358x128xbf16>, vector<128x256xbf16>, vector<358x256xf32> -> vector<358x256xf32>
    %c0_44 = arith.constant 0 : index
    %c0_45 = arith.constant 0 : index
    %102 = vector.load %arg12[%c0_44, %c0_45] : memref<1x256xf32, #tpu.memory_space<vmem>>, vector<1x256xf32>
    %103 = vector.broadcast %102 : vector<1x256xf32> to vector<358x256xf32>
    %104 = arith.addf %101, %103 : vector<358x256xf32>
    %105 = vector.extract_strided_slice %104 {offsets = [0, 0], sizes = [358, 128], strides = [1, 1]} : vector<358x256xf32> to vector<358x128xf32>
    %106 = arith.mulf %86, %105 : vector<358x128xf32>
    %107 = vector.extract_strided_slice %104 {offsets = [0, 128], sizes = [358, 128], strides = [1, 1]} : vector<358x256xf32> to vector<358x128xf32>
    %108 = arith.addf %106, %107 : vector<358x128xf32>
    %cst_46 = arith.constant 0.000000e+00 : f32
    %109 = vector.broadcast %cst_46 : f32 to vector<358x128xf32>
    %110 = arith.maximumf %108, %109 : vector<358x128xf32>
    %111 = vector.broadcast %88 : vector<358x1xf32> to vector<358x128xf32>
    %112 = arith.mulf %110, %111 : vector<358x128xf32>
    %113 = arith.truncf %112 : vector<358x128xf32> to vector<358x128xbf16>
    %114 = vector.extract_strided_slice %113 {offsets = [0, 0], sizes = [316, 128], strides = [1, 1]} : vector<358x128xbf16> to vector<316x128xbf16>
    %115 = vector.extract_strided_slice %113 {offsets = [1, 0], sizes = [316, 128], strides = [1, 1]} : vector<358x128xbf16> to vector<316x128xbf16>
    %116 = vector.extract_strided_slice %113 {offsets = [2, 0], sizes = [316, 128], strides = [1, 1]} : vector<358x128xbf16> to vector<316x128xbf16>
    %117 = tpu.concatenate %114, %115, %116 in 1 : vector<316x128xbf16>, vector<316x128xbf16>, vector<316x128xbf16> -> vector<316x384xbf16>
    %c0_47 = arith.constant 0 : index
    %c0_48 = arith.constant 0 : index
    %c0_49 = arith.constant 0 : index
    %118 = vector.load %arg13[%c0_47, %c0_48, %c0_49] : memref<3x384x128xbf16, #tpu.memory_space<vmem>>, vector<1x384x128xbf16>
    %119 = vector.shape_cast %118 : vector<1x384x128xbf16> to vector<384x128xbf16>
    %cst_50 = arith.constant dense<0.000000e+00> : vector<316x128xf32>
    %120 = tpu.matmul %117, %119, %cst_50 {dimension_numbers = #tpu.dot_dimension_numbers<[1], [0], [0], [1], [0, 0, 1, 1], [], []>} : vector<316x384xbf16>, vector<384x128xbf16>, vector<316x128xf32> -> vector<316x128xf32>
    %121 = vector.extract_strided_slice %113 {offsets = [20, 0], sizes = [316, 128], strides = [1, 1]} : vector<358x128xbf16> to vector<316x128xbf16>
    %122 = vector.extract_strided_slice %113 {offsets = [21, 0], sizes = [316, 128], strides = [1, 1]} : vector<358x128xbf16> to vector<316x128xbf16>
    %123 = vector.extract_strided_slice %113 {offsets = [22, 0], sizes = [316, 128], strides = [1, 1]} : vector<358x128xbf16> to vector<316x128xbf16>
    %124 = tpu.concatenate %121, %122, %123 in 1 : vector<316x128xbf16>, vector<316x128xbf16>, vector<316x128xbf16> -> vector<316x384xbf16>
    %c1_51 = arith.constant 1 : index
    %c0_52 = arith.constant 0 : index
    %c0_53 = arith.constant 0 : index
    %125 = vector.load %arg13[%c1_51, %c0_52, %c0_53] : memref<3x384x128xbf16, #tpu.memory_space<vmem>>, vector<1x384x128xbf16>
    %126 = vector.shape_cast %125 : vector<1x384x128xbf16> to vector<384x128xbf16>
    %cst_54 = arith.constant dense<0.000000e+00> : vector<316x128xf32>
    %127 = tpu.matmul %124, %126, %cst_54 {dimension_numbers = #tpu.dot_dimension_numbers<[1], [0], [0], [1], [0, 0, 1, 1], [], []>} : vector<316x384xbf16>, vector<384x128xbf16>, vector<316x128xf32> -> vector<316x128xf32>
    %128 = arith.addf %120, %127 : vector<316x128xf32>
    %129 = vector.extract_strided_slice %113 {offsets = [40, 0], sizes = [316, 128], strides = [1, 1]} : vector<358x128xbf16> to vector<316x128xbf16>
    %130 = vector.extract_strided_slice %113 {offsets = [41, 0], sizes = [316, 128], strides = [1, 1]} : vector<358x128xbf16> to vector<316x128xbf16>
    %131 = vector.extract_strided_slice %113 {offsets = [42, 0], sizes = [316, 128], strides = [1, 1]} : vector<358x128xbf16> to vector<316x128xbf16>
    %132 = tpu.concatenate %129, %130, %131 in 1 : vector<316x128xbf16>, vector<316x128xbf16>, vector<316x128xbf16> -> vector<316x384xbf16>
    %c2_55 = arith.constant 2 : index
    %c0_56 = arith.constant 0 : index
    %c0_57 = arith.constant 0 : index
    %133 = vector.load %arg13[%c2_55, %c0_56, %c0_57] : memref<3x384x128xbf16, #tpu.memory_space<vmem>>, vector<1x384x128xbf16>
    %134 = vector.shape_cast %133 : vector<1x384x128xbf16> to vector<384x128xbf16>
    %cst_58 = arith.constant dense<0.000000e+00> : vector<316x128xf32>
    %135 = tpu.matmul %132, %134, %cst_58 {dimension_numbers = #tpu.dot_dimension_numbers<[1], [0], [0], [1], [0, 0, 1, 1], [], []>} : vector<316x384xbf16>, vector<384x128xbf16>, vector<316x128xf32> -> vector<316x128xf32>
    %136 = arith.addf %128, %135 : vector<316x128xf32>
    %c0_59 = arith.constant 0 : index
    %c0_60 = arith.constant 0 : index
    %137 = vector.load %arg14[%c0_59, %c0_60] : memref<1x128xf32, #tpu.memory_space<vmem>>, vector<1x128xf32>
    %138 = vector.broadcast %137 : vector<1x128xf32> to vector<316x128xf32>
    %139 = arith.addf %136, %138 : vector<316x128xf32>
    %140 = vector.extract_strided_slice %1 {offsets = [42, 0], sizes = [316, 128], strides = [1, 1]} : vector<400x128xf32> to vector<316x128xf32>
    %141 = arith.addf %140, %139 : vector<316x128xf32>
    %c0_61 = arith.constant 0 : index
    %c0_62 = arith.constant 0 : index
    %c0_63 = arith.constant 0 : index
    %142 = vector.load %arg15[%c0_61, %c0_62, %c0_63] : memref<1x316x128xf32, #tpu.memory_space<vmem>>, vector<1x316x128xf32>
    %143 = vector.shape_cast %142 : vector<1x316x128xf32> to vector<316x128xf32>
    %144 = vector.shape_cast %141 : vector<316x128xf32> to vector<1x316x128xf32>
    tpu.vector_store %arg15[%c0_61, %c0_62, %c0_63], %144 {strides = array<i32>} : memref<1x316x128xf32, #tpu.memory_space<vmem>>, vector<1x316x128xf32>,
    return
  }
  func.func @transform_0(%arg0: i32) -> (i32, i32, i32) {
    %c0_i32 = arith.constant 0 : i32
    %c0_i32_0 = arith.constant 0 : i32
    %c0_i32_1 = arith.constant 0 : i32
    return %arg0, %c0_i32, %c0_i32_0 : i32, i32, i32
  }
  func.func @transform_1(%arg0: i32) -> (i32, i32, i32) {
    %c0_i32 = arith.constant 0 : i32
    %c0_i32_0 = arith.constant 0 : i32
    %c0_i32_1 = arith.constant 0 : i32
    return %arg0, %c0_i32, %c0_i32_0 : i32, i32, i32
  }
  func.func @transform_2(%arg0: i32) -> (i32, i32) {
    %c0_i32 = arith.constant 0 : i32
    %c0_i32_0 = arith.constant 0 : i32
    %c0_i32_1 = arith.constant 0 : i32
    return %c0_i32, %c0_i32_0 : i32, i32
  }
  func.func @transform_3(%arg0: i32) -> (i32, i32) {
    %c0_i32 = arith.constant 0 : i32
    %c0_i32_0 = arith.constant 0 : i32
    %c0_i32_1 = arith.constant 0 : i32
    return %c0_i32, %c0_i32_0 : i32, i32
  }
  func.func @transform_4(%arg0: i32) -> (i32, i32) {
    %c0_i32 = arith.constant 0 : i32
    %c0_i32_0 = arith.constant 0 : i32
    %c0_i32_1 = arith.constant 0 : i32
    return %c0_i32, %c0_i32_0 : i32, i32
  }
  func.func @transform_5(%arg0: i32) -> (i32, i32) {
    %c0_i32 = arith.constant 0 : i32
    %c0_i32_0 = arith.constant 0 : i32
    %c0_i32_1 = arith.constant 0 : i32
    return %c0_i32, %c0_i32_0 : i32, i32
  }
  func.func @transform_6(%arg0: i32) -> (i32, i32, i32) {
    %c0_i32 = arith.constant 0 : i32
    %c0_i32_0 = arith.constant 0 : i32
    %c0_i32_1 = arith.constant 0 : i32
    %c0_i32_2 = arith.constant 0 : i32
    return %c0_i32, %c0_i32_0, %c0_i32_1 : i32, i32, i32
  }
  func.func @transform_7(%arg0: i32) -> (i32, i32) {
    %c0_i32 = arith.constant 0 : i32
    %c0_i32_0 = arith.constant 0 : i32
    %c0_i32_1 = arith.constant 0 : i32
    return %c0_i32, %c0_i32_0 : i32, i32
  }
  func.func @transform_8(%arg0: i32) -> (i32, i32) {
    %c0_i32 = arith.constant 0 : i32
    %c0_i32_0 = arith.constant 0 : i32
    %c0_i32_1 = arith.constant 0 : i32
    return %c0_i32, %c0_i32_0 : i32, i32
  }
  func.func @transform_9(%arg0: i32) -> (i32, i32) {
    %c0_i32 = arith.constant 0 : i32
    %c0_i32_0 = arith.constant 0 : i32
    %c0_i32_1 = arith.constant 0 : i32
    return %c0_i32, %c0_i32_0 : i32, i32
  }
  func.func @transform_10(%arg0: i32) -> (i32, i32) {
    %c0_i32 = arith.constant 0 : i32
    %c0_i32_0 = arith.constant 0 : i32
    %c0_i32_1 = arith.constant 0 : i32
    return %c0_i32, %c0_i32_0 : i32, i32
  }
  func.func @transform_11(%arg0: i32) -> (i32, i32) {
    %c0_i32 = arith.constant 0 : i32
    %c0_i32_0 = arith.constant 0 : i32
    %c0_i32_1 = arith.constant 0 : i32
    return %c0_i32, %c0_i32_0 : i32, i32
  }
  func.func @transform_12(%arg0: i32) -> (i32, i32, i32) {
    %c0_i32 = arith.constant 0 : i32
    %c0_i32_0 = arith.constant 0 : i32
    %c0_i32_1 = arith.constant 0 : i32
    %c0_i32_2 = arith.constant 0 : i32
    return %c0_i32, %c0_i32_0, %c0_i32_1 : i32, i32, i32
  }
  func.func @transform_13(%arg0: i32) -> (i32, i32) {
    %c0_i32 = arith.constant 0 : i32
    %c0_i32_0 = arith.constant 0 : i32
    %c0_i32_1 = arith.constant 0 : i32
    return %c0_i32, %c0_i32_0 : i32, i32
  }
  func.func @transform_14(%arg0: i32) -> (i32, i32, i32) {
    %c0_i32 = arith.constant 0 : i32
    %c0_i32_0 = arith.constant 0 : i32
    %c0_i32_1 = arith.constant 0 : i32
    return %arg0, %c0_i32, %c0_i32_0 : i32, i32, i32
  }
}

</mosaic_0001>

<llo_original>
// kernel: resblock_sft_forward.1
$region0: #{resblock_sft_forward.1}
  #allocation0 [shape = 'u32[]', space=smem, size = 0x4, offset = 0x4, fixed_abs, tag = 'smem constant byte address 0x4 - core index']
  #allocation1 [shape = 'u32[144,128]{1,0:T(1,128)}', space=vmem, size = 0x12000, scoped, tag = 'internal scratch']
  %s0 = inlined_call_operand.hbm [shape: f32[1,400,128], index: 0, kind: input, shape index: {}]
  %s1 = inlined_call_operand.hbm [shape: bf16[1,400,64], index: 1, kind: input, shape index: {}]
  %s2 = inlined_call_operand.hbm [shape: bf16[64,128], index: 2, kind: input, shape index: {}]
  %s3 = inlined_call_operand.hbm [shape: f32[1,128], index: 3, kind: input, shape index: {}]
  %s4 = inlined_call_operand.hbm [shape: bf16[128,256], index: 4, kind: input, shape index: {}]
  %s5 = inlined_call_operand.hbm [shape: f32[1,256], index: 5, kind: input, shape index: {}]
  %s6 = inlined_call_operand.hbm [shape: bf16[3,384,128], index: 6, kind: input, shape index: {}]
  %s7 = inlined_call_operand.hbm [shape: f32[1,128], index: 7, kind: input, shape index: {}]
  %s8 = inlined_call_operand.hbm [shape: bf16[64,128], index: 8, kind: input, shape index: {}]
  %s9 = inlined_call_operand.hbm [shape: f32[1,128], index: 9, kind: input, shape index: {}]
  %s10 = inlined_call_operand.hbm [shape: bf16[128,256], index: 10, kind: input, shape index: {}]
  %s11 = inlined_call_operand.hbm [shape: f32[1,256], index: 11, kind: input, shape index: {}]
  %s12 = inlined_call_operand.hbm [shape: bf16[3,384,128], index: 12, kind: input, shape index: {}]
  %s13 = inlined_call_operand.hbm [shape: f32[1,128], index: 13, kind: input, shape index: {}]
  %s14 = inlined_call_operand.hbm [shape: f32[1,316,128], index: 14, kind: output, shape index: {}]
  %s15 = sld [smem:[#allocation0]]
  $region122: #{resblock_sft_forward.1} parent=0
    _
  %s17 = ssub.s32 1, %s15
  %s18 = scalar_select 0, %s17, %s15
  $region1: #{resblock_sft_forward.1} parent=0
    #allocation2 [shape = 'u8[204800]{0}', space=vmem, size = 0x32000, scoped, tag = 'input window, operand 0, single buffered']
    #allocation3 [shape = 's32[1]{0}', space=sflag, size = 0x4, scoped, tag = 'scoped memory for resblock_sft_forward.1']
    #allocation4 [shape = 's32[1]{0}', space=sflag, size = 0x4, scoped, tag = 'scoped memory for resblock_sft_forward.1']
    #allocation5 [shape = 'u8[102400]{0}', space=vmem, size = 0x19000, scoped, tag = 'input window, operand 1, single buffered']
    #allocation6 [shape = 's32[1]{0}', space=sflag, size = 0x4, scoped, tag = 'scoped memory for resblock_sft_forward.1']
    #allocation7 [shape = 'u8[16384]{0}', space=vmem, size = 0x4000, scoped, tag = 'input window, operand 2, single buffered']
    #allocation8 [shape = 'u8[512]{0}', space=vmem, size = 0x400, scoped, tag = 'input window, operand 3, single buffered']
    #allocation9 [shape = 's32[1]{0}', space=sflag, size = 0x4, scoped, tag = 'scoped memory for resblock_sft_forward.1']
    #allocation10 [shape = 'u8[65536]{0}', space=vmem, size = 0x10000, scoped, tag = 'input window, operand 4, single buffered']
    #allocation11 [shape = 'u8[1024]{0}', space=vmem, size = 0x400, scoped, tag = 'input window, operand 5, single buffered']
    #allocation12 [shape = 's32[1]{0}', space=sflag, size = 0x4, scoped, tag = 'scoped memory for resblock_sft_forward.1']
    #allocation13 [shape = 'u8[294912]{0}', space=vmem, size = 0x48000, scoped, tag = 'input window, operand 6, single buffered']
    #allocation14 [shape = 'u8[512]{0}', space=vmem, size = 0x400, scoped, tag = 'input window, operand 7, single buffered']
    #allocation15 [shape = 's32[1]{0}', space=sflag, size = 0x4, scoped, tag = 'scoped memory for resblock_sft_forward.1']
    #allocation16 [shape = 'u8[16384]{0}', space=vmem, size = 0x4000, scoped, tag = 'input window, operand 8, single buffered']
    #allocation17 [shape = 'u8[512]{0}', space=vmem, size = 0x400, scoped, tag = 'input window, operand 9, single buffered']
    #allocation18 [shape = 's32[1]{0}', space=sflag, size = 0x4, scoped, tag = 'scoped memory for resblock_sft_forward.1']
    #allocation19 [shape = 'u8[65536]{0}', space=vmem, size = 0x10000, scoped, tag = 'input window, operand 10, single buffered']
    #allocation20 [shape = 'u8[1024]{0}', space=vmem, size = 0x400, scoped, tag = 'input window, operand 11, single buffered']
    #allocation21 [shape = 's32[1]{0}', space=sflag, size = 0x4, scoped, tag = 'scoped memory for resblock_sft_forward.1']
    #allocation22 [shape = 'u8[294912]{0}', space=vmem, size = 0x48000, scoped, tag = 'input window, operand 12, single buffered']
    #allocation23 [shape = 'u8[512]{0}', space=vmem, size = 0x400, scoped, tag = 'input window, operand 13, single buffered']
    #allocation24 [shape = 's32[1]{0}', space=sflag, size = 0x4, scoped, tag = 'scoped memory for resblock_sft_forward.1']
    #allocation25 [shape = 'u8[163840]{0}', space=vmem, size = 0x28000, scoped, tag = 'output window, operand 0, single buffered']
    %19 = vsyncpa [#allocation3], 0
    %20 = vsyncpa [#allocation6], 0
    %21 = vsyncpa [#allocation9], 0
    %22 = vsyncpa [#allocation12], 0
    %23 = vsyncpa [#allocation15], 0
    %24 = vsyncpa [#allocation18], 0
    %25 = vsyncpa [#allocation21], 0
    %26 = vsyncpa [#allocation24], 0
    %27 = vsyncpa [#allocation4], 0
    // Predicated region
    $region2: #{resblock_sft_forward.1} parent=1 // pred_check
      _
    $region3: #{resblock_sft_forward.1} parent=1 // pred_check_branch
      %29 = sbr.rel (0) target = $region5
    $region4: #{resblock_sft_forward.1} parent=1 // pred_region
      %s31 = ssub.s32 6400, 6400
      %32 = vsyncadd [#allocation3], %s31
      %s33 = sshll.u32 [#allocation2], 4
      %s34 = int_to_ptr.vmem [resolvable:$true] %s33
      %39 = dma.hbm_to_vmem [thread:$0]  %s0, 6400, %s34, [#allocation3], 128, 128, 8
    $region5: #{resblock_sft_forward.1} parent=1 // pred_fallthru
      _
    // Predicated region
    $region6: #{resblock_sft_forward.1} parent=1 // pred_check
      _
    $region7: #{resblock_sft_forward.1} parent=1 // pred_check_branch
      %41 = sbr.rel (0) target = $region9
    $region8: #{resblock_sft_forward.1} parent=1 // pred_region
      %s43 = ssub.s32 3200, 3200
      %44 = vsyncadd [#allocation6], %s43
      %s45 = sshll.u32 [#allocation5], 4
      %s46 = int_to_ptr.vmem [resolvable:$true] %s45
      %51 = dma.hbm_to_vmem [thread:$0]  %s1, 3200, %s46, [#allocation6], 64, 64, 4
    $region9: #{resblock_sft_forward.1} parent=1 // pred_fallthru
      _
    // Predicated region
    $region10: #{resblock_sft_forward.1} parent=1 // pred_check
      _
    $region11: #{resblock_sft_forward.1} parent=1 // pred_check_branch
      %53 = sbr.rel (0) target = $region13
    $region12: #{resblock_sft_forward.1} parent=1 // pred_region
      %s55 = ssub.s32 512, 512
      %56 = vsyncadd [#allocation6], %s55
      %s57 = sshll.u32 [#allocation7], 4
      %s58 = int_to_ptr.vmem [resolvable:$true] %s57
      %63 = dma.hbm_to_vmem [thread:$0]  %s2, 512, %s58, [#allocation6], 64, 64, 4
    $region13: #{resblock_sft_forward.1} parent=1 // pred_fallthru
      _
    // Predicated region
    $region14: #{resblock_sft_forward.1} parent=1 // pred_check
      _
    $region15: #{resblock_sft_forward.1} parent=1 // pred_check_branch
      %65 = sbr.rel (0) target = $region17
    $region16: #{resblock_sft_forward.1} parent=1 // pred_region
      %s67 = ssub.s32 16, 16
      %68 = vsyncadd [#allocation9], %s67
      %s70 = sshll.u32 [#allocation8], 4
      %s71 = int_to_ptr.vmem [resolvable:$true] %s70
      %73 = dma.hbm_to_vmem [thread:$0]  %s3, 16, %s71, [#allocation9]
    $region17: #{resblock_sft_forward.1} parent=1 // pred_fallthru
      _
    // Predicated region
    $region18: #{resblock_sft_forward.1} parent=1 // pred_check
      _
    $region19: #{resblock_sft_forward.1} parent=1 // pred_check_branch
      %75 = sbr.rel (0) target = $region21
    $region20: #{resblock_sft_forward.1} parent=1 // pred_region
      %s77 = ssub.s32 2048, 2048
      %78 = vsyncadd [#allocation9], %s77
      %s79 = sshll.u32 [#allocation10], 4
      %s80 = int_to_ptr.vmem [resolvable:$true] %s79
      %85 = dma.hbm_to_vmem [thread:$0]  %s4, 2048, %s80, [#allocation9], 128, 128, 8
    $region21: #{resblock_sft_forward.1} parent=1 // pred_fallthru
      _
    // Predicated region
    $region22: #{resblock_sft_forward.1} parent=1 // pred_check
      _
    $region23: #{resblock_sft_forward.1} parent=1 // pred_check_branch
      %87 = sbr.rel (0) target = $region25
    $region24: #{resblock_sft_forward.1} parent=1 // pred_region
      %s89 = ssub.s32 32, 32
      %90 = vsyncadd [#allocation12], %s89
      %s92 = sshll.u32 [#allocation11], 4
      %s93 = int_to_ptr.vmem [resolvable:$true] %s92
      %95 = dma.hbm_to_vmem [thread:$0]  %s5, 32, %s93, [#allocation12]
    $region25: #{resblock_sft_forward.1} parent=1 // pred_fallthru
      _
    // Predicated region
    $region26: #{resblock_sft_forward.1} parent=1 // pred_check
      _
    $region27: #{resblock_sft_forward.1} parent=1 // pred_check_branch
      %97 = sbr.rel (0) target = $region29
    $region28: #{resblock_sft_forward.1} parent=1 // pred_region
      %s99 = ssub.s32 9216, 9216
      %100 = vsyncadd [#allocation12], %s99
      %s101 = sshll.u32 [#allocation13], 4
      %s102 = int_to_ptr.vmem [resolvable:$true] %s101
      %107 = dma.hbm_to_vmem [thread:$0]  %s6, 9216, %s102, [#allocation12], 64, 64, 4
    $region29: #{resblock_sft_forward.1} parent=1 // pred_fallthru
      _
    // Predicated region
    $region30: #{resblock_sft_forward.1} parent=1 // pred_check
      _
    $region31: #{resblock_sft_forward.1} parent=1 // pred_check_branch
      %109 = sbr.rel (0) target = $region33
    $region32: #{resblock_sft_forward.1} parent=1 // pred_region
      %s111 = ssub.s32 16, 16
      %112 = vsyncadd [#allocation15], %s111
      %s114 = sshll.u32 [#allocation14], 4
      %s115 = int_to_ptr.vmem [resolvable:$true] %s114
      %117 = dma.hbm_to_vmem [thread:$0]  %s7, 16, %s115, [#allocation15]
    $region33: #{resblock_sft_forward.1} parent=1 // pred_fallthru
      _
    // Predicated region
    $region34: #{resblock_sft_forward.1} parent=1 // pred_check
      _
    $region35: #{resblock_sft_forward.1} parent=1 // pred_check_branch
      %119 = sbr.rel (0) target = $region37
    $region36: #{resblock_sft_forward.1} parent=1 // pred_region
      %s121 = ssub.s32 512, 512
      %122 = vsyncadd [#allocation15], %s121
      %s123 = sshll.u32 [#allocation16], 4
      %s124 = int_to_ptr.vmem [resolvable:$true] %s123
      %129 = dma.hbm_to_vmem [thread:$0]  %s8, 512, %s124, [#allocation15], 64, 64, 4
    $region37: #{resblock_sft_forward.1} parent=1 // pred_fallthru
      _
    // Predicated region
    $region38: #{resblock_sft_forward.1} parent=1 // pred_check
      _
    $region39: #{resblock_sft_forward.1} parent=1 // pred_check_branch
      %131 = sbr.rel (0) target = $region41
    $region40: #{resblock_sft_forward.1} parent=1 // pred_region
      %s133 = ssub.s32 16, 16
      %134 = vsyncadd [#allocation18], %s133
      %s136 = sshll.u32 [#allocation17], 4
      %s137 = int_to_ptr.vmem [resolvable:$true] %s136
      %139 = dma.hbm_to_vmem [thread:$0]  %s9, 16, %s137, [#allocation18]
    $region41: #{resblock_sft_forward.1} parent=1 // pred_fallthru
      _
    // Predicated region
    $region42: #{resblock_sft_forward.1} parent=1 // pred_check
      _
    $region43: #{resblock_sft_forward.1} parent=1 // pred_check_branch
      %141 = sbr.rel (0) target = $region45
    $region44: #{resblock_sft_forward.1} parent=1 // pred_region
      %s143 = ssub.s32 2048, 2048
      %144 = vsyncadd [#allocation18], %s143
      %s145 = sshll.u32 [#allocation19], 4
      %s146 = int_to_ptr.vmem [resolvable:$true] %s145
      %151 = dma.hbm_to_vmem [thread:$0]  %s10, 2048, %s146, [#allocation18], 128, 128, 8
    $region45: #{resblock_sft_forward.1} parent=1 // pred_fallthru
      _
    // Predicated region
    $region46: #{resblock_sft_forward.1} parent=1 // pred_check
      _
    $region47: #{resblock_sft_forward.1} parent=1 // pred_check_branch
      %153 = sbr.rel (0) target = $region49
    $region48: #{resblock_sft_forward.1} parent=1 // pred_region
      %s155 = ssub.s32 32, 32
      %156 = vsyncadd [#allocation21], %s155
      %s158 = sshll.u32 [#allocation20], 4
      %s159 = int_to_ptr.vmem [resolvable:$true] %s158
      %161 = dma.hbm_to_vmem [thread:$0]  %s11, 32, %s159, [#allocation21]
    $region49: #{resblock_sft_forward.1} parent=1 // pred_fallthru
      _
    // Predicated region
    $region50: #{resblock_sft_forward.1} parent=1 // pred_check
      _
    $region51: #{resblock_sft_forward.1} parent=1 // pred_check_branch
      %163 = sbr.rel (0) target = $region53
    $region52: #{resblock_sft_forward.1} parent=1 // pred_region
      %s165 = ssub.s32 9216, 9216
      %166 = vsyncadd [#allocation21], %s165
      %s167 = sshll.u32 [#allocation22], 4
      %s168 = int_to_ptr.vmem [resolvable:$true] %s167
      %173 = dma.hbm_to_vmem [thread:$0]  %s12, 9216, %s168, [#allocation21], 64, 64, 4
    $region53: #{resblock_sft_forward.1} parent=1 // pred_fallthru
      _
    // Predicated region
    $region54: #{resblock_sft_forward.1} parent=1 // pred_check
      _
    $region55: #{resblock_sft_forward.1} parent=1 // pred_check_branch
      %175 = sbr.rel (0) target = $region57
    $region56: #{resblock_sft_forward.1} parent=1 // pred_region
      %s177 = ssub.s32 16, 16
      %178 = vsyncadd [#allocation24], %s177
      %s180 = sshll.u32 [#allocation23], 4
      %s181 = int_to_ptr.vmem [resolvable:$true] %s180
      %183 = dma.hbm_to_vmem [thread:$0]  %s13, 16, %s181, [#allocation24]
    $region57: #{resblock_sft_forward.1} parent=1 // pred_fallthru
      _
    // Predicated region
    $region58: #{resblock_sft_forward.1} parent=1 // pred_check
      _
    $region59: #{resblock_sft_forward.1} parent=1 // pred_check_branch
      %185 = sbr.rel (0) target = $region61
    $region60: #{resblock_sft_forward.1} parent=1 // pred_region
      %186 = dma.done [#allocation3], 6400
    $region61: #{resblock_sft_forward.1} parent=1 // pred_fallthru
      _
    // Predicated region
    $region62: #{resblock_sft_forward.1} parent=1 // pred_check
      _
    $region63: #{resblock_sft_forward.1} parent=1 // pred_check_branch
      %188 = sbr.rel (0) target = $region65
    $region64: #{resblock_sft_forward.1} parent=1 // pred_region
      %189 = dma.done [#allocation6], 3200
    $region65: #{resblock_sft_forward.1} parent=1 // pred_fallthru
      _
    // Predicated region
    $region66: #{resblock_sft_forward.1} parent=1 // pred_check
      _
    $region67: #{resblock_sft_forward.1} parent=1 // pred_check_branch
      %191 = sbr.rel (0) target = $region69
    $region68: #{resblock_sft_forward.1} parent=1 // pred_region
      %192 = dma.done [#allocation6], 512
    $region69: #{resblock_sft_forward.1} parent=1 // pred_fallthru
      _
    // Predicated region
    $region70: #{resblock_sft_forward.1} parent=1 // pred_check
      _
    $region71: #{resblock_sft_forward.1} parent=1 // pred_check_branch
      %194 = sbr.rel (0) target = $region73
    $region72: #{resblock_sft_forward.1} parent=1 // pred_region
      %195 = dma.done [#allocation9], 16
    $region73: #{resblock_sft_forward.1} parent=1 // pred_fallthru
      _
    // Predicated region
    $region74: #{resblock_sft_forward.1} parent=1 // pred_check
      _
    $region75: #{resblock_sft_forward.1} parent=1 // pred_check_branch
      %197 = sbr.rel (0) target = $region77
    $region76: #{resblock_sft_forward.1} parent=1 // pred_region
      %198 = dma.done [#allocation9], 2048
    $region77: #{resblock_sft_forward.1} parent=1 // pred_fallthru
      _
    // Predicated region
    $region78: #{resblock_sft_forward.1} parent=1 // pred_check
      _
    $region79: #{resblock_sft_forward.1} parent=1 // pred_check_branch
      %200 = sbr.rel (0) target = $region81
    $region80: #{resblock_sft_forward.1} parent=1 // pred_region
      %201 = dma.done [#allocation12], 32
    $region81: #{resblock_sft_forward.1} parent=1 // pred_fallthru
      _
    // Predicated region
    $region82: #{resblock_sft_forward.1} parent=1 // pred_check
      _
    $region83: #{resblock_sft_forward.1} parent=1 // pred_check_branch
      %203 = sbr.rel (0) target = $region85
    $region84: #{resblock_sft_forward.1} parent=1 // pred_region
      %204 = dma.done [#allocation12], 9216
    $region85: #{resblock_sft_forward.1} parent=1 // pred_fallthru
      _
    // Predicated region
    $region86: #{resblock_sft_forward.1} parent=1 // pred_check
      _
    $region87: #{resblock_sft_forward.1} parent=1 // pred_check_branch
      %206 = sbr.rel (0) target = $region89
    $region88: #{resblock_sft_forward.1} parent=1 // pred_region
      %207 = dma.done [#allocation15], 16
    $region89: #{resblock_sft_forward.1} parent=1 // pred_fallthru
      _
    // Predicated region
    $region90: #{resblock_sft_forward.1} parent=1 // pred_check
      _
    $region91: #{resblock_sft_forward.1} parent=1 // pred_check_branch
      %209 = sbr.rel (0) target = $region93
    $region92: #{resblock_sft_forward.1} parent=1 // pred_region
      %210 = dma.done [#allocation15], 512
    $region93: #{resblock_sft_forward.1} parent=1 // pred_fallthru
      _
    // Predicated region
    $region94: #{resblock_sft_forward.1} parent=1 // pred_check
      _
    $region95: #{resblock_sft_forward.1} parent=1 // pred_check_branch
      %212 = sbr.rel (0) target = $region97
    $region96: #{resblock_sft_forward.1} parent=1 // pred_region
      %213 = dma.done [#allocation18], 16
    $region97: #{resblock_sft_forward.1} parent=1 // pred_fallthru
      _
    // Predicated region
    $region98: #{resblock_sft_forward.1} parent=1 // pred_check
      _
    $region99: #{resblock_sft_forward.1} parent=1 // pred_check_branch
      %215 = sbr.rel (0) target = $region101
    $region100: #{resblock_sft_forward.1} parent=1 // pred_region
      %216 = dma.done [#allocation18], 2048
    $region101: #{resblock_sft_forward.1} parent=1 // pred_fallthru
      _
    // Predicated region
    $region102: #{resblock_sft_forward.1} parent=1 // pred_check
      _
    $region103: #{resblock_sft_forward.1} parent=1 // pred_check_branch
      %218 = sbr.rel (0) target = $region105
    $region104: #{resblock_sft_forward.1} parent=1 // pred_region
      %219 = dma.done [#allocation21], 32
    $region105: #{resblock_sft_forward.1} parent=1 // pred_fallthru
      _
    // Predicated region
    $region106: #{resblock_sft_forward.1} parent=1 // pred_check
      _
    $region107: #{resblock_sft_forward.1} parent=1 // pred_check_branch
      %221 = sbr.rel (0) target = $region109
    $region108: #{resblock_sft_forward.1} parent=1 // pred_region
      %222 = dma.done [#allocation21], 9216
    $region109: #{resblock_sft_forward.1} parent=1 // pred_fallthru
      _
    // Predicated region
    $region110: #{resblock_sft_forward.1} parent=1 // pred_check
      _
    $region111: #{resblock_sft_forward.1} parent=1 // pred_check_branch
      %224 = sbr.rel (0) target = $region113
    $region112: #{resblock_sft_forward.1} parent=1 // pred_region
      %225 = dma.done [#allocation24], 16
    $region113: #{resblock_sft_forward.1} parent=1 // pred_fallthru
      _
    %v227 = vld [vmem:[#allocation2] sm:$0xff]
    %v228 = vld [vmem:[#allocation2 + $0x8] sm:$0xff]
    %v229 = vld [vmem:[#allocation2 + $0x10] sm:$0xff]
    %v230 = vld [vmem:[#allocation2 + $0x18] sm:$0xff]
    %v231 = vld [vmem:[#allocation2 + $0x20] sm:$0xff]
    %v232 = vld [vmem:[#allocation2 + $0x28] sm:$0xff]
    %v233 = vld [vmem:[#allocation2 + $0x30] sm:$0xff]
    %v234 = vld [vmem:[#allocation2 + $0x38] sm:$0xff]
    %v235 = vld [vmem:[#allocation2 + $0x40] sm:$0xff]
    %v236 = vld [vmem:[#allocation2 + $0x48] sm:$0xff]
    %v237 = vld [vmem:[#allocation2 + $0x50] sm:$0xff]
    %v238 = vld [vmem:[#allocation2 + $0x58] sm:$0xff]
    %v239 = vld [vmem:[#allocation2 + $0x60] sm:$0xff]
    %v240 = vld [vmem:[#allocation2 + $0x68] sm:$0xff]
    %v241 = vld [vmem:[#allocation2 + $0x70] sm:$0xff]
    %v242 = vld [vmem:[#allocation2 + $0x78] sm:$0xff]
    %v243 = vld [vmem:[#allocation2 + $0x80] sm:$0xff]
    %v244 = vld [vmem:[#allocation2 + $0x88] sm:$0xff]
    %v245 = vld [vmem:[#allocation2 + $0x90] sm:$0xff]
    %v246 = vld [vmem:[#allocation2 + $0x98] sm:$0xff]
    %v247 = vld [vmem:[#allocation2 + $0xa0] sm:$0xff]
    %v248 = vld [vmem:[#allocation2 + $0xa8] sm:$0xff]
    %v249 = vld [vmem:[#allocation2 + $0xb0] sm:$0xff]
    %v250 = vld [vmem:[#allocation2 + $0xb8] sm:$0xff]
    %v251 = vld [vmem:[#allocation2 + $0xc0] sm:$0xff]
    %v252 = vld [vmem:[#allocation2 + $0xc8] sm:$0xff]
    %v253 = vld [vmem:[#allocation2 + $0xd0] sm:$0xff]
    %v254 = vld [vmem:[#allocation2 + $0xd8] sm:$0xff]
    %v255 = vld [vmem:[#allocation2 + $0xe0] sm:$0xff]
    %v256 = vld [vmem:[#allocation2 + $0xe8] sm:$0xff]
    %v257 = vld [vmem:[#allocation2 + $0xf0] sm:$0xff]
    %v258 = vld [vmem:[#allocation2 + $0xf8] sm:$0xff]
    %v259 = vld [vmem:[#allocation2 + $0x100] sm:$0xff]
    %v260 = vld [vmem:[#allocation2 + $0x108] sm:$0xff]
    %v261 = vld [vmem:[#allocation2 + $0x110] sm:$0xff]
    %v262 = vld [vmem:[#allocation2 + $0x118] sm:$0xff]
    %v263 = vld [vmem:[#allocation2 + $0x120] sm:$0xff]
    %v264 = vld [vmem:[#allocation2 + $0x128] sm:$0xff]
    %v265 = vld [vmem:[#allocation2 + $0x130] sm:$0xff]
    %v266 = vld [vmem:[#allocation2 + $0x138] sm:$0xff]
    %v267 = vld [vmem:[#allocation2 + $0x140] sm:$0xff]
    %v268 = vld [vmem:[#allocation2 + $0x148] sm:$0xff]
    %v269 = vld [vmem:[#allocation2 + $0x150] sm:$0xff]
    %v270 = vld [vmem:[#allocation2 + $0x158] sm:$0xff]
    %v271 = vld [vmem:[#allocation2 + $0x160] sm:$0xff]
    %v272 = vld [vmem:[#allocation2 + $0x168] sm:$0xff]
    %v273 = vld [vmem:[#allocation2 + $0x170] sm:$0xff]
    %v274 = vld [vmem:[#allocation2 + $0x178] sm:$0xff]
    %v275 = vld [vmem:[#allocation2 + $0x180] sm:$0xff]
    %v276 = vld [vmem:[#allocation2 + $0x188] sm:$0xff]
    %v277 = vld [vmem:[#allocation5] sm:$0xf]
    %v278 = vld [vmem:[#allocation5 + $0x4] sm:$0xf]
    %v279 = vld [vmem:[#allocation5 + $0x8] sm:$0xf]
    %v280 = vld [vmem:[#allocation5 + $0xc] sm:$0xf]
    %v281 = vld [vmem:[#allocation5 + $0x10] sm:$0xf]
    %v282 = vld [vmem:[#allocation5 + $0x14] sm:$0xf]
    %v283 = vld [vmem:[#allocation5 + $0x18] sm:$0xf]
    %v284 = vld [vmem:[#allocation5 + $0x1c] sm:$0xf]
    %v285 = vld [vmem:[#allocation5 + $0x20] sm:$0xf]
    %v286 = vld [vmem:[#allocation5 + $0x24] sm:$0xf]
    %v287 = vld [vmem:[#allocation5 + $0x28] sm:$0xf]
    %v288 = vld [vmem:[#allocation5 + $0x2c] sm:$0xf]
    %v289 = vld [vmem:[#allocation5 + $0x30] sm:$0xf]
    %v290 = vld [vmem:[#allocation5 + $0x34] sm:$0xf]
    %v291 = vld [vmem:[#allocation5 + $0x38] sm:$0xf]
    %v292 = vld [vmem:[#allocation5 + $0x3c] sm:$0xf]
    %v293 = vld [vmem:[#allocation5 + $0x40] sm:$0xf]
    %v294 = vld [vmem:[#allocation5 + $0x44] sm:$0xf]
    %v295 = vld [vmem:[#allocation5 + $0x48] sm:$0xf]
    %v296 = vld [vmem:[#allocation5 + $0x4c] sm:$0xf]
    %v297 = vld [vmem:[#allocation5 + $0x50] sm:$0xf]
    %v298 = vld [vmem:[#allocation5 + $0x54] sm:$0xf]
    %v299 = vld [vmem:[#allocation5 + $0x58] sm:$0xf]
    %v300 = vld [vmem:[#allocation5 + $0x5c] sm:$0xf]
    %v301 = vld [vmem:[#allocation5 + $0x60] sm:$0xf]
    %v302 = vld [vmem:[#allocation5 + $0x64] sm:$0xf]
    %v303 = vld [vmem:[#allocation5 + $0x68] sm:$0xf]
    %v304 = vld [vmem:[#allocation5 + $0x6c] sm:$0xf]
    %v305 = vld [vmem:[#allocation5 + $0x70] sm:$0xf]
    %v306 = vld [vmem:[#allocation5 + $0x74] sm:$0xf]
    %v307 = vld [vmem:[#allocation5 + $0x78] sm:$0xf]
    %v308 = vld [vmem:[#allocation5 + $0x7c] sm:$0xf]
    %v309 = vld [vmem:[#allocation5 + $0x80] sm:$0xf]
    %v310 = vld [vmem:[#allocation5 + $0x84] sm:$0xf]
    %v311 = vld [vmem:[#allocation5 + $0x88] sm:$0xf]
    %v312 = vld [vmem:[#allocation5 + $0x8c] sm:$0xf]
    %v313 = vld [vmem:[#allocation5 + $0x90] sm:$0xf]
    %v314 = vld [vmem:[#allocation5 + $0x94] sm:$0xf]
    %v315 = vld [vmem:[#allocation5 + $0x98] sm:$0xf]
    %v316 = vld [vmem:[#allocation5 + $0x9c] sm:$0xf]
    %v317 = vld [vmem:[#allocation5 + $0xa0] sm:$0xf]
    %v318 = vld [vmem:[#allocation5 + $0xa4] sm:$0xf]
    %v319 = vld [vmem:[#allocation5 + $0xa8] sm:$0xf]
    %v320 = vld [vmem:[#allocation5 + $0xac] sm:$0xf]
    %v321 = vld [vmem:[#allocation5 + $0xb0] sm:$0xf]
    %v322 = vld [vmem:[#allocation5 + $0xb4] sm:$0xf]
    %v323 = vld [vmem:[#allocation5 + $0xb8] sm:$0xf]
    %v324 = vld [vmem:[#allocation5 + $0xbc] sm:$0xf]
    %v325 = vld [vmem:[#allocation5 + $0xc0] sm:$0xf]
    %v326 = vld [vmem:[#allocation5 + $0xc4] sm:$0xf]
    %v327 = vlaneseq
    %v328 = vshrl.u32 %v327, 7
    %v329 = vadd.s32 %v328, 8
    %v330 = vadd.s32 %v328, 16
    %v331 = vadd.s32 %v328, 24
    %v332 = vadd.s32 %v328, 32
    %v333 = vadd.s32 %v328, 40
    %v334 = vadd.s32 %v328, 48
    %v335 = vadd.s32 %v328, 56
    %v336 = vadd.s32 %v328, 64
    %v337 = vadd.s32 %v328, 72
    %v338 = vadd.s32 %v328, 80
    %v339 = vadd.s32 %v328, 88
    %v340 = vadd.s32 %v328, 96
    %v341 = vadd.s32 %v328, 104
    %v342 = vadd.s32 %v328, 112
    %v343 = vadd.s32 %v328, 120
    %v344 = vadd.s32 %v328, 128
    %v345 = vadd.s32 %v328, 136
    %v346 = vadd.s32 %v328, 144
    %v347 = vadd.s32 %v328, 152
    %v348 = vadd.s32 %v328, 160
    %v349 = vadd.s32 %v328, 168
    %v350 = vadd.s32 %v328, 176
    %v351 = vadd.s32 %v328, 184
    %v352 = vadd.s32 %v328, 192
    %v353 = vadd.s32 %v328, 200
    %v354 = vadd.s32 %v328, 208
    %v355 = vadd.s32 %v328, 216
    %v356 = vadd.s32 %v328, 224
    %v357 = vadd.s32 %v328, 232
    %v358 = vadd.s32 %v328, 240
    %v359 = vadd.s32 %v328, 248
    %v360 = vadd.s32 %v328, 256
    %v361 = vadd.s32 %v328, 264
    %v362 = vadd.s32 %v328, 272
    %v363 = vadd.s32 %v328, 280
    %v364 = vadd.s32 %v328, 288
    %v365 = vadd.s32 %v328, 296
    %v366 = vadd.s32 %v328, 304
    %v367 = vadd.s32 %v328, 312
    %v368 = vadd.s32 %v328, 320
    %v369 = vadd.s32 %v328, 328
    %v370 = vadd.s32 %v328, 336
    %v371 = vadd.s32 %v328, 344
    %v372 = vadd.s32 %v328, 352
    %v373 = vadd.s32 %v328, 360
    %v374 = vadd.s32 %v328, 368
    %v375 = vadd.s32 %v328, 376
    %v376 = vadd.s32 %v328, 384
    %v377 = vadd.s32 %v328, 392
    %v378 = vcvt.s32.f32 %v328
    %v379 = vcvt.s32.f32 %v329
    %v380 = vcvt.s32.f32 %v330
    %v381 = vcvt.s32.f32 %v331
    %v382 = vcvt.s32.f32 %v332
    %v383 = vcvt.s32.f32 %v333
    %v384 = vcvt.s32.f32 %v334
    %v385 = vcvt.s32.f32 %v335
    %v386 = vcvt.s32.f32 %v336
    %v387 = vcvt.s32.f32 %v337
    %v388 = vcvt.s32.f32 %v338
    %v389 = vcvt.s32.f32 %v339
    %v390 = vcvt.s32.f32 %v340
    %v391 = vcvt.s32.f32 %v341
    %v392 = vcvt.s32.f32 %v342
    %v393 = vcvt.s32.f32 %v343
    %v394 = vcvt.s32.f32 %v344
    %v395 = vcvt.s32.f32 %v345
    %v396 = vcvt.s32.f32 %v346
    %v397 = vcvt.s32.f32 %v347
    %v398 = vcvt.s32.f32 %v348
    %v399 = vcvt.s32.f32 %v349
    %v400 = vcvt.s32.f32 %v350
    %v401 = vcvt.s32.f32 %v351
    %v402 = vcvt.s32.f32 %v352
    %v403 = vcvt.s32.f32 %v353
    %v404 = vcvt.s32.f32 %v354
    %v405 = vcvt.s32.f32 %v355
    %v406 = vcvt.s32.f32 %v356
    %v407 = vcvt.s32.f32 %v357
    %v408 = vcvt.s32.f32 %v358
    %v409 = vcvt.s32.f32 %v359
    %v410 = vcvt.s32.f32 %v360
    %v411 = vcvt.s32.f32 %v361
    %v412 = vcvt.s32.f32 %v362
    %v413 = vcvt.s32.f32 %v363
    %v414 = vcvt.s32.f32 %v364
    %v415 = vcvt.s32.f32 %v365
    %v416 = vcvt.s32.f32 %v366
    %v417 = vcvt.s32.f32 %v367
    %v418 = vcvt.s32.f32 %v368
    %v419 = vcvt.s32.f32 %v369
    %v420 = vcvt.s32.f32 %v370
    %v421 = vcvt.s32.f32 %v371
    %v422 = vcvt.s32.f32 %v372
    %v423 = vcvt.s32.f32 %v373
    %v424 = vcvt.s32.f32 %v374
    %v425 = vcvt.s32.f32 %v375
    %v426 = vcvt.s32.f32 %v376
    %v427 = vcvt.s32.f32 %v377
    %v428 = vmul.f32 %v378, 0.05
    %v429 = vmul.f32 %v379, 0.05
    %v430 = vmul.f32 %v380, 0.05
    %v431 = vmul.f32 %v381, 0.05
    %v432 = vmul.f32 %v382, 0.05
    %v433 = vmul.f32 %v383, 0.05
    %v434 = vmul.f32 %v384, 0.05
    %v435 = vmul.f32 %v385, 0.05
    %v436 = vmul.f32 %v386, 0.05
    %v437 = vmul.f32 %v387, 0.05
    %v438 = vmul.f32 %v388, 0.05
    %v439 = vmul.f32 %v389, 0.05
    %v440 = vmul.f32 %v390, 0.05
    %v441 = vmul.f32 %v391, 0.05
    %v442 = vmul.f32 %v392, 0.05
    %v443 = vmul.f32 %v393, 0.05
    %v444 = vmul.f32 %v394, 0.05
    %v445 = vmul.f32 %v395, 0.05
    %v446 = vmul.f32 %v396, 0.05
    %v447 = vmul.f32 %v397, 0.05
    %v448 = vmul.f32 %v398, 0.05
    %v449 = vmul.f32 %v399, 0.05
    %v450 = vmul.f32 %v400, 0.05
    %v451 = vmul.f32 %v401, 0.05
    %v452 = vmul.f32 %v402, 0.05
    %v453 = vmul.f32 %v403, 0.05
    %v454 = vmul.f32 %v404, 0.05
    %v455 = vmul.f32 %v405, 0.05
    %v456 = vmul.f32 %v406, 0.05
    %v457 = vmul.f32 %v407, 0.05
    %v458 = vmul.f32 %v408, 0.05
    %v459 = vmul.f32 %v409, 0.05
    %v460 = vmul.f32 %v410, 0.05
    %v461 = vmul.f32 %v411, 0.05
    %v462 = vmul.f32 %v412, 0.05
    %v463 = vmul.f32 %v413, 0.05
    %v464 = vmul.f32 %v414, 0.05
    %v465 = vmul.f32 %v415, 0.05
    %v466 = vmul.f32 %v416, 0.05
    %v467 = vmul.f32 %v417, 0.05
    %v468 = vmul.f32 %v418, 0.05
    %v469 = vmul.f32 %v419, 0.05
    %v470 = vmul.f32 %v420, 0.05
    %v471 = vmul.f32 %v421, 0.05
    %v472 = vmul.f32 %v422, 0.05
    %v473 = vmul.f32 %v423, 0.05
    %v474 = vmul.f32 %v424, 0.05
    %v475 = vmul.f32 %v425, 0.05
    %v476 = vmul.f32 %v426, 0.05
    %v477 = vmul.f32 %v427, 0.05
    %v478 = vcvt.f32.s32.to.zero.pseudo %v428
    %v479 = vcvt.f32.s32.to.zero.pseudo %v429
    %v480 = vcvt.f32.s32.to.zero.pseudo %v430
    %v481 = vcvt.f32.s32.to.zero.pseudo %v431
    %v482 = vcvt.f32.s32.to.zero.pseudo %v432
    %v483 = vcvt.f32.s32.to.zero.pseudo %v433
    %v484 = vcvt.f32.s32.to.zero.pseudo %v434
    %v485 = vcvt.f32.s32.to.zero.pseudo %v435
    %v486 = vcvt.f32.s32.to.zero.pseudo %v436
    %v487 = vcvt.f32.s32.to.zero.pseudo %v437
    %v488 = vcvt.f32.s32.to.zero.pseudo %v438
    %v489 = vcvt.f32.s32.to.zero.pseudo %v439
    %v490 = vcvt.f32.s32.to.zero.pseudo %v440
    %v491 = vcvt.f32.s32.to.zero.pseudo %v441
    %v492 = vcvt.f32.s32.to.zero.pseudo %v442
    %v493 = vcvt.f32.s32.to.zero.pseudo %v443
    %v494 = vcvt.f32.s32.to.zero.pseudo %v444
    %v495 = vcvt.f32.s32.to.zero.pseudo %v445
    %v496 = vcvt.f32.s32.to.zero.pseudo %v446
    %v497 = vcvt.f32.s32.to.zero.pseudo %v447
    %v498 = vcvt.f32.s32.to.zero.pseudo %v448
    %v499 = vcvt.f32.s32.to.zero.pseudo %v449
    %v500 = vcvt.f32.s32.to.zero.pseudo %v450
    %v501 = vcvt.f32.s32.to.zero.pseudo %v451
    %v502 = vcvt.f32.s32.to.zero.pseudo %v452
    %v503 = vcvt.f32.s32.to.zero.pseudo %v453
    %v504 = vcvt.f32.s32.to.zero.pseudo %v454
    %v505 = vcvt.f32.s32.to.zero.pseudo %v455
    %v506 = vcvt.f32.s32.to.zero.pseudo %v456
    %v507 = vcvt.f32.s32.to.zero.pseudo %v457
    %v508 = vcvt.f32.s32.to.zero.pseudo %v458
    %v509 = vcvt.f32.s32.to.zero.pseudo %v459
    %v510 = vcvt.f32.s32.to.zero.pseudo %v460
    %v511 = vcvt.f32.s32.to.zero.pseudo %v461
    %v512 = vcvt.f32.s32.to.zero.pseudo %v462
    %v513 = vcvt.f32.s32.to.zero.pseudo %v463
    %v514 = vcvt.f32.s32.to.zero.pseudo %v464
    %v515 = vcvt.f32.s32.to.zero.pseudo %v465
    %v516 = vcvt.f32.s32.to.zero.pseudo %v466
    %v517 = vcvt.f32.s32.to.zero.pseudo %v467
    %v518 = vcvt.f32.s32.to.zero.pseudo %v468
    %v519 = vcvt.f32.s32.to.zero.pseudo %v469
    %v520 = vcvt.f32.s32.to.zero.pseudo %v470
    %v521 = vcvt.f32.s32.to.zero.pseudo %v471
    %v522 = vcvt.f32.s32.to.zero.pseudo %v472
    %v523 = vcvt.f32.s32.to.zero.pseudo %v473
    %v524 = vcvt.f32.s32.to.zero.pseudo %v474
    %v525 = vcvt.f32.s32.to.zero.pseudo %v475
    %v526 = vcvt.f32.s32.to.zero.pseudo %v476
    %v527 = vcvt.f32.s32.to.zero.pseudo %v477
    %v528 = vmul.u32 %v478, 20
    %v529 = vmul.u32 %v479, 20
    %v530 = vmul.u32 %v480, 20
    %v531 = vmul.u32 %v481, 20
    %v532 = vmul.u32 %v482, 20
    %v533 = vmul.u32 %v483, 20
    %v534 = vmul.u32 %v484, 20
    %v535 = vmul.u32 %v485, 20
    %v536 = vmul.u32 %v486, 20
    %v537 = vmul.u32 %v487, 20
    %v538 = vmul.u32 %v488, 20
    %v539 = vmul.u32 %v489, 20
    %v540 = vmul.u32 %v490, 20
    %v541 = vmul.u32 %v491, 20
    %v542 = vmul.u32 %v492, 20
    %v543 = vmul.u32 %v493, 20
    %v544 = vmul.u32 %v494, 20
    %v545 = vmul.u32 %v495, 20
    %v546 = vmul.u32 %v496, 20
    %v547 = vmul.u32 %v497, 20
    %v548 = vmul.u32 %v498, 20
    %v549 = vmul.u32 %v499, 20
    %v550 = vmul.u32 %v500, 20
    %v551 = vmul.u32 %v501, 20
    %v552 = vmul.u32 %v502, 20
    %v553 = vmul.u32 %v503, 20
    %v554 = vmul.u32 %v504, 20
    %v555 = vmul.u32 %v505, 20
    %v556 = vmul.u32 %v506, 20
    %v557 = vmul.u32 %v507, 20
    %v558 = vmul.u32 %v508, 20
    %v559 = vmul.u32 %v509, 20
    %v560 = vmul.u32 %v510, 20
    %v561 = vmul.u32 %v511, 20
    %v562 = vmul.u32 %v512, 20
    %v563 = vmul.u32 %v513, 20
    %v564 = vmul.u32 %v514, 20
    %v565 = vmul.u32 %v515, 20
    %v566 = vmul.u32 %v516, 20
    %v567 = vmul.u32 %v517, 20
    %v568 = vmul.u32 %v518, 20
    %v569 = vmul.u32 %v519, 20
    %v570 = vmul.u32 %v520, 20
    %v571 = vmul.u32 %v521, 20
    %v572 = vmul.u32 %v522, 20
    %v573 = vmul.u32 %v523, 20
    %v574 = vmul.u32 %v524, 20
    %v575 = vmul.u32 %v525, 20
    %v576 = vmul.u32 %v526, 20
    %v577 = vmul.u32 %v527, 20
    %v578 = vsub.s32 %v328, %v528
    %v579 = vsub.s32 %v329, %v529
    %v580 = vsub.s32 %v330, %v530
    %v581 = vsub.s32 %v331, %v531
    %v582 = vsub.s32 %v332, %v532
    %v583 = vsub.s32 %v333, %v533
    %v584 = vsub.s32 %v334, %v534
    %v585 = vsub.s32 %v335, %v535
    %v586 = vsub.s32 %v336, %v536
    %v587 = vsub.s32 %v337, %v537
    %v588 = vsub.s32 %v338, %v538
    %v589 = vsub.s32 %v339, %v539
    %v590 = vsub.s32 %v340, %v540
    %v591 = vsub.s32 %v341, %v541
    %v592 = vsub.s32 %v342, %v542
    %v593 = vsub.s32 %v343, %v543
    %v594 = vsub.s32 %v344, %v544
    %v595 = vsub.s32 %v345, %v545
    %v596 = vsub.s32 %v346, %v546
    %v597 = vsub.s32 %v347, %v547
    %v598 = vsub.s32 %v348, %v548
    %v599 = vsub.s32 %v349, %v549
    %v600 = vsub.s32 %v350, %v550
    %v601 = vsub.s32 %v351, %v551
    %v602 = vsub.s32 %v352, %v552
    %v603 = vsub.s32 %v353, %v553
    %v604 = vsub.s32 %v354, %v554
    %v605 = vsub.s32 %v355, %v555
    %v606 = vsub.s32 %v356, %v556
    %v607 = vsub.s32 %v357, %v557
    %v608 = vsub.s32 %v358, %v558
    %v609 = vsub.s32 %v359, %v559
    %v610 = vsub.s32 %v360, %v560
    %v611 = vsub.s32 %v361, %v561
    %v612 = vsub.s32 %v362, %v562
    %v613 = vsub.s32 %v363, %v563
    %v614 = vsub.s32 %v364, %v564
    %v615 = vsub.s32 %v365, %v565
    %v616 = vsub.s32 %v366, %v566
    %v617 = vsub.s32 %v367, %v567
    %v618 = vsub.s32 %v368, %v568
    %v619 = vsub.s32 %v369, %v569
    %v620 = vsub.s32 %v370, %v570
    %v621 = vsub.s32 %v371, %v571
    %v622 = vsub.s32 %v372, %v572
    %v623 = vsub.s32 %v373, %v573
    %v624 = vsub.s32 %v374, %v574
    %v625 = vsub.s32 %v375, %v575
    %v626 = vsub.s32 %v376, %v576
    %v627 = vsub.s32 %v377, %v577
    %vm628 = vcmp.ge.s32.totalorder %v578, 20
    %vm629 = vcmp.ge.s32.totalorder %v579, 20
    %vm630 = vcmp.ge.s32.totalorder %v580, 20
    %vm631 = vcmp.ge.s32.totalorder %v581, 20
    %vm632 = vcmp.ge.s32.totalorder %v582, 20
    %vm633 = vcmp.ge.s32.totalorder %v583, 20
    %vm634 = vcmp.ge.s32.totalorder %v584, 20
    %vm635 = vcmp.ge.s32.totalorder %v585, 20
    %vm636 = vcmp.ge.s32.totalorder %v586, 20
    %vm637 = vcmp.ge.s32.totalorder %v587, 20
    %vm638 = vcmp.ge.s32.totalorder %v588, 20
    %vm639 = vcmp.ge.s32.totalorder %v589, 20
    %vm640 = vcmp.ge.s32.totalorder %v590, 20
    %vm641 = vcmp.ge.s32.totalorder %v591, 20
    %vm642 = vcmp.ge.s32.totalorder %v592, 20
    %vm643 = vcmp.ge.s32.totalorder %v593, 20
    %vm644 = vcmp.ge.s32.totalorder %v594, 20
    %vm645 = vcmp.ge.s32.totalorder %v595, 20
    %vm646 = vcmp.ge.s32.totalorder %v596, 20
    %vm647 = vcmp.ge.s32.totalorder %v597, 20
    %vm648 = vcmp.ge.s32.totalorder %v598, 20
    %vm649 = vcmp.ge.s32.totalorder %v599, 20
    %vm650 = vcmp.ge.s32.totalorder %v600, 20
    %vm651 = vcmp.ge.s32.totalorder %v601, 20
    %vm652 = vcmp.ge.s32.totalorder %v602, 20
    %vm653 = vcmp.ge.s32.totalorder %v603, 20
    %vm654 = vcmp.ge.s32.totalorder %v604, 20
    %vm655 = vcmp.ge.s32.totalorder %v605, 20
    %vm656 = vcmp.ge.s32.totalorder %v606, 20
    %vm657 = vcmp.ge.s32.totalorder %v607, 20
    %vm658 = vcmp.ge.s32.totalorder %v608, 20
    %vm659 = vcmp.ge.s32.totalorder %v609, 20
    %vm660 = vcmp.ge.s32.totalorder %v610, 20
    %vm661 = vcmp.ge.s32.totalorder %v611, 20
    %vm662 = vcmp.ge.s32.totalorder %v612, 20
    %vm663 = vcmp.ge.s32.totalorder %v613, 20
    %vm664 = vcmp.ge.s32.totalorder %v614, 20
    %vm665 = vcmp.ge.s32.totalorder %v615, 20
    %vm666 = vcmp.ge.s32.totalorder %v616, 20
    %vm667 = vcmp.ge.s32.totalorder %v617, 20
    %vm668 = vcmp.ge.s32.totalorder %v618, 20
    %vm669 = vcmp.ge.s32.totalorder %v619, 20
    %vm670 = vcmp.ge.s32.totalorder %v620, 20
    %vm671 = vcmp.ge.s32.totalorder %v621, 20
    %vm672 = vcmp.ge.s32.totalorder %v622, 20
    %vm673 = vcmp.ge.s32.totalorder %v623, 20
    %vm674 = vcmp.ge.s32.totalorder %v624, 20
    %vm675 = vcmp.ge.s32.totalorder %v625, 20
    %vm676 = vcmp.ge.s32.totalorder %v626, 20
    %vm677 = vcmp.ge.s32.totalorder %v627, 20
    %v678 = vsel %vm628, 1, 0
    %v679 = vsel %vm629, 1, 0
    %v680 = vsel %vm630, 1, 0
    %v681 = vsel %vm631, 1, 0
    %v682 = vsel %vm632, 1, 0
    %v683 = vsel %vm633, 1, 0
    %v684 = vsel %vm634, 1, 0
    %v685 = vsel %vm635, 1, 0
    %v686 = vsel %vm636, 1, 0
    %v687 = vsel %vm637, 1, 0
    %v688 = vsel %vm638, 1, 0
    %v689 = vsel %vm639, 1, 0
    %v690 = vsel %vm640, 1, 0
    %v691 = vsel %vm641, 1, 0
    %v692 = vsel %vm642, 1, 0
    %v693 = vsel %vm643, 1, 0
    %v694 = vsel %vm644, 1, 0
    %v695 = vsel %vm645, 1, 0
    %v696 = vsel %vm646, 1, 0
    %v697 = vsel %vm647, 1, 0
    %v698 = vsel %vm648, 1, 0
    %v699 = vsel %vm649, 1, 0
    %v700 = vsel %vm650, 1, 0
    %v701 = vsel %vm651, 1, 0
    %v702 = vsel %vm652, 1, 0
    %v703 = vsel %vm653, 1, 0
    %v704 = vsel %vm654, 1, 0
    %v705 = vsel %vm655, 1, 0
    %v706 = vsel %vm656, 1, 0
    %v707 = vsel %vm657, 1, 0
    %v708 = vsel %vm658, 1, 0
    %v709 = vsel %vm659, 1, 0
    %v710 = vsel %vm660, 1, 0
    %v711 = vsel %vm661, 1, 0
    %v712 = vsel %vm662, 1, 0
    %v713 = vsel %vm663, 1, 0
    %v714 = vsel %vm664, 1, 0
    %v715 = vsel %vm665, 1, 0
    %v716 = vsel %vm666, 1, 0
    %v717 = vsel %vm667, 1, 0
    %v718 = vsel %vm668, 1, 0
    %v719 = vsel %vm669, 1, 0
    %v720 = vsel %vm670, 1, 0
    %v721 = vsel %vm671, 1, 0
    %v722 = vsel %vm672, 1, 0
    %v723 = vsel %vm673, 1, 0
    %v724 = vsel %vm674, 1, 0
    %v725 = vsel %vm675, 1, 0
    %v726 = vsel %vm676, 1, 0
    %v727 = vsel %vm677, 1, 0
    %v728 = vadd.s32 %v478, %v678
    %v729 = vadd.s32 %v479, %v679
    %v730 = vadd.s32 %v480, %v680
    %v731 = vadd.s32 %v481, %v681
    %v732 = vadd.s32 %v482, %v682
    %v733 = vadd.s32 %v483, %v683
    %v734 = vadd.s32 %v484, %v684
    %v735 = vadd.s32 %v485, %v685
    %v736 = vadd.s32 %v486, %v686
    %v737 = vadd.s32 %v487, %v687
    %v738 = vadd.s32 %v488, %v688
    %v739 = vadd.s32 %v489, %v689
    %v740 = vadd.s32 %v490, %v690
    %v741 = vadd.s32 %v491, %v691
    %v742 = vadd.s32 %v492, %v692
    %v743 = vadd.s32 %v493, %v693
    %v744 = vadd.s32 %v494, %v694
    %v745 = vadd.s32 %v495, %v695
    %v746 = vadd.s32 %v496, %v696
    %v747 = vadd.s32 %v497, %v697
    %v748 = vadd.s32 %v498, %v698
    %v749 = vadd.s32 %v499, %v699
    %v750 = vadd.s32 %v500, %v700
    %v751 = vadd.s32 %v501, %v701
    %v752 = vadd.s32 %v502, %v702
    %v753 = vadd.s32 %v503, %v703
    %v754 = vadd.s32 %v504, %v704
    %v755 = vadd.s32 %v505, %v705
    %v756 = vadd.s32 %v506, %v706
    %v757 = vadd.s32 %v507, %v707
    %v758 = vadd.s32 %v508, %v708
    %v759 = vadd.s32 %v509, %v709
    %v760 = vadd.s32 %v510, %v710
    %v761 = vadd.s32 %v511, %v711
    %v762 = vadd.s32 %v512, %v712
    %v763 = vadd.s32 %v513, %v713
    %v764 = vadd.s32 %v514, %v714
    %v765 = vadd.s32 %v515, %v715
    %v766 = vadd.s32 %v516, %v716
    %v767 = vadd.s32 %v517, %v717
    %v768 = vadd.s32 %v518, %v718
    %v769 = vadd.s32 %v519, %v719
    %v770 = vadd.s32 %v520, %v720
    %v771 = vadd.s32 %v521, %v721
    %v772 = vadd.s32 %v522, %v722
    %v773 = vadd.s32 %v523, %v723
    %v774 = vadd.s32 %v524, %v724
    %v775 = vadd.s32 %v525, %v725
    %v776 = vadd.s32 %v526, %v726
    %v777 = vadd.s32 %v527, %v727
    %vm778 = vcmp.lt.s32.totalorder %v578, 0
    %vm779 = vcmp.lt.s32.totalorder %v579, 0
    %vm780 = vcmp.lt.s32.totalorder %v580, 0
    %vm781 = vcmp.lt.s32.totalorder %v581, 0
    %vm782 = vcmp.lt.s32.totalorder %v582, 0
    %vm783 = vcmp.lt.s32.totalorder %v583, 0
    %vm784 = vcmp.lt.s32.totalorder %v584, 0
    %vm785 = vcmp.lt.s32.totalorder %v585, 0
    %vm786 = vcmp.lt.s32.totalorder %v586, 0
    %vm787 = vcmp.lt.s32.totalorder %v587, 0
    %vm788 = vcmp.lt.s32.totalorder %v588, 0
    %vm789 = vcmp.lt.s32.totalorder %v589, 0
    %vm790 = vcmp.lt.s32.totalorder %v590, 0
    %vm791 = vcmp.lt.s32.totalorder %v591, 0
    %vm792 = vcmp.lt.s32.totalorder %v592, 0
    %vm793 = vcmp.lt.s32.totalorder %v593, 0
    %vm794 = vcmp.lt.s32.totalorder %v594, 0
    %vm795 = vcmp.lt.s32.totalorder %v595, 0
    %vm796 = vcmp.lt.s32.totalorder %v596, 0
    %vm797 = vcmp.lt.s32.totalorder %v597, 0
    %vm798 = vcmp.lt.s32.totalorder %v598, 0
    %vm799 = vcmp.lt.s32.totalorder %v599, 0
    %vm800 = vcmp.lt.s32.totalorder %v600, 0
    %vm801 = vcmp.lt.s32.totalorder %v601, 0
    %vm802 = vcmp.lt.s32.totalorder %v602, 0
    %vm803 = vcmp.lt.s32.totalorder %v603, 0
    %vm804 = vcmp.lt.s32.totalorder %v604, 0
    %vm805 = vcmp.lt.s32.totalorder %v605, 0
    %vm806 = vcmp.lt.s32.totalorder %v606, 0
    %vm807 = vcmp.lt.s32.totalorder %v607, 0
    %vm808 = vcmp.lt.s32.totalorder %v608, 0
    %vm809 = vcmp.lt.s32.totalorder %v609, 0
    %vm810 = vcmp.lt.s32.totalorder %v610, 0
    %vm811 = vcmp.lt.s32.totalorder %v611, 0
    %vm812 = vcmp.lt.s32.totalorder %v612, 0
    %vm813 = vcmp.lt.s32.totalorder %v613, 0
    %vm814 = vcmp.lt.s32.totalorder %v614, 0
    %vm815 = vcmp.lt.s32.totalorder %v615, 0
    %vm816 = vcmp.lt.s32.totalorder %v616, 0
    %vm817 = vcmp.lt.s32.totalorder %v617, 0
    %vm818 = vcmp.lt.s32.totalorder %v618, 0
    %vm819 = vcmp.lt.s32.totalorder %v619, 0
    %vm820 = vcmp.lt.s32.totalorder %v620, 0
    %vm821 = vcmp.lt.s32.totalorder %v621, 0
    %vm822 = vcmp.lt.s32.totalorder %v622, 0
    %vm823 = vcmp.lt.s32.totalorder %v623, 0
    %vm824 = vcmp.lt.s32.totalorder %v624, 0
    %vm825 = vcmp.lt.s32.totalorder %v625, 0
    %vm826 = vcmp.lt.s32.totalorder %v626, 0
    %vm827 = vcmp.lt.s32.totalorder %v627, 0
    %v828 = vsel %vm778, 1, 0
    %v829 = vsel %vm779, 1, 0
    %v830 = vsel %vm780, 1, 0
    %v831 = vsel %vm781, 1, 0
    %v832 = vsel %vm782, 1, 0
    %v833 = vsel %vm783, 1, 0
    %v834 = vsel %vm784, 1, 0
    %v835 = vsel %vm785, 1, 0
    %v836 = vsel %vm786, 1, 0
    %v837 = vsel %vm787, 1, 0
    %v838 = vsel %vm788, 1, 0
    %v839 = vsel %vm789, 1, 0
    %v840 = vsel %vm790, 1, 0
    %v841 = vsel %vm791, 1, 0
    %v842 = vsel %vm792, 1, 0
    %v843 = vsel %vm793, 1, 0
    %v844 = vsel %vm794, 1, 0
    %v845 = vsel %vm795, 1, 0
    %v846 = vsel %vm796, 1, 0
    %v847 = vsel %vm797, 1, 0
    %v848 = vsel %vm798, 1, 0
    %v849 = vsel %vm799, 1, 0
    %v850 = vsel %vm800, 1, 0
    %v851 = vsel %vm801, 1, 0
    %v852 = vsel %vm802, 1, 0
    %v853 = vsel %vm803, 1, 0
    %v854 = vsel %vm804, 1, 0
    %v855 = vsel %vm805, 1, 0
    %v856 = vsel %vm806, 1, 0
    %v857 = vsel %vm807, 1, 0
    %v858 = vsel %vm808, 1, 0
    %v859 = vsel %vm809, 1, 0
    %v860 = vsel %vm810, 1, 0
    %v861 = vsel %vm811, 1, 0
    %v862 = vsel %vm812, 1, 0
    %v863 = vsel %vm813, 1, 0
    %v864 = vsel %vm814, 1, 0
    %v865 = vsel %vm815, 1, 0
    %v866 = vsel %vm816, 1, 0
    %v867 = vsel %vm817, 1, 0
    %v868 = vsel %vm818, 1, 0
    %v869 = vsel %vm819, 1, 0
    %v870 = vsel %vm820, 1, 0
    %v871 = vsel %vm821, 1, 0
    %v872 = vsel %vm822, 1, 0
    %v873 = vsel %vm823, 1, 0
    %v874 = vsel %vm824, 1, 0
    %v875 = vsel %vm825, 1, 0
    %v876 = vsel %vm826, 1, 0
    %v877 = vsel %vm827, 1, 0
    %v878 = vsub.s32 %v728, %v828
    %v879 = vsub.s32 %v729, %v829
    %v880 = vsub.s32 %v730, %v830
    %v881 = vsub.s32 %v731, %v831
    %v882 = vsub.s32 %v732, %v832
    %v883 = vsub.s32 %v733, %v833
    %v884 = vsub.s32 %v734, %v834
    %v885 = vsub.s32 %v735, %v835
    %v886 = vsub.s32 %v736, %v836
    %v887 = vsub.s32 %v737, %v837
    %v888 = vsub.s32 %v738, %v838
    %v889 = vsub.s32 %v739, %v839
    %v890 = vsub.s32 %v740, %v840
    %v891 = vsub.s32 %v741, %v841
    %v892 = vsub.s32 %v742, %v842
    %v893 = vsub.s32 %v743, %v843
    %v894 = vsub.s32 %v744, %v844
    %v895 = vsub.s32 %v745, %v845
    %v896 = vsub.s32 %v746, %v846
    %v897 = vsub.s32 %v747, %v847
    %v898 = vsub.s32 %v748, %v848
    %v899 = vsub.s32 %v749, %v849
    %v900 = vsub.s32 %v750, %v850
    %v901 = vsub.s32 %v751, %v851
    %v902 = vsub.s32 %v752, %v852
    %v903 = vsub.s32 %v753, %v853
    %v904 = vsub.s32 %v754, %v854
    %v905 = vsub.s32 %v755, %v855
    %v906 = vsub.s32 %v756, %v856
    %v907 = vsub.s32 %v757, %v857
    %v908 = vsub.s32 %v758, %v858
    %v909 = vsub.s32 %v759, %v859
    %v910 = vsub.s32 %v760, %v860
    %v911 = vsub.s32 %v761, %v861
    %v912 = vsub.s32 %v762, %v862
    %v913 = vsub.s32 %v763, %v863
    %v914 = vsub.s32 %v764, %v864
    %v915 = vsub.s32 %v765, %v865
    %v916 = vsub.s32 %v766, %v866
    %v917 = vsub.s32 %v767, %v867
    %v918 = vsub.s32 %v768, %v868
    %v919 = vsub.s32 %v769, %v869
    %v920 = vsub.s32 %v770, %v870
    %v921 = vsub.s32 %v771, %v871
    %v922 = vsub.s32 %v772, %v872
    %v923 = vsub.s32 %v773, %v873
    %v924 = vsub.s32 %v774, %v874
    %v925 = vsub.s32 %v775, %v875
    %v926 = vsub.s32 %v776, %v876
    %v927 = vsub.s32 %v777, %v877
    %v928 = vmul.u32 %v878, 20
    %v929 = vmul.u32 %v879, 20
    %v930 = vmul.u32 %v880, 20
    %v931 = vmul.u32 %v881, 20
    %v932 = vmul.u32 %v882, 20
    %v933 = vmul.u32 %v883, 20
    %v934 = vmul.u32 %v884, 20
    %v935 = vmul.u32 %v885, 20
    %v936 = vmul.u32 %v886, 20
    %v937 = vmul.u32 %v887, 20
    %v938 = vmul.u32 %v888, 20
    %v939 = vmul.u32 %v889, 20
    %v940 = vmul.u32 %v890, 20
    %v941 = vmul.u32 %v891, 20
    %v942 = vmul.u32 %v892, 20
    %v943 = vmul.u32 %v893, 20
    %v944 = vmul.u32 %v894, 20
    %v945 = vmul.u32 %v895, 20
    %v946 = vmul.u32 %v896, 20
    %v947 = vmul.u32 %v897, 20
    %v948 = vmul.u32 %v898, 20
    %v949 = vmul.u32 %v899, 20
    %v950 = vmul.u32 %v900, 20
    %v951 = vmul.u32 %v901, 20
    %v952 = vmul.u32 %v902, 20
    %v953 = vmul.u32 %v903, 20
    %v954 = vmul.u32 %v904, 20
    %v955 = vmul.u32 %v905, 20
    %v956 = vmul.u32 %v906, 20
    %v957 = vmul.u32 %v907, 20
    %v958 = vmul.u32 %v908, 20
    %v959 = vmul.u32 %v909, 20
    %v960 = vmul.u32 %v910, 20
    %v961 = vmul.u32 %v911, 20
    %v962 = vmul.u32 %v912, 20
    %v963 = vmul.u32 %v913, 20
    %v964 = vmul.u32 %v914, 20
    %v965 = vmul.u32 %v915, 20
    %v966 = vmul.u32 %v916, 20
    %v967 = vmul.u32 %v917, 20
    %v968 = vmul.u32 %v918, 20
    %v969 = vmul.u32 %v919, 20
    %v970 = vmul.u32 %v920, 20
    %v971 = vmul.u32 %v921, 20
    %v972 = vmul.u32 %v922, 20
    %v973 = vmul.u32 %v923, 20
    %v974 = vmul.u32 %v924, 20
    %v975 = vmul.u32 %v925, 20
    %v976 = vmul.u32 %v926, 20
    %v977 = vmul.u32 %v927, 20
    %v978 = vsub.s32 %v328, %v928
    %v979 = vsub.s32 %v329, %v929
    %v980 = vsub.s32 %v330, %v930
    %v981 = vsub.s32 %v331, %v931
    %v982 = vsub.s32 %v332, %v932
    %v983 = vsub.s32 %v333, %v933
    %v984 = vsub.s32 %v334, %v934
    %v985 = vsub.s32 %v335, %v935
    %v986 = vsub.s32 %v336, %v936
    %v987 = vsub.s32 %v337, %v937
    %v988 = vsub.s32 %v338, %v938
    %v989 = vsub.s32 %v339, %v939
    %v990 = vsub.s32 %v340, %v940
    %v991 = vsub.s32 %v341, %v941
    %v992 = vsub.s32 %v342, %v942
    %v993 = vsub.s32 %v343, %v943
    %v994 = vsub.s32 %v344, %v944
    %v995 = vsub.s32 %v345, %v945
    %v996 = vsub.s32 %v346, %v946
    %v997 = vsub.s32 %v347, %v947
    %v998 = vsub.s32 %v348, %v948
    %v999 = vsub.s32 %v349, %v949
    %v1000 = vsub.s32 %v350, %v950
    %v1001 = vsub.s32 %v351, %v951
    %v1002 = vsub.s32 %v352, %v952
    %v1003 = vsub.s32 %v353, %v953
    %v1004 = vsub.s32 %v354, %v954
    %v1005 = vsub.s32 %v355, %v955
    %v1006 = vsub.s32 %v356, %v956
    %v1007 = vsub.s32 %v357, %v957
    %v1008 = vsub.s32 %v358, %v958
    %v1009 = vsub.s32 %v359, %v959
    %v1010 = vsub.s32 %v360, %v960
    %v1011 = vsub.s32 %v361, %v961
    %v1012 = vsub.s32 %v362, %v962
    %v1013 = vsub.s32 %v363, %v963
    %v1014 = vsub.s32 %v364, %v964
    %v1015 = vsub.s32 %v365, %v965
    %v1016 = vsub.s32 %v366, %v966
    %v1017 = vsub.s32 %v367, %v967
    %v1018 = vsub.s32 %v368, %v968
    %v1019 = vsub.s32 %v369, %v969
    %v1020 = vsub.s32 %v370, %v970
    %v1021 = vsub.s32 %v371, %v971
    %v1022 = vsub.s32 %v372, %v972
    %v1023 = vsub.s32 %v373, %v973
    %v1024 = vsub.s32 %v374, %v974
    %v1025 = vsub.s32 %v375, %v975
    %v1026 = vsub.s32 %v376, %v976
    %v1027 = vsub.s32 %v377, %v977
    %vm1028 = vcmp.ge.s32.totalorder %v878, 2
    %vm1029 = vcmp.ge.s32.totalorder %v879, 2
    %vm1030 = vcmp.ge.s32.totalorder %v880, 2
    %vm1031 = vcmp.ge.s32.totalorder %v881, 2
    %vm1032 = vcmp.ge.s32.totalorder %v882, 2
    %vm1033 = vcmp.ge.s32.totalorder %v883, 2
    %vm1034 = vcmp.ge.s32.totalorder %v884, 2
    %vm1035 = vcmp.ge.s32.totalorder %v885, 2
    %vm1036 = vcmp.ge.s32.totalorder %v886, 2
    %vm1037 = vcmp.ge.s32.totalorder %v887, 2
    %vm1038 = vcmp.ge.s32.totalorder %v888, 2
    %vm1039 = vcmp.ge.s32.totalorder %v889, 2
    %vm1040 = vcmp.ge.s32.totalorder %v890, 2
    %vm1041 = vcmp.ge.s32.totalorder %v891, 2
    %vm1042 = vcmp.ge.s32.totalorder %v892, 2
    %vm1043 = vcmp.ge.s32.totalorder %v893, 2
    %vm1044 = vcmp.ge.s32.totalorder %v894, 2
    %vm1045 = vcmp.ge.s32.totalorder %v895, 2
    %vm1046 = vcmp.ge.s32.totalorder %v896, 2
    %vm1047 = vcmp.ge.s32.totalorder %v897, 2
    %vm1048 = vcmp.ge.s32.totalorder %v898, 2
    %vm1049 = vcmp.ge.s32.totalorder %v899, 2
    %vm1050 = vcmp.ge.s32.totalorder %v900, 2
    %vm1051 = vcmp.ge.s32.totalorder %v901, 2
    %vm1052 = vcmp.ge.s32.totalorder %v902, 2
    %vm1053 = vcmp.ge.s32.totalorder %v903, 2
    %vm1054 = vcmp.ge.s32.totalorder %v904, 2
    %vm1055 = vcmp.ge.s32.totalorder %v905, 2
    %vm1056 = vcmp.ge.s32.totalorder %v906, 2
    %vm1057 = vcmp.ge.s32.totalorder %v907, 2
    %vm1058 = vcmp.ge.s32.totalorder %v908, 2
    %vm1059 = vcmp.ge.s32.totalorder %v909, 2
    %vm1060 = vcmp.ge.s32.totalorder %v910, 2
    %vm1061 = vcmp.ge.s32.totalorder %v911, 2
    %vm1062 = vcmp.ge.s32.totalorder %v912, 2
    %vm1063 = vcmp.ge.s32.totalorder %v913, 2
    %vm1064 = vcmp.ge.s32.totalorder %v914, 2
    %vm1065 = vcmp.ge.s32.totalorder %v915, 2
    %vm1066 = vcmp.ge.s32.totalorder %v916, 2
    %vm1067 = vcmp.ge.s32.totalorder %v917, 2
    %vm1068 = vcmp.ge.s32.totalorder %v918, 2
    %vm1069 = vcmp.ge.s32.totalorder %v919, 2
    %vm1070 = vcmp.ge.s32.totalorder %v920, 2
    %vm1071 = vcmp.ge.s32.totalorder %v921, 2
    %vm1072 = vcmp.ge.s32.totalorder %v922, 2
    %vm1073 = vcmp.ge.s32.totalorder %v923, 2
    %vm1074 = vcmp.ge.s32.totalorder %v924, 2
    %vm1075 = vcmp.ge.s32.totalorder %v925, 2
    %vm1076 = vcmp.ge.s32.totalorder %v926, 2
    %vm1077 = vcmp.ge.s32.totalorder %v927, 2
    %vm1078 = vcmp.lt.s32.totalorder %v878, 18
    %vm1079 = vcmp.lt.s32.totalorder %v879, 18
    %vm1080 = vcmp.lt.s32.totalorder %v880, 18
    %vm1081 = vcmp.lt.s32.totalorder %v881, 18
    %vm1082 = vcmp.lt.s32.totalorder %v882, 18
    %vm1083 = vcmp.lt.s32.totalorder %v883, 18
    %vm1084 = vcmp.lt.s32.totalorder %v884, 18
    %vm1085 = vcmp.lt.s32.totalorder %v885, 18
    %vm1086 = vcmp.lt.s32.totalorder %v886, 18
    %vm1087 = vcmp.lt.s32.totalorder %v887, 18
    %vm1088 = vcmp.lt.s32.totalorder %v888, 18
    %vm1089 = vcmp.lt.s32.totalorder %v889, 18
    %vm1090 = vcmp.lt.s32.totalorder %v890, 18
    %vm1091 = vcmp.lt.s32.totalorder %v891, 18
    %vm1092 = vcmp.lt.s32.totalorder %v892, 18
    %vm1093 = vcmp.lt.s32.totalorder %v893, 18
    %vm1094 = vcmp.lt.s32.totalorder %v894, 18
    %vm1095 = vcmp.lt.s32.totalorder %v895, 18
    %vm1096 = vcmp.lt.s32.totalorder %v896, 18
    %vm1097 = vcmp.lt.s32.totalorder %v897, 18
    %vm1098 = vcmp.lt.s32.totalorder %v898, 18
    %vm1099 = vcmp.lt.s32.totalorder %v899, 18
    %vm1100 = vcmp.lt.s32.totalorder %v900, 18
    %vm1101 = vcmp.lt.s32.totalorder %v901, 18
    %vm1102 = vcmp.lt.s32.totalorder %v902, 18
    %vm1103 = vcmp.lt.s32.totalorder %v903, 18
    %vm1104 = vcmp.lt.s32.totalorder %v904, 18
    %vm1105 = vcmp.lt.s32.totalorder %v905, 18
    %vm1106 = vcmp.lt.s32.totalorder %v906, 18
    %vm1107 = vcmp.lt.s32.totalorder %v907, 18
    %vm1108 = vcmp.lt.s32.totalorder %v908, 18
    %vm1109 = vcmp.lt.s32.totalorder %v909, 18
    %vm1110 = vcmp.lt.s32.totalorder %v910, 18
    %vm1111 = vcmp.lt.s32.totalorder %v911, 18
    %vm1112 = vcmp.lt.s32.totalorder %v912, 18
    %vm1113 = vcmp.lt.s32.totalorder %v913, 18
    %vm1114 = vcmp.lt.s32.totalorder %v914, 18
    %vm1115 = vcmp.lt.s32.totalorder %v915, 18
    %vm1116 = vcmp.lt.s32.totalorder %v916, 18
    %vm1117 = vcmp.lt.s32.totalorder %v917, 18
    %vm1118 = vcmp.lt.s32.totalorder %v918, 18
    %vm1119 = vcmp.lt.s32.totalorder %v919, 18
    %vm1120 = vcmp.lt.s32.totalorder %v920, 18
    %vm1121 = vcmp.lt.s32.totalorder %v921, 18
    %vm1122 = vcmp.lt.s32.totalorder %v922, 18
    %vm1123 = vcmp.lt.s32.totalorder %v923, 18
    %vm1124 = vcmp.lt.s32.totalorder %v924, 18
    %vm1125 = vcmp.lt.s32.totalorder %v925, 18
    %vm1126 = vcmp.lt.s32.totalorder %v926, 18
    %vm1127 = vcmp.lt.s32.totalorder %v927, 18
    %vm1128 = vmand %vm1028, %vm1078
    %vm1129 = vmand %vm1029, %vm1079
    %vm1130 = vmand %vm1030, %vm1080
    %vm1131 = vmand %vm1031, %vm1081
    %vm1132 = vmand %vm1032, %vm1082
    %vm1133 = vmand %vm1033, %vm1083
    %vm1134 = vmand %vm1034, %vm1084
    %vm1135 = vmand %vm1035, %vm1085
    %vm1136 = vmand %vm1036, %vm1086
    %vm1137 = vmand %vm1037, %vm1087
    %vm1138 = vmand %vm1038, %vm1088
    %vm1139 = vmand %vm1039, %vm1089
    %vm1140 = vmand %vm1040, %vm1090
    %vm1141 = vmand %vm1041, %vm1091
    %vm1142 = vmand %vm1042, %vm1092
    %vm1143 = vmand %vm1043, %vm1093
    %vm1144 = vmand %vm1044, %vm1094
    %vm1145 = vmand %vm1045, %vm1095
    %vm1146 = vmand %vm1046, %vm1096
    %vm1147 = vmand %vm1047, %vm1097
    %vm1148 = vmand %vm1048, %vm1098
    %vm1149 = vmand %vm1049, %vm1099
    %vm1150 = vmand %vm1050, %vm1100
    %vm1151 = vmand %vm1051, %vm1101
    %vm1152 = vmand %vm1052, %vm1102
    %vm1153 = vmand %vm1053, %vm1103
    %vm1154 = vmand %vm1054, %vm1104
    %vm1155 = vmand %vm1055, %vm1105
    %vm1156 = vmand %vm1056, %vm1106
    %vm1157 = vmand %vm1057, %vm1107
    %vm1158 = vmand %vm1058, %vm1108
    %vm1159 = vmand %vm1059, %vm1109
    %vm1160 = vmand %vm1060, %vm1110
    %vm1161 = vmand %vm1061, %vm1111
    %vm1162 = vmand %vm1062, %vm1112
    %vm1163 = vmand %vm1063, %vm1113
    %vm1164 = vmand %vm1064, %vm1114
    %vm1165 = vmand %vm1065, %vm1115
    %vm1166 = vmand %vm1066, %vm1116
    %vm1167 = vmand %vm1067, %vm1117
    %vm1168 = vmand %vm1068, %vm1118
    %vm1169 = vmand %vm1069, %vm1119
    %vm1170 = vmand %vm1070, %vm1120
    %vm1171 = vmand %vm1071, %vm1121
    %vm1172 = vmand %vm1072, %vm1122
    %vm1173 = vmand %vm1073, %vm1123
    %vm1174 = vmand %vm1074, %vm1124
    %vm1175 = vmand %vm1075, %vm1125
    %vm1176 = vmand %vm1076, %vm1126
    %vm1177 = vmand %vm1077, %vm1127
    %vm1178 = vcmp.ge.s32.totalorder %v978, 2
    %vm1179 = vcmp.ge.s32.totalorder %v979, 2
    %vm1180 = vcmp.ge.s32.totalorder %v980, 2
    %vm1181 = vcmp.ge.s32.totalorder %v981, 2
    %vm1182 = vcmp.ge.s32.totalorder %v982, 2
    %vm1183 = vcmp.ge.s32.totalorder %v983, 2
    %vm1184 = vcmp.ge.s32.totalorder %v984, 2
    %vm1185 = vcmp.ge.s32.totalorder %v985, 2
    %vm1186 = vcmp.ge.s32.totalorder %v986, 2
    %vm1187 = vcmp.ge.s32.totalorder %v987, 2
    %vm1188 = vcmp.ge.s32.totalorder %v988, 2
    %vm1189 = vcmp.ge.s32.totalorder %v989, 2
    %vm1190 = vcmp.ge.s32.totalorder %v990, 2
    %vm1191 = vcmp.ge.s32.totalorder %v991, 2
    %vm1192 = vcmp.ge.s32.totalorder %v992, 2
    %vm1193 = vcmp.ge.s32.totalorder %v993, 2
    %vm1194 = vcmp.ge.s32.totalorder %v994, 2
    %vm1195 = vcmp.ge.s32.totalorder %v995, 2
    %vm1196 = vcmp.ge.s32.totalorder %v996, 2
    %vm1197 = vcmp.ge.s32.totalorder %v997, 2
    %vm1198 = vcmp.ge.s32.totalorder %v998, 2
    %vm1199 = vcmp.ge.s32.totalorder %v999, 2
    %vm1200 = vcmp.ge.s32.totalorder %v1000, 2
    %vm1201 = vcmp.ge.s32.totalorder %v1001, 2
    %vm1202 = vcmp.ge.s32.totalorder %v1002, 2
    %vm1203 = vcmp.ge.s32.totalorder %v1003, 2
    %vm1204 = vcmp.ge.s32.totalorder %v1004, 2
    %vm1205 = vcmp.ge.s32.totalorder %v1005, 2
    %vm1206 = vcmp.ge.s32.totalorder %v1006, 2
    %vm1207 = vcmp.ge.s32.totalorder %v1007, 2
    %vm1208 = vcmp.ge.s32.totalorder %v1008, 2
    %vm1209 = vcmp.ge.s32.totalorder %v1009, 2
    %vm1210 = vcmp.ge.s32.totalorder %v1010, 2
    %vm1211 = vcmp.ge.s32.totalorder %v1011, 2
    %vm1212 = vcmp.ge.s32.totalorder %v1012, 2
    %vm1213 = vcmp.ge.s32.totalorder %v1013, 2
    %vm1214 = vcmp.ge.s32.totalorder %v1014, 2
    %vm1215 = vcmp.ge.s32.totalorder %v1015, 2
    %vm1216 = vcmp.ge.s32.totalorder %v1016, 2
    %vm1217 = vcmp.ge.s32.totalorder %v1017, 2
    %vm1218 = vcmp.ge.s32.totalorder %v1018, 2
    %vm1219 = vcmp.ge.s32.totalorder %v1019, 2
    %vm1220 = vcmp.ge.s32.totalorder %v1020, 2
    %vm1221 = vcmp.ge.s32.totalorder %v1021, 2
    %vm1222 = vcmp.ge.s32.totalorder %v1022, 2
    %vm1223 = vcmp.ge.s32.totalorder %v1023, 2
    %vm1224 = vcmp.ge.s32.totalorder %v1024, 2
    %vm1225 = vcmp.ge.s32.totalorder %v1025, 2
    %vm1226 = vcmp.ge.s32.totalorder %v1026, 2
    %vm1227 = vcmp.ge.s32.totalorder %v1027, 2
    %vm1228 = vmand %vm1128, %vm1178
    %vm1229 = vmand %vm1129, %vm1179
    %vm1230 = vmand %vm1130, %vm1180
    %vm1231 = vmand %vm1131, %vm1181
    %vm1232 = vmand %vm1132, %vm1182
    %vm1233 = vmand %vm1133, %vm1183
    %vm1234 = vmand %vm1134, %vm1184
    %vm1235 = vmand %vm1135, %vm1185
    %vm1236 = vmand %vm1136, %vm1186
    %vm1237 = vmand %vm1137, %vm1187
    %vm1238 = vmand %vm1138, %vm1188
    %vm1239 = vmand %vm1139, %vm1189
    %vm1240 = vmand %vm1140, %vm1190
    %vm1241 = vmand %vm1141, %vm1191
    %vm1242 = vmand %vm1142, %vm1192
    %vm1243 = vmand %vm1143, %vm1193
    %vm1244 = vmand %vm1144, %vm1194
    %vm1245 = vmand %vm1145, %vm1195
    %vm1246 = vmand %vm1146, %vm1196
    %vm1247 = vmand %vm1147, %vm1197
    %vm1248 = vmand %vm1148, %vm1198
    %vm1249 = vmand %vm1149, %vm1199
    %vm1250 = vmand %vm1150, %vm1200
    %vm1251 = vmand %vm1151, %vm1201
    %vm1252 = vmand %vm1152, %vm1202
    %vm1253 = vmand %vm1153, %vm1203
    %vm1254 = vmand %vm1154, %vm1204
    %vm1255 = vmand %vm1155, %vm1205
    %vm1256 = vmand %vm1156, %vm1206
    %vm1257 = vmand %vm1157, %vm1207
    %vm1258 = vmand %vm1158, %vm1208
    %vm1259 = vmand %vm1159, %vm1209
    %vm1260 = vmand %vm1160, %vm1210
    %vm1261 = vmand %vm1161, %vm1211
    %vm1262 = vmand %vm1162, %vm1212
    %vm1263 = vmand %vm1163, %vm1213
    %vm1264 = vmand %vm1164, %vm1214
    %vm1265 = vmand %vm1165, %vm1215
    %vm1266 = vmand %vm1166, %vm1216
    %vm1267 = vmand %vm1167, %vm1217
    %vm1268 = vmand %vm1168, %vm1218
    %vm1269 = vmand %vm1169, %vm1219
    %vm1270 = vmand %vm1170, %vm1220
    %vm1271 = vmand %vm1171, %vm1221
    %vm1272 = vmand %vm1172, %vm1222
    %vm1273 = vmand %vm1173, %vm1223
    %vm1274 = vmand %vm1174, %vm1224
    %vm1275 = vmand %vm1175, %vm1225
    %vm1276 = vmand %vm1176, %vm1226
    %vm1277 = vmand %vm1177, %vm1227
    %vm1278 = vcmp.lt.s32.totalorder %v978, 18
    %vm1279 = vcmp.lt.s32.totalorder %v979, 18
    %vm1280 = vcmp.lt.s32.totalorder %v980, 18
    %vm1281 = vcmp.lt.s32.totalorder %v981, 18
    %vm1282 = vcmp.lt.s32.totalorder %v982, 18
    %vm1283 = vcmp.lt.s32.totalorder %v983, 18
    %vm1284 = vcmp.lt.s32.totalorder %v984, 18
    %vm1285 = vcmp.lt.s32.totalorder %v985, 18
    %vm1286 = vcmp.lt.s32.totalorder %v986, 18
    %vm1287 = vcmp.lt.s32.totalorder %v987, 18
    %vm1288 = vcmp.lt.s32.totalorder %v988, 18
    %vm1289 = vcmp.lt.s32.totalorder %v989, 18
    %vm1290 = vcmp.lt.s32.totalorder %v990, 18
    %vm1291 = vcmp.lt.s32.totalorder %v991, 18
    %vm1292 = vcmp.lt.s32.totalorder %v992, 18
    %vm1293 = vcmp.lt.s32.totalorder %v993, 18
    %vm1294 = vcmp.lt.s32.totalorder %v994, 18
    %vm1295 = vcmp.lt.s32.totalorder %v995, 18
    %vm1296 = vcmp.lt.s32.totalorder %v996, 18
    %vm1297 = vcmp.lt.s32.totalorder %v997, 18
    %vm1298 = vcmp.lt.s32.totalorder %v998, 18
    %vm1299 = vcmp.lt.s32.totalorder %v999, 18
    %vm1300 = vcmp.lt.s32.totalorder %v1000, 18
    %vm1301 = vcmp.lt.s32.totalorder %v1001, 18
    %vm1302 = vcmp.lt.s32.totalorder %v1002, 18
    %vm1303 = vcmp.lt.s32.totalorder %v1003, 18
    %vm1304 = vcmp.lt.s32.totalorder %v1004, 18
    %vm1305 = vcmp.lt.s32.totalorder %v1005, 18
    %vm1306 = vcmp.lt.s32.totalorder %v1006, 18
    %vm1307 = vcmp.lt.s32.totalorder %v1007, 18
    %vm1308 = vcmp.lt.s32.totalorder %v1008, 18
    %vm1309 = vcmp.lt.s32.totalorder %v1009, 18
    %vm1310 = vcmp.lt.s32.totalorder %v1010, 18
    %vm1311 = vcmp.lt.s32.totalorder %v1011, 18
    %vm1312 = vcmp.lt.s32.totalorder %v1012, 18
    %vm1313 = vcmp.lt.s32.totalorder %v1013, 18
    %vm1314 = vcmp.lt.s32.totalorder %v1014, 18
    %vm1315 = vcmp.lt.s32.totalorder %v1015, 18
    %vm1316 = vcmp.lt.s32.totalorder %v1016, 18
    %vm1317 = vcmp.lt.s32.totalorder %v1017, 18
    %vm1318 = vcmp.lt.s32.totalorder %v1018, 18
    %vm1319 = vcmp.lt.s32.totalorder %v1019, 18
    %vm1320 = vcmp.lt.s32.totalorder %v1020, 18
    %vm1321 = vcmp.lt.s32.totalorder %v1021, 18
    %vm1322 = vcmp.lt.s32.totalorder %v1022, 18
    %vm1323 = vcmp.lt.s32.totalorder %v1023, 18
    %vm1324 = vcmp.lt.s32.totalorder %v1024, 18
    %vm1325 = vcmp.lt.s32.totalorder %v1025, 18
    %vm1326 = vcmp.lt.s32.totalorder %v1026, 18
    %vm1327 = vcmp.lt.s32.totalorder %v1027, 18
    %vm1328 = vmand %vm1228, %vm1278
    %vm1329 = vmand %vm1229, %vm1279
    %vm1330 = vmand %vm1230, %vm1280
    %vm1331 = vmand %vm1231, %vm1281
    %vm1332 = vmand %vm1232, %vm1282
    %vm1333 = vmand %vm1233, %vm1283
    %vm1334 = vmand %vm1234, %vm1284
    %vm1335 = vmand %vm1235, %vm1285
    %vm1336 = vmand %vm1236, %vm1286
    %vm1337 = vmand %vm1237, %vm1287
    %vm1338 = vmand %vm1238, %vm1288
    %vm1339 = vmand %vm1239, %vm1289
    %vm1340 = vmand %vm1240, %vm1290
    %vm1341 = vmand %vm1241, %vm1291
    %vm1342 = vmand %vm1242, %vm1292
    %vm1343 = vmand %vm1243, %vm1293
    %vm1344 = vmand %vm1244, %vm1294
    %vm1345 = vmand %vm1245, %vm1295
    %vm1346 = vmand %vm1246, %vm1296
    %vm1347 = vmand %vm1247, %vm1297
    %vm1348 = vmand %vm1248, %vm1298
    %vm1349 = vmand %vm1249, %vm1299
    %vm1350 = vmand %vm1250, %vm1300
    %vm1351 = vmand %vm1251, %vm1301
    %vm1352 = vmand %vm1252, %vm1302
    %vm1353 = vmand %vm1253, %vm1303
    %vm1354 = vmand %vm1254, %vm1304
    %vm1355 = vmand %vm1255, %vm1305
    %vm1356 = vmand %vm1256, %vm1306
    %vm1357 = vmand %vm1257, %vm1307
    %vm1358 = vmand %vm1258, %vm1308
    %vm1359 = vmand %vm1259, %vm1309
    %vm1360 = vmand %vm1260, %vm1310
    %vm1361 = vmand %vm1261, %vm1311
    %vm1362 = vmand %vm1262, %vm1312
    %vm1363 = vmand %vm1263, %vm1313
    %vm1364 = vmand %vm1264, %vm1314
    %vm1365 = vmand %vm1265, %vm1315
    %vm1366 = vmand %vm1266, %vm1316
    %vm1367 = vmand %vm1267, %vm1317
    %vm1368 = vmand %vm1268, %vm1318
    %vm1369 = vmand %vm1269, %vm1319
    %vm1370 = vmand %vm1270, %vm1320
    %vm1371 = vmand %vm1271, %vm1321
    %vm1372 = vmand %vm1272, %vm1322
    %vm1373 = vmand %vm1273, %vm1323
    %vm1374 = vmand %vm1274, %vm1324
    %vm1375 = vmand %vm1275, %vm1325
    %vm1376 = vmand %vm1276, %vm1326
    %vm1377 = vmand %vm1277, %vm1327
    %v1378 = vsel %vm1328, 1, 0
    %v1379 = vsel %vm1329, 1, 0
    %v1380 = vsel %vm1330, 1, 0
    %v1381 = vsel %vm1331, 1, 0
    %v1382 = vsel %vm1332, 1, 0
    %v1383 = vsel %vm1333, 1, 0
    %v1384 = vsel %vm1334, 1, 0
    %v1385 = vsel %vm1335, 1, 0
    %v1386 = vsel %vm1336, 1, 0
    %v1387 = vsel %vm1337, 1, 0
    %v1388 = vsel %vm1338, 1, 0
    %v1389 = vsel %vm1339, 1, 0
    %v1390 = vsel %vm1340, 1, 0
    %v1391 = vsel %vm1341, 1, 0
    %v1392 = vsel %vm1342, 1, 0
    %v1393 = vsel %vm1343, 1, 0
    %v1394 = vsel %vm1344, 1, 0
    %v1395 = vsel %vm1345, 1, 0
    %v1396 = vsel %vm1346, 1, 0
    %v1397 = vsel %vm1347, 1, 0
    %v1398 = vsel %vm1348, 1, 0
    %v1399 = vsel %vm1349, 1, 0
    %v1400 = vsel %vm1350, 1, 0
    %v1401 = vsel %vm1351, 1, 0
    %v1402 = vsel %vm1352, 1, 0
    %v1403 = vsel %vm1353, 1, 0
    %v1404 = vsel %vm1354, 1, 0
    %v1405 = vsel %vm1355, 1, 0
    %v1406 = vsel %vm1356, 1, 0
    %v1407 = vsel %vm1357, 1, 0
    %v1408 = vsel %vm1358, 1, 0
    %v1409 = vsel %vm1359, 1, 0
    %v1410 = vsel %vm1360, 1, 0
    %v1411 = vsel %vm1361, 1, 0
    %v1412 = vsel %vm1362, 1, 0
    %v1413 = vsel %vm1363, 1, 0
    %v1414 = vsel %vm1364, 1, 0
    %v1415 = vsel %vm1365, 1, 0
    %v1416 = vsel %vm1366, 1, 0
    %v1417 = vsel %vm1367, 1, 0
    %v1418 = vsel %vm1368, 1, 0
    %v1419 = vsel %vm1369, 1, 0
    %v1420 = vsel %vm1370, 1, 0
    %v1421 = vsel %vm1371, 1, 0
    %v1422 = vsel %vm1372, 1, 0
    %v1423 = vsel %vm1373, 1, 0
    %v1424 = vsel %vm1374, 1, 0
    %v1425 = vsel %vm1375, 1, 0
    %v1426 = vsel %vm1376, 1, 0
    %v1427 = vsel %vm1377, 1, 0
    %v1428 = vcvt.s32.f32 %v1378
    %v1429 = vcvt.s32.f32 %v1379
    %v1430 = vcvt.s32.f32 %v1380
    %v1431 = vcvt.s32.f32 %v1381
    %v1432 = vcvt.s32.f32 %v1382
    %v1433 = vcvt.s32.f32 %v1383
    %v1434 = vcvt.s32.f32 %v1384
    %v1435 = vcvt.s32.f32 %v1385
    %v1436 = vcvt.s32.f32 %v1386
    %v1437 = vcvt.s32.f32 %v1387
    %v1438 = vcvt.s32.f32 %v1388
    %v1439 = vcvt.s32.f32 %v1389
    %v1440 = vcvt.s32.f32 %v1390
    %v1441 = vcvt.s32.f32 %v1391
    %v1442 = vcvt.s32.f32 %v1392
    %v1443 = vcvt.s32.f32 %v1393
    %v1444 = vcvt.s32.f32 %v1394
    %v1445 = vcvt.s32.f32 %v1395
    %v1446 = vcvt.s32.f32 %v1396
    %v1447 = vcvt.s32.f32 %v1397
    %v1448 = vcvt.s32.f32 %v1398
    %v1449 = vcvt.s32.f32 %v1399
    %v1450 = vcvt.s32.f32 %v1400
    %v1451 = vcvt.s32.f32 %v1401
    %v1452 = vcvt.s32.f32 %v1402
    %v1453 = vcvt.s32.f32 %v1403
    %v1454 = vcvt.s32.f32 %v1404
    %v1455 = vcvt.s32.f32 %v1405
    %v1456 = vcvt.s32.f32 %v1406
    %v1457 = vcvt.s32.f32 %v1407
    %v1458 = vcvt.s32.f32 %v1408
    %v1459 = vcvt.s32.f32 %v1409
    %v1460 = vcvt.s32.f32 %v1410
    %v1461 = vcvt.s32.f32 %v1411
    %v1462 = vcvt.s32.f32 %v1412
    %v1463 = vcvt.s32.f32 %v1413
    %v1464 = vcvt.s32.f32 %v1414
    %v1465 = vcvt.s32.f32 %v1415
    %v1466 = vcvt.s32.f32 %v1416
    %v1467 = vcvt.s32.f32 %v1417
    %v1468 = vcvt.s32.f32 %v1418
    %v1469 = vcvt.s32.f32 %v1419
    %v1470 = vcvt.s32.f32 %v1420
    %v1471 = vcvt.s32.f32 %v1421
    %v1472 = vcvt.s32.f32 %v1422
    %v1473 = vcvt.s32.f32 %v1423
    %v1474 = vcvt.s32.f32 %v1424
    %v1475 = vcvt.s32.f32 %v1425
    %v1476 = vcvt.s32.f32 %v1426
    %v1477 = vcvt.s32.f32 %v1427
    %v1478 = vld [vmem:[#allocation7] sm:$0xf]
    %v1479 = vld [vmem:[#allocation7 + $0x4] sm:$0xf]
    %v1480 = vld [vmem:[#allocation7 + $0x8] sm:$0xf]
    %v1481 = vld [vmem:[#allocation7 + $0xc] sm:$0xf]
    %v1482 = vld [vmem:[#allocation7 + $0x10] sm:$0xf]
    %v1483 = vld [vmem:[#allocation7 + $0x14] sm:$0xf]
    %v1484 = vld [vmem:[#allocation7 + $0x18] sm:$0xf]
    %v1485 = vld [vmem:[#allocation7 + $0x1c] sm:$0xf]
    %v1486 = vld [vmem:[#allocation8] sm:$0x1]
    %v1488 = vlaneseq
    %v1489 = vshrl.u32 %v1488, 7
    %v1490 = vsub.s32 0, %v1489
    %v1491 = vrot.slane %v1486, %v1490
    %v1543 = vunpack.c.l.b16 %v277
    %v1544 = vunpack.c.l.b16 %v278
    %v1545 = vunpack.c.l.b16 %v279
    %v1546 = vunpack.c.l.b16 %v280
    %v1547 = vunpack.c.l.b16 %v281
    %v1548 = vunpack.c.l.b16 %v282
    %v1549 = vunpack.c.l.b16 %v283
    %v1550 = vunpack.c.l.b16 %v284
    %v1551 = vunpack.c.l.b16 %v285
    %v1552 = vunpack.c.l.b16 %v286
    %v1553 = vunpack.c.l.b16 %v287
    %v1554 = vunpack.c.l.b16 %v288
    %v1555 = vunpack.c.l.b16 %v289
    %v1556 = vunpack.c.l.b16 %v290
    %v1557 = vunpack.c.l.b16 %v291
    %v1558 = vunpack.c.l.b16 %v292
    %v1559 = vunpack.c.l.b16 %v293
    %v1560 = vunpack.c.l.b16 %v294
    %v1561 = vunpack.c.l.b16 %v295
    %v1562 = vunpack.c.l.b16 %v296
    %v1563 = vunpack.c.l.b16 %v297
    %v1564 = vunpack.c.l.b16 %v298
    %v1565 = vunpack.c.l.b16 %v299
    %v1566 = vunpack.c.l.b16 %v300
    %v1567 = vunpack.c.l.b16 %v301
    %v1568 = vunpack.c.l.b16 %v302
    %v1569 = vunpack.c.l.b16 %v303
    %v1570 = vunpack.c.l.b16 %v304
    %v1571 = vunpack.c.l.b16 %v305
    %v1572 = vunpack.c.l.b16 %v306
    %v1573 = vunpack.c.l.b16 %v307
    %v1574 = vunpack.c.l.b16 %v308
    %v1575 = vunpack.c.l.b16 %v309
    %v1576 = vunpack.c.l.b16 %v310
    %v1577 = vunpack.c.l.b16 %v311
    %v1578 = vunpack.c.l.b16 %v312
    %v1579 = vunpack.c.l.b16 %v313
    %v1580 = vunpack.c.l.b16 %v314
    %v1581 = vunpack.c.l.b16 %v315
    %v1582 = vunpack.c.l.b16 %v316
    %v1583 = vunpack.c.l.b16 %v317
    %v1584 = vunpack.c.l.b16 %v318
    %v1585 = vunpack.c.l.b16 %v319
    %v1586 = vunpack.c.l.b16 %v320
    %v1587 = vunpack.c.l.b16 %v321
    %v1588 = vunpack.c.l.b16 %v322
    %v1589 = vunpack.c.l.b16 %v323
    %v1590 = vunpack.c.l.b16 %v324
    %v1591 = vunpack.c.l.b16 %v325
    %v1592 = vunpack.c.l.b16 %v326
    %v1593 = vpack.c.b16 %v1544, %v1543
    %v1594 = vpack.c.b16 %v1546, %v1545
    %v1595 = vpack.c.b16 %v1548, %v1547
    %v1596 = vpack.c.b16 %v1550, %v1549
    %v1597 = vpack.c.b16 %v1552, %v1551
    %v1598 = vpack.c.b16 %v1554, %v1553
    %v1599 = vpack.c.b16 %v1556, %v1555
    %v1600 = vpack.c.b16 %v1558, %v1557
    %v1601 = vpack.c.b16 %v1560, %v1559
    %v1602 = vpack.c.b16 %v1562, %v1561
    %v1603 = vpack.c.b16 %v1564, %v1563
    %v1604 = vpack.c.b16 %v1566, %v1565
    %v1605 = vpack.c.b16 %v1568, %v1567
    %v1606 = vpack.c.b16 %v1570, %v1569
    %v1607 = vpack.c.b16 %v1572, %v1571
    %v1608 = vpack.c.b16 %v1574, %v1573
    %v1609 = vpack.c.b16 %v1576, %v1575
    %v1610 = vpack.c.b16 %v1578, %v1577
    %v1611 = vpack.c.b16 %v1580, %v1579
    %v1612 = vpack.c.b16 %v1582, %v1581
    %v1613 = vpack.c.b16 %v1584, %v1583
    %v1614 = vpack.c.b16 %v1586, %v1585
    %v1615 = vpack.c.b16 %v1588, %v1587
    %v1616 = vpack.c.b16 %v1590, %v1589
    %v1617 = vpack.c.b16 %v1592, %v1591
    %v1626 = vunpack.c.l.b16 %v1478
    %v1627 = vunpack.c.l.b16 %v1479
    %v1628 = vunpack.c.l.b16 %v1480
    %v1629 = vunpack.c.l.b16 %v1481
    %v1630 = vunpack.c.l.b16 %v1482
    %v1631 = vunpack.c.l.b16 %v1483
    %v1632 = vunpack.c.l.b16 %v1484
    %v1633 = vunpack.c.l.b16 %v1485
    %v1634 = vpack.c.b16 %v1627, %v1626
    %v1635 = vpack.c.b16 %v1629, %v1628
    %v1636 = vpack.c.b16 %v1631, %v1630
    %v1637 = vpack.c.b16 %v1633, %v1632
    %vm1642 = vcmask 523264
    %v1644 = vsel %vm1642, %v1593, 0
    %v1647 = vsel %vm1642, %v1594, 0
    %v1650 = vsel %vm1642, %v1595, 0
    %v1653 = vsel %vm1642, %v1596, 0
    %v1656 = vsel %vm1642, %v1597, 0
    %v1659 = vsel %vm1642, %v1598, 0
    %v1662 = vsel %vm1642, %v1599, 0
    %v1665 = vsel %vm1642, %v1600, 0
    %v1668 = vsel %vm1642, %v1601, 0
    %v1671 = vsel %vm1642, %v1602, 0
    %v1674 = vsel %vm1642, %v1603, 0
    %v1677 = vsel %vm1642, %v1604, 0
    %v1680 = vsel %vm1642, %v1605, 0
    %v1683 = vsel %vm1642, %v1606, 0
    %v1686 = vsel %vm1642, %v1607, 0
    %v1689 = vsel %vm1642, %v1608, 0
    %v1692 = vsel %vm1642, %v1609, 0
    %v1695 = vsel %vm1642, %v1610, 0
    %v1698 = vsel %vm1642, %v1611, 0
    %v1701 = vsel %vm1642, %v1612, 0
    %v1704 = vsel %vm1642, %v1613, 0
    %v1707 = vsel %vm1642, %v1614, 0
    %v1710 = vsel %vm1642, %v1615, 0
    %v1713 = vsel %vm1642, %v1616, 0
    %v1716 = vsel %vm1642, %v1617, 0
    %1718 = vmatprep.subr.bf16.mxu0 0
    %1719 = vmatpush1.bf16.msra.mxu0 %v1634
    %1720 = vmatprep.subr.bf16.mxu0 0
    %1721 = vmatpush1.bf16.msra.mxu0 %v1635
    %1722 = vmatprep.subr.bf16.mxu0 0
    %1723 = vmatpush1.bf16.msra.mxu0 %v1636
    %1724 = vmatprep.subr.bf16.mxu0 0
    %1725 = vmatpush1.bf16.msra.mxu0 %v1637
    %1726 = vmatprep.subr.bf16.mxu0 0
    %1727 = vmatpush1.bf16.msra.mxu0 0
    %1728 = vmatprep.subr.bf16.mxu0 0
    %1729 = vmatpush1.bf16.msra.mxu0 0
    %1730 = vmatprep.subr.bf16.mxu0 0
    %1731 = vmatpush1.bf16.msra.mxu0 0
    %1732 = vmatprep.subr.bf16.mxu0 0
    %1733 = vmatpush1.bf16.msra.mxu0 0
    %1734 = vmatprep.subr.bf16.mxu0 0
    %1735 = vmatpush1.bf16.msra.mxu0 0
    %1736 = vmatprep.subr.bf16.mxu0 0
    %1737 = vmatpush1.bf16.msra.mxu0 0
    %1738 = vmatprep.subr.bf16.mxu0 0
    %1739 = vmatpush1.bf16.msra.mxu0 0
    %1740 = vmatprep.subr.bf16.mxu0 0
    %1741 = vmatpush1.bf16.msra.mxu0 0
    %1742 = vmatprep.subr.bf16.mxu0 0
    %1743 = vmatpush1.bf16.msra.mxu0 0
    %1744 = vmatprep.subr.bf16.mxu0 0
    %1745 = vmatpush1.bf16.msra.mxu0 0
    %1746 = vmatprep.subr.bf16.mxu0 0
    %1747 = vmatpush1.bf16.msra.mxu0 0
    %1748 = vmatprep.subr.bf16.mxu0 0
    %1749 = vmatpush1.bf16.msra.mxu0 0
    %1750 = vmatprep.mubr.bf16.mxu0 0
    %1751 = vmatmul.mubr.bf16.gmra.mrb[0].mxu0 %v1644
    %v1752 = vpop.f32.mrb[0].mxu0
    %v1753 = vadd.f32 %v1491, %v1752
    %v1754 = vpop.f32.mrb[0].mxu0
    %v1755 = vpop.f32.mrb[0].mxu0
    %v1756 = vadd.f32 %v1491, %v1755
    %v1757 = vpop.f32.mrb[0].mxu0
    %1758 = vmatprep.mubr.bf16.mxu0 0
    %1759 = vmatmul.mubr.bf16.gmra.mrb[0].mxu0 %v1647
    %v1760 = vpop.f32.mrb[0].mxu0
    %v1761 = vadd.f32 %v1491, %v1760
    %v1762 = vpop.f32.mrb[0].mxu0
    %v1763 = vpop.f32.mrb[0].mxu0
    %v1764 = vadd.f32 %v1491, %v1763
    %v1765 = vpop.f32.mrb[0].mxu0
    %1766 = vmatprep.mubr.bf16.mxu0 0
    %1767 = vmatmul.mubr.bf16.gmra.mrb[0].mxu0 %v1650
    %v1768 = vpop.f32.mrb[0].mxu0
    %v1769 = vadd.f32 %v1491, %v1768
    %v1770 = vpop.f32.mrb[0].mxu0
    %v1771 = vpop.f32.mrb[0].mxu0
    %v1772 = vadd.f32 %v1491, %v1771
    %v1773 = vpop.f32.mrb[0].mxu0
    %1774 = vmatprep.mubr.bf16.mxu0 0
    %1775 = vmatmul.mubr.bf16.gmra.mrb[0].mxu0 %v1653
    %v1776 = vpop.f32.mrb[0].mxu0
    %v1777 = vadd.f32 %v1491, %v1776
    %v1778 = vpop.f32.mrb[0].mxu0
    %v1779 = vpop.f32.mrb[0].mxu0
    %v1780 = vadd.f32 %v1491, %v1779
    %v1781 = vpop.f32.mrb[0].mxu0
    %1782 = vmatprep.mubr.bf16.mxu0 0
    %1783 = vmatmul.mubr.bf16.gmra.mrb[0].mxu0 %v1656
    %v1784 = vpop.f32.mrb[0].mxu0
    %v1785 = vadd.f32 %v1491, %v1784
    %v1786 = vpop.f32.mrb[0].mxu0
    %v1787 = vpop.f32.mrb[0].mxu0
    %v1788 = vadd.f32 %v1491, %v1787
    %v1789 = vpop.f32.mrb[0].mxu0
    %1790 = vmatprep.mubr.bf16.mxu0 0
    %1791 = vmatmul.mubr.bf16.gmra.mrb[0].mxu0 %v1659
    %v1792 = vpop.f32.mrb[0].mxu0
    %v1793 = vadd.f32 %v1491, %v1792
    %v1794 = vpop.f32.mrb[0].mxu0
    %v1795 = vpop.f32.mrb[0].mxu0
    %v1796 = vadd.f32 %v1491, %v1795
    %v1797 = vpop.f32.mrb[0].mxu0
    %1798 = vmatprep.mubr.bf16.mxu0 0
    %1799 = vmatmul.mubr.bf16.gmra.mrb[0].mxu0 %v1662
    %v1800 = vpop.f32.mrb[0].mxu0
    %v1801 = vadd.f32 %v1491, %v1800
    %v1802 = vpop.f32.mrb[0].mxu0
    %v1803 = vpop.f32.mrb[0].mxu0
    %v1804 = vadd.f32 %v1491, %v1803
    %v1805 = vpop.f32.mrb[0].mxu0
    %1806 = vmatprep.mubr.bf16.mxu0 0
    %1807 = vmatmul.mubr.bf16.gmra.mrb[0].mxu0 %v1665
    %v1808 = vpop.f32.mrb[0].mxu0
    %v1809 = vadd.f32 %v1491, %v1808
    %v1810 = vpop.f32.mrb[0].mxu0
    %v1811 = vpop.f32.mrb[0].mxu0
    %v1812 = vadd.f32 %v1491, %v1811
    %v1813 = vpop.f32.mrb[0].mxu0
    %1814 = vmatprep.mubr.bf16.mxu0 0
    %1815 = vmatmul.mubr.bf16.gmra.mrb[0].mxu0 %v1668
    %v1816 = vpop.f32.mrb[0].mxu0
    %v1817 = vadd.f32 %v1491, %v1816
    %v1818 = vpop.f32.mrb[0].mxu0
    %v1819 = vpop.f32.mrb[0].mxu0
    %v1820 = vadd.f32 %v1491, %v1819
    %v1821 = vpop.f32.mrb[0].mxu0
    %1822 = vmatprep.mubr.bf16.mxu0 0
    %1823 = vmatmul.mubr.bf16.gmra.mrb[0].mxu0 %v1671
    %v1824 = vpop.f32.mrb[0].mxu0
    %v1825 = vadd.f32 %v1491, %v1824
    %v1826 = vpop.f32.mrb[0].mxu0
    %v1827 = vpop.f32.mrb[0].mxu0
    %v1828 = vadd.f32 %v1491, %v1827
    %v1829 = vpop.f32.mrb[0].mxu0
    %1830 = vmatprep.mubr.bf16.mxu0 0
    %1831 = vmatmul.mubr.bf16.gmra.mrb[0].mxu0 %v1674
    %v1832 = vpop.f32.mrb[0].mxu0
    %v1833 = vadd.f32 %v1491, %v1832
    %v1834 = vpop.f32.mrb[0].mxu0
    %v1835 = vpop.f32.mrb[0].mxu0
    %v1836 = vadd.f32 %v1491, %v1835
    %v1837 = vpop.f32.mrb[0].mxu0
    %1838 = vmatprep.mubr.bf16.mxu0 0
    %1839 = vmatmul.mubr.bf16.gmra.mrb[0].mxu0 %v1677
    %v1840 = vpop.f32.mrb[0].mxu0
    %v1841 = vadd.f32 %v1491, %v1840
    %v1842 = vpop.f32.mrb[0].mxu0
    %v1843 = vpop.f32.mrb[0].mxu0
    %v1844 = vadd.f32 %v1491, %v1843
    %v1845 = vpop.f32.mrb[0].mxu0
    %1846 = vmatprep.mubr.bf16.mxu0 0
    %1847 = vmatmul.mubr.bf16.gmra.mrb[0].mxu0 %v1680
    %v1848 = vpop.f32.mrb[0].mxu0
    %v1849 = vadd.f32 %v1491, %v1848
    %v1850 = vpop.f32.mrb[0].mxu0
    %v1851 = vpop.f32.mrb[0].mxu0
    %v1852 = vadd.f32 %v1491, %v1851
    %v1853 = vpop.f32.mrb[0].mxu0
    %1854 = vmatprep.mubr.bf16.mxu0 0
    %1855 = vmatmul.mubr.bf16.gmra.mrb[0].mxu0 %v1683
    %v1856 = vpop.f32.mrb[0].mxu0
    %v1857 = vadd.f32 %v1491, %v1856
    %v1858 = vpop.f32.mrb[0].mxu0
    %v1859 = vpop.f32.mrb[0].mxu0
    %v1860 = vadd.f32 %v1491, %v1859
    %v1861 = vpop.f32.mrb[0].mxu0
    %1862 = vmatprep.mubr.bf16.mxu0 0
    %1863 = vmatmul.mubr.bf16.gmra.mrb[0].mxu0 %v1686
    %v1864 = vpop.f32.mrb[0].mxu0
    %v1865 = vadd.f32 %v1491, %v1864
    %v1866 = vpop.f32.mrb[0].mxu0
    %v1867 = vpop.f32.mrb[0].mxu0
    %v1868 = vadd.f32 %v1491, %v1867
    %v1869 = vpop.f32.mrb[0].mxu0
    %1870 = vmatprep.mubr.bf16.mxu0 0
    %1871 = vmatmul.mubr.bf16.gmra.mrb[0].mxu0 %v1689
    %v1872 = vpop.f32.mrb[0].mxu0
    %v1873 = vadd.f32 %v1491, %v1872
    %v1874 = vpop.f32.mrb[0].mxu0
    %v1875 = vpop.f32.mrb[0].mxu0
    %v1876 = vadd.f32 %v1491, %v1875
    %v1877 = vpop.f32.mrb[0].mxu0
    %1878 = vmatprep.mubr.bf16.mxu0 0
    %1879 = vmatmul.mubr.bf16.gmra.mrb[0].mxu0 %v1692
    %v1880 = vpop.f32.mrb[0].mxu0
    %v1881 = vadd.f32 %v1491, %v1880
    %v1882 = vpop.f32.mrb[0].mxu0
    %v1883 = vpop.f32.mrb[0].mxu0
    %v1884 = vadd.f32 %v1491, %v1883
    %v1885 = vpop.f32.mrb[0].mxu0
    %1886 = vmatprep.mubr.bf16.mxu0 0
    %1887 = vmatmul.mubr.bf16.gmra.mrb[0].mxu0 %v1695
    %v1888 = vpop.f32.mrb[0].mxu0
    %v1889 = vadd.f32 %v1491, %v1888
    %v1890 = vpop.f32.mrb[0].mxu0
    %v1891 = vpop.f32.mrb[0].mxu0
    %v1892 = vadd.f32 %v1491, %v1891
    %v1893 = vpop.f32.mrb[0].mxu0
    %1894 = vmatprep.mubr.bf16.mxu0 0
    %1895 = vmatmul.mubr.bf16.gmra.mrb[0].mxu0 %v1698
    %v1896 = vpop.f32.mrb[0].mxu0
    %v1897 = vadd.f32 %v1491, %v1896
    %v1898 = vpop.f32.mrb[0].mxu0
    %v1899 = vpop.f32.mrb[0].mxu0
    %v1900 = vadd.f32 %v1491, %v1899
    %v1901 = vpop.f32.mrb[0].mxu0
    %1902 = vmatprep.mubr.bf16.mxu0 0
    %1903 = vmatmul.mubr.bf16.gmra.mrb[0].mxu0 %v1701
    %v1904 = vpop.f32.mrb[0].mxu0
    %v1905 = vadd.f32 %v1491, %v1904
    %v1906 = vpop.f32.mrb[0].mxu0
    %v1907 = vpop.f32.mrb[0].mxu0
    %v1908 = vadd.f32 %v1491, %v1907
    %v1909 = vpop.f32.mrb[0].mxu0
    %1910 = vmatprep.mubr.bf16.mxu0 0
    %1911 = vmatmul.mubr.bf16.gmra.mrb[0].mxu0 %v1704
    %v1912 = vpop.f32.mrb[0].mxu0
    %v1913 = vadd.f32 %v1491, %v1912
    %v1914 = vpop.f32.mrb[0].mxu0
    %v1915 = vpop.f32.mrb[0].mxu0
    %v1916 = vadd.f32 %v1491, %v1915
    %v1917 = vpop.f32.mrb[0].mxu0
    %1918 = vmatprep.mubr.bf16.mxu0 0
    %1919 = vmatmul.mubr.bf16.gmra.mrb[0].mxu0 %v1707
    %v1920 = vpop.f32.mrb[0].mxu0
    %v1921 = vadd.f32 %v1491, %v1920
    %v1922 = vpop.f32.mrb[0].mxu0
    %v1923 = vpop.f32.mrb[0].mxu0
    %v1924 = vadd.f32 %v1491, %v1923
    %v1925 = vpop.f32.mrb[0].mxu0
    %1926 = vmatprep.mubr.bf16.mxu0 0
    %1927 = vmatmul.mubr.bf16.gmra.mrb[0].mxu0 %v1710
    %v1928 = vpop.f32.mrb[0].mxu0
    %v1929 = vadd.f32 %v1491, %v1928
    %v1930 = vpop.f32.mrb[0].mxu0
    %v1931 = vpop.f32.mrb[0].mxu0
    %v1932 = vadd.f32 %v1491, %v1931
    %v1933 = vpop.f32.mrb[0].mxu0
    %1934 = vmatprep.mubr.bf16.mxu0 0
    %1935 = vmatmul.mubr.bf16.gmra.mrb[0].mxu0 %v1713
    %v1936 = vpop.f32.mrb[0].mxu0
    %v1937 = vadd.f32 %v1491, %v1936
    %v1938 = vpop.f32.mrb[0].mxu0
    %v1939 = vpop.f32.mrb[0].mxu0
    %v1940 = vadd.f32 %v1491, %v1939
    %v1941 = vpop.f32.mrb[0].mxu0
    %1942 = vmatprep.mubr.bf16.mxu0 0
    %1943 = vmatmul.mubr.bf16.gmra.mrb[0].mxu0 %v1716
    %v1944 = vpop.f32.mrb[0].mxu0
    %v1945 = vadd.f32 %v1491, %v1944
    %v1946 = vpop.f32.mrb[0].mxu0
    %v1947 = vpop.f32.mrb[0].mxu0
    %v1948 = vadd.f32 %v1491, %v1947
    %v1949 = vpop.f32.mrb[0].mxu0
    %1950 = vdwg.mxu0
    %vm1951 = vcmp.gt.f32.partialorder %v1753, 0.0
    %vm1952 = vcmp.gt.f32.partialorder %v1756, 0.0
    %vm1953 = vcmp.gt.f32.partialorder %v1761, 0.0
    %vm1954 = vcmp.gt.f32.partialorder %v1764, 0.0
    %vm1955 = vcmp.gt.f32.partialorder %v1769, 0.0
    %vm1956 = vcmp.gt.f32.partialorder %v1772, 0.0
    %vm1957 = vcmp.gt.f32.partialorder %v1777, 0.0
    %vm1958 = vcmp.gt.f32.partialorder %v1780, 0.0
    %vm1959 = vcmp.gt.f32.partialorder %v1785, 0.0
    %vm1960 = vcmp.gt.f32.partialorder %v1788, 0.0
    %vm1961 = vcmp.gt.f32.partialorder %v1793, 0.0
    %vm1962 = vcmp.gt.f32.partialorder %v1796, 0.0
    %vm1963 = vcmp.gt.f32.partialorder %v1801, 0.0
    %vm1964 = vcmp.gt.f32.partialorder %v1804, 0.0
    %vm1965 = vcmp.gt.f32.partialorder %v1809, 0.0
    %vm1966 = vcmp.gt.f32.partialorder %v1812, 0.0
    %vm1967 = vcmp.gt.f32.partialorder %v1817, 0.0
    %vm1968 = vcmp.gt.f32.partialorder %v1820, 0.0
    %vm1969 = vcmp.gt.f32.partialorder %v1825, 0.0
    %vm1970 = vcmp.gt.f32.partialorder %v1828, 0.0
    %vm1971 = vcmp.gt.f32.partialorder %v1833, 0.0
    %vm1972 = vcmp.gt.f32.partialorder %v1836, 0.0
    %vm1973 = vcmp.gt.f32.partialorder %v1841, 0.0
    %vm1974 = vcmp.gt.f32.partialorder %v1844, 0.0
    %vm1975 = vcmp.gt.f32.partialorder %v1849, 0.0
    %vm1976 = vcmp.gt.f32.partialorder %v1852, 0.0
    %vm1977 = vcmp.gt.f32.partialorder %v1857, 0.0
    %vm1978 = vcmp.gt.f32.partialorder %v1860, 0.0
    %vm1979 = vcmp.gt.f32.partialorder %v1865, 0.0
    %vm1980 = vcmp.gt.f32.partialorder %v1868, 0.0
    %vm1981 = vcmp.gt.f32.partialorder %v1873, 0.0
    %vm1982 = vcmp.gt.f32.partialorder %v1876, 0.0
    %vm1983 = vcmp.gt.f32.partialorder %v1881, 0.0
    %vm1984 = vcmp.gt.f32.partialorder %v1884, 0.0
    %vm1985 = vcmp.gt.f32.partialorder %v1889, 0.0
    %vm1986 = vcmp.gt.f32.partialorder %v1892, 0.0
    %vm1987 = vcmp.gt.f32.partialorder %v1897, 0.0
    %vm1988 = vcmp.gt.f32.partialorder %v1900, 0.0
    %vm1989 = vcmp.gt.f32.partialorder %v1905, 0.0
    %vm1990 = vcmp.gt.f32.partialorder %v1908, 0.0
    %vm1991 = vcmp.gt.f32.partialorder %v1913, 0.0
    %vm1992 = vcmp.gt.f32.partialorder %v1916, 0.0
    %vm1993 = vcmp.gt.f32.partialorder %v1921, 0.0
    %vm1994 = vcmp.gt.f32.partialorder %v1924, 0.0
    %vm1995 = vcmp.gt.f32.partialorder %v1929, 0.0
    %vm1996 = vcmp.gt.f32.partialorder %v1932, 0.0
    %vm1997 = vcmp.gt.f32.partialorder %v1937, 0.0
    %vm1998 = vcmp.gt.f32.partialorder %v1940, 0.0
    %vm1999 = vcmp.gt.f32.partialorder %v1945, 0.0
    %vm2000 = vcmp.gt.f32.partialorder %v1948, 0.0
    %v2001 = vmul.f32 %v1753, 0.01
    %v2002 = vmul.f32 %v1756, 0.01
    %v2003 = vmul.f32 %v1761, 0.01
    %v2004 = vmul.f32 %v1764, 0.01
    %v2005 = vmul.f32 %v1769, 0.01
    %v2006 = vmul.f32 %v1772, 0.01
    %v2007 = vmul.f32 %v1777, 0.01
    %v2008 = vmul.f32 %v1780, 0.01
    %v2009 = vmul.f32 %v1785, 0.01
    %v2010 = vmul.f32 %v1788, 0.01
    %v2011 = vmul.f32 %v1793, 0.01
    %v2012 = vmul.f32 %v1796, 0.01
    %v2013 = vmul.f32 %v1801, 0.01
    %v2014 = vmul.f32 %v1804, 0.01
    %v2015 = vmul.f32 %v1809, 0.01
    %v2016 = vmul.f32 %v1812, 0.01
    %v2017 = vmul.f32 %v1817, 0.01
    %v2018 = vmul.f32 %v1820, 0.01
    %v2019 = vmul.f32 %v1825, 0.01
    %v2020 = vmul.f32 %v1828, 0.01
    %v2021 = vmul.f32 %v1833, 0.01
    %v2022 = vmul.f32 %v1836, 0.01
    %v2023 = vmul.f32 %v1841, 0.01
    %v2024 = vmul.f32 %v1844, 0.01
    %v2025 = vmul.f32 %v1849, 0.01
    %v2026 = vmul.f32 %v1852, 0.01
    %v2027 = vmul.f32 %v1857, 0.01
    %v2028 = vmul.f32 %v1860, 0.01
    %v2029 = vmul.f32 %v1865, 0.01
    %v2030 = vmul.f32 %v1868, 0.01
    %v2031 = vmul.f32 %v1873, 0.01
    %v2032 = vmul.f32 %v1876, 0.01
    %v2033 = vmul.f32 %v1881, 0.01
    %v2034 = vmul.f32 %v1884, 0.01
    %v2035 = vmul.f32 %v1889, 0.01
    %v2036 = vmul.f32 %v1892, 0.01
    %v2037 = vmul.f32 %v1897, 0.01
    %v2038 = vmul.f32 %v1900, 0.01
    %v2039 = vmul.f32 %v1905, 0.01
    %v2040 = vmul.f32 %v1908, 0.01
    %v2041 = vmul.f32 %v1913, 0.01
    %v2042 = vmul.f32 %v1916, 0.01
    %v2043 = vmul.f32 %v1921, 0.01
    %v2044 = vmul.f32 %v1924, 0.01
    %v2045 = vmul.f32 %v1929, 0.01
    %v2046 = vmul.f32 %v1932, 0.01
    %v2047 = vmul.f32 %v1937, 0.01
    %v2048 = vmul.f32 %v1940, 0.01
    %v2049 = vmul.f32 %v1945, 0.01
    %v2050 = vmul.f32 %v1948, 0.01
    %v2051 = vsel %vm1951, %v1753, %v2001
    %v2052 = vsel %vm1952, %v1756, %v2002
    %v2053 = vsel %vm1953, %v1761, %v2003
    %v2054 = vsel %vm1954, %v1764, %v2004
    %v2055 = vsel %vm1955, %v1769, %v2005
    %v2056 = vsel %vm1956, %v1772, %v2006
    %v2057 = vsel %vm1957, %v1777, %v2007
    %v2058 = vsel %vm1958, %v1780, %v2008
    %v2059 = vsel %vm1959, %v1785, %v2009
    %v2060 = vsel %vm1960, %v1788, %v2010
    %v2061 = vsel %vm1961, %v1793, %v2011
    %v2062 = vsel %vm1962, %v1796, %v2012
    %v2063 = vsel %vm1963, %v1801, %v2013
    %v2064 = vsel %vm1964, %v1804, %v2014
    %v2065 = vsel %vm1965, %v1809, %v2015
    %v2066 = vsel %vm1966, %v1812, %v2016
    %v2067 = vsel %vm1967, %v1817, %v2017
    %v2068 = vsel %vm1968, %v1820, %v2018
    %v2069 = vsel %vm1969, %v1825, %v2019
    %v2070 = vsel %vm1970, %v1828, %v2020
    %v2071 = vsel %vm1971, %v1833, %v2021
    %v2072 = vsel %vm1972, %v1836, %v2022
    %v2073 = vsel %vm1973, %v1841, %v2023
    %v2074 = vsel %vm1974, %v1844, %v2024
    %v2075 = vsel %vm1975, %v1849, %v2025
    %v2076 = vsel %vm1976, %v1852, %v2026
    %v2077 = vsel %vm1977, %v1857, %v2027
    %v2078 = vsel %vm1978, %v1860, %v2028
    %v2079 = vsel %vm1979, %v1865, %v2029
    %v2080 = vsel %vm1980, %v1868, %v2030
    %v2081 = vsel %vm1981, %v1873, %v2031
    %v2082 = vsel %vm1982, %v1876, %v2032
    %v2083 = vsel %vm1983, %v1881, %v2033
    %v2084 = vsel %vm1984, %v1884, %v2034
    %v2085 = vsel %vm1985, %v1889, %v2035
    %v2086 = vsel %vm1986, %v1892, %v2036
    %v2087 = vsel %vm1987, %v1897, %v2037
    %v2088 = vsel %vm1988, %v1900, %v2038
    %v2089 = vsel %vm1989, %v1905, %v2039
    %v2090 = vsel %vm1990, %v1908, %v2040
    %v2091 = vsel %vm1991, %v1913, %v2041
    %v2092 = vsel %vm1992, %v1916, %v2042
    %v2093 = vsel %vm1993, %v1921, %v2043
    %v2094 = vsel %vm1994, %v1924, %v2044
    %v2095 = vsel %vm1995, %v1929, %v2045
    %v2096 = vsel %vm1996, %v1932, %v2046
    %v2097 = vsel %vm1997, %v1937, %v2047
    %v2098 = vsel %vm1998, %v1940, %v2048
    %v2099 = vsel %vm1999, %v1945, %v2049
    %v2100 = vsel %vm2000, %v1948, %v2050
    %v2101 = vpack.c.bf16 %v2052, %v2051
    %v2102 = vpack.c.bf16 %v2054, %v2053
    %v2103 = vpack.c.bf16 %v2056, %v2055
    %v2104 = vpack.c.bf16 %v2058, %v2057
    %v2105 = vpack.c.bf16 %v2060, %v2059
    %v2106 = vpack.c.bf16 %v2062, %v2061
    %v2107 = vpack.c.bf16 %v2064, %v2063
    %v2108 = vpack.c.bf16 %v2066, %v2065
    %v2109 = vpack.c.bf16 %v2068, %v2067
    %v2110 = vpack.c.bf16 %v2070, %v2069
    %v2111 = vpack.c.bf16 %v2072, %v2071
    %v2112 = vpack.c.bf16 %v2074, %v2073
    %v2113 = vpack.c.bf16 %v2076, %v2075
    %v2114 = vpack.c.bf16 %v2078, %v2077
    %v2115 = vpack.c.bf16 %v2080, %v2079
    %v2116 = vpack.c.bf16 %v2082, %v2081
    %v2117 = vpack.c.bf16 %v2084, %v2083
    %v2118 = vpack.c.bf16 %v2086, %v2085
    %v2119 = vpack.c.bf16 %v2088, %v2087
    %v2120 = vpack.c.bf16 %v2090, %v2089
    %v2121 = vpack.c.bf16 %v2092, %v2091
    %v2122 = vpack.c.bf16 %v2094, %v2093
    %v2123 = vpack.c.bf16 %v2096, %v2095
    %v2124 = vpack.c.bf16 %v2098, %v2097
    %v2125 = vpack.c.bf16 %v2100, %v2099
    %v2126 = vld [vmem:[#allocation10] sm:$0xff]
    %v2127 = vld [vmem:[#allocation10 + $0x8] sm:$0xff]
    %v2128 = vld [vmem:[#allocation10 + $0x10] sm:$0xff]
    %v2129 = vld [vmem:[#allocation10 + $0x18] sm:$0xff]
    %v2130 = vld [vmem:[#allocation10 + $0x20] sm:$0xff]
    %v2131 = vld [vmem:[#allocation10 + $0x28] sm:$0xff]
    %v2132 = vld [vmem:[#allocation10 + $0x30] sm:$0xff]
    %v2133 = vld [vmem:[#allocation10 + $0x38] sm:$0xff]
    %v2134 = vld [vmem:[#allocation10 + $0x40] sm:$0xff]
    %v2135 = vld [vmem:[#allocation10 + $0x48] sm:$0xff]
    %v2136 = vld [vmem:[#allocation10 + $0x50] sm:$0xff]
    %v2137 = vld [vmem:[#allocation10 + $0x58] sm:$0xff]
    %v2138 = vld [vmem:[#allocation10 + $0x60] sm:$0xff]
    %v2139 = vld [vmem:[#allocation10 + $0x68] sm:$0xff]
    %v2140 = vld [vmem:[#allocation10 + $0x70] sm:$0xff]
    %v2141 = vld [vmem:[#allocation10 + $0x78] sm:$0xff]
    %v2142 = vld [vmem:[#allocation11] sm:$0x3]
    %v2144 = vlaneseq
    %v2145 = vshrl.u32 %v2144, 7
    %v2146 = vsub.s32 0, %v2145
    %v2147 = vrot.slane %v2142, %v2146
    %v2148 = vlaneseq
    %v2149 = vshrl.u32 %v2148, 7
    %v2150 = vsub.s32 1, %v2149
    %v2151 = vrot.slane %v2142, %v2150
    %v2170 = vunpack.c.l.b16 %v2126
    %v2171 = vunpack.c.h.b16 %v2126
    %v2172 = vunpack.c.l.b16 %v2127
    %v2173 = vunpack.c.h.b16 %v2127
    %v2174 = vunpack.c.l.b16 %v2128
    %v2175 = vunpack.c.h.b16 %v2128
    %v2176 = vunpack.c.l.b16 %v2129
    %v2177 = vunpack.c.h.b16 %v2129
    %v2178 = vunpack.c.l.b16 %v2130
    %v2179 = vunpack.c.h.b16 %v2130
    %v2180 = vunpack.c.l.b16 %v2131
    %v2181 = vunpack.c.h.b16 %v2131
    %v2182 = vunpack.c.l.b16 %v2132
    %v2183 = vunpack.c.h.b16 %v2132
    %v2184 = vunpack.c.l.b16 %v2133
    %v2185 = vunpack.c.h.b16 %v2133
    %v2186 = vunpack.c.l.b16 %v2134
    %v2187 = vunpack.c.h.b16 %v2134
    %v2188 = vunpack.c.l.b16 %v2135
    %v2189 = vunpack.c.h.b16 %v2135
    %v2190 = vunpack.c.l.b16 %v2136
    %v2191 = vunpack.c.h.b16 %v2136
    %v2192 = vunpack.c.l.b16 %v2137
    %v2193 = vunpack.c.h.b16 %v2137
    %v2194 = vunpack.c.l.b16 %v2138
    %v2195 = vunpack.c.h.b16 %v2138
    %v2196 = vunpack.c.l.b16 %v2139
    %v2197 = vunpack.c.h.b16 %v2139
    %v2198 = vunpack.c.l.b16 %v2140
    %v2199 = vunpack.c.h.b16 %v2140
    %v2200 = vunpack.c.l.b16 %v2141
    %v2201 = vunpack.c.h.b16 %v2141
    %v2202 = vpack.c.b16 %v2172, %v2170
    %v2203 = vpack.c.b16 %v2173, %v2171
    %v2204 = vpack.c.b16 %v2176, %v2174
    %v2205 = vpack.c.b16 %v2177, %v2175
    %v2206 = vpack.c.b16 %v2180, %v2178
    %v2207 = vpack.c.b16 %v2181, %v2179
    %v2208 = vpack.c.b16 %v2184, %v2182
    %v2209 = vpack.c.b16 %v2185, %v2183
    %v2210 = vpack.c.b16 %v2188, %v2186
    %v2211 = vpack.c.b16 %v2189, %v2187
    %v2212 = vpack.c.b16 %v2192, %v2190
    %v2213 = vpack.c.b16 %v2193, %v2191
    %v2214 = vpack.c.b16 %v2196, %v2194
    %v2215 = vpack.c.b16 %v2197, %v2195
    %v2216 = vpack.c.b16 %v2200, %v2198
    %v2217 = vpack.c.b16 %v2201, %v2199
    %2234 = vmatprep.subr.bf16.mxu0 %v2203
    %2235 = vmatpush1.bf16.msra.mxu0 %v2202
    %2236 = vmatprep.subr.bf16.mxu0 %v2205
    %2237 = vmatpush1.bf16.msra.mxu0 %v2204
    %2238 = vmatprep.subr.bf16.mxu0 %v2207
    %2239 = vmatpush1.bf16.msra.mxu0 %v2206
    %2240 = vmatprep.subr.bf16.mxu0 %v2209
    %2241 = vmatpush1.bf16.msra.mxu0 %v2208
    %2242 = vmatprep.subr.bf16.mxu0 %v2211
    %2243 = vmatpush1.bf16.msra.mxu0 %v2210
    %2244 = vmatprep.subr.bf16.mxu0 %v2213
    %2245 = vmatpush1.bf16.msra.mxu0 %v2212
    %2246 = vmatprep.subr.bf16.mxu0 %v2215
    %2247 = vmatpush1.bf16.msra.mxu0 %v2214
    %2248 = vmatprep.subr.bf16.mxu0 %v2217
    %2249 = vmatpush1.bf16.msra.mxu0 %v2216
    %2250 = vmatprep.subr.bf16.mxu0 0
    %2251 = vmatpush1.bf16.msra.mxu0 0
    %2252 = vmatprep.subr.bf16.mxu0 0
    %2253 = vmatpush1.bf16.msra.mxu0 0
    %2254 = vmatprep.subr.bf16.mxu0 0
    %2255 = vmatpush1.bf16.msra.mxu0 0
    %2256 = vmatprep.subr.bf16.mxu0 0
    %2257 = vmatpush1.bf16.msra.mxu0 0
    %2258 = vmatprep.subr.bf16.mxu0 0
    %2259 = vmatpush1.bf16.msra.mxu0 0
    %2260 = vmatprep.subr.bf16.mxu0 0
    %2261 = vmatpush1.bf16.msra.mxu0 0
    %2262 = vmatprep.subr.bf16.mxu0 0
    %2263 = vmatpush1.bf16.msra.mxu0 0
    %2264 = vmatprep.subr.bf16.mxu0 0
    %2265 = vmatpush1.bf16.msra.mxu0 0
    %2266 = vmatprep.mubr.bf16.mxu0 0
    %2267 = vmatmul.mubr.bf16.gmra.mrb[0].mxu0 %v2101
    %v2268 = vpop.f32.mrb[0].mxu0
    %v2269 = vadd.f32 %v2147, %v2268
    %v2270 = vpop.f32.mrb[0].mxu0
    %v2271 = vadd.f32 %v2151, %v2270
    %v2272 = vpop.f32.mrb[0].mxu0
    %v2273 = vadd.f32 %v2147, %v2272
    %v2274 = vpop.f32.mrb[0].mxu0
    %v2275 = vadd.f32 %v2151, %v2274
    %2276 = vmatprep.mubr.bf16.mxu0 0
    %2277 = vmatmul.mubr.bf16.gmra.mrb[0].mxu0 %v2102
    %v2278 = vpop.f32.mrb[0].mxu0
    %v2279 = vadd.f32 %v2147, %v2278
    %v2280 = vpop.f32.mrb[0].mxu0
    %v2281 = vadd.f32 %v2151, %v2280
    %v2282 = vpop.f32.mrb[0].mxu0
    %v2283 = vadd.f32 %v2147, %v2282
    %v2284 = vpop.f32.mrb[0].mxu0
    %v2285 = vadd.f32 %v2151, %v2284
    %2286 = vmatprep.mubr.bf16.mxu0 0
    %2287 = vmatmul.mubr.bf16.gmra.mrb[0].mxu0 %v2103
    %v2288 = vpop.f32.mrb[0].mxu0
    %v2289 = vadd.f32 %v2147, %v2288
    %v2290 = vpop.f32.mrb[0].mxu0
    %v2291 = vadd.f32 %v2151, %v2290
    %v2292 = vpop.f32.mrb[0].mxu0
    %v2293 = vadd.f32 %v2147, %v2292
    %v2294 = vpop.f32.mrb[0].mxu0
    %v2295 = vadd.f32 %v2151, %v2294
    %2296 = vmatprep.mubr.bf16.mxu0 0
    %2297 = vmatmul.mubr.bf16.gmra.mrb[0].mxu0 %v2104
    %v2298 = vpop.f32.mrb[0].mxu0
    %v2299 = vadd.f32 %v2147, %v2298
    %v2300 = vpop.f32.mrb[0].mxu0
    %v2301 = vadd.f32 %v2151, %v2300
    %v2302 = vpop.f32.mrb[0].mxu0
    %v2303 = vadd.f32 %v2147, %v2302
    %v2304 = vpop.f32.mrb[0].mxu0
    %v2305 = vadd.f32 %v2151, %v2304
    %2306 = vmatprep.mubr.bf16.mxu0 0
    %2307 = vmatmul.mubr.bf16.gmra.mrb[0].mxu0 %v2105
    %v2308 = vpop.f32.mrb[0].mxu0
    %v2309 = vadd.f32 %v2147, %v2308
    %v2310 = vpop.f32.mrb[0].mxu0
    %v2311 = vadd.f32 %v2151, %v2310
    %v2312 = vpop.f32.mrb[0].mxu0
    %v2313 = vadd.f32 %v2147, %v2312
    %v2314 = vpop.f32.mrb[0].mxu0
    %v2315 = vadd.f32 %v2151, %v2314
    %2316 = vmatprep.mubr.bf16.mxu0 0
    %2317 = vmatmul.mubr.bf16.gmra.mrb[0].mxu0 %v2106
    %v2318 = vpop.f32.mrb[0].mxu0
    %v2319 = vadd.f32 %v2147, %v2318
    %v2320 = vpop.f32.mrb[0].mxu0
    %v2321 = vadd.f32 %v2151, %v2320
    %v2322 = vpop.f32.mrb[0].mxu0
    %v2323 = vadd.f32 %v2147, %v2322
    %v2324 = vpop.f32.mrb[0].mxu0
    %v2325 = vadd.f32 %v2151, %v2324
    %2326 = vmatprep.mubr.bf16.mxu0 0
    %2327 = vmatmul.mubr.bf16.gmra.mrb[0].mxu0 %v2107
    %v2328 = vpop.f32.mrb[0].mxu0
    %v2329 = vadd.f32 %v2147, %v2328
    %v2330 = vpop.f32.mrb[0].mxu0
    %v2331 = vadd.f32 %v2151, %v2330
    %v2332 = vpop.f32.mrb[0].mxu0
    %v2333 = vadd.f32 %v2147, %v2332
    %v2334 = vpop.f32.mrb[0].mxu0
    %v2335 = vadd.f32 %v2151, %v2334
    %2336 = vmatprep.mubr.bf16.mxu0 0
    %2337 = vmatmul.mubr.bf16.gmra.mrb[0].mxu0 %v2108
    %v2338 = vpop.f32.mrb[0].mxu0
    %v2339 = vadd.f32 %v2147, %v2338
    %v2340 = vpop.f32.mrb[0].mxu0
    %v2341 = vadd.f32 %v2151, %v2340
    %v2342 = vpop.f32.mrb[0].mxu0
    %v2343 = vadd.f32 %v2147, %v2342
    %v2344 = vpop.f32.mrb[0].mxu0
    %v2345 = vadd.f32 %v2151, %v2344
    %2346 = vmatprep.mubr.bf16.mxu0 0
    %2347 = vmatmul.mubr.bf16.gmra.mrb[0].mxu0 %v2109
    %v2348 = vpop.f32.mrb[0].mxu0
    %v2349 = vadd.f32 %v2147, %v2348
    %v2350 = vpop.f32.mrb[0].mxu0
    %v2351 = vadd.f32 %v2151, %v2350
    %v2352 = vpop.f32.mrb[0].mxu0
    %v2353 = vadd.f32 %v2147, %v2352
    %v2354 = vpop.f32.mrb[0].mxu0
    %v2355 = vadd.f32 %v2151, %v2354
    %2356 = vmatprep.mubr.bf16.mxu0 0
    %2357 = vmatmul.mubr.bf16.gmra.mrb[0].mxu0 %v2110
    %v2358 = vpop.f32.mrb[0].mxu0
    %v2359 = vadd.f32 %v2147, %v2358
    %v2360 = vpop.f32.mrb[0].mxu0
    %v2361 = vadd.f32 %v2151, %v2360
    %v2362 = vpop.f32.mrb[0].mxu0
    %v2363 = vadd.f32 %v2147, %v2362
    %v2364 = vpop.f32.mrb[0].mxu0
    %v2365 = vadd.f32 %v2151, %v2364
    %2366 = vmatprep.mubr.bf16.mxu0 0
    %2367 = vmatmul.mubr.bf16.gmra.mrb[0].mxu0 %v2111
    %v2368 = vpop.f32.mrb[0].mxu0
    %v2369 = vadd.f32 %v2147, %v2368
    %v2370 = vpop.f32.mrb[0].mxu0
    %v2371 = vadd.f32 %v2151, %v2370
    %v2372 = vpop.f32.mrb[0].mxu0
    %v2373 = vadd.f32 %v2147, %v2372
    %v2374 = vpop.f32.mrb[0].mxu0
    %v2375 = vadd.f32 %v2151, %v2374
    %2376 = vmatprep.mubr.bf16.mxu0 0
    %2377 = vmatmul.mubr.bf16.gmra.mrb[0].mxu0 %v2112
    %v2378 = vpop.f32.mrb[0].mxu0
    %v2379 = vadd.f32 %v2147, %v2378
    %v2380 = vpop.f32.mrb[0].mxu0
    %v2381 = vadd.f32 %v2151, %v2380
    %v2382 = vpop.f32.mrb[0].mxu0
    %v2383 = vadd.f32 %v2147, %v2382
    %v2384 = vpop.f32.mrb[0].mxu0
    %v2385 = vadd.f32 %v2151, %v2384
    %2386 = vmatprep.mubr.bf16.mxu0 0
    %2387 = vmatmul.mubr.bf16.gmra.mrb[0].mxu0 %v2113
    %v2388 = vpop.f32.mrb[0].mxu0
    %v2389 = vadd.f32 %v2147, %v2388
    %v2390 = vpop.f32.mrb[0].mxu0
    %v2391 = vadd.f32 %v2151, %v2390
    %v2392 = vpop.f32.mrb[0].mxu0
    %v2393 = vadd.f32 %v2147, %v2392
    %v2394 = vpop.f32.mrb[0].mxu0
    %v2395 = vadd.f32 %v2151, %v2394
    %2396 = vmatprep.mubr.bf16.mxu0 0
    %2397 = vmatmul.mubr.bf16.gmra.mrb[0].mxu0 %v2114
    %v2398 = vpop.f32.mrb[0].mxu0
    %v2399 = vadd.f32 %v2147, %v2398
    %v2400 = vpop.f32.mrb[0].mxu0
    %v2401 = vadd.f32 %v2151, %v2400
    %v2402 = vpop.f32.mrb[0].mxu0
    %v2403 = vadd.f32 %v2147, %v2402
    %v2404 = vpop.f32.mrb[0].mxu0
    %v2405 = vadd.f32 %v2151, %v2404
    %2406 = vmatprep.mubr.bf16.mxu0 0
    %2407 = vmatmul.mubr.bf16.gmra.mrb[0].mxu0 %v2115
    %v2408 = vpop.f32.mrb[0].mxu0
    %v2409 = vadd.f32 %v2147, %v2408
    %v2410 = vpop.f32.mrb[0].mxu0
    %v2411 = vadd.f32 %v2151, %v2410
    %v2412 = vpop.f32.mrb[0].mxu0
    %v2413 = vadd.f32 %v2147, %v2412
    %v2414 = vpop.f32.mrb[0].mxu0
    %v2415 = vadd.f32 %v2151, %v2414
    %2416 = vmatprep.mubr.bf16.mxu0 0
    %2417 = vmatmul.mubr.bf16.gmra.mrb[0].mxu0 %v2116
    %v2418 = vpop.f32.mrb[0].mxu0
    %v2419 = vadd.f32 %v2147, %v2418
    %v2420 = vpop.f32.mrb[0].mxu0
    %v2421 = vadd.f32 %v2151, %v2420
    %v2422 = vpop.f32.mrb[0].mxu0
    %v2423 = vadd.f32 %v2147, %v2422
    %v2424 = vpop.f32.mrb[0].mxu0
    %v2425 = vadd.f32 %v2151, %v2424
    %2426 = vmatprep.mubr.bf16.mxu0 0
    %2427 = vmatmul.mubr.bf16.gmra.mrb[0].mxu0 %v2117
    %v2428 = vpop.f32.mrb[0].mxu0
    %v2429 = vadd.f32 %v2147, %v2428
    %v2430 = vpop.f32.mrb[0].mxu0
    %v2431 = vadd.f32 %v2151, %v2430
    %v2432 = vpop.f32.mrb[0].mxu0
    %v2433 = vadd.f32 %v2147, %v2432
    %v2434 = vpop.f32.mrb[0].mxu0
    %v2435 = vadd.f32 %v2151, %v2434
    %2436 = vmatprep.mubr.bf16.mxu0 0
    %2437 = vmatmul.mubr.bf16.gmra.mrb[0].mxu0 %v2118
    %v2438 = vpop.f32.mrb[0].mxu0
    %v2439 = vadd.f32 %v2147, %v2438
    %v2440 = vpop.f32.mrb[0].mxu0
    %v2441 = vadd.f32 %v2151, %v2440
    %v2442 = vpop.f32.mrb[0].mxu0
    %v2443 = vadd.f32 %v2147, %v2442
    %v2444 = vpop.f32.mrb[0].mxu0
    %v2445 = vadd.f32 %v2151, %v2444
    %2446 = vmatprep.mubr.bf16.mxu0 0
    %2447 = vmatmul.mubr.bf16.gmra.mrb[0].mxu0 %v2119
    %v2448 = vpop.f32.mrb[0].mxu0
    %v2449 = vadd.f32 %v2147, %v2448
    %v2450 = vpop.f32.mrb[0].mxu0
    %v2451 = vadd.f32 %v2151, %v2450
    %v2452 = vpop.f32.mrb[0].mxu0
    %v2453 = vadd.f32 %v2147, %v2452
    %v2454 = vpop.f32.mrb[0].mxu0
    %v2455 = vadd.f32 %v2151, %v2454
    %2456 = vmatprep.mubr.bf16.mxu0 0
    %2457 = vmatmul.mubr.bf16.gmra.mrb[0].mxu0 %v2120
    %v2458 = vpop.f32.mrb[0].mxu0
    %v2459 = vadd.f32 %v2147, %v2458
    %v2460 = vpop.f32.mrb[0].mxu0
    %v2461 = vadd.f32 %v2151, %v2460
    %v2462 = vpop.f32.mrb[0].mxu0
    %v2463 = vadd.f32 %v2147, %v2462
    %v2464 = vpop.f32.mrb[0].mxu0
    %v2465 = vadd.f32 %v2151, %v2464
    %2466 = vmatprep.mubr.bf16.mxu0 0
    %2467 = vmatmul.mubr.bf16.gmra.mrb[0].mxu0 %v2121
    %v2468 = vpop.f32.mrb[0].mxu0
    %v2469 = vadd.f32 %v2147, %v2468
    %v2470 = vpop.f32.mrb[0].mxu0
    %v2471 = vadd.f32 %v2151, %v2470
    %v2472 = vpop.f32.mrb[0].mxu0
    %v2473 = vadd.f32 %v2147, %v2472
    %v2474 = vpop.f32.mrb[0].mxu0
    %v2475 = vadd.f32 %v2151, %v2474
    %2476 = vmatprep.mubr.bf16.mxu0 0
    %2477 = vmatmul.mubr.bf16.gmra.mrb[0].mxu0 %v2122
    %v2478 = vpop.f32.mrb[0].mxu0
    %v2479 = vadd.f32 %v2147, %v2478
    %v2480 = vpop.f32.mrb[0].mxu0
    %v2481 = vadd.f32 %v2151, %v2480
    %v2482 = vpop.f32.mrb[0].mxu0
    %v2483 = vadd.f32 %v2147, %v2482
    %v2484 = vpop.f32.mrb[0].mxu0
    %v2485 = vadd.f32 %v2151, %v2484
    %2486 = vmatprep.mubr.bf16.mxu0 0
    %2487 = vmatmul.mubr.bf16.gmra.mrb[0].mxu0 %v2123
    %v2488 = vpop.f32.mrb[0].mxu0
    %v2489 = vadd.f32 %v2147, %v2488
    %v2490 = vpop.f32.mrb[0].mxu0
    %v2491 = vadd.f32 %v2151, %v2490
    %v2492 = vpop.f32.mrb[0].mxu0
    %v2493 = vadd.f32 %v2147, %v2492
    %v2494 = vpop.f32.mrb[0].mxu0
    %v2495 = vadd.f32 %v2151, %v2494
    %2496 = vmatprep.mubr.bf16.mxu0 0
    %2497 = vmatmul.mubr.bf16.gmra.mrb[0].mxu0 %v2124
    %v2498 = vpop.f32.mrb[0].mxu0
    %v2499 = vadd.f32 %v2147, %v2498
    %v2500 = vpop.f32.mrb[0].mxu0
    %v2501 = vadd.f32 %v2151, %v2500
    %v2502 = vpop.f32.mrb[0].mxu0
    %v2503 = vadd.f32 %v2147, %v2502
    %v2504 = vpop.f32.mrb[0].mxu0
    %v2505 = vadd.f32 %v2151, %v2504
    %2506 = vmatprep.mubr.bf16.mxu0 0
    %2507 = vmatmul.mubr.bf16.gmra.mrb[0].mxu0 %v2125
    %v2508 = vpop.f32.mrb[0].mxu0
    %v2509 = vadd.f32 %v2147, %v2508
    %v2510 = vpop.f32.mrb[0].mxu0
    %v2511 = vadd.f32 %v2151, %v2510
    %v2512 = vpop.f32.mrb[0].mxu0
    %v2513 = vadd.f32 %v2147, %v2512
    %v2514 = vpop.f32.mrb[0].mxu0
    %v2515 = vadd.f32 %v2151, %v2514
    %2516 = vdwg.mxu0
    %v2517 = vmul.f32 %v227, %v2269
    %v2518 = vmul.f32 %v228, %v2273
    %v2519 = vmul.f32 %v229, %v2279
    %v2520 = vmul.f32 %v230, %v2283
    %v2521 = vmul.f32 %v231, %v2289
    %v2522 = vmul.f32 %v232, %v2293
    %v2523 = vmul.f32 %v233, %v2299
    %v2524 = vmul.f32 %v234, %v2303
    %v2525 = vmul.f32 %v235, %v2309
    %v2526 = vmul.f32 %v236, %v2313
    %v2527 = vmul.f32 %v237, %v2319
    %v2528 = vmul.f32 %v238, %v2323
    %v2529 = vmul.f32 %v239, %v2329
    %v2530 = vmul.f32 %v240, %v2333
    %v2531 = vmul.f32 %v241, %v2339
    %v2532 = vmul.f32 %v242, %v2343
    %v2533 = vmul.f32 %v243, %v2349
    %v2534 = vmul.f32 %v244, %v2353
    %v2535 = vmul.f32 %v245, %v2359
    %v2536 = vmul.f32 %v246, %v2363
    %v2537 = vmul.f32 %v247, %v2369
    %v2538 = vmul.f32 %v248, %v2373
    %v2539 = vmul.f32 %v249, %v2379
    %v2540 = vmul.f32 %v250, %v2383
    %v2541 = vmul.f32 %v251, %v2389
    %v2542 = vmul.f32 %v252, %v2393
    %v2543 = vmul.f32 %v253, %v2399
    %v2544 = vmul.f32 %v254, %v2403
    %v2545 = vmul.f32 %v255, %v2409
    %v2546 = vmul.f32 %v256, %v2413
    %v2547 = vmul.f32 %v257, %v2419
    %v2548 = vmul.f32 %v258, %v2423
    %v2549 = vmul.f32 %v259, %v2429
    %v2550 = vmul.f32 %v260, %v2433
    %v2551 = vmul.f32 %v261, %v2439
    %v2552 = vmul.f32 %v262, %v2443
    %v2553 = vmul.f32 %v263, %v2449
    %v2554 = vmul.f32 %v264, %v2453
    %v2555 = vmul.f32 %v265, %v2459
    %v2556 = vmul.f32 %v266, %v2463
    %v2557 = vmul.f32 %v267, %v2469
    %v2558 = vmul.f32 %v268, %v2473
    %v2559 = vmul.f32 %v269, %v2479
    %v2560 = vmul.f32 %v270, %v2483
    %v2561 = vmul.f32 %v271, %v2489
    %v2562 = vmul.f32 %v272, %v2493
    %v2563 = vmul.f32 %v273, %v2499
    %v2564 = vmul.f32 %v274, %v2503
    %v2565 = vmul.f32 %v275, %v2509
    %v2566 = vmul.f32 %v276, %v2513
    %v2567 = vadd.f32 %v2517, %v2271
    %v2568 = vadd.f32 %v2518, %v2275
    %v2569 = vadd.f32 %v2519, %v2281
    %v2570 = vadd.f32 %v2520, %v2285
    %v2571 = vadd.f32 %v2521, %v2291
    %v2572 = vadd.f32 %v2522, %v2295
    %v2573 = vadd.f32 %v2523, %v2301
    %v2574 = vadd.f32 %v2524, %v2305
    %v2575 = vadd.f32 %v2525, %v2311
    %v2576 = vadd.f32 %v2526, %v2315
    %v2577 = vadd.f32 %v2527, %v2321
    %v2578 = vadd.f32 %v2528, %v2325
    %v2579 = vadd.f32 %v2529, %v2331
    %v2580 = vadd.f32 %v2530, %v2335
    %v2581 = vadd.f32 %v2531, %v2341
    %v2582 = vadd.f32 %v2532, %v2345
    %v2583 = vadd.f32 %v2533, %v2351
    %v2584 = vadd.f32 %v2534, %v2355
    %v2585 = vadd.f32 %v2535, %v2361
    %v2586 = vadd.f32 %v2536, %v2365
    %v2587 = vadd.f32 %v2537, %v2371
    %v2588 = vadd.f32 %v2538, %v2375
    %v2589 = vadd.f32 %v2539, %v2381
    %v2590 = vadd.f32 %v2540, %v2385
    %v2591 = vadd.f32 %v2541, %v2391
    %v2592 = vadd.f32 %v2542, %v2395
    %v2593 = vadd.f32 %v2543, %v2401
    %v2594 = vadd.f32 %v2544, %v2405
    %v2595 = vadd.f32 %v2545, %v2411
    %v2596 = vadd.f32 %v2546, %v2415
    %v2597 = vadd.f32 %v2547, %v2421
    %v2598 = vadd.f32 %v2548, %v2425
    %v2599 = vadd.f32 %v2549, %v2431
    %v2600 = vadd.f32 %v2550, %v2435
    %v2601 = vadd.f32 %v2551, %v2441
    %v2602 = vadd.f32 %v2552, %v2445
    %v2603 = vadd.f32 %v2553, %v2451
    %v2604 = vadd.f32 %v2554, %v2455
    %v2605 = vadd.f32 %v2555, %v2461
    %v2606 = vadd.f32 %v2556, %v2465
    %v2607 = vadd.f32 %v2557, %v2471
    %v2608 = vadd.f32 %v2558, %v2475
    %v2609 = vadd.f32 %v2559, %v2481
    %v2610 = vadd.f32 %v2560, %v2485
    %v2611 = vadd.f32 %v2561, %v2491
    %v2612 = vadd.f32 %v2562, %v2495
    %v2613 = vadd.f32 %v2563, %v2501
    %v2614 = vadd.f32 %v2564, %v2505
    %v2615 = vadd.f32 %v2565, %v2511
    %v2616 = vadd.f32 %v2566, %v2515
    %v2617 = vmax.f32 %v2567, 0.0
    %v2618 = vmax.f32 %v2568, 0.0
    %v2619 = vmax.f32 %v2569, 0.0
    %v2620 = vmax.f32 %v2570, 0.0
    %v2621 = vmax.f32 %v2571, 0.0
    %v2622 = vmax.f32 %v2572, 0.0
    %v2623 = vmax.f32 %v2573, 0.0
    %v2624 = vmax.f32 %v2574, 0.0
    %v2625 = vmax.f32 %v2575, 0.0
    %v2626 = vmax.f32 %v2576, 0.0
    %v2627 = vmax.f32 %v2577, 0.0
    %v2628 = vmax.f32 %v2578, 0.0
    %v2629 = vmax.f32 %v2579, 0.0
    %v2630 = vmax.f32 %v2580, 0.0
    %v2631 = vmax.f32 %v2581, 0.0
    %v2632 = vmax.f32 %v2582, 0.0
    %v2633 = vmax.f32 %v2583, 0.0
    %v2634 = vmax.f32 %v2584, 0.0
    %v2635 = vmax.f32 %v2585, 0.0
    %v2636 = vmax.f32 %v2586, 0.0
    %v2637 = vmax.f32 %v2587, 0.0
    %v2638 = vmax.f32 %v2588, 0.0
    %v2639 = vmax.f32 %v2589, 0.0
    %v2640 = vmax.f32 %v2590, 0.0
    %v2641 = vmax.f32 %v2591, 0.0
    %v2642 = vmax.f32 %v2592, 0.0
    %v2643 = vmax.f32 %v2593, 0.0
    %v2644 = vmax.f32 %v2594, 0.0
    %v2645 = vmax.f32 %v2595, 0.0
    %v2646 = vmax.f32 %v2596, 0.0
    %v2647 = vmax.f32 %v2597, 0.0
    %v2648 = vmax.f32 %v2598, 0.0
    %v2649 = vmax.f32 %v2599, 0.0
    %v2650 = vmax.f32 %v2600, 0.0
    %v2651 = vmax.f32 %v2601, 0.0
    %v2652 = vmax.f32 %v2602, 0.0
    %v2653 = vmax.f32 %v2603, 0.0
    %v2654 = vmax.f32 %v2604, 0.0
    %v2655 = vmax.f32 %v2605, 0.0
    %v2656 = vmax.f32 %v2606, 0.0
    %v2657 = vmax.f32 %v2607, 0.0
    %v2658 = vmax.f32 %v2608, 0.0
    %v2659 = vmax.f32 %v2609, 0.0
    %v2660 = vmax.f32 %v2610, 0.0
    %v2661 = vmax.f32 %v2611, 0.0
    %v2662 = vmax.f32 %v2612, 0.0
    %v2663 = vmax.f32 %v2613, 0.0
    %v2664 = vmax.f32 %v2614, 0.0
    %v2665 = vmax.f32 %v2615, 0.0
    %v2666 = vmax.f32 %v2616, 0.0
    %v2667 = vmul.f32 %v2617, %v1428
    %v2668 = vmul.f32 %v2618, %v1429
    %v2669 = vmul.f32 %v2619, %v1430
    %v2670 = vmul.f32 %v2620, %v1431
    %v2671 = vmul.f32 %v2621, %v1432
    %v2672 = vmul.f32 %v2622, %v1433
    %v2673 = vmul.f32 %v2623, %v1434
    %v2674 = vmul.f32 %v2624, %v1435
    %v2675 = vmul.f32 %v2625, %v1436
    %v2676 = vmul.f32 %v2626, %v1437
    %v2677 = vmul.f32 %v2627, %v1438
    %v2678 = vmul.f32 %v2628, %v1439
    %v2679 = vmul.f32 %v2629, %v1440
    %v2680 = vmul.f32 %v2630, %v1441
    %v2681 = vmul.f32 %v2631, %v1442
    %v2682 = vmul.f32 %v2632, %v1443
    %v2683 = vmul.f32 %v2633, %v1444
    %v2684 = vmul.f32 %v2634, %v1445
    %v2685 = vmul.f32 %v2635, %v1446
    %v2686 = vmul.f32 %v2636, %v1447
    %v2687 = vmul.f32 %v2637, %v1448
    %v2688 = vmul.f32 %v2638, %v1449
    %v2689 = vmul.f32 %v2639, %v1450
    %v2690 = vmul.f32 %v2640, %v1451
    %v2691 = vmul.f32 %v2641, %v1452
    %v2692 = vmul.f32 %v2642, %v1453
    %v2693 = vmul.f32 %v2643, %v1454
    %v2694 = vmul.f32 %v2644, %v1455
    %v2695 = vmul.f32 %v2645, %v1456
    %v2696 = vmul.f32 %v2646, %v1457
    %v2697 = vmul.f32 %v2647, %v1458
    %v2698 = vmul.f32 %v2648, %v1459
    %v2699 = vmul.f32 %v2649, %v1460
    %v2700 = vmul.f32 %v2650, %v1461
    %v2701 = vmul.f32 %v2651, %v1462
    %v2702 = vmul.f32 %v2652, %v1463
    %v2703 = vmul.f32 %v2653, %v1464
    %v2704 = vmul.f32 %v2654, %v1465
    %v2705 = vmul.f32 %v2655, %v1466
    %v2706 = vmul.f32 %v2656, %v1467
    %v2707 = vmul.f32 %v2657, %v1468
    %v2708 = vmul.f32 %v2658, %v1469
    %v2709 = vmul.f32 %v2659, %v1470
    %v2710 = vmul.f32 %v2660, %v1471
    %v2711 = vmul.f32 %v2661, %v1472
    %v2712 = vmul.f32 %v2662, %v1473
    %v2713 = vmul.f32 %v2663, %v1474
    %v2714 = vmul.f32 %v2664, %v1475
    %v2715 = vmul.f32 %v2665, %v1476
    %v2716 = vmul.f32 %v2666, %v1477
    %v2717 = vpack.c.bf16 %v2668, %v2667
    %v2718 = vpack.c.bf16 %v2670, %v2669
    %v2719 = vpack.c.bf16 %v2672, %v2671
    %v2720 = vpack.c.bf16 %v2674, %v2673
    %v2721 = vpack.c.bf16 %v2676, %v2675
    %v2722 = vpack.c.bf16 %v2678, %v2677
    %v2723 = vpack.c.bf16 %v2680, %v2679
    %v2724 = vpack.c.bf16 %v2682, %v2681
    %v2725 = vpack.c.bf16 %v2684, %v2683
    %v2726 = vpack.c.bf16 %v2686, %v2685
    %v2727 = vpack.c.bf16 %v2688, %v2687
    %v2728 = vpack.c.bf16 %v2690, %v2689
    %v2729 = vpack.c.bf16 %v2692, %v2691
    %v2730 = vpack.c.bf16 %v2694, %v2693
    %v2731 = vpack.c.bf16 %v2696, %v2695
    %v2732 = vpack.c.bf16 %v2698, %v2697
    %v2733 = vpack.c.bf16 %v2700, %v2699
    %v2734 = vpack.c.bf16 %v2702, %v2701
    %v2735 = vpack.c.bf16 %v2704, %v2703
    %v2736 = vpack.c.bf16 %v2706, %v2705
    %v2737 = vpack.c.bf16 %v2708, %v2707
    %v2738 = vpack.c.bf16 %v2710, %v2709
    %v2739 = vpack.c.bf16 %v2712, %v2711
    %v2740 = vpack.c.bf16 %v2714, %v2713
    %v2741 = vpack.c.bf16 %v2716, %v2715
    %vm2742 = vsmask.f32 7424
    %v2744 = vshrl.u32 %v2717, 16
    %v2746 = vshll.u32 %v2717, 16
    %v2748 = vrot.slane %v2746, 1
    %v2749 = vor.u32 %v2744, %v2748
    %v2751 = vshll.u32 %v2718, 16
    %v2753 = vrot.slane %v2751, 1
    %v2754 = vsel %vm2742, %v2749, %v2753
    %v2755 = vshrl.u32 %v2718, 16
    %v2757 = vor.u32 %v2755, %v2753
    %v2759 = vshll.u32 %v2719, 16
    %v2761 = vrot.slane %v2759, 1
    %v2762 = vsel %vm2742, %v2757, %v2761
    %v2763 = vshrl.u32 %v2719, 16
    %v2765 = vor.u32 %v2763, %v2761
    %v2767 = vshll.u32 %v2720, 16
    %v2769 = vrot.slane %v2767, 1
    %v2770 = vsel %vm2742, %v2765, %v2769
    %v2771 = vshrl.u32 %v2720, 16
    %v2773 = vor.u32 %v2771, %v2769
    %v2775 = vshll.u32 %v2721, 16
    %v2777 = vrot.slane %v2775, 1
    %v2778 = vsel %vm2742, %v2773, %v2777
    %v2779 = vshrl.u32 %v2721, 16
    %v2781 = vor.u32 %v2779, %v2777
    %v2783 = vshll.u32 %v2722, 16
    %v2785 = vrot.slane %v2783, 1
    %v2786 = vsel %vm2742, %v2781, %v2785
    %v2787 = vshrl.u32 %v2722, 16
    %v2789 = vor.u32 %v2787, %v2785
    %v2791 = vshll.u32 %v2723, 16
    %v2793 = vrot.slane %v2791, 1
    %v2794 = vsel %vm2742, %v2789, %v2793
    %v2795 = vshrl.u32 %v2723, 16
    %v2797 = vor.u32 %v2795, %v2793
    %v2799 = vshll.u32 %v2724, 16
    %v2801 = vrot.slane %v2799, 1
    %v2802 = vsel %vm2742, %v2797, %v2801
    %v2803 = vshrl.u32 %v2724, 16
    %v2805 = vor.u32 %v2803, %v2801
    %v2807 = vshll.u32 %v2725, 16
    %v2809 = vrot.slane %v2807, 1
    %v2810 = vsel %vm2742, %v2805, %v2809
    %v2811 = vshrl.u32 %v2725, 16
    %v2813 = vor.u32 %v2811, %v2809
    %v2815 = vshll.u32 %v2726, 16
    %v2817 = vrot.slane %v2815, 1
    %v2818 = vsel %vm2742, %v2813, %v2817
    %v2819 = vshrl.u32 %v2726, 16
    %v2821 = vor.u32 %v2819, %v2817
    %v2823 = vshll.u32 %v2727, 16
    %v2825 = vrot.slane %v2823, 1
    %v2826 = vsel %vm2742, %v2821, %v2825
    %v2827 = vshrl.u32 %v2727, 16
    %v2829 = vor.u32 %v2827, %v2825
    %v2831 = vshll.u32 %v2728, 16
    %v2833 = vrot.slane %v2831, 1
    %v2834 = vsel %vm2742, %v2829, %v2833
    %v2835 = vshrl.u32 %v2728, 16
    %v2837 = vor.u32 %v2835, %v2833
    %v2839 = vshll.u32 %v2729, 16
    %v2841 = vrot.slane %v2839, 1
    %v2842 = vsel %vm2742, %v2837, %v2841
    %v2843 = vshrl.u32 %v2729, 16
    %v2845 = vor.u32 %v2843, %v2841
    %v2847 = vshll.u32 %v2730, 16
    %v2849 = vrot.slane %v2847, 1
    %v2850 = vsel %vm2742, %v2845, %v2849
    %v2851 = vshrl.u32 %v2730, 16
    %v2853 = vor.u32 %v2851, %v2849
    %v2855 = vshll.u32 %v2731, 16
    %v2857 = vrot.slane %v2855, 1
    %v2858 = vsel %vm2742, %v2853, %v2857
    %v2859 = vshrl.u32 %v2731, 16
    %v2861 = vor.u32 %v2859, %v2857
    %v2863 = vshll.u32 %v2732, 16
    %v2865 = vrot.slane %v2863, 1
    %v2866 = vsel %vm2742, %v2861, %v2865
    %v2867 = vshrl.u32 %v2732, 16
    %v2869 = vor.u32 %v2867, %v2865
    %v2871 = vshll.u32 %v2733, 16
    %v2873 = vrot.slane %v2871, 1
    %v2874 = vsel %vm2742, %v2869, %v2873
    %v2875 = vshrl.u32 %v2733, 16
    %v2877 = vor.u32 %v2875, %v2873
    %v2879 = vshll.u32 %v2734, 16
    %v2881 = vrot.slane %v2879, 1
    %v2882 = vsel %vm2742, %v2877, %v2881
    %v2883 = vshrl.u32 %v2734, 16
    %v2885 = vor.u32 %v2883, %v2881
    %v2887 = vshll.u32 %v2735, 16
    %v2889 = vrot.slane %v2887, 1
    %v2890 = vsel %vm2742, %v2885, %v2889
    %v2891 = vshrl.u32 %v2735, 16
    %v2893 = vor.u32 %v2891, %v2889
    %v2895 = vshll.u32 %v2736, 16
    %v2897 = vrot.slane %v2895, 1
    %v2898 = vsel %vm2742, %v2893, %v2897
    %v2899 = vshrl.u32 %v2736, 16
    %v2901 = vor.u32 %v2899, %v2897
    %v2903 = vshll.u32 %v2737, 16
    %v2905 = vrot.slane %v2903, 1
    %v2906 = vsel %vm2742, %v2901, %v2905
    %v2907 = vshrl.u32 %v2737, 16
    %v2909 = vor.u32 %v2907, %v2905
    %v2911 = vshll.u32 %v2738, 16
    %v2913 = vrot.slane %v2911, 1
    %v2914 = vsel %vm2742, %v2909, %v2913
    %v2915 = vshrl.u32 %v2738, 16
    %v2917 = vor.u32 %v2915, %v2913
    %v2919 = vshll.u32 %v2739, 16
    %v2921 = vrot.slane %v2919, 1
    %v2922 = vsel %vm2742, %v2917, %v2921
    %v2923 = vshrl.u32 %v2739, 16
    %v2925 = vor.u32 %v2923, %v2921
    %vm2972 = vcmask 1046528
    %v2973 = vrot.slane %v2717, 1
    %v2974 = vrot.slane %v2718, 1
    %v2975 = vsel %vm2972, %v2973, %v2974
    %v2976 = vrot.slane %v2719, 1
    %v2977 = vsel %vm2972, %v2974, %v2976
    %v2978 = vrot.slane %v2720, 1
    %v2979 = vsel %vm2972, %v2976, %v2978
    %v2980 = vrot.slane %v2721, 1
    %v2981 = vsel %vm2972, %v2978, %v2980
    %v2982 = vrot.slane %v2722, 1
    %v2983 = vsel %vm2972, %v2980, %v2982
    %v2984 = vrot.slane %v2723, 1
    %v2985 = vsel %vm2972, %v2982, %v2984
    %v2986 = vrot.slane %v2724, 1
    %v2987 = vsel %vm2972, %v2984, %v2986
    %v2988 = vrot.slane %v2725, 1
    %v2989 = vsel %vm2972, %v2986, %v2988
    %v2990 = vrot.slane %v2726, 1
    %v2991 = vsel %vm2972, %v2988, %v2990
    %v2992 = vrot.slane %v2727, 1
    %v2993 = vsel %vm2972, %v2990, %v2992
    %v2994 = vrot.slane %v2728, 1
    %v2995 = vsel %vm2972, %v2992, %v2994
    %v2996 = vrot.slane %v2729, 1
    %v2997 = vsel %vm2972, %v2994, %v2996
    %v2998 = vrot.slane %v2730, 1
    %v2999 = vsel %vm2972, %v2996, %v2998
    %v3000 = vrot.slane %v2731, 1
    %v3001 = vsel %vm2972, %v2998, %v3000
    %v3002 = vrot.slane %v2732, 1
    %v3003 = vsel %vm2972, %v3000, %v3002
    %v3004 = vrot.slane %v2733, 1
    %v3005 = vsel %vm2972, %v3002, %v3004
    %v3006 = vrot.slane %v2734, 1
    %v3007 = vsel %vm2972, %v3004, %v3006
    %v3008 = vrot.slane %v2735, 1
    %v3009 = vsel %vm2972, %v3006, %v3008
    %v3010 = vrot.slane %v2736, 1
    %v3011 = vsel %vm2972, %v3008, %v3010
    %v3012 = vrot.slane %v2737, 1
    %v3013 = vsel %vm2972, %v3010, %v3012
    %v3014 = vrot.slane %v2738, 1
    %v3015 = vsel %vm2972, %v3012, %v3014
    %v3016 = vrot.slane %v2739, 1
    %v3017 = vsel %vm2972, %v3014, %v3016
    %v3041 = vld [vmem:[#allocation13] sm:$0xf]
    %v3042 = vld [vmem:[#allocation13 + $0x4] sm:$0xf]
    %v3043 = vld [vmem:[#allocation13 + $0x8] sm:$0xf]
    %v3044 = vld [vmem:[#allocation13 + $0xc] sm:$0xf]
    %v3045 = vld [vmem:[#allocation13 + $0x10] sm:$0xf]
    %v3046 = vld [vmem:[#allocation13 + $0x14] sm:$0xf]
    %v3047 = vld [vmem:[#allocation13 + $0x18] sm:$0xf]
    %v3048 = vld [vmem:[#allocation13 + $0x1c] sm:$0xf]
    %v3049 = vld [vmem:[#allocation13 + $0x20] sm:$0xf]
    %v3050 = vld [vmem:[#allocation13 + $0x24] sm:$0xf]
    %v3051 = vld [vmem:[#allocation13 + $0x28] sm:$0xf]
    %v3052 = vld [vmem:[#allocation13 + $0x2c] sm:$0xf]
    %v3053 = vld [vmem:[#allocation13 + $0x30] sm:$0xf]
    %v3054 = vld [vmem:[#allocation13 + $0x34] sm:$0xf]
    %v3055 = vld [vmem:[#allocation13 + $0x38] sm:$0xf]
    %v3056 = vld [vmem:[#allocation13 + $0x3c] sm:$0xf]
    %v3057 = vld [vmem:[#allocation13 + $0x40] sm:$0xf]
    %v3058 = vld [vmem:[#allocation13 + $0x44] sm:$0xf]
    %v3059 = vld [vmem:[#allocation13 + $0x48] sm:$0xf]
    %v3060 = vld [vmem:[#allocation13 + $0x4c] sm:$0xf]
    %v3061 = vld [vmem:[#allocation13 + $0x50] sm:$0xf]
    %v3062 = vld [vmem:[#allocation13 + $0x54] sm:$0xf]
    %v3063 = vld [vmem:[#allocation13 + $0x58] sm:$0xf]
    %v3064 = vld [vmem:[#allocation13 + $0x5c] sm:$0xf]
    %v3065 = vld [vmem:[#allocation13 + $0x60] sm:$0xf]
    %v3066 = vld [vmem:[#allocation13 + $0x64] sm:$0xf]
    %v3067 = vld [vmem:[#allocation13 + $0x68] sm:$0xf]
    %v3068 = vld [vmem:[#allocation13 + $0x6c] sm:$0xf]
    %v3069 = vld [vmem:[#allocation13 + $0x70] sm:$0xf]
    %v3070 = vld [vmem:[#allocation13 + $0x74] sm:$0xf]
    %v3071 = vld [vmem:[#allocation13 + $0x78] sm:$0xf]
    %v3072 = vld [vmem:[#allocation13 + $0x7c] sm:$0xf]
    %v3073 = vld [vmem:[#allocation13 + $0x80] sm:$0xf]
    %v3074 = vld [vmem:[#allocation13 + $0x84] sm:$0xf]
    %v3075 = vld [vmem:[#allocation13 + $0x88] sm:$0xf]
    %v3076 = vld [vmem:[#allocation13 + $0x8c] sm:$0xf]
    %v3077 = vld [vmem:[#allocation13 + $0x90] sm:$0xf]
    %v3078 = vld [vmem:[#allocation13 + $0x94] sm:$0xf]
    %v3079 = vld [vmem:[#allocation13 + $0x98] sm:$0xf]
    %v3080 = vld [vmem:[#allocation13 + $0x9c] sm:$0xf]
    %v3081 = vld [vmem:[#allocation13 + $0xa0] sm:$0xf]
    %v3082 = vld [vmem:[#allocation13 + $0xa4] sm:$0xf]
    %v3083 = vld [vmem:[#allocation13 + $0xa8] sm:$0xf]
    %v3084 = vld [vmem:[#allocation13 + $0xac] sm:$0xf]
    %v3085 = vld [vmem:[#allocation13 + $0xb0] sm:$0xf]
    %v3086 = vld [vmem:[#allocation13 + $0xb4] sm:$0xf]
    %v3087 = vld [vmem:[#allocation13 + $0xb8] sm:$0xf]
    %v3088 = vld [vmem:[#allocation13 + $0xbc] sm:$0xf]
    %v3090 = vshll.u32 %v2740, 16
    %v3092 = vrot.slane %v3090, 1
    %v3093 = vsel %vm2742, %v2925, %v3092
    %v3094 = vshrl.u32 %v2740, 16
    %v3096 = vor.u32 %v3094, %v3092
    %v3098 = vrot.slane %v2740, 1
    %v3099 = vsel %vm2972, %v3016, %v3098
    %s3100 = scalar_lea.vmem [#allocation13], 192
    %v3101 = vld [vmem:[%s3100] sm:$0xf]
    %v3102 = vld [vmem:[%s3100 + $0x4] sm:$0xf]
    %v3103 = vld [vmem:[%s3100 + $0x8] sm:$0xf]
    %v3104 = vld [vmem:[%s3100 + $0xc] sm:$0xf]
    %v3105 = vld [vmem:[%s3100 + $0x10] sm:$0xf]
    %v3106 = vld [vmem:[%s3100 + $0x14] sm:$0xf]
    %v3107 = vld [vmem:[%s3100 + $0x18] sm:$0xf]
    %v3108 = vld [vmem:[%s3100 + $0x1c] sm:$0xf]
    %v3109 = vld [vmem:[%s3100 + $0x20] sm:$0xf]
    %v3110 = vld [vmem:[%s3100 + $0x24] sm:$0xf]
    %v3111 = vld [vmem:[%s3100 + $0x28] sm:$0xf]
    %v3112 = vld [vmem:[%s3100 + $0x2c] sm:$0xf]
    %v3113 = vld [vmem:[%s3100 + $0x30] sm:$0xf]
    %v3114 = vld [vmem:[%s3100 + $0x34] sm:$0xf]
    %v3115 = vld [vmem:[%s3100 + $0x38] sm:$0xf]
    %v3116 = vld [vmem:[%s3100 + $0x3c] sm:$0xf]
    %v3117 = vld [vmem:[%s3100 + $0x40] sm:$0xf]
    %v3118 = vld [vmem:[%s3100 + $0x44] sm:$0xf]
    %v3119 = vld [vmem:[%s3100 + $0x48] sm:$0xf]
    %v3120 = vld [vmem:[%s3100 + $0x4c] sm:$0xf]
    %v3121 = vld [vmem:[%s3100 + $0x50] sm:$0xf]
    %v3122 = vld [vmem:[%s3100 + $0x54] sm:$0xf]
    %v3123 = vld [vmem:[%s3100 + $0x58] sm:$0xf]
    %v3124 = vld [vmem:[%s3100 + $0x5c] sm:$0xf]
    %v3125 = vld [vmem:[%s3100 + $0x60] sm:$0xf]
    %v3126 = vld [vmem:[%s3100 + $0x64] sm:$0xf]
    %v3127 = vld [vmem:[%s3100 + $0x68] sm:$0xf]
    %v3128 = vld [vmem:[%s3100 + $0x6c] sm:$0xf]
    %v3129 = vld [vmem:[%s3100 + $0x70] sm:$0xf]
    %v3130 = vld [vmem:[%s3100 + $0x74] sm:$0xf]
    %v3131 = vld [vmem:[%s3100 + $0x78] sm:$0xf]
    %v3132 = vld [vmem:[%s3100 + $0x7c] sm:$0xf]
    %v3133 = vld [vmem:[%s3100 + $0x80] sm:$0xf]
    %v3134 = vld [vmem:[%s3100 + $0x84] sm:$0xf]
    %v3135 = vld [vmem:[%s3100 + $0x88] sm:$0xf]
    %v3136 = vld [vmem:[%s3100 + $0x8c] sm:$0xf]
    %v3137 = vld [vmem:[%s3100 + $0x90] sm:$0xf]
    %v3138 = vld [vmem:[%s3100 + $0x94] sm:$0xf]
    %v3139 = vld [vmem:[%s3100 + $0x98] sm:$0xf]
    %v3140 = vld [vmem:[%s3100 + $0x9c] sm:$0xf]
    %v3141 = vld [vmem:[%s3100 + $0xa0] sm:$0xf]
    %v3142 = vld [vmem:[%s3100 + $0xa4] sm:$0xf]
    %v3143 = vld [vmem:[%s3100 + $0xa8] sm:$0xf]
    %v3144 = vld [vmem:[%s3100 + $0xac] sm:$0xf]
    %v3145 = vld [vmem:[%s3100 + $0xb0] sm:$0xf]
    %v3146 = vld [vmem:[%s3100 + $0xb4] sm:$0xf]
    %v3147 = vld [vmem:[%s3100 + $0xb8] sm:$0xf]
    %v3148 = vld [vmem:[%s3100 + $0xbc] sm:$0xf]
    %vm3149 = vcmask 1045504
    %v3150 = vrot.slane %v2718, 2
    %v3151 = vrot.slane %v2719, 2
    %v3152 = vsel %vm3149, %v3150, %v3151
    %v3153 = vrot.slane %v2762, 2
    %v3154 = vrot.slane %v2770, 2
    %v3155 = vsel %vm3149, %v3153, %v3154
    %v3156 = vrot.slane %v2977, 2
    %v3157 = vrot.slane %v2979, 2
    %v3158 = vsel %vm3149, %v3156, %v3157
    %v3159 = vrot.slane %v2720, 2
    %v3160 = vsel %vm3149, %v3151, %v3159
    %v3161 = vrot.slane %v2778, 2
    %v3162 = vsel %vm3149, %v3154, %v3161
    %v3163 = vrot.slane %v2981, 2
    %v3164 = vsel %vm3149, %v3157, %v3163
    %v3165 = vrot.slane %v2721, 2
    %v3166 = vsel %vm3149, %v3159, %v3165
    %v3167 = vrot.slane %v2786, 2
    %v3168 = vsel %vm3149, %v3161, %v3167
    %v3169 = vrot.slane %v2983, 2
    %v3170 = vsel %vm3149, %v3163, %v3169
    %v3171 = vrot.slane %v2722, 2
    %v3172 = vsel %vm3149, %v3165, %v3171
    %v3173 = vrot.slane %v2794, 2
    %v3174 = vsel %vm3149, %v3167, %v3173
    %v3175 = vrot.slane %v2985, 2
    %v3176 = vsel %vm3149, %v3169, %v3175
    %v3177 = vrot.slane %v2723, 2
    %v3178 = vsel %vm3149, %v3171, %v3177
    %v3179 = vrot.slane %v2802, 2
    %v3180 = vsel %vm3149, %v3173, %v3179
    %v3181 = vrot.slane %v2987, 2
    %v3182 = vsel %vm3149, %v3175, %v3181
    %v3183 = vrot.slane %v2724, 2
    %v3184 = vsel %vm3149, %v3177, %v3183
    %v3185 = vrot.slane %v2810, 2
    %v3186 = vsel %vm3149, %v3179, %v3185
    %v3187 = vrot.slane %v2989, 2
    %v3188 = vsel %vm3149, %v3181, %v3187
    %v3189 = vrot.slane %v2725, 2
    %v3190 = vsel %vm3149, %v3183, %v3189
    %v3191 = vrot.slane %v2818, 2
    %v3192 = vsel %vm3149, %v3185, %v3191
    %v3193 = vrot.slane %v2991, 2
    %v3194 = vsel %vm3149, %v3187, %v3193
    %v3195 = vrot.slane %v2726, 2
    %v3196 = vsel %vm3149, %v3189, %v3195
    %v3197 = vrot.slane %v2826, 2
    %v3198 = vsel %vm3149, %v3191, %v3197
    %v3199 = vrot.slane %v2993, 2
    %v3200 = vsel %vm3149, %v3193, %v3199
    %v3201 = vrot.slane %v2727, 2
    %v3202 = vsel %vm3149, %v3195, %v3201
    %v3203 = vrot.slane %v2834, 2
    %v3204 = vsel %vm3149, %v3197, %v3203
    %v3205 = vrot.slane %v2995, 2
    %v3206 = vsel %vm3149, %v3199, %v3205
    %v3207 = vrot.slane %v2728, 2
    %v3208 = vsel %vm3149, %v3201, %v3207
    %v3209 = vrot.slane %v2842, 2
    %v3210 = vsel %vm3149, %v3203, %v3209
    %v3211 = vrot.slane %v2997, 2
    %v3212 = vsel %vm3149, %v3205, %v3211
    %v3213 = vrot.slane %v2729, 2
    %v3214 = vsel %vm3149, %v3207, %v3213
    %v3215 = vrot.slane %v2850, 2
    %v3216 = vsel %vm3149, %v3209, %v3215
    %v3217 = vrot.slane %v2999, 2
    %v3218 = vsel %vm3149, %v3211, %v3217
    %v3219 = vrot.slane %v2730, 2
    %v3220 = vsel %vm3149, %v3213, %v3219
    %v3221 = vrot.slane %v2858, 2
    %v3222 = vsel %vm3149, %v3215, %v3221
    %v3223 = vrot.slane %v3001, 2
    %v3224 = vsel %vm3149, %v3217, %v3223
    %v3225 = vrot.slane %v2731, 2
    %v3226 = vsel %vm3149, %v3219, %v3225
    %v3227 = vrot.slane %v2866, 2
    %v3228 = vsel %vm3149, %v3221, %v3227
    %v3229 = vrot.slane %v3003, 2
    %v3230 = vsel %vm3149, %v3223, %v3229
    %v3231 = vrot.slane %v2732, 2
    %v3232 = vsel %vm3149, %v3225, %v3231
    %v3233 = vrot.slane %v2874, 2
    %v3234 = vsel %vm3149, %v3227, %v3233
    %v3235 = vrot.slane %v3005, 2
    %v3236 = vsel %vm3149, %v3229, %v3235
    %v3237 = vrot.slane %v2733, 2
    %v3238 = vsel %vm3149, %v3231, %v3237
    %v3239 = vrot.slane %v2882, 2
    %v3240 = vsel %vm3149, %v3233, %v3239
    %v3241 = vrot.slane %v3007, 2
    %v3242 = vsel %vm3149, %v3235, %v3241
    %v3243 = vrot.slane %v2734, 2
    %v3244 = vsel %vm3149, %v3237, %v3243
    %v3245 = vrot.slane %v2890, 2
    %v3246 = vsel %vm3149, %v3239, %v3245
    %v3247 = vrot.slane %v3009, 2
    %v3248 = vsel %vm3149, %v3241, %v3247
    %v3249 = vrot.slane %v2735, 2
    %v3250 = vsel %vm3149, %v3243, %v3249
    %v3251 = vrot.slane %v2898, 2
    %v3252 = vsel %vm3149, %v3245, %v3251
    %v3253 = vrot.slane %v3011, 2
    %v3254 = vsel %vm3149, %v3247, %v3253
    %v3255 = vrot.slane %v2736, 2
    %v3256 = vsel %vm3149, %v3249, %v3255
    %v3257 = vrot.slane %v2906, 2
    %v3258 = vsel %vm3149, %v3251, %v3257
    %v3259 = vrot.slane %v3013, 2
    %v3260 = vsel %vm3149, %v3253, %v3259
    %v3261 = vrot.slane %v2737, 2
    %v3262 = vsel %vm3149, %v3255, %v3261
    %v3263 = vrot.slane %v2914, 2
    %v3264 = vsel %vm3149, %v3257, %v3263
    %v3265 = vrot.slane %v3015, 2
    %v3266 = vsel %vm3149, %v3259, %v3265
    %v3267 = vrot.slane %v2738, 2
    %v3268 = vsel %vm3149, %v3261, %v3267
    %v3269 = vrot.slane %v2922, 2
    %v3270 = vsel %vm3149, %v3263, %v3269
    %v3271 = vrot.slane %v3017, 2
    %v3272 = vsel %vm3149, %v3265, %v3271
    %v3273 = vrot.slane %v2739, 2
    %v3274 = vsel %vm3149, %v3267, %v3273
    %v3275 = vrot.slane %v3093, 2
    %v3276 = vsel %vm3149, %v3269, %v3275
    %v3277 = vrot.slane %v3099, 2
    %v3278 = vsel %vm3149, %v3271, %v3277
    %v3279 = vrot.slane %v2740, 2
    %v3280 = vsel %vm3149, %v3273, %v3279
    %v3281 = vrot.slane %v3096, 2
    %v3282 = vsel %vm3149, %v3275, %v3281
    %v3283 = vrot.slane %v3098, 2
    %v3284 = vsel %vm3149, %v3277, %v3283
    %v3402 = vunpack.c.l.b16 %v3101
    %v3403 = vunpack.c.l.b16 %v3102
    %v3404 = vunpack.c.l.b16 %v3103
    %v3405 = vunpack.c.l.b16 %v3104
    %v3406 = vunpack.c.l.b16 %v3105
    %v3407 = vunpack.c.l.b16 %v3106
    %v3408 = vunpack.c.l.b16 %v3107
    %v3409 = vunpack.c.l.b16 %v3108
    %v3410 = vunpack.c.l.b16 %v3109
    %v3411 = vunpack.c.l.b16 %v3110
    %v3412 = vunpack.c.l.b16 %v3111
    %v3413 = vunpack.c.l.b16 %v3112
    %v3414 = vunpack.c.l.b16 %v3113
    %v3415 = vunpack.c.l.b16 %v3114
    %v3416 = vunpack.c.l.b16 %v3115
    %v3417 = vunpack.c.l.b16 %v3116
    %v3418 = vunpack.c.l.b16 %v3117
    %v3419 = vunpack.c.l.b16 %v3118
    %v3420 = vunpack.c.l.b16 %v3119
    %v3421 = vunpack.c.l.b16 %v3120
    %v3422 = vunpack.c.l.b16 %v3121
    %v3423 = vunpack.c.l.b16 %v3122
    %v3424 = vunpack.c.l.b16 %v3123
    %v3425 = vunpack.c.l.b16 %v3124
    %v3426 = vunpack.c.l.b16 %v3125
    %v3427 = vunpack.c.l.b16 %v3126
    %v3428 = vunpack.c.l.b16 %v3127
    %v3429 = vunpack.c.l.b16 %v3128
    %v3430 = vunpack.c.l.b16 %v3129
    %v3431 = vunpack.c.l.b16 %v3130
    %v3432 = vunpack.c.l.b16 %v3131
    %v3433 = vunpack.c.l.b16 %v3132
    %v3434 = vunpack.c.l.b16 %v3133
    %v3435 = vunpack.c.l.b16 %v3134
    %v3436 = vunpack.c.l.b16 %v3135
    %v3437 = vunpack.c.l.b16 %v3136
    %v3438 = vunpack.c.l.b16 %v3137
    %v3439 = vunpack.c.l.b16 %v3138
    %v3440 = vunpack.c.l.b16 %v3139
    %v3441 = vunpack.c.l.b16 %v3140
    %v3442 = vunpack.c.l.b16 %v3141
    %v3443 = vunpack.c.l.b16 %v3142
    %v3444 = vunpack.c.l.b16 %v3143
    %v3445 = vunpack.c.l.b16 %v3144
    %v3446 = vunpack.c.l.b16 %v3145
    %v3447 = vunpack.c.l.b16 %v3146
    %v3448 = vunpack.c.l.b16 %v3147
    %v3449 = vunpack.c.l.b16 %v3148
    %v3450 = vpack.c.b16 %v3403, %v3402
    %v3451 = vpack.c.b16 %v3405, %v3404
    %v3452 = vpack.c.b16 %v3407, %v3406
    %v3453 = vpack.c.b16 %v3409, %v3408
    %v3454 = vpack.c.b16 %v3411, %v3410
    %v3455 = vpack.c.b16 %v3413, %v3412
    %v3456 = vpack.c.b16 %v3415, %v3414
    %v3457 = vpack.c.b16 %v3417, %v3416
    %v3458 = vpack.c.b16 %v3419, %v3418
    %v3459 = vpack.c.b16 %v3421, %v3420
    %v3460 = vpack.c.b16 %v3423, %v3422
    %v3461 = vpack.c.b16 %v3425, %v3424
    %v3462 = vpack.c.b16 %v3427, %v3426
    %v3463 = vpack.c.b16 %v3429, %v3428
    %v3464 = vpack.c.b16 %v3431, %v3430
    %v3465 = vpack.c.b16 %v3433, %v3432
    %v3466 = vpack.c.b16 %v3435, %v3434
    %v3467 = vpack.c.b16 %v3437, %v3436
    %v3468 = vpack.c.b16 %v3439, %v3438
    %v3469 = vpack.c.b16 %v3441, %v3440
    %v3470 = vpack.c.b16 %v3443, %v3442
    %v3471 = vpack.c.b16 %v3445, %v3444
    %v3472 = vpack.c.b16 %v3447, %v3446
    %v3473 = vpack.c.b16 %v3449, %v3448
    %3498 = vmatprep.subr.bf16.mxu0 0
    %3499 = vmatpush1.bf16.msra.mxu0 %v3450
    %3500 = vmatprep.subr.bf16.mxu0 0
    %3501 = vmatpush1.bf16.msra.mxu0 %v3451
    %3502 = vmatprep.subr.bf16.mxu0 0
    %3503 = vmatpush1.bf16.msra.mxu0 %v3452
    %3504 = vmatprep.subr.bf16.mxu0 0
    %3505 = vmatpush1.bf16.msra.mxu0 %v3453
    %3506 = vmatprep.subr.bf16.mxu0 0
    %3507 = vmatpush1.bf16.msra.mxu0 %v3454
    %3508 = vmatprep.subr.bf16.mxu0 0
    %3509 = vmatpush1.bf16.msra.mxu0 %v3455
    %3510 = vmatprep.subr.bf16.mxu0 0
    %3511 = vmatpush1.bf16.msra.mxu0 %v3456
    %3512 = vmatprep.subr.bf16.mxu0 0
    %3513 = vmatpush1.bf16.msra.mxu0 %v3457
    %3514 = vmatprep.subr.bf16.mxu0 0
    %3515 = vmatpush1.bf16.msra.mxu0 %v3458
    %3516 = vmatprep.subr.bf16.mxu0 0
    %3517 = vmatpush1.bf16.msra.mxu0 %v3459
    %3518 = vmatprep.subr.bf16.mxu0 0
    %3519 = vmatpush1.bf16.msra.mxu0 %v3460
    %3520 = vmatprep.subr.bf16.mxu0 0
    %3521 = vmatpush1.bf16.msra.mxu0 %v3461
    %3522 = vmatprep.subr.bf16.mxu0 0
    %3523 = vmatpush1.bf16.msra.mxu0 %v3462
    %3524 = vmatprep.subr.bf16.mxu0 0
    %3525 = vmatpush1.bf16.msra.mxu0 %v3463
    %3526 = vmatprep.subr.bf16.mxu0 0
    %3527 = vmatpush1.bf16.msra.mxu0 %v3464
    %3528 = vmatprep.subr.bf16.mxu0 0
    %3529 = vmatpush1.bf16.msra.mxu0 %v3465
    %3530 = vmatprep.mubr.bf16.mxu0 %v3155
    %3531 = vmatmul.mubr.bf16.gmra.mrb[0].mxu0 %v3152
    %v3532 = vpop.f32.mrb[0].mxu0
    %v3533 = vadd.f32 0.0, %v3532
    %v3534 = vpop.f32.mrb[0].mxu0
    %v3535 = vpop.f32.mrb[0].mxu0
    %v3536 = vadd.f32 0.0, %v3535
    %v3537 = vpop.f32.mrb[0].mxu0
    %3538 = vmatprep.mubr.bf16.mxu0 %v3162
    %3539 = vmatmul.mubr.bf16.gmra.mrb[0].mxu0 %v3160
    %v3540 = vpop.f32.mrb[0].mxu0
    %v3541 = vadd.f32 0.0, %v3540
    %v3542 = vpop.f32.mrb[0].mxu0
    %v3543 = vpop.f32.mrb[0].mxu0
    %v3544 = vadd.f32 0.0, %v3543
    %v3545 = vpop.f32.mrb[0].mxu0
    %3546 = vmatprep.mubr.bf16.mxu0 %v3168
    %3547 = vmatmul.mubr.bf16.gmra.mrb[0].mxu0 %v3166
    %v3548 = vpop.f32.mrb[0].mxu0
    %v3549 = vadd.f32 0.0, %v3548
    %v3550 = vpop.f32.mrb[0].mxu0
    %v3551 = vpop.f32.mrb[0].mxu0
    %v3552 = vadd.f32 0.0, %v3551
    %v3553 = vpop.f32.mrb[0].mxu0
    %3554 = vmatprep.mubr.bf16.mxu0 %v3174
    %3555 = vmatmul.mubr.bf16.gmra.mrb[0].mxu0 %v3172
    %v3556 = vpop.f32.mrb[0].mxu0
    %v3557 = vadd.f32 0.0, %v3556
    %v3558 = vpop.f32.mrb[0].mxu0
    %v3559 = vpop.f32.mrb[0].mxu0
    %v3560 = vadd.f32 0.0, %v3559
    %v3561 = vpop.f32.mrb[0].mxu0
    %3562 = vmatprep.mubr.bf16.mxu0 %v3180
    %3563 = vmatmul.mubr.bf16.gmra.mrb[0].mxu0 %v3178
    %v3564 = vpop.f32.mrb[0].mxu0
    %v3565 = vadd.f32 0.0, %v3564
    %v3566 = vpop.f32.mrb[0].mxu0
    %v3567 = vpop.f32.mrb[0].mxu0
    %v3568 = vadd.f32 0.0, %v3567
    %v3569 = vpop.f32.mrb[0].mxu0
    %3570 = vmatprep.mubr.bf16.mxu0 %v3186
    %3571 = vmatmul.mubr.bf16.gmra.mrb[0].mxu0 %v3184
    %v3572 = vpop.f32.mrb[0].mxu0
    %v3573 = vadd.f32 0.0, %v3572
    %v3574 = vpop.f32.mrb[0].mxu0
    %v3575 = vpop.f32.mrb[0].mxu0
    %v3576 = vadd.f32 0.0, %v3575
    %v3577 = vpop.f32.mrb[0].mxu0
    %3578 = vmatprep.mubr.bf16.mxu0 %v3192
    %3579 = vmatmul.mubr.bf16.gmra.mrb[0].mxu0 %v3190
    %v3580 = vpop.f32.mrb[0].mxu0
    %v3581 = vadd.f32 0.0, %v3580
    %v3582 = vpop.f32.mrb[0].mxu0
    %v3583 = vpop.f32.mrb[0].mxu0
    %v3584 = vadd.f32 0.0, %v3583
    %v3585 = vpop.f32.mrb[0].mxu0
    %3586 = vmatprep.mubr.bf16.mxu0 %v3198
    %3587 = vmatmul.mubr.bf16.gmra.mrb[0].mxu0 %v3196
    %v3588 = vpop.f32.mrb[0].mxu0
    %v3589 = vadd.f32 0.0, %v3588
    %v3590 = vpop.f32.mrb[0].mxu0
    %v3591 = vpop.f32.mrb[0].mxu0
    %v3592 = vadd.f32 0.0, %v3591
    %v3593 = vpop.f32.mrb[0].mxu0
    %3594 = vmatprep.mubr.bf16.mxu0 %v3204
    %3595 = vmatmul.mubr.bf16.gmra.mrb[0].mxu0 %v3202
    %v3596 = vpop.f32.mrb[0].mxu0
    %v3597 = vadd.f32 0.0, %v3596
    %v3598 = vpop.f32.mrb[0].mxu0
    %v3599 = vpop.f32.mrb[0].mxu0
    %v3600 = vadd.f32 0.0, %v3599
    %v3601 = vpop.f32.mrb[0].mxu0
    %3602 = vmatprep.mubr.bf16.mxu0 %v3210
    %3603 = vmatmul.mubr.bf16.gmra.mrb[0].mxu0 %v3208
    %v3604 = vpop.f32.mrb[0].mxu0
    %v3605 = vadd.f32 0.0, %v3604
    %v3606 = vpop.f32.mrb[0].mxu0
    %v3607 = vpop.f32.mrb[0].mxu0
    %v3608 = vadd.f32 0.0, %v3607
    %v3609 = vpop.f32.mrb[0].mxu0
    %3610 = vmatprep.mubr.bf16.mxu0 %v3216
    %3611 = vmatmul.mubr.bf16.gmra.mrb[0].mxu0 %v3214
    %v3612 = vpop.f32.mrb[0].mxu0
    %v3613 = vadd.f32 0.0, %v3612
    %v3614 = vpop.f32.mrb[0].mxu0
    %v3615 = vpop.f32.mrb[0].mxu0
    %v3616 = vadd.f32 0.0, %v3615
    %v3617 = vpop.f32.mrb[0].mxu0
    %3618 = vmatprep.mubr.bf16.mxu0 %v3222
    %3619 = vmatmul.mubr.bf16.gmra.mrb[0].mxu0 %v3220
    %v3620 = vpop.f32.mrb[0].mxu0
    %v3621 = vadd.f32 0.0, %v3620
    %v3622 = vpop.f32.mrb[0].mxu0
    %v3623 = vpop.f32.mrb[0].mxu0
    %v3624 = vadd.f32 0.0, %v3623
    %v3625 = vpop.f32.mrb[0].mxu0
    %3626 = vmatprep.mubr.bf16.mxu0 %v3228
    %3627 = vmatmul.mubr.bf16.gmra.mrb[0].mxu0 %v3226
    %v3628 = vpop.f32.mrb[0].mxu0
    %v3629 = vadd.f32 0.0, %v3628
    %v3630 = vpop.f32.mrb[0].mxu0
    %v3631 = vpop.f32.mrb[0].mxu0
    %v3632 = vadd.f32 0.0, %v3631
    %v3633 = vpop.f32.mrb[0].mxu0
    %3634 = vmatprep.mubr.bf16.mxu0 %v3234
    %3635 = vmatmul.mubr.bf16.gmra.mrb[0].mxu0 %v3232
    %v3636 = vpop.f32.mrb[0].mxu0
    %v3637 = vadd.f32 0.0, %v3636
    %v3638 = vpop.f32.mrb[0].mxu0
    %v3639 = vpop.f32.mrb[0].mxu0
    %v3640 = vadd.f32 0.0, %v3639
    %v3641 = vpop.f32.mrb[0].mxu0
    %3642 = vmatprep.mubr.bf16.mxu0 %v3240
    %3643 = vmatmul.mubr.bf16.gmra.mrb[0].mxu0 %v3238
    %v3644 = vpop.f32.mrb[0].mxu0
    %v3645 = vadd.f32 0.0, %v3644
    %v3646 = vpop.f32.mrb[0].mxu0
    %v3647 = vpop.f32.mrb[0].mxu0
    %v3648 = vadd.f32 0.0, %v3647
    %v3649 = vpop.f32.mrb[0].mxu0
    %3650 = vmatprep.mubr.bf16.mxu0 %v3246
    %3651 = vmatmul.mubr.bf16.gmra.mrb[0].mxu0 %v3244
    %v3652 = vpop.f32.mrb[0].mxu0
    %v3653 = vadd.f32 0.0, %v3652
    %v3654 = vpop.f32.mrb[0].mxu0
    %v3655 = vpop.f32.mrb[0].mxu0
    %v3656 = vadd.f32 0.0, %v3655
    %v3657 = vpop.f32.mrb[0].mxu0
    %3658 = vmatprep.mubr.bf16.mxu0 %v3252
    %3659 = vmatmul.mubr.bf16.gmra.mrb[0].mxu0 %v3250
    %v3660 = vpop.f32.mrb[0].mxu0
    %v3661 = vadd.f32 0.0, %v3660
    %v3662 = vpop.f32.mrb[0].mxu0
    %v3663 = vpop.f32.mrb[0].mxu0
    %v3664 = vadd.f32 0.0, %v3663
    %v3665 = vpop.f32.mrb[0].mxu0
    %3666 = vmatprep.mubr.bf16.mxu0 %v3258
    %3667 = vmatmul.mubr.bf16.gmra.mrb[0].mxu0 %v3256
    %v3668 = vpop.f32.mrb[0].mxu0
    %v3669 = vadd.f32 0.0, %v3668
    %v3670 = vpop.f32.mrb[0].mxu0
    %v3671 = vpop.f32.mrb[0].mxu0
    %v3672 = vadd.f32 0.0, %v3671
    %v3673 = vpop.f32.mrb[0].mxu0
    %3674 = vmatprep.mubr.bf16.mxu0 %v3264
    %3675 = vmatmul.mubr.bf16.gmra.mrb[0].mxu0 %v3262
    %v3676 = vpop.f32.mrb[0].mxu0
    %v3677 = vadd.f32 0.0, %v3676
    %v3678 = vpop.f32.mrb[0].mxu0
    %v3679 = vpop.f32.mrb[0].mxu0
    %v3680 = vadd.f32 0.0, %v3679
    %v3681 = vpop.f32.mrb[0].mxu0
    %3682 = vmatprep.mubr.bf16.mxu0 %v3270
    %3683 = vmatmul.mubr.bf16.gmra.mrb[0].mxu0 %v3268
    %v3684 = vpop.f32.mrb[0].mxu0
    %v3685 = vadd.f32 0.0, %v3684
    %v3686 = vpop.f32.mrb[0].mxu0
    %v3687 = vpop.f32.mrb[0].mxu0
    %v3688 = vadd.f32 0.0, %v3687
    %v3689 = vpop.f32.mrb[0].mxu0
    %3690 = vmatprep.mubr.bf16.mxu0 %v3276
    %3691 = vmatmul.mubr.bf16.gmra.mrb[0].mxu0 %v3274
    %v3692 = vpop.f32.mrb[0].mxu0
    %v3693 = vadd.f32 0.0, %v3692
    %v3694 = vpop.f32.mrb[0].mxu0
    %v3695 = vpop.f32.mrb[0].mxu0
    %v3696 = vadd.f32 0.0, %v3695
    %v3697 = vpop.f32.mrb[0].mxu0
    %3698 = vmatprep.mubr.bf16.mxu0 %v3282
    %3699 = vmatmul.mubr.bf16.gmra.mrb[0].mxu0 %v3280
    %v3700 = vpop.f32.mrb[0].mxu0
    %v3701 = vadd.f32 0.0, %v3700
    %v3702 = vpop.f32.mrb[0].mxu0
    %v3703 = vpop.f32.mrb[0].mxu0
    %v3704 = vadd.f32 0.0, %v3703
    %v3705 = vpop.f32.mrb[0].mxu0
    %3706 = vmatprep.mubr.bf16.mxu0 %v3281
    %3707 = vmatmul.mubr.bf16.gmra.mrb[0].mxu0 %v3279
    %v3708 = vpop.f32.mrb[0].mxu0
    %v3709 = vadd.f32 0.0, %v3708
    %v3710 = vpop.f32.mrb[0].mxu0
    %v3711 = vpop.f32.mrb[0].mxu0
    %v3712 = vpop.f32.mrb[0].mxu0
    %3713 = vdwg.mxu0
    %3714 = vmatprep.subr.bf16.mxu0 0
    %3715 = vmatpush1.bf16.msra.mxu0 %v3466
    %3716 = vmatprep.subr.bf16.mxu0 0
    %3717 = vmatpush1.bf16.msra.mxu0 %v3467
    %3718 = vmatprep.subr.bf16.mxu0 0
    %3719 = vmatpush1.bf16.msra.mxu0 %v3468
    %3720 = vmatprep.subr.bf16.mxu0 0
    %3721 = vmatpush1.bf16.msra.mxu0 %v3469
    %3722 = vmatprep.subr.bf16.mxu0 0
    %3723 = vmatpush1.bf16.msra.mxu0 %v3470
    %3724 = vmatprep.subr.bf16.mxu0 0
    %3725 = vmatpush1.bf16.msra.mxu0 %v3471
    %3726 = vmatprep.subr.bf16.mxu0 0
    %3727 = vmatpush1.bf16.msra.mxu0 %v3472
    %3728 = vmatprep.subr.bf16.mxu0 0
    %3729 = vmatpush1.bf16.msra.mxu0 %v3473
    %3730 = vmatprep.subr.bf16.mxu0 0
    %3731 = vmatpush1.bf16.msra.mxu0 0
    %3732 = vmatprep.subr.bf16.mxu0 0
    %3733 = vmatpush1.bf16.msra.mxu0 0
    %3734 = vmatprep.subr.bf16.mxu0 0
    %3735 = vmatpush1.bf16.msra.mxu0 0
    %3736 = vmatprep.subr.bf16.mxu0 0
    %3737 = vmatpush1.bf16.msra.mxu0 0
    %3738 = vmatprep.subr.bf16.mxu0 0
    %3739 = vmatpush1.bf16.msra.mxu0 0
    %3740 = vmatprep.subr.bf16.mxu0 0
    %3741 = vmatpush1.bf16.msra.mxu0 0
    %3742 = vmatprep.subr.bf16.mxu0 0
    %3743 = vmatpush1.bf16.msra.mxu0 0
    %3744 = vmatprep.subr.bf16.mxu0 0
    %3745 = vmatpush1.bf16.msra.mxu0 0
    %3746 = vmatprep.mubr.bf16.mxu0 0
    %3747 = vmatmul.mubr.bf16.gmra.mrb[0].mxu0 %v3158
    %v3748 = vpop.f32.mrb[0].mxu0
    %v3749 = vadd.f32 %v3533, %v3748
    %v3750 = vpop.f32.mrb[0].mxu0
    %v3751 = vpop.f32.mrb[0].mxu0
    %v3752 = vadd.f32 %v3536, %v3751
    %v3753 = vpop.f32.mrb[0].mxu0
    %3754 = vmatprep.mubr.bf16.mxu0 0
    %3755 = vmatmul.mubr.bf16.gmra.mrb[0].mxu0 %v3164
    %v3756 = vpop.f32.mrb[0].mxu0
    %v3757 = vadd.f32 %v3541, %v3756
    %v3758 = vpop.f32.mrb[0].mxu0
    %v3759 = vpop.f32.mrb[0].mxu0
    %v3760 = vadd.f32 %v3544, %v3759
    %v3761 = vpop.f32.mrb[0].mxu0
    %3762 = vmatprep.mubr.bf16.mxu0 0
    %3763 = vmatmul.mubr.bf16.gmra.mrb[0].mxu0 %v3170
    %v3764 = vpop.f32.mrb[0].mxu0
    %v3765 = vadd.f32 %v3549, %v3764
    %v3766 = vpop.f32.mrb[0].mxu0
    %v3767 = vpop.f32.mrb[0].mxu0
    %v3768 = vadd.f32 %v3552, %v3767
    %v3769 = vpop.f32.mrb[0].mxu0
    %3770 = vmatprep.mubr.bf16.mxu0 0
    %3771 = vmatmul.mubr.bf16.gmra.mrb[0].mxu0 %v3176
    %v3772 = vpop.f32.mrb[0].mxu0
    %v3773 = vadd.f32 %v3557, %v3772
    %v3774 = vpop.f32.mrb[0].mxu0
    %v3775 = vpop.f32.mrb[0].mxu0
    %v3776 = vadd.f32 %v3560, %v3775
    %v3777 = vpop.f32.mrb[0].mxu0
    %3778 = vmatprep.mubr.bf16.mxu0 0
    %3779 = vmatmul.mubr.bf16.gmra.mrb[0].mxu0 %v3182
    %v3780 = vpop.f32.mrb[0].mxu0
    %v3781 = vadd.f32 %v3565, %v3780
    %v3782 = vpop.f32.mrb[0].mxu0
    %v3783 = vpop.f32.mrb[0].mxu0
    %v3784 = vadd.f32 %v3568, %v3783
    %v3785 = vpop.f32.mrb[0].mxu0
    %3786 = vmatprep.mubr.bf16.mxu0 0
    %3787 = vmatmul.mubr.bf16.gmra.mrb[0].mxu0 %v3188
    %v3788 = vpop.f32.mrb[0].mxu0
    %v3789 = vadd.f32 %v3573, %v3788
    %v3790 = vpop.f32.mrb[0].mxu0
    %v3791 = vpop.f32.mrb[0].mxu0
    %v3792 = vadd.f32 %v3576, %v3791
    %v3793 = vpop.f32.mrb[0].mxu0
    %3794 = vmatprep.mubr.bf16.mxu0 0
    %3795 = vmatmul.mubr.bf16.gmra.mrb[0].mxu0 %v3194
    %v3796 = vpop.f32.mrb[0].mxu0
    %v3797 = vadd.f32 %v3581, %v3796
    %v3798 = vpop.f32.mrb[0].mxu0
    %v3799 = vpop.f32.mrb[0].mxu0
    %v3800 = vadd.f32 %v3584, %v3799
    %v3801 = vpop.f32.mrb[0].mxu0
    %3802 = vmatprep.mubr.bf16.mxu0 0
    %3803 = vmatmul.mubr.bf16.gmra.mrb[0].mxu0 %v3200
    %v3804 = vpop.f32.mrb[0].mxu0
    %v3805 = vadd.f32 %v3589, %v3804
    %v3806 = vpop.f32.mrb[0].mxu0
    %v3807 = vpop.f32.mrb[0].mxu0
    %v3808 = vadd.f32 %v3592, %v3807
    %v3809 = vpop.f32.mrb[0].mxu0
    %3810 = vmatprep.mubr.bf16.mxu0 0
    %3811 = vmatmul.mubr.bf16.gmra.mrb[0].mxu0 %v3206
    %v3812 = vpop.f32.mrb[0].mxu0
    %v3813 = vadd.f32 %v3597, %v3812
    %v3814 = vpop.f32.mrb[0].mxu0
    %v3815 = vpop.f32.mrb[0].mxu0
    %v3816 = vadd.f32 %v3600, %v3815
    %v3817 = vpop.f32.mrb[0].mxu0
    %3818 = vmatprep.mubr.bf16.mxu0 0
    %3819 = vmatmul.mubr.bf16.gmra.mrb[0].mxu0 %v3212
    %v3820 = vpop.f32.mrb[0].mxu0
    %v3821 = vadd.f32 %v3605, %v3820
    %v3822 = vpop.f32.mrb[0].mxu0
    %v3823 = vpop.f32.mrb[0].mxu0
    %v3824 = vadd.f32 %v3608, %v3823
    %v3825 = vpop.f32.mrb[0].mxu0
    %3826 = vmatprep.mubr.bf16.mxu0 0
    %3827 = vmatmul.mubr.bf16.gmra.mrb[0].mxu0 %v3218
    %v3828 = vpop.f32.mrb[0].mxu0
    %v3829 = vadd.f32 %v3613, %v3828
    %v3830 = vpop.f32.mrb[0].mxu0
    %v3831 = vpop.f32.mrb[0].mxu0
    %v3832 = vadd.f32 %v3616, %v3831
    %v3833 = vpop.f32.mrb[0].mxu0
    %3834 = vmatprep.mubr.bf16.mxu0 0
    %3835 = vmatmul.mubr.bf16.gmra.mrb[0].mxu0 %v3224
    %v3836 = vpop.f32.mrb[0].mxu0
    %v3837 = vadd.f32 %v3621, %v3836
    %v3838 = vpop.f32.mrb[0].mxu0
    %v3839 = vpop.f32.mrb[0].mxu0
    %v3840 = vadd.f32 %v3624, %v3839
    %v3841 = vpop.f32.mrb[0].mxu0
    %3842 = vmatprep.mubr.bf16.mxu0 0
    %3843 = vmatmul.mubr.bf16.gmra.mrb[0].mxu0 %v3230
    %v3844 = vpop.f32.mrb[0].mxu0
    %v3845 = vadd.f32 %v3629, %v3844
    %v3846 = vpop.f32.mrb[0].mxu0
    %v3847 = vpop.f32.mrb[0].mxu0
    %v3848 = vadd.f32 %v3632, %v3847
    %v3849 = vpop.f32.mrb[0].mxu0
    %3850 = vmatprep.mubr.bf16.mxu0 0
    %3851 = vmatmul.mubr.bf16.gmra.mrb[0].mxu0 %v3236
    %v3852 = vpop.f32.mrb[0].mxu0
    %v3853 = vadd.f32 %v3637, %v3852
    %v3854 = vpop.f32.mrb[0].mxu0
    %v3855 = vpop.f32.mrb[0].mxu0
    %v3856 = vadd.f32 %v3640, %v3855
    %v3857 = vpop.f32.mrb[0].mxu0
    %3858 = vmatprep.mubr.bf16.mxu0 0
    %3859 = vmatmul.mubr.bf16.gmra.mrb[0].mxu0 %v3242
    %v3860 = vpop.f32.mrb[0].mxu0
    %v3861 = vadd.f32 %v3645, %v3860
    %v3862 = vpop.f32.mrb[0].mxu0
    %v3863 = vpop.f32.mrb[0].mxu0
    %v3864 = vadd.f32 %v3648, %v3863
    %v3865 = vpop.f32.mrb[0].mxu0
    %3866 = vmatprep.mubr.bf16.mxu0 0
    %3867 = vmatmul.mubr.bf16.gmra.mrb[0].mxu0 %v3248
    %v3868 = vpop.f32.mrb[0].mxu0
    %v3869 = vadd.f32 %v3653, %v3868
    %v3870 = vpop.f32.mrb[0].mxu0
    %v3871 = vpop.f32.mrb[0].mxu0
    %v3872 = vadd.f32 %v3656, %v3871
    %v3873 = vpop.f32.mrb[0].mxu0
    %3874 = vmatprep.mubr.bf16.mxu0 0
    %3875 = vmatmul.mubr.bf16.gmra.mrb[0].mxu0 %v3254
    %v3876 = vpop.f32.mrb[0].mxu0
    %v3877 = vadd.f32 %v3661, %v3876
    %v3878 = vpop.f32.mrb[0].mxu0
    %v3879 = vpop.f32.mrb[0].mxu0
    %v3880 = vadd.f32 %v3664, %v3879
    %v3881 = vpop.f32.mrb[0].mxu0
    %3882 = vmatprep.mubr.bf16.mxu0 0
    %3883 = vmatmul.mubr.bf16.gmra.mrb[0].mxu0 %v3260
    %v3884 = vpop.f32.mrb[0].mxu0
    %v3885 = vadd.f32 %v3669, %v3884
    %v3886 = vpop.f32.mrb[0].mxu0
    %v3887 = vpop.f32.mrb[0].mxu0
    %v3888 = vadd.f32 %v3672, %v3887
    %v3889 = vpop.f32.mrb[0].mxu0
    %3890 = vmatprep.mubr.bf16.mxu0 0
    %3891 = vmatmul.mubr.bf16.gmra.mrb[0].mxu0 %v3266
    %v3892 = vpop.f32.mrb[0].mxu0
    %v3893 = vadd.f32 %v3677, %v3892
    %v3894 = vpop.f32.mrb[0].mxu0
    %v3895 = vpop.f32.mrb[0].mxu0
    %v3896 = vadd.f32 %v3680, %v3895
    %v3897 = vpop.f32.mrb[0].mxu0
    %3898 = vmatprep.mubr.bf16.mxu0 0
    %3899 = vmatmul.mubr.bf16.gmra.mrb[0].mxu0 %v3272
    %v3900 = vpop.f32.mrb[0].mxu0
    %v3901 = vadd.f32 %v3685, %v3900
    %v3902 = vpop.f32.mrb[0].mxu0
    %v3903 = vpop.f32.mrb[0].mxu0
    %v3904 = vadd.f32 %v3688, %v3903
    %v3905 = vpop.f32.mrb[0].mxu0
    %3906 = vmatprep.mubr.bf16.mxu0 0
    %3907 = vmatmul.mubr.bf16.gmra.mrb[0].mxu0 %v3278
    %v3908 = vpop.f32.mrb[0].mxu0
    %v3909 = vadd.f32 %v3693, %v3908
    %v3910 = vpop.f32.mrb[0].mxu0
    %v3911 = vpop.f32.mrb[0].mxu0
    %v3912 = vadd.f32 %v3696, %v3911
    %v3913 = vpop.f32.mrb[0].mxu0
    %3914 = vmatprep.mubr.bf16.mxu0 0
    %3915 = vmatmul.mubr.bf16.gmra.mrb[0].mxu0 %v3284
    %v3916 = vpop.f32.mrb[0].mxu0
    %v3917 = vadd.f32 %v3701, %v3916
    %v3918 = vpop.f32.mrb[0].mxu0
    %v3919 = vpop.f32.mrb[0].mxu0
    %v3920 = vadd.f32 %v3704, %v3919
    %v3921 = vpop.f32.mrb[0].mxu0
    %3922 = vmatprep.mubr.bf16.mxu0 0
    %3923 = vmatmul.mubr.bf16.gmra.mrb[0].mxu0 %v3283
    %v3924 = vpop.f32.mrb[0].mxu0
    %v3925 = vadd.f32 %v3709, %v3924
    %v3926 = vpop.f32.mrb[0].mxu0
    %v3927 = vpop.f32.mrb[0].mxu0
    %v3928 = vpop.f32.mrb[0].mxu0
    %3929 = vdwg.mxu0
    %v3978 = vunpack.c.l.b16 %v3041
    %v3979 = vunpack.c.l.b16 %v3042
    %v3980 = vunpack.c.l.b16 %v3043
    %v3981 = vunpack.c.l.b16 %v3044
    %v3982 = vunpack.c.l.b16 %v3045
    %v3983 = vunpack.c.l.b16 %v3046
    %v3984 = vunpack.c.l.b16 %v3047
    %v3985 = vunpack.c.l.b16 %v3048
    %v3986 = vunpack.c.l.b16 %v3049
    %v3987 = vunpack.c.l.b16 %v3050
    %v3988 = vunpack.c.l.b16 %v3051
    %v3989 = vunpack.c.l.b16 %v3052
    %v3990 = vunpack.c.l.b16 %v3053
    %v3991 = vunpack.c.l.b16 %v3054
    %v3992 = vunpack.c.l.b16 %v3055
    %v3993 = vunpack.c.l.b16 %v3056
    %v3994 = vunpack.c.l.b16 %v3057
    %v3995 = vunpack.c.l.b16 %v3058
    %v3996 = vunpack.c.l.b16 %v3059
    %v3997 = vunpack.c.l.b16 %v3060
    %v3998 = vunpack.c.l.b16 %v3061
    %v3999 = vunpack.c.l.b16 %v3062
    %v4000 = vunpack.c.l.b16 %v3063
    %v4001 = vunpack.c.l.b16 %v3064
    %v4002 = vunpack.c.l.b16 %v3065
    %v4003 = vunpack.c.l.b16 %v3066
    %v4004 = vunpack.c.l.b16 %v3067
    %v4005 = vunpack.c.l.b16 %v3068
    %v4006 = vunpack.c.l.b16 %v3069
    %v4007 = vunpack.c.l.b16 %v3070
    %v4008 = vunpack.c.l.b16 %v3071
    %v4009 = vunpack.c.l.b16 %v3072
    %v4010 = vunpack.c.l.b16 %v3073
    %v4011 = vunpack.c.l.b16 %v3074
    %v4012 = vunpack.c.l.b16 %v3075
    %v4013 = vunpack.c.l.b16 %v3076
    %v4014 = vunpack.c.l.b16 %v3077
    %v4015 = vunpack.c.l.b16 %v3078
    %v4016 = vunpack.c.l.b16 %v3079
    %v4017 = vunpack.c.l.b16 %v3080
    %v4018 = vunpack.c.l.b16 %v3081
    %v4019 = vunpack.c.l.b16 %v3082
    %v4020 = vunpack.c.l.b16 %v3083
    %v4021 = vunpack.c.l.b16 %v3084
    %v4022 = vunpack.c.l.b16 %v3085
    %v4023 = vunpack.c.l.b16 %v3086
    %v4024 = vunpack.c.l.b16 %v3087
    %v4025 = vunpack.c.l.b16 %v3088
    %v4026 = vpack.c.b16 %v3979, %v3978
    %v4027 = vpack.c.b16 %v3981, %v3980
    %v4028 = vpack.c.b16 %v3983, %v3982
    %v4029 = vpack.c.b16 %v3985, %v3984
    %v4030 = vpack.c.b16 %v3987, %v3986
    %v4031 = vpack.c.b16 %v3989, %v3988
    %v4032 = vpack.c.b16 %v3991, %v3990
    %v4033 = vpack.c.b16 %v3993, %v3992
    %v4034 = vpack.c.b16 %v3995, %v3994
    %v4035 = vpack.c.b16 %v3997, %v3996
    %v4036 = vpack.c.b16 %v3999, %v3998
    %v4037 = vpack.c.b16 %v4001, %v4000
    %v4038 = vpack.c.b16 %v4003, %v4002
    %v4039 = vpack.c.b16 %v4005, %v4004
    %v4040 = vpack.c.b16 %v4007, %v4006
    %v4041 = vpack.c.b16 %v4009, %v4008
    %v4042 = vpack.c.b16 %v4011, %v4010
    %v4043 = vpack.c.b16 %v4013, %v4012
    %v4044 = vpack.c.b16 %v4015, %v4014
    %v4045 = vpack.c.b16 %v4017, %v4016
    %v4046 = vpack.c.b16 %v4019, %v4018
    %v4047 = vpack.c.b16 %v4021, %v4020
    %v4048 = vpack.c.b16 %v4023, %v4022
    %v4049 = vpack.c.b16 %v4025, %v4024
    %4074 = vmatprep.subr.bf16.mxu0 0
    %4075 = vmatpush1.bf16.msra.mxu0 %v4026
    %4076 = vmatprep.subr.bf16.mxu0 0
    %4077 = vmatpush1.bf16.msra.mxu0 %v4027
    %4078 = vmatprep.subr.bf16.mxu0 0
    %4079 = vmatpush1.bf16.msra.mxu0 %v4028
    %4080 = vmatprep.subr.bf16.mxu0 0
    %4081 = vmatpush1.bf16.msra.mxu0 %v4029
    %4082 = vmatprep.subr.bf16.mxu0 0
    %4083 = vmatpush1.bf16.msra.mxu0 %v4030
    %4084 = vmatprep.subr.bf16.mxu0 0
    %4085 = vmatpush1.bf16.msra.mxu0 %v4031
    %4086 = vmatprep.subr.bf16.mxu0 0
    %4087 = vmatpush1.bf16.msra.mxu0 %v4032
    %4088 = vmatprep.subr.bf16.mxu0 0
    %4089 = vmatpush1.bf16.msra.mxu0 %v4033
    %4090 = vmatprep.subr.bf16.mxu0 0
    %4091 = vmatpush1.bf16.msra.mxu0 %v4034
    %4092 = vmatprep.subr.bf16.mxu0 0
    %4093 = vmatpush1.bf16.msra.mxu0 %v4035
    %4094 = vmatprep.subr.bf16.mxu0 0
    %4095 = vmatpush1.bf16.msra.mxu0 %v4036
    %4096 = vmatprep.subr.bf16.mxu0 0
    %4097 = vmatpush1.bf16.msra.mxu0 %v4037
    %4098 = vmatprep.subr.bf16.mxu0 0
    %4099 = vmatpush1.bf16.msra.mxu0 %v4038
    %4100 = vmatprep.subr.bf16.mxu0 0
    %4101 = vmatpush1.bf16.msra.mxu0 %v4039
    %4102 = vmatprep.subr.bf16.mxu0 0
    %4103 = vmatpush1.bf16.msra.mxu0 %v4040
    %4104 = vmatprep.subr.bf16.mxu0 0
    %4105 = vmatpush1.bf16.msra.mxu0 %v4041
    %4106 = vmatprep.mubr.bf16.mxu0 %v2754
    %4107 = vmatmul.mubr.bf16.gmra.mrb[0].mxu0 %v2717
    %v4108 = vpop.f32.mrb[0].mxu0
    %v4109 = vadd.f32 %v3749, %v4108
    %v4110 = vpop.f32.mrb[0].mxu0
    %v4111 = vpop.f32.mrb[0].mxu0
    %v4112 = vadd.f32 %v3752, %v4111
    %v4113 = vpop.f32.mrb[0].mxu0
    %4114 = vmatprep.mubr.bf16.mxu0 %v2762
    %4115 = vmatmul.mubr.bf16.gmra.mrb[0].mxu0 %v2718
    %v4116 = vpop.f32.mrb[0].mxu0
    %v4117 = vadd.f32 %v3757, %v4116
    %v4118 = vpop.f32.mrb[0].mxu0
    %v4119 = vpop.f32.mrb[0].mxu0
    %v4120 = vadd.f32 %v3760, %v4119
    %v4121 = vpop.f32.mrb[0].mxu0
    %4122 = vmatprep.mubr.bf16.mxu0 %v2770
    %4123 = vmatmul.mubr.bf16.gmra.mrb[0].mxu0 %v2719
    %v4124 = vpop.f32.mrb[0].mxu0
    %v4125 = vadd.f32 %v3765, %v4124
    %v4126 = vpop.f32.mrb[0].mxu0
    %v4127 = vpop.f32.mrb[0].mxu0
    %v4128 = vadd.f32 %v3768, %v4127
    %v4129 = vpop.f32.mrb[0].mxu0
    %4130 = vmatprep.mubr.bf16.mxu0 %v2778
    %4131 = vmatmul.mubr.bf16.gmra.mrb[0].mxu0 %v2720
    %v4132 = vpop.f32.mrb[0].mxu0
    %v4133 = vadd.f32 %v3773, %v4132
    %v4134 = vpop.f32.mrb[0].mxu0
    %v4135 = vpop.f32.mrb[0].mxu0
    %v4136 = vadd.f32 %v3776, %v4135
    %v4137 = vpop.f32.mrb[0].mxu0
    %4138 = vmatprep.mubr.bf16.mxu0 %v2786
    %4139 = vmatmul.mubr.bf16.gmra.mrb[0].mxu0 %v2721
    %v4140 = vpop.f32.mrb[0].mxu0
    %v4141 = vadd.f32 %v3781, %v4140
    %v4142 = vpop.f32.mrb[0].mxu0
    %v4143 = vpop.f32.mrb[0].mxu0
    %v4144 = vadd.f32 %v3784, %v4143
    %v4145 = vpop.f32.mrb[0].mxu0
    %4146 = vmatprep.mubr.bf16.mxu0 %v2794
    %4147 = vmatmul.mubr.bf16.gmra.mrb[0].mxu0 %v2722
    %v4148 = vpop.f32.mrb[0].mxu0
    %v4149 = vadd.f32 %v3789, %v4148
    %v4150 = vpop.f32.mrb[0].mxu0
    %v4151 = vpop.f32.mrb[0].mxu0
    %v4152 = vadd.f32 %v3792, %v4151
    %v4153 = vpop.f32.mrb[0].mxu0
    %4154 = vmatprep.mubr.bf16.mxu0 %v2802
    %4155 = vmatmul.mubr.bf16.gmra.mrb[0].mxu0 %v2723
    %v4156 = vpop.f32.mrb[0].mxu0
    %v4157 = vadd.f32 %v3797, %v4156
    %v4158 = vpop.f32.mrb[0].mxu0
    %v4159 = vpop.f32.mrb[0].mxu0
    %v4160 = vadd.f32 %v3800, %v4159
    %v4161 = vpop.f32.mrb[0].mxu0
    %4162 = vmatprep.mubr.bf16.mxu0 %v2810
    %4163 = vmatmul.mubr.bf16.gmra.mrb[0].mxu0 %v2724
    %v4164 = vpop.f32.mrb[0].mxu0
    %v4165 = vadd.f32 %v3805, %v4164
    %v4166 = vpop.f32.mrb[0].mxu0
    %v4167 = vpop.f32.mrb[0].mxu0
    %v4168 = vadd.f32 %v3808, %v4167
    %v4169 = vpop.f32.mrb[0].mxu0
    %4170 = vmatprep.mubr.bf16.mxu0 %v2818
    %4171 = vmatmul.mubr.bf16.gmra.mrb[0].mxu0 %v2725
    %v4172 = vpop.f32.mrb[0].mxu0
    %v4173 = vadd.f32 %v3813, %v4172
    %v4174 = vpop.f32.mrb[0].mxu0
    %v4175 = vpop.f32.mrb[0].mxu0
    %v4176 = vadd.f32 %v3816, %v4175
    %v4177 = vpop.f32.mrb[0].mxu0
    %4178 = vmatprep.mubr.bf16.mxu0 %v2826
    %4179 = vmatmul.mubr.bf16.gmra.mrb[0].mxu0 %v2726
    %v4180 = vpop.f32.mrb[0].mxu0
    %v4181 = vadd.f32 %v3821, %v4180
    %v4182 = vpop.f32.mrb[0].mxu0
    %v4183 = vpop.f32.mrb[0].mxu0
    %v4184 = vadd.f32 %v3824, %v4183
    %v4185 = vpop.f32.mrb[0].mxu0
    %4186 = vmatprep.mubr.bf16.mxu0 %v2834
    %4187 = vmatmul.mubr.bf16.gmra.mrb[0].mxu0 %v2727
    %v4188 = vpop.f32.mrb[0].mxu0
    %v4189 = vadd.f32 %v3829, %v4188
    %v4190 = vpop.f32.mrb[0].mxu0
    %v4191 = vpop.f32.mrb[0].mxu0
    %v4192 = vadd.f32 %v3832, %v4191
    %v4193 = vpop.f32.mrb[0].mxu0
    %4194 = vmatprep.mubr.bf16.mxu0 %v2842
    %4195 = vmatmul.mubr.bf16.gmra.mrb[0].mxu0 %v2728
    %v4196 = vpop.f32.mrb[0].mxu0
    %v4197 = vadd.f32 %v3837, %v4196
    %v4198 = vpop.f32.mrb[0].mxu0
    %v4199 = vpop.f32.mrb[0].mxu0
    %v4200 = vadd.f32 %v3840, %v4199
    %v4201 = vpop.f32.mrb[0].mxu0
    %4202 = vmatprep.mubr.bf16.mxu0 %v2850
    %4203 = vmatmul.mubr.bf16.gmra.mrb[0].mxu0 %v2729
    %v4204 = vpop.f32.mrb[0].mxu0
    %v4205 = vadd.f32 %v3845, %v4204
    %v4206 = vpop.f32.mrb[0].mxu0
    %v4207 = vpop.f32.mrb[0].mxu0
    %v4208 = vadd.f32 %v3848, %v4207
    %v4209 = vpop.f32.mrb[0].mxu0
    %4210 = vmatprep.mubr.bf16.mxu0 %v2858
    %4211 = vmatmul.mubr.bf16.gmra.mrb[0].mxu0 %v2730
    %v4212 = vpop.f32.mrb[0].mxu0
    %v4213 = vadd.f32 %v3853, %v4212
    %v4214 = vpop.f32.mrb[0].mxu0
    %v4215 = vpop.f32.mrb[0].mxu0
    %v4216 = vadd.f32 %v3856, %v4215
    %v4217 = vpop.f32.mrb[0].mxu0
    %4218 = vmatprep.mubr.bf16.mxu0 %v2866
    %4219 = vmatmul.mubr.bf16.gmra.mrb[0].mxu0 %v2731
    %v4220 = vpop.f32.mrb[0].mxu0
    %v4221 = vadd.f32 %v3861, %v4220
    %v4222 = vpop.f32.mrb[0].mxu0
    %v4223 = vpop.f32.mrb[0].mxu0
    %v4224 = vadd.f32 %v3864, %v4223
    %v4225 = vpop.f32.mrb[0].mxu0
    %4226 = vmatprep.mubr.bf16.mxu0 %v2874
    %4227 = vmatmul.mubr.bf16.gmra.mrb[0].mxu0 %v2732
    %v4228 = vpop.f32.mrb[0].mxu0
    %v4229 = vadd.f32 %v3869, %v4228
    %v4230 = vpop.f32.mrb[0].mxu0
    %v4231 = vpop.f32.mrb[0].mxu0
    %v4232 = vadd.f32 %v3872, %v4231
    %v4233 = vpop.f32.mrb[0].mxu0
    %4234 = vmatprep.mubr.bf16.mxu0 %v2882
    %4235 = vmatmul.mubr.bf16.gmra.mrb[0].mxu0 %v2733
    %v4236 = vpop.f32.mrb[0].mxu0
    %v4237 = vadd.f32 %v3877, %v4236
    %v4238 = vpop.f32.mrb[0].mxu0
    %v4239 = vpop.f32.mrb[0].mxu0
    %v4240 = vadd.f32 %v3880, %v4239
    %v4241 = vpop.f32.mrb[0].mxu0
    %4242 = vmatprep.mubr.bf16.mxu0 %v2890
    %4243 = vmatmul.mubr.bf16.gmra.mrb[0].mxu0 %v2734
    %v4244 = vpop.f32.mrb[0].mxu0
    %v4245 = vadd.f32 %v3885, %v4244
    %v4246 = vpop.f32.mrb[0].mxu0
    %v4247 = vpop.f32.mrb[0].mxu0
    %v4248 = vadd.f32 %v3888, %v4247
    %v4249 = vpop.f32.mrb[0].mxu0
    %4250 = vmatprep.mubr.bf16.mxu0 %v2898
    %4251 = vmatmul.mubr.bf16.gmra.mrb[0].mxu0 %v2735
    %v4252 = vpop.f32.mrb[0].mxu0
    %v4253 = vadd.f32 %v3893, %v4252
    %v4254 = vpop.f32.mrb[0].mxu0
    %v4255 = vpop.f32.mrb[0].mxu0
    %v4256 = vadd.f32 %v3896, %v4255
    %v4257 = vpop.f32.mrb[0].mxu0
    %4258 = vmatprep.mubr.bf16.mxu0 %v2906
    %4259 = vmatmul.mubr.bf16.gmra.mrb[0].mxu0 %v2736
    %v4260 = vpop.f32.mrb[0].mxu0
    %v4261 = vadd.f32 %v3901, %v4260
    %v4262 = vpop.f32.mrb[0].mxu0
    %v4263 = vpop.f32.mrb[0].mxu0
    %v4264 = vadd.f32 %v3904, %v4263
    %v4265 = vpop.f32.mrb[0].mxu0
    %4266 = vmatprep.mubr.bf16.mxu0 %v2914
    %4267 = vmatmul.mubr.bf16.gmra.mrb[0].mxu0 %v2737
    %v4268 = vpop.f32.mrb[0].mxu0
    %v4269 = vadd.f32 %v3909, %v4268
    %v4270 = vpop.f32.mrb[0].mxu0
    %v4271 = vpop.f32.mrb[0].mxu0
    %v4272 = vadd.f32 %v3912, %v4271
    %v4273 = vpop.f32.mrb[0].mxu0
    %4274 = vmatprep.mubr.bf16.mxu0 %v2922
    %4275 = vmatmul.mubr.bf16.gmra.mrb[0].mxu0 %v2738
    %v4276 = vpop.f32.mrb[0].mxu0
    %v4277 = vadd.f32 %v3917, %v4276
    %v4278 = vpop.f32.mrb[0].mxu0
    %v4279 = vpop.f32.mrb[0].mxu0
    %v4280 = vadd.f32 %v3920, %v4279
    %v4281 = vpop.f32.mrb[0].mxu0
    %4282 = vmatprep.mubr.bf16.mxu0 %v2925
    %4283 = vmatmul.mubr.bf16.gmra.mrb[0].mxu0 %v2739
    %v4284 = vpop.f32.mrb[0].mxu0
    %v4285 = vadd.f32 %v3925, %v4284
    %v4286 = vpop.f32.mrb[0].mxu0
    %v4287 = vpop.f32.mrb[0].mxu0
    %v4288 = vpop.f32.mrb[0].mxu0
    %4289 = vdwg.mxu0
    %4290 = vmatprep.subr.bf16.mxu0 0
    %4291 = vmatpush1.bf16.msra.mxu0 %v4042
    %4292 = vmatprep.subr.bf16.mxu0 0
    %4293 = vmatpush1.bf16.msra.mxu0 %v4043
    %4294 = vmatprep.subr.bf16.mxu0 0
    %4295 = vmatpush1.bf16.msra.mxu0 %v4044
    %4296 = vmatprep.subr.bf16.mxu0 0
    %4297 = vmatpush1.bf16.msra.mxu0 %v4045
    %4298 = vmatprep.subr.bf16.mxu0 0
    %4299 = vmatpush1.bf16.msra.mxu0 %v4046
    %4300 = vmatprep.subr.bf16.mxu0 0
    %4301 = vmatpush1.bf16.msra.mxu0 %v4047
    %4302 = vmatprep.subr.bf16.mxu0 0
    %4303 = vmatpush1.bf16.msra.mxu0 %v4048
    %4304 = vmatprep.subr.bf16.mxu0 0
    %4305 = vmatpush1.bf16.msra.mxu0 %v4049
    %4306 = vmatprep.subr.bf16.mxu0 0
    %4307 = vmatpush1.bf16.msra.mxu0 0
    %4308 = vmatprep.subr.bf16.mxu0 0
    %4309 = vmatpush1.bf16.msra.mxu0 0
    %4310 = vmatprep.subr.bf16.mxu0 0
    %4311 = vmatpush1.bf16.msra.mxu0 0
    %4312 = vmatprep.subr.bf16.mxu0 0
    %4313 = vmatpush1.bf16.msra.mxu0 0
    %4314 = vmatprep.subr.bf16.mxu0 0
    %4315 = vmatpush1.bf16.msra.mxu0 0
    %4316 = vmatprep.subr.bf16.mxu0 0
    %4317 = vmatpush1.bf16.msra.mxu0 0
    %4318 = vmatprep.subr.bf16.mxu0 0
    %4319 = vmatpush1.bf16.msra.mxu0 0
    %4320 = vmatprep.subr.bf16.mxu0 0
    %4321 = vmatpush1.bf16.msra.mxu0 0
    %4322 = vmatprep.mubr.bf16.mxu0 0
    %4323 = vmatmul.mubr.bf16.gmra.mrb[0].mxu0 %v2975
    %v4324 = vpop.f32.mrb[0].mxu0
    %v4325 = vadd.f32 %v4109, %v4324
    %v4326 = vpop.f32.mrb[0].mxu0
    %v4327 = vpop.f32.mrb[0].mxu0
    %v4328 = vadd.f32 %v4112, %v4327
    %v4329 = vpop.f32.mrb[0].mxu0
    %4330 = vmatprep.mubr.bf16.mxu0 0
    %4331 = vmatmul.mubr.bf16.gmra.mrb[0].mxu0 %v2977
    %v4332 = vpop.f32.mrb[0].mxu0
    %v4333 = vadd.f32 %v4117, %v4332
    %v4334 = vpop.f32.mrb[0].mxu0
    %v4335 = vpop.f32.mrb[0].mxu0
    %v4336 = vadd.f32 %v4120, %v4335
    %v4337 = vpop.f32.mrb[0].mxu0
    %4338 = vmatprep.mubr.bf16.mxu0 0
    %4339 = vmatmul.mubr.bf16.gmra.mrb[0].mxu0 %v2979
    %v4340 = vpop.f32.mrb[0].mxu0
    %v4341 = vadd.f32 %v4125, %v4340
    %v4342 = vpop.f32.mrb[0].mxu0
    %v4343 = vpop.f32.mrb[0].mxu0
    %v4344 = vadd.f32 %v4128, %v4343
    %v4345 = vpop.f32.mrb[0].mxu0
    %4346 = vmatprep.mubr.bf16.mxu0 0
    %4347 = vmatmul.mubr.bf16.gmra.mrb[0].mxu0 %v2981
    %v4348 = vpop.f32.mrb[0].mxu0
    %v4349 = vadd.f32 %v4133, %v4348
    %v4350 = vpop.f32.mrb[0].mxu0
    %v4351 = vpop.f32.mrb[0].mxu0
    %v4352 = vadd.f32 %v4136, %v4351
    %v4353 = vpop.f32.mrb[0].mxu0
    %4354 = vmatprep.mubr.bf16.mxu0 0
    %4355 = vmatmul.mubr.bf16.gmra.mrb[0].mxu0 %v2983
    %v4356 = vpop.f32.mrb[0].mxu0
    %v4357 = vadd.f32 %v4141, %v4356
    %v4358 = vpop.f32.mrb[0].mxu0
    %v4359 = vpop.f32.mrb[0].mxu0
    %v4360 = vadd.f32 %v4144, %v4359
    %v4361 = vpop.f32.mrb[0].mxu0
    %4362 = vmatprep.mubr.bf16.mxu0 0
    %4363 = vmatmul.mubr.bf16.gmra.mrb[0].mxu0 %v2985
    %v4364 = vpop.f32.mrb[0].mxu0
    %v4365 = vadd.f32 %v4149, %v4364
    %v4366 = vpop.f32.mrb[0].mxu0
    %v4367 = vpop.f32.mrb[0].mxu0
    %v4368 = vadd.f32 %v4152, %v4367
    %v4369 = vpop.f32.mrb[0].mxu0
    %4370 = vmatprep.mubr.bf16.mxu0 0
    %4371 = vmatmul.mubr.bf16.gmra.mrb[0].mxu0 %v2987
    %v4372 = vpop.f32.mrb[0].mxu0
    %v4373 = vadd.f32 %v4157, %v4372
    %v4374 = vpop.f32.mrb[0].mxu0
    %v4375 = vpop.f32.mrb[0].mxu0
    %v4376 = vadd.f32 %v4160, %v4375
    %v4377 = vpop.f32.mrb[0].mxu0
    %4378 = vmatprep.mubr.bf16.mxu0 0
    %4379 = vmatmul.mubr.bf16.gmra.mrb[0].mxu0 %v2989
    %v4380 = vpop.f32.mrb[0].mxu0
    %v4381 = vadd.f32 %v4165, %v4380
    %v4382 = vpop.f32.mrb[0].mxu0
    %v4383 = vpop.f32.mrb[0].mxu0
    %v4384 = vadd.f32 %v4168, %v4383
    %v4385 = vpop.f32.mrb[0].mxu0
    %4386 = vmatprep.mubr.bf16.mxu0 0
    %4387 = vmatmul.mubr.bf16.gmra.mrb[0].mxu0 %v2991
    %v4388 = vpop.f32.mrb[0].mxu0
    %v4389 = vadd.f32 %v4173, %v4388
    %v4390 = vpop.f32.mrb[0].mxu0
    %v4391 = vpop.f32.mrb[0].mxu0
    %v4392 = vadd.f32 %v4176, %v4391
    %v4393 = vpop.f32.mrb[0].mxu0
    %4394 = vmatprep.mubr.bf16.mxu0 0
    %4395 = vmatmul.mubr.bf16.gmra.mrb[0].mxu0 %v2993
    %v4396 = vpop.f32.mrb[0].mxu0
    %v4397 = vadd.f32 %v4181, %v4396
    %v4398 = vpop.f32.mrb[0].mxu0
    %v4399 = vpop.f32.mrb[0].mxu0
    %v4400 = vadd.f32 %v4184, %v4399
    %v4401 = vpop.f32.mrb[0].mxu0
    %4402 = vmatprep.mubr.bf16.mxu0 0
    %4403 = vmatmul.mubr.bf16.gmra.mrb[0].mxu0 %v2995
    %v4404 = vpop.f32.mrb[0].mxu0
    %v4405 = vadd.f32 %v4189, %v4404
    %v4406 = vpop.f32.mrb[0].mxu0
    %v4407 = vpop.f32.mrb[0].mxu0
    %v4408 = vadd.f32 %v4192, %v4407
    %v4409 = vpop.f32.mrb[0].mxu0
    %4410 = vmatprep.mubr.bf16.mxu0 0
    %4411 = vmatmul.mubr.bf16.gmra.mrb[0].mxu0 %v2997
    %v4412 = vpop.f32.mrb[0].mxu0
    %v4413 = vadd.f32 %v4197, %v4412
    %v4414 = vpop.f32.mrb[0].mxu0
    %v4415 = vpop.f32.mrb[0].mxu0
    %v4416 = vadd.f32 %v4200, %v4415
    %v4417 = vpop.f32.mrb[0].mxu0
    %4418 = vmatprep.mubr.bf16.mxu0 0
    %4419 = vmatmul.mubr.bf16.gmra.mrb[0].mxu0 %v2999
    %v4420 = vpop.f32.mrb[0].mxu0
    %v4421 = vadd.f32 %v4205, %v4420
    %v4422 = vpop.f32.mrb[0].mxu0
    %v4423 = vpop.f32.mrb[0].mxu0
    %v4424 = vadd.f32 %v4208, %v4423
    %v4425 = vpop.f32.mrb[0].mxu0
    %4426 = vmatprep.mubr.bf16.mxu0 0
    %4427 = vmatmul.mubr.bf16.gmra.mrb[0].mxu0 %v3001
    %v4428 = vpop.f32.mrb[0].mxu0
    %v4429 = vadd.f32 %v4213, %v4428
    %v4430 = vpop.f32.mrb[0].mxu0
    %v4431 = vpop.f32.mrb[0].mxu0
    %v4432 = vadd.f32 %v4216, %v4431
    %v4433 = vpop.f32.mrb[0].mxu0
    %4434 = vmatprep.mubr.bf16.mxu0 0
    %4435 = vmatmul.mubr.bf16.gmra.mrb[0].mxu0 %v3003
    %v4436 = vpop.f32.mrb[0].mxu0
    %v4437 = vadd.f32 %v4221, %v4436
    %v4438 = vpop.f32.mrb[0].mxu0
    %v4439 = vpop.f32.mrb[0].mxu0
    %v4440 = vadd.f32 %v4224, %v4439
    %v4441 = vpop.f32.mrb[0].mxu0
    %4442 = vmatprep.mubr.bf16.mxu0 0
    %4443 = vmatmul.mubr.bf16.gmra.mrb[0].mxu0 %v3005
    %v4444 = vpop.f32.mrb[0].mxu0
    %v4445 = vadd.f32 %v4229, %v4444
    %v4446 = vpop.f32.mrb[0].mxu0
    %v4447 = vpop.f32.mrb[0].mxu0
    %v4448 = vadd.f32 %v4232, %v4447
    %v4449 = vpop.f32.mrb[0].mxu0
    %4450 = vmatprep.mubr.bf16.mxu0 0
    %4451 = vmatmul.mubr.bf16.gmra.mrb[0].mxu0 %v3007
    %v4452 = vpop.f32.mrb[0].mxu0
    %v4453 = vadd.f32 %v4237, %v4452
    %v4454 = vpop.f32.mrb[0].mxu0
    %v4455 = vpop.f32.mrb[0].mxu0
    %v4456 = vadd.f32 %v4240, %v4455
    %v4457 = vpop.f32.mrb[0].mxu0
    %4458 = vmatprep.mubr.bf16.mxu0 0
    %4459 = vmatmul.mubr.bf16.gmra.mrb[0].mxu0 %v3009
    %v4460 = vpop.f32.mrb[0].mxu0
    %v4461 = vadd.f32 %v4245, %v4460
    %v4462 = vpop.f32.mrb[0].mxu0
    %v4463 = vpop.f32.mrb[0].mxu0
    %v4464 = vadd.f32 %v4248, %v4463
    %v4465 = vpop.f32.mrb[0].mxu0
    %4466 = vmatprep.mubr.bf16.mxu0 0
    %4467 = vmatmul.mubr.bf16.gmra.mrb[0].mxu0 %v3011
    %v4468 = vpop.f32.mrb[0].mxu0
    %v4469 = vadd.f32 %v4253, %v4468
    %v4470 = vpop.f32.mrb[0].mxu0
    %v4471 = vpop.f32.mrb[0].mxu0
    %v4472 = vadd.f32 %v4256, %v4471
    %v4473 = vpop.f32.mrb[0].mxu0
    %4474 = vmatprep.mubr.bf16.mxu0 0
    %4475 = vmatmul.mubr.bf16.gmra.mrb[0].mxu0 %v3013
    %v4476 = vpop.f32.mrb[0].mxu0
    %v4477 = vadd.f32 %v4261, %v4476
    %v4478 = vpop.f32.mrb[0].mxu0
    %v4479 = vpop.f32.mrb[0].mxu0
    %v4480 = vadd.f32 %v4264, %v4479
    %v4481 = vpop.f32.mrb[0].mxu0
    %4482 = vmatprep.mubr.bf16.mxu0 0
    %4483 = vmatmul.mubr.bf16.gmra.mrb[0].mxu0 %v3015
    %v4484 = vpop.f32.mrb[0].mxu0
    %v4485 = vadd.f32 %v4269, %v4484
    %v4486 = vpop.f32.mrb[0].mxu0
    %v4487 = vpop.f32.mrb[0].mxu0
    %v4488 = vadd.f32 %v4272, %v4487
    %v4489 = vpop.f32.mrb[0].mxu0
    %4490 = vmatprep.mubr.bf16.mxu0 0
    %4491 = vmatmul.mubr.bf16.gmra.mrb[0].mxu0 %v3017
    %v4492 = vpop.f32.mrb[0].mxu0
    %v4493 = vadd.f32 %v4277, %v4492
    %v4494 = vpop.f32.mrb[0].mxu0
    %v4495 = vpop.f32.mrb[0].mxu0
    %v4496 = vadd.f32 %v4280, %v4495
    %v4497 = vpop.f32.mrb[0].mxu0
    %4498 = vmatprep.mubr.bf16.mxu0 0
    %4499 = vmatmul.mubr.bf16.gmra.mrb[0].mxu0 %v3016
    %v4500 = vpop.f32.mrb[0].mxu0
    %v4501 = vadd.f32 %v4285, %v4500
    %v4502 = vpop.f32.mrb[0].mxu0
    %v4503 = vpop.f32.mrb[0].mxu0
    %v4504 = vpop.f32.mrb[0].mxu0
    %4505 = vdwg.mxu0
    %v4507 = vshll.u32 %v2741, 16
    %v4509 = vrot.slane %v4507, 1
    %v4510 = vsel %vm2742, %v3096, %v4509
    %v4511 = vshrl.u32 %v2741, 16
    %v4513 = vor.u32 %v4511, %v4509
    %v4515 = vrot.slane %v2741, 1
    %v4516 = vsel %vm2972, %v3098, %v4515
    %s4517 = scalar_lea.vmem [#allocation13], 384
    %v4518 = vld [vmem:[%s4517] sm:$0xf]
    %v4519 = vld [vmem:[%s4517 + $0x4] sm:$0xf]
    %v4520 = vld [vmem:[%s4517 + $0x8] sm:$0xf]
    %v4521 = vld [vmem:[%s4517 + $0xc] sm:$0xf]
    %v4522 = vld [vmem:[%s4517 + $0x10] sm:$0xf]
    %v4523 = vld [vmem:[%s4517 + $0x14] sm:$0xf]
    %v4524 = vld [vmem:[%s4517 + $0x18] sm:$0xf]
    %v4525 = vld [vmem:[%s4517 + $0x1c] sm:$0xf]
    %v4526 = vld [vmem:[%s4517 + $0x20] sm:$0xf]
    %v4527 = vld [vmem:[%s4517 + $0x24] sm:$0xf]
    %v4528 = vld [vmem:[%s4517 + $0x28] sm:$0xf]
    %v4529 = vld [vmem:[%s4517 + $0x2c] sm:$0xf]
    %v4530 = vld [vmem:[%s4517 + $0x30] sm:$0xf]
    %v4531 = vld [vmem:[%s4517 + $0x34] sm:$0xf]
    %v4532 = vld [vmem:[%s4517 + $0x38] sm:$0xf]
    %v4533 = vld [vmem:[%s4517 + $0x3c] sm:$0xf]
    %v4534 = vld [vmem:[%s4517 + $0x40] sm:$0xf]
    %v4535 = vld [vmem:[%s4517 + $0x44] sm:$0xf]
    %v4536 = vld [vmem:[%s4517 + $0x48] sm:$0xf]
    %v4537 = vld [vmem:[%s4517 + $0x4c] sm:$0xf]
    %v4538 = vld [vmem:[%s4517 + $0x50] sm:$0xf]
    %v4539 = vld [vmem:[%s4517 + $0x54] sm:$0xf]
    %v4540 = vld [vmem:[%s4517 + $0x58] sm:$0xf]
    %v4541 = vld [vmem:[%s4517 + $0x5c] sm:$0xf]
    %v4542 = vld [vmem:[%s4517 + $0x60] sm:$0xf]
    %v4543 = vld [vmem:[%s4517 + $0x64] sm:$0xf]
    %v4544 = vld [vmem:[%s4517 + $0x68] sm:$0xf]
    %v4545 = vld [vmem:[%s4517 + $0x6c] sm:$0xf]
    %v4546 = vld [vmem:[%s4517 + $0x70] sm:$0xf]
    %v4547 = vld [vmem:[%s4517 + $0x74] sm:$0xf]
    %v4548 = vld [vmem:[%s4517 + $0x78] sm:$0xf]
    %v4549 = vld [vmem:[%s4517 + $0x7c] sm:$0xf]
    %v4550 = vld [vmem:[%s4517 + $0x80] sm:$0xf]
    %v4551 = vld [vmem:[%s4517 + $0x84] sm:$0xf]
    %v4552 = vld [vmem:[%s4517 + $0x88] sm:$0xf]
    %v4553 = vld [vmem:[%s4517 + $0x8c] sm:$0xf]
    %v4554 = vld [vmem:[%s4517 + $0x90] sm:$0xf]
    %v4555 = vld [vmem:[%s4517 + $0x94] sm:$0xf]
    %v4556 = vld [vmem:[%s4517 + $0x98] sm:$0xf]
    %v4557 = vld [vmem:[%s4517 + $0x9c] sm:$0xf]
    %v4558 = vld [vmem:[%s4517 + $0xa0] sm:$0xf]
    %v4559 = vld [vmem:[%s4517 + $0xa4] sm:$0xf]
    %v4560 = vld [vmem:[%s4517 + $0xa8] sm:$0xf]
    %v4561 = vld [vmem:[%s4517 + $0xac] sm:$0xf]
    %v4562 = vld [vmem:[%s4517 + $0xb0] sm:$0xf]
    %v4563 = vld [vmem:[%s4517 + $0xb4] sm:$0xf]
    %v4564 = vld [vmem:[%s4517 + $0xb8] sm:$0xf]
    %v4565 = vld [vmem:[%s4517 + $0xbc] sm:$0xf]
    %vm4566 = vcmask 1043456
    %v4567 = vrot.slane %v2719, 4
    %v4568 = vrot.slane %v2720, 4
    %v4569 = vsel %vm4566, %v4567, %v4568
    %v4570 = vrot.slane %v2770, 4
    %v4571 = vrot.slane %v2778, 4
    %v4572 = vsel %vm4566, %v4570, %v4571
    %v4573 = vrot.slane %v2979, 4
    %v4574 = vrot.slane %v2981, 4
    %v4575 = vsel %vm4566, %v4573, %v4574
    %v4576 = vrot.slane %v2721, 4
    %v4577 = vsel %vm4566, %v4568, %v4576
    %v4578 = vrot.slane %v2786, 4
    %v4579 = vsel %vm4566, %v4571, %v4578
    %v4580 = vrot.slane %v2983, 4
    %v4581 = vsel %vm4566, %v4574, %v4580
    %v4582 = vrot.slane %v2722, 4
    %v4583 = vsel %vm4566, %v4576, %v4582
    %v4584 = vrot.slane %v2794, 4
    %v4585 = vsel %vm4566, %v4578, %v4584
    %v4586 = vrot.slane %v2985, 4
    %v4587 = vsel %vm4566, %v4580, %v4586
    %v4588 = vrot.slane %v2723, 4
    %v4589 = vsel %vm4566, %v4582, %v4588
    %v4590 = vrot.slane %v2802, 4
    %v4591 = vsel %vm4566, %v4584, %v4590
    %v4592 = vrot.slane %v2987, 4
    %v4593 = vsel %vm4566, %v4586, %v4592
    %v4594 = vrot.slane %v2724, 4
    %v4595 = vsel %vm4566, %v4588, %v4594
    %v4596 = vrot.slane %v2810, 4
    %v4597 = vsel %vm4566, %v4590, %v4596
    %v4598 = vrot.slane %v2989, 4
    %v4599 = vsel %vm4566, %v4592, %v4598
    %v4600 = vrot.slane %v2725, 4
    %v4601 = vsel %vm4566, %v4594, %v4600
    %v4602 = vrot.slane %v2818, 4
    %v4603 = vsel %vm4566, %v4596, %v4602
    %v4604 = vrot.slane %v2991, 4
    %v4605 = vsel %vm4566, %v4598, %v4604
    %v4606 = vrot.slane %v2726, 4
    %v4607 = vsel %vm4566, %v4600, %v4606
    %v4608 = vrot.slane %v2826, 4
    %v4609 = vsel %vm4566, %v4602, %v4608
    %v4610 = vrot.slane %v2993, 4
    %v4611 = vsel %vm4566, %v4604, %v4610
    %v4612 = vrot.slane %v2727, 4
    %v4613 = vsel %vm4566, %v4606, %v4612
    %v4614 = vrot.slane %v2834, 4
    %v4615 = vsel %vm4566, %v4608, %v4614
    %v4616 = vrot.slane %v2995, 4
    %v4617 = vsel %vm4566, %v4610, %v4616
    %v4618 = vrot.slane %v2728, 4
    %v4619 = vsel %vm4566, %v4612, %v4618
    %v4620 = vrot.slane %v2842, 4
    %v4621 = vsel %vm4566, %v4614, %v4620
    %v4622 = vrot.slane %v2997, 4
    %v4623 = vsel %vm4566, %v4616, %v4622
    %v4624 = vrot.slane %v2729, 4
    %v4625 = vsel %vm4566, %v4618, %v4624
    %v4626 = vrot.slane %v2850, 4
    %v4627 = vsel %vm4566, %v4620, %v4626
    %v4628 = vrot.slane %v2999, 4
    %v4629 = vsel %vm4566, %v4622, %v4628
    %v4630 = vrot.slane %v2730, 4
    %v4631 = vsel %vm4566, %v4624, %v4630
    %v4632 = vrot.slane %v2858, 4
    %v4633 = vsel %vm4566, %v4626, %v4632
    %v4634 = vrot.slane %v3001, 4
    %v4635 = vsel %vm4566, %v4628, %v4634
    %v4636 = vrot.slane %v2731, 4
    %v4637 = vsel %vm4566, %v4630, %v4636
    %v4638 = vrot.slane %v2866, 4
    %v4639 = vsel %vm4566, %v4632, %v4638
    %v4640 = vrot.slane %v3003, 4
    %v4641 = vsel %vm4566, %v4634, %v4640
    %v4642 = vrot.slane %v2732, 4
    %v4643 = vsel %vm4566, %v4636, %v4642
    %v4644 = vrot.slane %v2874, 4
    %v4645 = vsel %vm4566, %v4638, %v4644
    %v4646 = vrot.slane %v3005, 4
    %v4647 = vsel %vm4566, %v4640, %v4646
    %v4648 = vrot.slane %v2733, 4
    %v4649 = vsel %vm4566, %v4642, %v4648
    %v4650 = vrot.slane %v2882, 4
    %v4651 = vsel %vm4566, %v4644, %v4650
    %v4652 = vrot.slane %v3007, 4
    %v4653 = vsel %vm4566, %v4646, %v4652
    %v4654 = vrot.slane %v2734, 4
    %v4655 = vsel %vm4566, %v4648, %v4654
    %v4656 = vrot.slane %v2890, 4
    %v4657 = vsel %vm4566, %v4650, %v4656
    %v4658 = vrot.slane %v3009, 4
    %v4659 = vsel %vm4566, %v4652, %v4658
    %v4660 = vrot.slane %v2735, 4
    %v4661 = vsel %vm4566, %v4654, %v4660
    %v4662 = vrot.slane %v2898, 4
    %v4663 = vsel %vm4566, %v4656, %v4662
    %v4664 = vrot.slane %v3011, 4
    %v4665 = vsel %vm4566, %v4658, %v4664
    %v4666 = vrot.slane %v2736, 4
    %v4667 = vsel %vm4566, %v4660, %v4666
    %v4668 = vrot.slane %v2906, 4
    %v4669 = vsel %vm4566, %v4662, %v4668
    %v4670 = vrot.slane %v3013, 4
    %v4671 = vsel %vm4566, %v4664, %v4670
    %v4672 = vrot.slane %v2737, 4
    %v4673 = vsel %vm4566, %v4666, %v4672
    %v4674 = vrot.slane %v2914, 4
    %v4675 = vsel %vm4566, %v4668, %v4674
    %v4676 = vrot.slane %v3015, 4
    %v4677 = vsel %vm4566, %v4670, %v4676
    %v4678 = vrot.slane %v2738, 4
    %v4679 = vsel %vm4566, %v4672, %v4678
    %v4680 = vrot.slane %v2922, 4
    %v4681 = vsel %vm4566, %v4674, %v4680
    %v4682 = vrot.slane %v3017, 4
    %v4683 = vsel %vm4566, %v4676, %v4682
    %v4684 = vrot.slane %v2739, 4
    %v4685 = vsel %vm4566, %v4678, %v4684
    %v4686 = vrot.slane %v3093, 4
    %v4687 = vsel %vm4566, %v4680, %v4686
    %v4688 = vrot.slane %v3099, 4
    %v4689 = vsel %vm4566, %v4682, %v4688
    %v4690 = vrot.slane %v2740, 4
    %v4691 = vsel %vm4566, %v4684, %v4690
    %v4692 = vrot.slane %v4510, 4
    %v4693 = vsel %vm4566, %v4686, %v4692
    %v4694 = vrot.slane %v4516, 4
    %v4695 = vsel %vm4566, %v4688, %v4694
    %v4696 = vrot.slane %v2741, 4
    %v4697 = vsel %vm4566, %v4690, %v4696
    %v4698 = vrot.slane %v4513, 4
    %v4699 = vsel %vm4566, %v4692, %v4698
    %v4700 = vrot.slane %v4515, 4
    %v4701 = vsel %vm4566, %v4694, %v4700
    %v4819 = vunpack.c.l.b16 %v4518
    %v4820 = vunpack.c.l.b16 %v4519
    %v4821 = vunpack.c.l.b16 %v4520
    %v4822 = vunpack.c.l.b16 %v4521
    %v4823 = vunpack.c.l.b16 %v4522
    %v4824 = vunpack.c.l.b16 %v4523
    %v4825 = vunpack.c.l.b16 %v4524
    %v4826 = vunpack.c.l.b16 %v4525
    %v4827 = vunpack.c.l.b16 %v4526
    %v4828 = vunpack.c.l.b16 %v4527
    %v4829 = vunpack.c.l.b16 %v4528
    %v4830 = vunpack.c.l.b16 %v4529
    %v4831 = vunpack.c.l.b16 %v4530
    %v4832 = vunpack.c.l.b16 %v4531
    %v4833 = vunpack.c.l.b16 %v4532
    %v4834 = vunpack.c.l.b16 %v4533
    %v4835 = vunpack.c.l.b16 %v4534
    %v4836 = vunpack.c.l.b16 %v4535
    %v4837 = vunpack.c.l.b16 %v4536
    %v4838 = vunpack.c.l.b16 %v4537
    %v4839 = vunpack.c.l.b16 %v4538
    %v4840 = vunpack.c.l.b16 %v4539
    %v4841 = vunpack.c.l.b16 %v4540
    %v4842 = vunpack.c.l.b16 %v4541
    %v4843 = vunpack.c.l.b16 %v4542
    %v4844 = vunpack.c.l.b16 %v4543
    %v4845 = vunpack.c.l.b16 %v4544
    %v4846 = vunpack.c.l.b16 %v4545
    %v4847 = vunpack.c.l.b16 %v4546
    %v4848 = vunpack.c.l.b16 %v4547
    %v4849 = vunpack.c.l.b16 %v4548
    %v4850 = vunpack.c.l.b16 %v4549
    %v4851 = vunpack.c.l.b16 %v4550
    %v4852 = vunpack.c.l.b16 %v4551
    %v4853 = vunpack.c.l.b16 %v4552
    %v4854 = vunpack.c.l.b16 %v4553
    %v4855 = vunpack.c.l.b16 %v4554
    %v4856 = vunpack.c.l.b16 %v4555
    %v4857 = vunpack.c.l.b16 %v4556
    %v4858 = vunpack.c.l.b16 %v4557
    %v4859 = vunpack.c.l.b16 %v4558
    %v4860 = vunpack.c.l.b16 %v4559
    %v4861 = vunpack.c.l.b16 %v4560
    %v4862 = vunpack.c.l.b16 %v4561
    %v4863 = vunpack.c.l.b16 %v4562
    %v4864 = vunpack.c.l.b16 %v4563
    %v4865 = vunpack.c.l.b16 %v4564
    %v4866 = vunpack.c.l.b16 %v4565
    %v4867 = vpack.c.b16 %v4820, %v4819
    %v4868 = vpack.c.b16 %v4822, %v4821
    %v4869 = vpack.c.b16 %v4824, %v4823
    %v4870 = vpack.c.b16 %v4826, %v4825
    %v4871 = vpack.c.b16 %v4828, %v4827
    %v4872 = vpack.c.b16 %v4830, %v4829
    %v4873 = vpack.c.b16 %v4832, %v4831
    %v4874 = vpack.c.b16 %v4834, %v4833
    %v4875 = vpack.c.b16 %v4836, %v4835
    %v4876 = vpack.c.b16 %v4838, %v4837
    %v4877 = vpack.c.b16 %v4840, %v4839
    %v4878 = vpack.c.b16 %v4842, %v4841
    %v4879 = vpack.c.b16 %v4844, %v4843
    %v4880 = vpack.c.b16 %v4846, %v4845
    %v4881 = vpack.c.b16 %v4848, %v4847
    %v4882 = vpack.c.b16 %v4850, %v4849
    %v4883 = vpack.c.b16 %v4852, %v4851
    %v4884 = vpack.c.b16 %v4854, %v4853
    %v4885 = vpack.c.b16 %v4856, %v4855
    %v4886 = vpack.c.b16 %v4858, %v4857
    %v4887 = vpack.c.b16 %v4860, %v4859
    %v4888 = vpack.c.b16 %v4862, %v4861
    %v4889 = vpack.c.b16 %v4864, %v4863
    %v4890 = vpack.c.b16 %v4866, %v4865
    %4915 = vmatprep.subr.bf16.mxu0 0
    %4916 = vmatpush1.bf16.msra.mxu0 %v4867
    %4917 = vmatprep.subr.bf16.mxu0 0
    %4918 = vmatpush1.bf16.msra.mxu0 %v4868
    %4919 = vmatprep.subr.bf16.mxu0 0
    %4920 = vmatpush1.bf16.msra.mxu0 %v4869
    %4921 = vmatprep.subr.bf16.mxu0 0
    %4922 = vmatpush1.bf16.msra.mxu0 %v4870
    %4923 = vmatprep.subr.bf16.mxu0 0
    %4924 = vmatpush1.bf16.msra.mxu0 %v4871
    %4925 = vmatprep.subr.bf16.mxu0 0
    %4926 = vmatpush1.bf16.msra.mxu0 %v4872
    %4927 = vmatprep.subr.bf16.mxu0 0
    %4928 = vmatpush1.bf16.msra.mxu0 %v4873
    %4929 = vmatprep.subr.bf16.mxu0 0
    %4930 = vmatpush1.bf16.msra.mxu0 %v4874
    %4931 = vmatprep.subr.bf16.mxu0 0
    %4932 = vmatpush1.bf16.msra.mxu0 %v4875
    %4933 = vmatprep.subr.bf16.mxu0 0
    %4934 = vmatpush1.bf16.msra.mxu0 %v4876
    %4935 = vmatprep.subr.bf16.mxu0 0
    %4936 = vmatpush1.bf16.msra.mxu0 %v4877
    %4937 = vmatprep.subr.bf16.mxu0 0
    %4938 = vmatpush1.bf16.msra.mxu0 %v4878
    %4939 = vmatprep.subr.bf16.mxu0 0
    %4940 = vmatpush1.bf16.msra.mxu0 %v4879
    %4941 = vmatprep.subr.bf16.mxu0 0
    %4942 = vmatpush1.bf16.msra.mxu0 %v4880
    %4943 = vmatprep.subr.bf16.mxu0 0
    %4944 = vmatpush1.bf16.msra.mxu0 %v4881
    %4945 = vmatprep.subr.bf16.mxu0 0
    %4946 = vmatpush1.bf16.msra.mxu0 %v4882
    %4947 = vmatprep.mubr.bf16.mxu0 %v4572
    %4948 = vmatmul.mubr.bf16.gmra.mrb[0].mxu0 %v4569
    %v4949 = vpop.f32.mrb[0].mxu0
    %v4950 = vadd.f32 0.0, %v4949
    %v4951 = vpop.f32.mrb[0].mxu0
    %v4952 = vpop.f32.mrb[0].mxu0
    %v4953 = vadd.f32 0.0, %v4952
    %v4954 = vpop.f32.mrb[0].mxu0
    %4955 = vmatprep.mubr.bf16.mxu0 %v4579
    %4956 = vmatmul.mubr.bf16.gmra.mrb[0].mxu0 %v4577
    %v4957 = vpop.f32.mrb[0].mxu0
    %v4958 = vadd.f32 0.0, %v4957
    %v4959 = vpop.f32.mrb[0].mxu0
    %v4960 = vpop.f32.mrb[0].mxu0
    %v4961 = vadd.f32 0.0, %v4960
    %v4962 = vpop.f32.mrb[0].mxu0
    %4963 = vmatprep.mubr.bf16.mxu0 %v4585
    %4964 = vmatmul.mubr.bf16.gmra.mrb[0].mxu0 %v4583
    %v4965 = vpop.f32.mrb[0].mxu0
    %v4966 = vadd.f32 0.0, %v4965
    %v4967 = vpop.f32.mrb[0].mxu0
    %v4968 = vpop.f32.mrb[0].mxu0
    %v4969 = vadd.f32 0.0, %v4968
    %v4970 = vpop.f32.mrb[0].mxu0
    %4971 = vmatprep.mubr.bf16.mxu0 %v4591
    %4972 = vmatmul.mubr.bf16.gmra.mrb[0].mxu0 %v4589
    %v4973 = vpop.f32.mrb[0].mxu0
    %v4974 = vadd.f32 0.0, %v4973
    %v4975 = vpop.f32.mrb[0].mxu0
    %v4976 = vpop.f32.mrb[0].mxu0
    %v4977 = vadd.f32 0.0, %v4976
    %v4978 = vpop.f32.mrb[0].mxu0
    %4979 = vmatprep.mubr.bf16.mxu0 %v4597
    %4980 = vmatmul.mubr.bf16.gmra.mrb[0].mxu0 %v4595
    %v4981 = vpop.f32.mrb[0].mxu0
    %v4982 = vadd.f32 0.0, %v4981
    %v4983 = vpop.f32.mrb[0].mxu0
    %v4984 = vpop.f32.mrb[0].mxu0
    %v4985 = vadd.f32 0.0, %v4984
    %v4986 = vpop.f32.mrb[0].mxu0
    %4987 = vmatprep.mubr.bf16.mxu0 %v4603
    %4988 = vmatmul.mubr.bf16.gmra.mrb[0].mxu0 %v4601
    %v4989 = vpop.f32.mrb[0].mxu0
    %v4990 = vadd.f32 0.0, %v4989
    %v4991 = vpop.f32.mrb[0].mxu0
    %v4992 = vpop.f32.mrb[0].mxu0
    %v4993 = vadd.f32 0.0, %v4992
    %v4994 = vpop.f32.mrb[0].mxu0
    %4995 = vmatprep.mubr.bf16.mxu0 %v4609
    %4996 = vmatmul.mubr.bf16.gmra.mrb[0].mxu0 %v4607
    %v4997 = vpop.f32.mrb[0].mxu0
    %v4998 = vadd.f32 0.0, %v4997
    %v4999 = vpop.f32.mrb[0].mxu0
    %v5000 = vpop.f32.mrb[0].mxu0
    %v5001 = vadd.f32 0.0, %v5000
    %v5002 = vpop.f32.mrb[0].mxu0
    %5003 = vmatprep.mubr.bf16.mxu0 %v4615
    %5004 = vmatmul.mubr.bf16.gmra.mrb[0].mxu0 %v4613
    %v5005 = vpop.f32.mrb[0].mxu0
    %v5006 = vadd.f32 0.0, %v5005
    %v5007 = vpop.f32.mrb[0].mxu0
    %v5008 = vpop.f32.mrb[0].mxu0
    %v5009 = vadd.f32 0.0, %v5008
    %v5010 = vpop.f32.mrb[0].mxu0
    %5011 = vmatprep.mubr.bf16.mxu0 %v4621
    %5012 = vmatmul.mubr.bf16.gmra.mrb[0].mxu0 %v4619
    %v5013 = vpop.f32.mrb[0].mxu0
    %v5014 = vadd.f32 0.0, %v5013
    %v5015 = vpop.f32.mrb[0].mxu0
    %v5016 = vpop.f32.mrb[0].mxu0
    %v5017 = vadd.f32 0.0, %v5016
    %v5018 = vpop.f32.mrb[0].mxu0
    %5019 = vmatprep.mubr.bf16.mxu0 %v4627
    %5020 = vmatmul.mubr.bf16.gmra.mrb[0].mxu0 %v4625
    %v5021 = vpop.f32.mrb[0].mxu0
    %v5022 = vadd.f32 0.0, %v5021
    %v5023 = vpop.f32.mrb[0].mxu0
    %v5024 = vpop.f32.mrb[0].mxu0
    %v5025 = vadd.f32 0.0, %v5024
    %v5026 = vpop.f32.mrb[0].mxu0
    %5027 = vmatprep.mubr.bf16.mxu0 %v4633
    %5028 = vmatmul.mubr.bf16.gmra.mrb[0].mxu0 %v4631
    %v5029 = vpop.f32.mrb[0].mxu0
    %v5030 = vadd.f32 0.0, %v5029
    %v5031 = vpop.f32.mrb[0].mxu0
    %v5032 = vpop.f32.mrb[0].mxu0
    %v5033 = vadd.f32 0.0, %v5032
    %v5034 = vpop.f32.mrb[0].mxu0
    %5035 = vmatprep.mubr.bf16.mxu0 %v4639
    %5036 = vmatmul.mubr.bf16.gmra.mrb[0].mxu0 %v4637
    %v5037 = vpop.f32.mrb[0].mxu0
    %v5038 = vadd.f32 0.0, %v5037
    %v5039 = vpop.f32.mrb[0].mxu0
    %v5040 = vpop.f32.mrb[0].mxu0
    %v5041 = vadd.f32 0.0, %v5040
    %v5042 = vpop.f32.mrb[0].mxu0
    %5043 = vmatprep.mubr.bf16.mxu0 %v4645
    %5044 = vmatmul.mubr.bf16.gmra.mrb[0].mxu0 %v4643
    %v5045 = vpop.f32.mrb[0].mxu0
    %v5046 = vadd.f32 0.0, %v5045
    %v5047 = vpop.f32.mrb[0].mxu0
    %v5048 = vpop.f32.mrb[0].mxu0
    %v5049 = vadd.f32 0.0, %v5048
    %v5050 = vpop.f32.mrb[0].mxu0
    %5051 = vmatprep.mubr.bf16.mxu0 %v4651
    %5052 = vmatmul.mubr.bf16.gmra.mrb[0].mxu0 %v4649
    %v5053 = vpop.f32.mrb[0].mxu0
    %v5054 = vadd.f32 0.0, %v5053
    %v5055 = vpop.f32.mrb[0].mxu0
    %v5056 = vpop.f32.mrb[0].mxu0
    %v5057 = vadd.f32 0.0, %v5056
    %v5058 = vpop.f32.mrb[0].mxu0
    %5059 = vmatprep.mubr.bf16.mxu0 %v4657
    %5060 = vmatmul.mubr.bf16.gmra.mrb[0].mxu0 %v4655
    %v5061 = vpop.f32.mrb[0].mxu0
    %v5062 = vadd.f32 0.0, %v5061
    %v5063 = vpop.f32.mrb[0].mxu0
    %v5064 = vpop.f32.mrb[0].mxu0
    %v5065 = vadd.f32 0.0, %v5064
    %v5066 = vpop.f32.mrb[0].mxu0
    %5067 = vmatprep.mubr.bf16.mxu0 %v4663
    %5068 = vmatmul.mubr.bf16.gmra.mrb[0].mxu0 %v4661
    %v5069 = vpop.f32.mrb[0].mxu0
    %v5070 = vadd.f32 0.0, %v5069
    %v5071 = vpop.f32.mrb[0].mxu0
    %v5072 = vpop.f32.mrb[0].mxu0
    %v5073 = vadd.f32 0.0, %v5072
    %v5074 = vpop.f32.mrb[0].mxu0
    %5075 = vmatprep.mubr.bf16.mxu0 %v4669
    %5076 = vmatmul.mubr.bf16.gmra.mrb[0].mxu0 %v4667
    %v5077 = vpop.f32.mrb[0].mxu0
    %v5078 = vadd.f32 0.0, %v5077
    %v5079 = vpop.f32.mrb[0].mxu0
    %v5080 = vpop.f32.mrb[0].mxu0
    %v5081 = vadd.f32 0.0, %v5080
    %v5082 = vpop.f32.mrb[0].mxu0
    %5083 = vmatprep.mubr.bf16.mxu0 %v4675
    %5084 = vmatmul.mubr.bf16.gmra.mrb[0].mxu0 %v4673
    %v5085 = vpop.f32.mrb[0].mxu0
    %v5086 = vadd.f32 0.0, %v5085
    %v5087 = vpop.f32.mrb[0].mxu0
    %v5088 = vpop.f32.mrb[0].mxu0
    %v5089 = vadd.f32 0.0, %v5088
    %v5090 = vpop.f32.mrb[0].mxu0
    %5091 = vmatprep.mubr.bf16.mxu0 %v4681
    %5092 = vmatmul.mubr.bf16.gmra.mrb[0].mxu0 %v4679
    %v5093 = vpop.f32.mrb[0].mxu0
    %v5094 = vadd.f32 0.0, %v5093
    %v5095 = vpop.f32.mrb[0].mxu0
    %v5096 = vpop.f32.mrb[0].mxu0
    %v5097 = vadd.f32 0.0, %v5096
    %v5098 = vpop.f32.mrb[0].mxu0
    %5099 = vmatprep.mubr.bf16.mxu0 %v4687
    %5100 = vmatmul.mubr.bf16.gmra.mrb[0].mxu0 %v4685
    %v5101 = vpop.f32.mrb[0].mxu0
    %v5102 = vadd.f32 0.0, %v5101
    %v5103 = vpop.f32.mrb[0].mxu0
    %v5104 = vpop.f32.mrb[0].mxu0
    %v5105 = vadd.f32 0.0, %v5104
    %v5106 = vpop.f32.mrb[0].mxu0
    %5107 = vmatprep.mubr.bf16.mxu0 %v4693
    %5108 = vmatmul.mubr.bf16.gmra.mrb[0].mxu0 %v4691
    %v5109 = vpop.f32.mrb[0].mxu0
    %v5110 = vadd.f32 0.0, %v5109
    %v5111 = vpop.f32.mrb[0].mxu0
    %v5112 = vpop.f32.mrb[0].mxu0
    %v5113 = vadd.f32 0.0, %v5112
    %v5114 = vpop.f32.mrb[0].mxu0
    %5115 = vmatprep.mubr.bf16.mxu0 %v4699
    %5116 = vmatmul.mubr.bf16.gmra.mrb[0].mxu0 %v4697
    %v5117 = vpop.f32.mrb[0].mxu0
    %v5118 = vadd.f32 0.0, %v5117
    %v5119 = vpop.f32.mrb[0].mxu0
    %v5120 = vpop.f32.mrb[0].mxu0
    %v5121 = vadd.f32 0.0, %v5120
    %v5122 = vpop.f32.mrb[0].mxu0
    %5123 = vmatprep.mubr.bf16.mxu0 %v4698
    %5124 = vmatmul.mubr.bf16.gmra.mrb[0].mxu0 %v4696
    %v5125 = vpop.f32.mrb[0].mxu0
    %v5126 = vadd.f32 0.0, %v5125
    %v5127 = vpop.f32.mrb[0].mxu0
    %v5128 = vpop.f32.mrb[0].mxu0
    %v5129 = vpop.f32.mrb[0].mxu0
    %5130 = vdwg.mxu0
    %5131 = vmatprep.subr.bf16.mxu0 0
    %5132 = vmatpush1.bf16.msra.mxu0 %v4883
    %5133 = vmatprep.subr.bf16.mxu0 0
    %5134 = vmatpush1.bf16.msra.mxu0 %v4884
    %5135 = vmatprep.subr.bf16.mxu0 0
    %5136 = vmatpush1.bf16.msra.mxu0 %v4885
    %5137 = vmatprep.subr.bf16.mxu0 0
    %5138 = vmatpush1.bf16.msra.mxu0 %v4886
    %5139 = vmatprep.subr.bf16.mxu0 0
    %5140 = vmatpush1.bf16.msra.mxu0 %v4887
    %5141 = vmatprep.subr.bf16.mxu0 0
    %5142 = vmatpush1.bf16.msra.mxu0 %v4888
    %5143 = vmatprep.subr.bf16.mxu0 0
    %5144 = vmatpush1.bf16.msra.mxu0 %v4889
    %5145 = vmatprep.subr.bf16.mxu0 0
    %5146 = vmatpush1.bf16.msra.mxu0 %v4890
    %5147 = vmatprep.subr.bf16.mxu0 0
    %5148 = vmatpush1.bf16.msra.mxu0 0
    %5149 = vmatprep.subr.bf16.mxu0 0
    %5150 = vmatpush1.bf16.msra.mxu0 0
    %5151 = vmatprep.subr.bf16.mxu0 0
    %5152 = vmatpush1.bf16.msra.mxu0 0
    %5153 = vmatprep.subr.bf16.mxu0 0
    %5154 = vmatpush1.bf16.msra.mxu0 0
    %5155 = vmatprep.subr.bf16.mxu0 0
    %5156 = vmatpush1.bf16.msra.mxu0 0
    %5157 = vmatprep.subr.bf16.mxu0 0
    %5158 = vmatpush1.bf16.msra.mxu0 0
    %5159 = vmatprep.subr.bf16.mxu0 0
    %5160 = vmatpush1.bf16.msra.mxu0 0
    %5161 = vmatprep.subr.bf16.mxu0 0
    %5162 = vmatpush1.bf16.msra.mxu0 0
    %5163 = vmatprep.mubr.bf16.mxu0 0
    %5164 = vmatmul.mubr.bf16.gmra.mrb[0].mxu0 %v4575
    %v5165 = vpop.f32.mrb[0].mxu0
    %v5166 = vadd.f32 %v4950, %v5165
    %v5167 = vpop.f32.mrb[0].mxu0
    %v5168 = vpop.f32.mrb[0].mxu0
    %v5169 = vadd.f32 %v4953, %v5168
    %v5170 = vpop.f32.mrb[0].mxu0
    %5171 = vmatprep.mubr.bf16.mxu0 0
    %5172 = vmatmul.mubr.bf16.gmra.mrb[0].mxu0 %v4581
    %v5173 = vpop.f32.mrb[0].mxu0
    %v5174 = vadd.f32 %v4958, %v5173
    %v5175 = vpop.f32.mrb[0].mxu0
    %v5176 = vpop.f32.mrb[0].mxu0
    %v5177 = vadd.f32 %v4961, %v5176
    %v5178 = vpop.f32.mrb[0].mxu0
    %5179 = vmatprep.mubr.bf16.mxu0 0
    %5180 = vmatmul.mubr.bf16.gmra.mrb[0].mxu0 %v4587
    %v5181 = vpop.f32.mrb[0].mxu0
    %v5182 = vadd.f32 %v4966, %v5181
    %v5183 = vpop.f32.mrb[0].mxu0
    %v5184 = vpop.f32.mrb[0].mxu0
    %v5185 = vadd.f32 %v4969, %v5184
    %v5186 = vpop.f32.mrb[0].mxu0
    %5187 = vmatprep.mubr.bf16.mxu0 0
    %5188 = vmatmul.mubr.bf16.gmra.mrb[0].mxu0 %v4593
    %v5189 = vpop.f32.mrb[0].mxu0
    %v5190 = vadd.f32 %v4974, %v5189
    %v5191 = vpop.f32.mrb[0].mxu0
    %v5192 = vpop.f32.mrb[0].mxu0
    %v5193 = vadd.f32 %v4977, %v5192
    %v5194 = vpop.f32.mrb[0].mxu0
    %5195 = vmatprep.mubr.bf16.mxu0 0
    %5196 = vmatmul.mubr.bf16.gmra.mrb[0].mxu0 %v4599
    %v5197 = vpop.f32.mrb[0].mxu0
    %v5198 = vadd.f32 %v4982, %v5197
    %v5199 = vpop.f32.mrb[0].mxu0
    %v5200 = vpop.f32.mrb[0].mxu0
    %v5201 = vadd.f32 %v4985, %v5200
    %v5202 = vpop.f32.mrb[0].mxu0
    %5203 = vmatprep.mubr.bf16.mxu0 0
    %5204 = vmatmul.mubr.bf16.gmra.mrb[0].mxu0 %v4605
    %v5205 = vpop.f32.mrb[0].mxu0
    %v5206 = vadd.f32 %v4990, %v5205
    %v5207 = vpop.f32.mrb[0].mxu0
    %v5208 = vpop.f32.mrb[0].mxu0
    %v5209 = vadd.f32 %v4993, %v5208
    %v5210 = vpop.f32.mrb[0].mxu0
    %5211 = vmatprep.mubr.bf16.mxu0 0
    %5212 = vmatmul.mubr.bf16.gmra.mrb[0].mxu0 %v4611
    %v5213 = vpop.f32.mrb[0].mxu0
    %v5214 = vadd.f32 %v4998, %v5213
    %v5215 = vpop.f32.mrb[0].mxu0
    %v5216 = vpop.f32.mrb[0].mxu0
    %v5217 = vadd.f32 %v5001, %v5216
    %v5218 = vpop.f32.mrb[0].mxu0
    %5219 = vmatprep.mubr.bf16.mxu0 0
    %5220 = vmatmul.mubr.bf16.gmra.mrb[0].mxu0 %v4617
    %v5221 = vpop.f32.mrb[0].mxu0
    %v5222 = vadd.f32 %v5006, %v5221
    %v5223 = vpop.f32.mrb[0].mxu0
    %v5224 = vpop.f32.mrb[0].mxu0
    %v5225 = vadd.f32 %v5009, %v5224
    %v5226 = vpop.f32.mrb[0].mxu0
    %5227 = vmatprep.mubr.bf16.mxu0 0
    %5228 = vmatmul.mubr.bf16.gmra.mrb[0].mxu0 %v4623
    %v5229 = vpop.f32.mrb[0].mxu0
    %v5230 = vadd.f32 %v5014, %v5229
    %v5231 = vpop.f32.mrb[0].mxu0
    %v5232 = vpop.f32.mrb[0].mxu0
    %v5233 = vadd.f32 %v5017, %v5232
    %v5234 = vpop.f32.mrb[0].mxu0
    %5235 = vmatprep.mubr.bf16.mxu0 0
    %5236 = vmatmul.mubr.bf16.gmra.mrb[0].mxu0 %v4629
    %v5237 = vpop.f32.mrb[0].mxu0
    %v5238 = vadd.f32 %v5022, %v5237
    %v5239 = vpop.f32.mrb[0].mxu0
    %v5240 = vpop.f32.mrb[0].mxu0
    %v5241 = vadd.f32 %v5025, %v5240
    %v5242 = vpop.f32.mrb[0].mxu0
    %5243 = vmatprep.mubr.bf16.mxu0 0
    %5244 = vmatmul.mubr.bf16.gmra.mrb[0].mxu0 %v4635
    %v5245 = vpop.f32.mrb[0].mxu0
    %v5246 = vadd.f32 %v5030, %v5245
    %v5247 = vpop.f32.mrb[0].mxu0
    %v5248 = vpop.f32.mrb[0].mxu0
    %v5249 = vadd.f32 %v5033, %v5248
    %v5250 = vpop.f32.mrb[0].mxu0
    %5251 = vmatprep.mubr.bf16.mxu0 0
    %5252 = vmatmul.mubr.bf16.gmra.mrb[0].mxu0 %v4641
    %v5253 = vpop.f32.mrb[0].mxu0
    %v5254 = vadd.f32 %v5038, %v5253
    %v5255 = vpop.f32.mrb[0].mxu0
    %v5256 = vpop.f32.mrb[0].mxu0
    %v5257 = vadd.f32 %v5041, %v5256
    %v5258 = vpop.f32.mrb[0].mxu0
    %5259 = vmatprep.mubr.bf16.mxu0 0
    %5260 = vmatmul.mubr.bf16.gmra.mrb[0].mxu0 %v4647
    %v5261 = vpop.f32.mrb[0].mxu0
    %v5262 = vadd.f32 %v5046, %v5261
    %v5263 = vpop.f32.mrb[0].mxu0
    %v5264 = vpop.f32.mrb[0].mxu0
    %v5265 = vadd.f32 %v5049, %v5264
    %v5266 = vpop.f32.mrb[0].mxu0
    %5267 = vmatprep.mubr.bf16.mxu0 0
    %5268 = vmatmul.mubr.bf16.gmra.mrb[0].mxu0 %v4653
    %v5269 = vpop.f32.mrb[0].mxu0
    %v5270 = vadd.f32 %v5054, %v5269
    %v5271 = vpop.f32.mrb[0].mxu0
    %v5272 = vpop.f32.mrb[0].mxu0
    %v5273 = vadd.f32 %v5057, %v5272
    %v5274 = vpop.f32.mrb[0].mxu0
    %5275 = vmatprep.mubr.bf16.mxu0 0
    %5276 = vmatmul.mubr.bf16.gmra.mrb[0].mxu0 %v4659
    %v5277 = vpop.f32.mrb[0].mxu0
    %v5278 = vadd.f32 %v5062, %v5277
    %v5279 = vpop.f32.mrb[0].mxu0
    %v5280 = vpop.f32.mrb[0].mxu0
    %v5281 = vadd.f32 %v5065, %v5280
    %v5282 = vpop.f32.mrb[0].mxu0
    %5283 = vmatprep.mubr.bf16.mxu0 0
    %5284 = vmatmul.mubr.bf16.gmra.mrb[0].mxu0 %v4665
    %v5285 = vpop.f32.mrb[0].mxu0
    %v5286 = vadd.f32 %v5070, %v5285
    %v5287 = vpop.f32.mrb[0].mxu0
    %v5288 = vpop.f32.mrb[0].mxu0
    %v5289 = vadd.f32 %v5073, %v5288
    %v5290 = vpop.f32.mrb[0].mxu0
    %5291 = vmatprep.mubr.bf16.mxu0 0
    %5292 = vmatmul.mubr.bf16.gmra.mrb[0].mxu0 %v4671
    %v5293 = vpop.f32.mrb[0].mxu0
    %v5294 = vadd.f32 %v5078, %v5293
    %v5295 = vpop.f32.mrb[0].mxu0
    %v5296 = vpop.f32.mrb[0].mxu0
    %v5297 = vadd.f32 %v5081, %v5296
    %v5298 = vpop.f32.mrb[0].mxu0
    %5299 = vmatprep.mubr.bf16.mxu0 0
    %5300 = vmatmul.mubr.bf16.gmra.mrb[0].mxu0 %v4677
    %v5301 = vpop.f32.mrb[0].mxu0
    %v5302 = vadd.f32 %v5086, %v5301
    %v5303 = vpop.f32.mrb[0].mxu0
    %v5304 = vpop.f32.mrb[0].mxu0
    %v5305 = vadd.f32 %v5089, %v5304
    %v5306 = vpop.f32.mrb[0].mxu0
    %5307 = vmatprep.mubr.bf16.mxu0 0
    %5308 = vmatmul.mubr.bf16.gmra.mrb[0].mxu0 %v4683
    %v5309 = vpop.f32.mrb[0].mxu0
    %v5310 = vadd.f32 %v5094, %v5309
    %v5311 = vpop.f32.mrb[0].mxu0
    %v5312 = vpop.f32.mrb[0].mxu0
    %v5313 = vadd.f32 %v5097, %v5312
    %v5314 = vpop.f32.mrb[0].mxu0
    %5315 = vmatprep.mubr.bf16.mxu0 0
    %5316 = vmatmul.mubr.bf16.gmra.mrb[0].mxu0 %v4689
    %v5317 = vpop.f32.mrb[0].mxu0
    %v5318 = vadd.f32 %v5102, %v5317
    %v5319 = vpop.f32.mrb[0].mxu0
    %v5320 = vpop.f32.mrb[0].mxu0
    %v5321 = vadd.f32 %v5105, %v5320
    %v5322 = vpop.f32.mrb[0].mxu0
    %5323 = vmatprep.mubr.bf16.mxu0 0
    %5324 = vmatmul.mubr.bf16.gmra.mrb[0].mxu0 %v4695
    %v5325 = vpop.f32.mrb[0].mxu0
    %v5326 = vadd.f32 %v5110, %v5325
    %v5327 = vpop.f32.mrb[0].mxu0
    %v5328 = vpop.f32.mrb[0].mxu0
    %v5329 = vadd.f32 %v5113, %v5328
    %v5330 = vpop.f32.mrb[0].mxu0
    %5331 = vmatprep.mubr.bf16.mxu0 0
    %5332 = vmatmul.mubr.bf16.gmra.mrb[0].mxu0 %v4701
    %v5333 = vpop.f32.mrb[0].mxu0
    %v5334 = vadd.f32 %v5118, %v5333
    %v5335 = vpop.f32.mrb[0].mxu0
    %v5336 = vpop.f32.mrb[0].mxu0
    %v5337 = vadd.f32 %v5121, %v5336
    %v5338 = vpop.f32.mrb[0].mxu0
    %5339 = vmatprep.mubr.bf16.mxu0 0
    %5340 = vmatmul.mubr.bf16.gmra.mrb[0].mxu0 %v4700
    %v5341 = vpop.f32.mrb[0].mxu0
    %v5342 = vadd.f32 %v5126, %v5341
    %v5343 = vpop.f32.mrb[0].mxu0
    %v5344 = vpop.f32.mrb[0].mxu0
    %v5345 = vpop.f32.mrb[0].mxu0
    %5346 = vdwg.mxu0
    %v5347 = vadd.f32 %v4325, %v5166
    %v5348 = vadd.f32 %v4328, %v5169
    %v5349 = vadd.f32 %v4333, %v5174
    %v5350 = vadd.f32 %v4336, %v5177
    %v5351 = vadd.f32 %v4341, %v5182
    %v5352 = vadd.f32 %v4344, %v5185
    %v5353 = vadd.f32 %v4349, %v5190
    %v5354 = vadd.f32 %v4352, %v5193
    %v5355 = vadd.f32 %v4357, %v5198
    %v5356 = vadd.f32 %v4360, %v5201
    %v5357 = vadd.f32 %v4365, %v5206
    %v5358 = vadd.f32 %v4368, %v5209
    %v5359 = vadd.f32 %v4373, %v5214
    %v5360 = vadd.f32 %v4376, %v5217
    %v5361 = vadd.f32 %v4381, %v5222
    %v5362 = vadd.f32 %v4384, %v5225
    %v5363 = vadd.f32 %v4389, %v5230
    %v5364 = vadd.f32 %v4392, %v5233
    %v5365 = vadd.f32 %v4397, %v5238
    %v5366 = vadd.f32 %v4400, %v5241
    %v5367 = vadd.f32 %v4405, %v5246
    %v5368 = vadd.f32 %v4408, %v5249
    %v5369 = vadd.f32 %v4413, %v5254
    %v5370 = vadd.f32 %v4416, %v5257
    %v5371 = vadd.f32 %v4421, %v5262
    %v5372 = vadd.f32 %v4424, %v5265
    %v5373 = vadd.f32 %v4429, %v5270
    %v5374 = vadd.f32 %v4432, %v5273
    %v5375 = vadd.f32 %v4437, %v5278
    %v5376 = vadd.f32 %v4440, %v5281
    %v5377 = vadd.f32 %v4445, %v5286
    %v5378 = vadd.f32 %v4448, %v5289
    %v5379 = vadd.f32 %v4453, %v5294
    %v5380 = vadd.f32 %v4456, %v5297
    %v5381 = vadd.f32 %v4461, %v5302
    %v5382 = vadd.f32 %v4464, %v5305
    %v5383 = vadd.f32 %v4469, %v5310
    %v5384 = vadd.f32 %v4472, %v5313
    %v5385 = vadd.f32 %v4477, %v5318
    %v5386 = vadd.f32 %v4480, %v5321
    %v5387 = vadd.f32 %v4485, %v5326
    %v5388 = vadd.f32 %v4488, %v5329
    %v5389 = vadd.f32 %v4493, %v5334
    %v5390 = vadd.f32 %v4496, %v5337
    %v5391 = vadd.f32 %v4501, %v5342
    %v5392 = vld [vmem:[#allocation14] sm:$0x1]
    %v5394 = vlaneseq
    %v5395 = vshrl.u32 %v5394, 7
    %v5396 = vsub.s32 0, %v5395
    %v5397 = vrot.slane %v5392, %v5396
    %v5399 = vadd.f32 %v5347, %v5397
    %v5400 = vadd.f32 %v5348, %v5397
    %v5401 = vadd.f32 %v5349, %v5397
    %v5402 = vadd.f32 %v5350, %v5397
    %v5403 = vadd.f32 %v5351, %v5397
    %v5404 = vadd.f32 %v5352, %v5397
    %v5405 = vadd.f32 %v5353, %v5397
    %v5406 = vadd.f32 %v5354, %v5397
    %v5407 = vadd.f32 %v5355, %v5397
    %v5408 = vadd.f32 %v5356, %v5397
    %v5409 = vadd.f32 %v5357, %v5397
    %v5410 = vadd.f32 %v5358, %v5397
    %v5411 = vadd.f32 %v5359, %v5397
    %v5412 = vadd.f32 %v5360, %v5397
    %v5413 = vadd.f32 %v5361, %v5397
    %v5414 = vadd.f32 %v5362, %v5397
    %v5415 = vadd.f32 %v5363, %v5397
    %v5416 = vadd.f32 %v5364, %v5397
    %v5417 = vadd.f32 %v5365, %v5397
    %v5418 = vadd.f32 %v5366, %v5397
    %v5419 = vadd.f32 %v5367, %v5397
    %v5420 = vadd.f32 %v5368, %v5397
    %v5421 = vadd.f32 %v5369, %v5397
    %v5422 = vadd.f32 %v5370, %v5397
    %v5423 = vadd.f32 %v5371, %v5397
    %v5424 = vadd.f32 %v5372, %v5397
    %v5425 = vadd.f32 %v5373, %v5397
    %v5426 = vadd.f32 %v5374, %v5397
    %v5427 = vadd.f32 %v5375, %v5397
    %v5428 = vadd.f32 %v5376, %v5397
    %v5429 = vadd.f32 %v5377, %v5397
    %v5430 = vadd.f32 %v5378, %v5397
    %v5431 = vadd.f32 %v5379, %v5397
    %v5432 = vadd.f32 %v5380, %v5397
    %v5433 = vadd.f32 %v5381, %v5397
    %v5434 = vadd.f32 %v5382, %v5397
    %v5435 = vadd.f32 %v5383, %v5397
    %v5436 = vadd.f32 %v5384, %v5397
    %v5437 = vadd.f32 %v5385, %v5397
    %v5438 = vadd.f32 %v5386, %v5397
    %v5439 = vadd.f32 %v5387, %v5397
    %v5440 = vadd.f32 %v5388, %v5397
    %v5441 = vadd.f32 %v5389, %v5397
    %v5442 = vadd.f32 %v5390, %v5397
    %v5443 = vadd.f32 %v5391, %v5397
    %v5444 = vld [vmem:[#allocation16] sm:$0xf]
    %v5445 = vld [vmem:[#allocation16 + $0x4] sm:$0xf]
    %v5446 = vld [vmem:[#allocation16 + $0x8] sm:$0xf]
    %v5447 = vld [vmem:[#allocation16 + $0xc] sm:$0xf]
    %v5448 = vld [vmem:[#allocation16 + $0x10] sm:$0xf]
    %v5449 = vld [vmem:[#allocation16 + $0x14] sm:$0xf]
    %v5450 = vld [vmem:[#allocation16 + $0x18] sm:$0xf]
    %v5451 = vld [vmem:[#allocation16 + $0x1c] sm:$0xf]
    %v5452 = vld [vmem:[#allocation17] sm:$0x1]
    %v5454 = vlaneseq
    %v5455 = vshrl.u32 %v5454, 7
    %v5456 = vsub.s32 0, %v5455
    %v5457 = vrot.slane %v5452, %v5456
    %vm5459 = vsmask.f32 5376
    %v5460 = vshrl.u32 %v1594, 16
    %v5462 = vrot.slane %v5460, 2
    %v5463 = vshll.u32 %v1594, 16
    %v5465 = vrot.slane %v5463, 3
    %v5466 = vor.u32 %v5462, %v5465
    %v5467 = vshrl.u32 %v1595, 16
    %v5469 = vrot.slane %v5467, 2
    %v5470 = vshll.u32 %v1595, 16
    %v5472 = vrot.slane %v5470, 3
    %v5473 = vor.u32 %v5469, %v5472
    %v5474 = vsel %vm5459, %v5466, %v5473
    %v5475 = vshrl.u32 %v1596, 16
    %v5477 = vrot.slane %v5475, 2
    %v5478 = vshll.u32 %v1596, 16
    %v5480 = vrot.slane %v5478, 3
    %v5481 = vor.u32 %v5477, %v5480
    %v5482 = vsel %vm5459, %v5473, %v5481
    %v5483 = vshrl.u32 %v1597, 16
    %v5485 = vrot.slane %v5483, 2
    %v5486 = vshll.u32 %v1597, 16
    %v5488 = vrot.slane %v5486, 3
    %v5489 = vor.u32 %v5485, %v5488
    %v5490 = vsel %vm5459, %v5481, %v5489
    %v5491 = vshrl.u32 %v1598, 16
    %v5493 = vrot.slane %v5491, 2
    %v5494 = vshll.u32 %v1598, 16
    %v5496 = vrot.slane %v5494, 3
    %v5497 = vor.u32 %v5493, %v5496
    %v5498 = vsel %vm5459, %v5489, %v5497
    %v5499 = vshrl.u32 %v1599, 16
    %v5501 = vrot.slane %v5499, 2
    %v5502 = vshll.u32 %v1599, 16
    %v5504 = vrot.slane %v5502, 3
    %v5505 = vor.u32 %v5501, %v5504
    %v5506 = vsel %vm5459, %v5497, %v5505
    %v5507 = vshrl.u32 %v1600, 16
    %v5509 = vrot.slane %v5507, 2
    %v5510 = vshll.u32 %v1600, 16
    %v5512 = vrot.slane %v5510, 3
    %v5513 = vor.u32 %v5509, %v5512
    %v5514 = vsel %vm5459, %v5505, %v5513
    %v5515 = vshrl.u32 %v1601, 16
    %v5517 = vrot.slane %v5515, 2
    %v5518 = vshll.u32 %v1601, 16
    %v5520 = vrot.slane %v5518, 3
    %v5521 = vor.u32 %v5517, %v5520
    %v5522 = vsel %vm5459, %v5513, %v5521
    %v5523 = vshrl.u32 %v1602, 16
    %v5525 = vrot.slane %v5523, 2
    %v5526 = vshll.u32 %v1602, 16
    %v5528 = vrot.slane %v5526, 3
    %v5529 = vor.u32 %v5525, %v5528
    %v5530 = vsel %vm5459, %v5521, %v5529
    %v5531 = vshrl.u32 %v1603, 16
    %v5533 = vrot.slane %v5531, 2
    %v5534 = vshll.u32 %v1603, 16
    %v5536 = vrot.slane %v5534, 3
    %v5537 = vor.u32 %v5533, %v5536
    %v5538 = vsel %vm5459, %v5529, %v5537
    %v5539 = vshrl.u32 %v1604, 16
    %v5541 = vrot.slane %v5539, 2
    %v5542 = vshll.u32 %v1604, 16
    %v5544 = vrot.slane %v5542, 3
    %v5545 = vor.u32 %v5541, %v5544
    %v5546 = vsel %vm5459, %v5537, %v5545
    %v5547 = vshrl.u32 %v1605, 16
    %v5549 = vrot.slane %v5547, 2
    %v5550 = vshll.u32 %v1605, 16
    %v5552 = vrot.slane %v5550, 3
    %v5553 = vor.u32 %v5549, %v5552
    %v5554 = vsel %vm5459, %v5545, %v5553
    %v5555 = vshrl.u32 %v1606, 16
    %v5557 = vrot.slane %v5555, 2
    %v5558 = vshll.u32 %v1606, 16
    %v5560 = vrot.slane %v5558, 3
    %v5561 = vor.u32 %v5557, %v5560
    %v5562 = vsel %vm5459, %v5553, %v5561
    %v5563 = vshrl.u32 %v1607, 16
    %v5565 = vrot.slane %v5563, 2
    %v5566 = vshll.u32 %v1607, 16
    %v5568 = vrot.slane %v5566, 3
    %v5569 = vor.u32 %v5565, %v5568
    %v5570 = vsel %vm5459, %v5561, %v5569
    %v5571 = vshrl.u32 %v1608, 16
    %v5573 = vrot.slane %v5571, 2
    %v5574 = vshll.u32 %v1608, 16
    %v5576 = vrot.slane %v5574, 3
    %v5577 = vor.u32 %v5573, %v5576
    %v5578 = vsel %vm5459, %v5569, %v5577
    %v5579 = vshrl.u32 %v1609, 16
    %v5581 = vrot.slane %v5579, 2
    %v5582 = vshll.u32 %v1609, 16
    %v5584 = vrot.slane %v5582, 3
    %v5585 = vor.u32 %v5581, %v5584
    %v5586 = vsel %vm5459, %v5577, %v5585
    %v5587 = vshrl.u32 %v1610, 16
    %v5589 = vrot.slane %v5587, 2
    %v5590 = vshll.u32 %v1610, 16
    %v5592 = vrot.slane %v5590, 3
    %v5593 = vor.u32 %v5589, %v5592
    %v5594 = vsel %vm5459, %v5585, %v5593
    %v5595 = vshrl.u32 %v1611, 16
    %v5597 = vrot.slane %v5595, 2
    %v5598 = vshll.u32 %v1611, 16
    %v5600 = vrot.slane %v5598, 3
    %v5601 = vor.u32 %v5597, %v5600
    %v5602 = vsel %vm5459, %v5593, %v5601
    %v5603 = vshrl.u32 %v1612, 16
    %v5605 = vrot.slane %v5603, 2
    %v5606 = vshll.u32 %v1612, 16
    %v5608 = vrot.slane %v5606, 3
    %v5609 = vor.u32 %v5605, %v5608
    %v5610 = vsel %vm5459, %v5601, %v5609
    %v5611 = vshrl.u32 %v1613, 16
    %v5613 = vrot.slane %v5611, 2
    %v5614 = vshll.u32 %v1613, 16
    %v5616 = vrot.slane %v5614, 3
    %v5617 = vor.u32 %v5613, %v5616
    %v5618 = vsel %vm5459, %v5609, %v5617
    %v5619 = vshrl.u32 %v1614, 16
    %v5621 = vrot.slane %v5619, 2
    %v5622 = vshll.u32 %v1614, 16
    %v5624 = vrot.slane %v5622, 3
    %v5625 = vor.u32 %v5621, %v5624
    %v5626 = vsel %vm5459, %v5617, %v5625
    %v5627 = vshrl.u32 %v1615, 16
    %v5629 = vrot.slane %v5627, 2
    %v5630 = vshll.u32 %v1615, 16
    %v5632 = vrot.slane %v5630, 3
    %v5633 = vor.u32 %v5629, %v5632
    %v5634 = vsel %vm5459, %v5625, %v5633
    %v5635 = vshrl.u32 %v1616, 16
    %v5637 = vrot.slane %v5635, 2
    %v5638 = vshll.u32 %v1616, 16
    %v5640 = vrot.slane %v5638, 3
    %v5641 = vor.u32 %v5637, %v5640
    %v5642 = vsel %vm5459, %v5633, %v5641
    %v5651 = vunpack.c.l.b16 %v5444
    %v5652 = vunpack.c.l.b16 %v5445
    %v5653 = vunpack.c.l.b16 %v5446
    %v5654 = vunpack.c.l.b16 %v5447
    %v5655 = vunpack.c.l.b16 %v5448
    %v5656 = vunpack.c.l.b16 %v5449
    %v5657 = vunpack.c.l.b16 %v5450
    %v5658 = vunpack.c.l.b16 %v5451
    %v5659 = vpack.c.b16 %v5652, %v5651
    %v5660 = vpack.c.b16 %v5654, %v5653
    %v5661 = vpack.c.b16 %v5656, %v5655
    %v5662 = vpack.c.b16 %v5658, %v5657
    %v5668 = vsel %vm1642, %v5474, 0
    %v5671 = vsel %vm1642, %v5482, 0
    %v5674 = vsel %vm1642, %v5490, 0
    %v5677 = vsel %vm1642, %v5498, 0
    %v5680 = vsel %vm1642, %v5506, 0
    %v5683 = vsel %vm1642, %v5514, 0
    %v5686 = vsel %vm1642, %v5522, 0
    %v5689 = vsel %vm1642, %v5530, 0
    %v5692 = vsel %vm1642, %v5538, 0
    %v5695 = vsel %vm1642, %v5546, 0
    %v5698 = vsel %vm1642, %v5554, 0
    %v5701 = vsel %vm1642, %v5562, 0
    %v5704 = vsel %vm1642, %v5570, 0
    %v5707 = vsel %vm1642, %v5578, 0
    %v5710 = vsel %vm1642, %v5586, 0
    %v5713 = vsel %vm1642, %v5594, 0
    %v5716 = vsel %vm1642, %v5602, 0
    %v5719 = vsel %vm1642, %v5610, 0
    %v5722 = vsel %vm1642, %v5618, 0
    %v5725 = vsel %vm1642, %v5626, 0
    %v5728 = vsel %vm1642, %v5634, 0
    %v5731 = vsel %vm1642, %v5642, 0
    %v5734 = vsel %vm1642, %v5641, 0
    %5736 = vmatprep.subr.bf16.mxu0 0
    %5737 = vmatpush1.bf16.msra.mxu0 %v5659
    %5738 = vmatprep.subr.bf16.mxu0 0
    %5739 = vmatpush1.bf16.msra.mxu0 %v5660
    %5740 = vmatprep.subr.bf16.mxu0 0
    %5741 = vmatpush1.bf16.msra.mxu0 %v5661
    %5742 = vmatprep.subr.bf16.mxu0 0
    %5743 = vmatpush1.bf16.msra.mxu0 %v5662
    %5744 = vmatprep.subr.bf16.mxu0 0
    %5745 = vmatpush1.bf16.msra.mxu0 0
    %5746 = vmatprep.subr.bf16.mxu0 0
    %5747 = vmatpush1.bf16.msra.mxu0 0
    %5748 = vmatprep.subr.bf16.mxu0 0
    %5749 = vmatpush1.bf16.msra.mxu0 0
    %5750 = vmatprep.subr.bf16.mxu0 0
    %5751 = vmatpush1.bf16.msra.mxu0 0
    %5752 = vmatprep.subr.bf16.mxu0 0
    %5753 = vmatpush1.bf16.msra.mxu0 0
    %5754 = vmatprep.subr.bf16.mxu0 0
    %5755 = vmatpush1.bf16.msra.mxu0 0
    %5756 = vmatprep.subr.bf16.mxu0 0
    %5757 = vmatpush1.bf16.msra.mxu0 0
    %5758 = vmatprep.subr.bf16.mxu0 0
    %5759 = vmatpush1.bf16.msra.mxu0 0
    %5760 = vmatprep.subr.bf16.mxu0 0
    %5761 = vmatpush1.bf16.msra.mxu0 0
    %5762 = vmatprep.subr.bf16.mxu0 0
    %5763 = vmatpush1.bf16.msra.mxu0 0
    %5764 = vmatprep.subr.bf16.mxu0 0
    %5765 = vmatpush1.bf16.msra.mxu0 0
    %5766 = vmatprep.subr.bf16.mxu0 0
    %5767 = vmatpush1.bf16.msra.mxu0 0
    %5768 = vmatprep.mubr.bf16.mxu0 0
    %5769 = vmatmul.mubr.bf16.gmra.mrb[0].mxu0 %v5668
    %v5770 = vpop.f32.mrb[0].mxu0
    %v5771 = vadd.f32 %v5457, %v5770
    %v5772 = vpop.f32.mrb[0].mxu0
    %v5773 = vpop.f32.mrb[0].mxu0
    %v5774 = vadd.f32 %v5457, %v5773
    %v5775 = vpop.f32.mrb[0].mxu0
    %5776 = vmatprep.mubr.bf16.mxu0 0
    %5777 = vmatmul.mubr.bf16.gmra.mrb[0].mxu0 %v5671
    %v5778 = vpop.f32.mrb[0].mxu0
    %v5779 = vadd.f32 %v5457, %v5778
    %v5780 = vpop.f32.mrb[0].mxu0
    %v5781 = vpop.f32.mrb[0].mxu0
    %v5782 = vadd.f32 %v5457, %v5781
    %v5783 = vpop.f32.mrb[0].mxu0
    %5784 = vmatprep.mubr.bf16.mxu0 0
    %5785 = vmatmul.mubr.bf16.gmra.mrb[0].mxu0 %v5674
    %v5786 = vpop.f32.mrb[0].mxu0
    %v5787 = vadd.f32 %v5457, %v5786
    %v5788 = vpop.f32.mrb[0].mxu0
    %v5789 = vpop.f32.mrb[0].mxu0
    %v5790 = vadd.f32 %v5457, %v5789
    %v5791 = vpop.f32.mrb[0].mxu0
    %5792 = vmatprep.mubr.bf16.mxu0 0
    %5793 = vmatmul.mubr.bf16.gmra.mrb[0].mxu0 %v5677
    %v5794 = vpop.f32.mrb[0].mxu0
    %v5795 = vadd.f32 %v5457, %v5794
    %v5796 = vpop.f32.mrb[0].mxu0
    %v5797 = vpop.f32.mrb[0].mxu0
    %v5798 = vadd.f32 %v5457, %v5797
    %v5799 = vpop.f32.mrb[0].mxu0
    %5800 = vmatprep.mubr.bf16.mxu0 0
    %5801 = vmatmul.mubr.bf16.gmra.mrb[0].mxu0 %v5680
    %v5802 = vpop.f32.mrb[0].mxu0
    %v5803 = vadd.f32 %v5457, %v5802
    %v5804 = vpop.f32.mrb[0].mxu0
    %v5805 = vpop.f32.mrb[0].mxu0
    %v5806 = vadd.f32 %v5457, %v5805
    %v5807 = vpop.f32.mrb[0].mxu0
    %5808 = vmatprep.mubr.bf16.mxu0 0
    %5809 = vmatmul.mubr.bf16.gmra.mrb[0].mxu0 %v5683
    %v5810 = vpop.f32.mrb[0].mxu0
    %v5811 = vadd.f32 %v5457, %v5810
    %v5812 = vpop.f32.mrb[0].mxu0
    %v5813 = vpop.f32.mrb[0].mxu0
    %v5814 = vadd.f32 %v5457, %v5813
    %v5815 = vpop.f32.mrb[0].mxu0
    %5816 = vmatprep.mubr.bf16.mxu0 0
    %5817 = vmatmul.mubr.bf16.gmra.mrb[0].mxu0 %v5686
    %v5818 = vpop.f32.mrb[0].mxu0
    %v5819 = vadd.f32 %v5457, %v5818
    %v5820 = vpop.f32.mrb[0].mxu0
    %v5821 = vpop.f32.mrb[0].mxu0
    %v5822 = vadd.f32 %v5457, %v5821
    %v5823 = vpop.f32.mrb[0].mxu0
    %5824 = vmatprep.mubr.bf16.mxu0 0
    %5825 = vmatmul.mubr.bf16.gmra.mrb[0].mxu0 %v5689
    %v5826 = vpop.f32.mrb[0].mxu0
    %v5827 = vadd.f32 %v5457, %v5826
    %v5828 = vpop.f32.mrb[0].mxu0
    %v5829 = vpop.f32.mrb[0].mxu0
    %v5830 = vadd.f32 %v5457, %v5829
    %v5831 = vpop.f32.mrb[0].mxu0
    %5832 = vmatprep.mubr.bf16.mxu0 0
    %5833 = vmatmul.mubr.bf16.gmra.mrb[0].mxu0 %v5692
    %v5834 = vpop.f32.mrb[0].mxu0
    %v5835 = vadd.f32 %v5457, %v5834
    %v5836 = vpop.f32.mrb[0].mxu0
    %v5837 = vpop.f32.mrb[0].mxu0
    %v5838 = vadd.f32 %v5457, %v5837
    %v5839 = vpop.f32.mrb[0].mxu0
    %5840 = vmatprep.mubr.bf16.mxu0 0
    %5841 = vmatmul.mubr.bf16.gmra.mrb[0].mxu0 %v5695
    %v5842 = vpop.f32.mrb[0].mxu0
    %v5843 = vadd.f32 %v5457, %v5842
    %v5844 = vpop.f32.mrb[0].mxu0
    %v5845 = vpop.f32.mrb[0].mxu0
    %v5846 = vadd.f32 %v5457, %v5845
    %v5847 = vpop.f32.mrb[0].mxu0
    %5848 = vmatprep.mubr.bf16.mxu0 0
    %5849 = vmatmul.mubr.bf16.gmra.mrb[0].mxu0 %v5698
    %v5850 = vpop.f32.mrb[0].mxu0
    %v5851 = vadd.f32 %v5457, %v5850
    %v5852 = vpop.f32.mrb[0].mxu0
    %v5853 = vpop.f32.mrb[0].mxu0
    %v5854 = vadd.f32 %v5457, %v5853
    %v5855 = vpop.f32.mrb[0].mxu0
    %5856 = vmatprep.mubr.bf16.mxu0 0
    %5857 = vmatmul.mubr.bf16.gmra.mrb[0].mxu0 %v5701
    %v5858 = vpop.f32.mrb[0].mxu0
    %v5859 = vadd.f32 %v5457, %v5858
    %v5860 = vpop.f32.mrb[0].mxu0
    %v5861 = vpop.f32.mrb[0].mxu0
    %v5862 = vadd.f32 %v5457, %v5861
    %v5863 = vpop.f32.mrb[0].mxu0
    %5864 = vmatprep.mubr.bf16.mxu0 0
    %5865 = vmatmul.mubr.bf16.gmra.mrb[0].mxu0 %v5704
    %v5866 = vpop.f32.mrb[0].mxu0
    %v5867 = vadd.f32 %v5457, %v5866
    %v5868 = vpop.f32.mrb[0].mxu0
    %v5869 = vpop.f32.mrb[0].mxu0
    %v5870 = vadd.f32 %v5457, %v5869
    %v5871 = vpop.f32.mrb[0].mxu0
    %5872 = vmatprep.mubr.bf16.mxu0 0
    %5873 = vmatmul.mubr.bf16.gmra.mrb[0].mxu0 %v5707
    %v5874 = vpop.f32.mrb[0].mxu0
    %v5875 = vadd.f32 %v5457, %v5874
    %v5876 = vpop.f32.mrb[0].mxu0
    %v5877 = vpop.f32.mrb[0].mxu0
    %v5878 = vadd.f32 %v5457, %v5877
    %v5879 = vpop.f32.mrb[0].mxu0
    %5880 = vmatprep.mubr.bf16.mxu0 0
    %5881 = vmatmul.mubr.bf16.gmra.mrb[0].mxu0 %v5710
    %v5882 = vpop.f32.mrb[0].mxu0
    %v5883 = vadd.f32 %v5457, %v5882
    %v5884 = vpop.f32.mrb[0].mxu0
    %v5885 = vpop.f32.mrb[0].mxu0
    %v5886 = vadd.f32 %v5457, %v5885
    %v5887 = vpop.f32.mrb[0].mxu0
    %5888 = vmatprep.mubr.bf16.mxu0 0
    %5889 = vmatmul.mubr.bf16.gmra.mrb[0].mxu0 %v5713
    %v5890 = vpop.f32.mrb[0].mxu0
    %v5891 = vadd.f32 %v5457, %v5890
    %v5892 = vpop.f32.mrb[0].mxu0
    %v5893 = vpop.f32.mrb[0].mxu0
    %v5894 = vadd.f32 %v5457, %v5893
    %v5895 = vpop.f32.mrb[0].mxu0
    %5896 = vmatprep.mubr.bf16.mxu0 0
    %5897 = vmatmul.mubr.bf16.gmra.mrb[0].mxu0 %v5716
    %v5898 = vpop.f32.mrb[0].mxu0
    %v5899 = vadd.f32 %v5457, %v5898
    %v5900 = vpop.f32.mrb[0].mxu0
    %v5901 = vpop.f32.mrb[0].mxu0
    %v5902 = vadd.f32 %v5457, %v5901
    %v5903 = vpop.f32.mrb[0].mxu0
    %5904 = vmatprep.mubr.bf16.mxu0 0
    %5905 = vmatmul.mubr.bf16.gmra.mrb[0].mxu0 %v5719
    %v5906 = vpop.f32.mrb[0].mxu0
    %v5907 = vadd.f32 %v5457, %v5906
    %v5908 = vpop.f32.mrb[0].mxu0
    %v5909 = vpop.f32.mrb[0].mxu0
    %v5910 = vadd.f32 %v5457, %v5909
    %v5911 = vpop.f32.mrb[0].mxu0
    %5912 = vmatprep.mubr.bf16.mxu0 0
    %5913 = vmatmul.mubr.bf16.gmra.mrb[0].mxu0 %v5722
    %v5914 = vpop.f32.mrb[0].mxu0
    %v5915 = vadd.f32 %v5457, %v5914
    %v5916 = vpop.f32.mrb[0].mxu0
    %v5917 = vpop.f32.mrb[0].mxu0
    %v5918 = vadd.f32 %v5457, %v5917
    %v5919 = vpop.f32.mrb[0].mxu0
    %5920 = vmatprep.mubr.bf16.mxu0 0
    %5921 = vmatmul.mubr.bf16.gmra.mrb[0].mxu0 %v5725
    %v5922 = vpop.f32.mrb[0].mxu0
    %v5923 = vadd.f32 %v5457, %v5922
    %v5924 = vpop.f32.mrb[0].mxu0
    %v5925 = vpop.f32.mrb[0].mxu0
    %v5926 = vadd.f32 %v5457, %v5925
    %v5927 = vpop.f32.mrb[0].mxu0
    %5928 = vmatprep.mubr.bf16.mxu0 0
    %5929 = vmatmul.mubr.bf16.gmra.mrb[0].mxu0 %v5728
    %v5930 = vpop.f32.mrb[0].mxu0
    %v5931 = vadd.f32 %v5457, %v5930
    %v5932 = vpop.f32.mrb[0].mxu0
    %v5933 = vpop.f32.mrb[0].mxu0
    %v5934 = vadd.f32 %v5457, %v5933
    %v5935 = vpop.f32.mrb[0].mxu0
    %5936 = vmatprep.mubr.bf16.mxu0 0
    %5937 = vmatmul.mubr.bf16.gmra.mrb[0].mxu0 %v5731
    %v5938 = vpop.f32.mrb[0].mxu0
    %v5939 = vadd.f32 %v5457, %v5938
    %v5940 = vpop.f32.mrb[0].mxu0
    %v5941 = vpop.f32.mrb[0].mxu0
    %v5942 = vadd.f32 %v5457, %v5941
    %v5943 = vpop.f32.mrb[0].mxu0
    %5944 = vmatprep.mubr.bf16.mxu0 0
    %5945 = vmatmul.mubr.bf16.gmra.mrb[0].mxu0 %v5734
    %v5946 = vpop.f32.mrb[0].mxu0
    %v5947 = vadd.f32 %v5457, %v5946
    %v5948 = vpop.f32.mrb[0].mxu0
    %v5949 = vpop.f32.mrb[0].mxu0
    %v5950 = vpop.f32.mrb[0].mxu0
    %5951 = vdwg.mxu0
    %vm5952 = vcmp.gt.f32.partialorder %v5771, 0.0
    %vm5953 = vcmp.gt.f32.partialorder %v5774, 0.0
    %vm5954 = vcmp.gt.f32.partialorder %v5779, 0.0
    %vm5955 = vcmp.gt.f32.partialorder %v5782, 0.0
    %vm5956 = vcmp.gt.f32.partialorder %v5787, 0.0
    %vm5957 = vcmp.gt.f32.partialorder %v5790, 0.0
    %vm5958 = vcmp.gt.f32.partialorder %v5795, 0.0
    %vm5959 = vcmp.gt.f32.partialorder %v5798, 0.0
    %vm5960 = vcmp.gt.f32.partialorder %v5803, 0.0
    %vm5961 = vcmp.gt.f32.partialorder %v5806, 0.0
    %vm5962 = vcmp.gt.f32.partialorder %v5811, 0.0
    %vm5963 = vcmp.gt.f32.partialorder %v5814, 0.0
    %vm5964 = vcmp.gt.f32.partialorder %v5819, 0.0
    %vm5965 = vcmp.gt.f32.partialorder %v5822, 0.0
    %vm5966 = vcmp.gt.f32.partialorder %v5827, 0.0
    %vm5967 = vcmp.gt.f32.partialorder %v5830, 0.0
    %vm5968 = vcmp.gt.f32.partialorder %v5835, 0.0
    %vm5969 = vcmp.gt.f32.partialorder %v5838, 0.0
    %vm5970 = vcmp.gt.f32.partialorder %v5843, 0.0
    %vm5971 = vcmp.gt.f32.partialorder %v5846, 0.0
    %vm5972 = vcmp.gt.f32.partialorder %v5851, 0.0
    %vm5973 = vcmp.gt.f32.partialorder %v5854, 0.0
    %vm5974 = vcmp.gt.f32.partialorder %v5859, 0.0
    %vm5975 = vcmp.gt.f32.partialorder %v5862, 0.0
    %vm5976 = vcmp.gt.f32.partialorder %v5867, 0.0
    %vm5977 = vcmp.gt.f32.partialorder %v5870, 0.0
    %vm5978 = vcmp.gt.f32.partialorder %v5875, 0.0
    %vm5979 = vcmp.gt.f32.partialorder %v5878, 0.0
    %vm5980 = vcmp.gt.f32.partialorder %v5883, 0.0
    %vm5981 = vcmp.gt.f32.partialorder %v5886, 0.0
    %vm5982 = vcmp.gt.f32.partialorder %v5891, 0.0
    %vm5983 = vcmp.gt.f32.partialorder %v5894, 0.0
    %vm5984 = vcmp.gt.f32.partialorder %v5899, 0.0
    %vm5985 = vcmp.gt.f32.partialorder %v5902, 0.0
    %vm5986 = vcmp.gt.f32.partialorder %v5907, 0.0
    %vm5987 = vcmp.gt.f32.partialorder %v5910, 0.0
    %vm5988 = vcmp.gt.f32.partialorder %v5915, 0.0
    %vm5989 = vcmp.gt.f32.partialorder %v5918, 0.0
    %vm5990 = vcmp.gt.f32.partialorder %v5923, 0.0
    %vm5991 = vcmp.gt.f32.partialorder %v5926, 0.0
    %vm5992 = vcmp.gt.f32.partialorder %v5931, 0.0
    %vm5993 = vcmp.gt.f32.partialorder %v5934, 0.0
    %vm5994 = vcmp.gt.f32.partialorder %v5939, 0.0
    %vm5995 = vcmp.gt.f32.partialorder %v5942, 0.0
    %vm5996 = vcmp.gt.f32.partialorder %v5947, 0.0
    %v5997 = vmul.f32 %v5771, 0.01
    %v5998 = vmul.f32 %v5774, 0.01
    %v5999 = vmul.f32 %v5779, 0.01
    %v6000 = vmul.f32 %v5782, 0.01
    %v6001 = vmul.f32 %v5787, 0.01
    %v6002 = vmul.f32 %v5790, 0.01
    %v6003 = vmul.f32 %v5795, 0.01
    %v6004 = vmul.f32 %v5798, 0.01
    %v6005 = vmul.f32 %v5803, 0.01
    %v6006 = vmul.f32 %v5806, 0.01
    %v6007 = vmul.f32 %v5811, 0.01
    %v6008 = vmul.f32 %v5814, 0.01
    %v6009 = vmul.f32 %v5819, 0.01
    %v6010 = vmul.f32 %v5822, 0.01
    %v6011 = vmul.f32 %v5827, 0.01
    %v6012 = vmul.f32 %v5830, 0.01
    %v6013 = vmul.f32 %v5835, 0.01
    %v6014 = vmul.f32 %v5838, 0.01
    %v6015 = vmul.f32 %v5843, 0.01
    %v6016 = vmul.f32 %v5846, 0.01
    %v6017 = vmul.f32 %v5851, 0.01
    %v6018 = vmul.f32 %v5854, 0.01
    %v6019 = vmul.f32 %v5859, 0.01
    %v6020 = vmul.f32 %v5862, 0.01
    %v6021 = vmul.f32 %v5867, 0.01
    %v6022 = vmul.f32 %v5870, 0.01
    %v6023 = vmul.f32 %v5875, 0.01
    %v6024 = vmul.f32 %v5878, 0.01
    %v6025 = vmul.f32 %v5883, 0.01
    %v6026 = vmul.f32 %v5886, 0.01
    %v6027 = vmul.f32 %v5891, 0.01
    %v6028 = vmul.f32 %v5894, 0.01
    %v6029 = vmul.f32 %v5899, 0.01
    %v6030 = vmul.f32 %v5902, 0.01
    %v6031 = vmul.f32 %v5907, 0.01
    %v6032 = vmul.f32 %v5910, 0.01
    %v6033 = vmul.f32 %v5915, 0.01
    %v6034 = vmul.f32 %v5918, 0.01
    %v6035 = vmul.f32 %v5923, 0.01
    %v6036 = vmul.f32 %v5926, 0.01
    %v6037 = vmul.f32 %v5931, 0.01
    %v6038 = vmul.f32 %v5934, 0.01
    %v6039 = vmul.f32 %v5939, 0.01
    %v6040 = vmul.f32 %v5942, 0.01
    %v6041 = vmul.f32 %v5947, 0.01
    %v6042 = vsel %vm5952, %v5771, %v5997
    %v6043 = vsel %vm5953, %v5774, %v5998
    %v6044 = vsel %vm5954, %v5779, %v5999
    %v6045 = vsel %vm5955, %v5782, %v6000
    %v6046 = vsel %vm5956, %v5787, %v6001
    %v6047 = vsel %vm5957, %v5790, %v6002
    %v6048 = vsel %vm5958, %v5795, %v6003
    %v6049 = vsel %vm5959, %v5798, %v6004
    %v6050 = vsel %vm5960, %v5803, %v6005
    %v6051 = vsel %vm5961, %v5806, %v6006
    %v6052 = vsel %vm5962, %v5811, %v6007
    %v6053 = vsel %vm5963, %v5814, %v6008
    %v6054 = vsel %vm5964, %v5819, %v6009
    %v6055 = vsel %vm5965, %v5822, %v6010
    %v6056 = vsel %vm5966, %v5827, %v6011
    %v6057 = vsel %vm5967, %v5830, %v6012
    %v6058 = vsel %vm5968, %v5835, %v6013
    %v6059 = vsel %vm5969, %v5838, %v6014
    %v6060 = vsel %vm5970, %v5843, %v6015
    %v6061 = vsel %vm5971, %v5846, %v6016
    %v6062 = vsel %vm5972, %v5851, %v6017
    %v6063 = vsel %vm5973, %v5854, %v6018
    %v6064 = vsel %vm5974, %v5859, %v6019
    %v6065 = vsel %vm5975, %v5862, %v6020
    %v6066 = vsel %vm5976, %v5867, %v6021
    %v6067 = vsel %vm5977, %v5870, %v6022
    %v6068 = vsel %vm5978, %v5875, %v6023
    %v6069 = vsel %vm5979, %v5878, %v6024
    %v6070 = vsel %vm5980, %v5883, %v6025
    %v6071 = vsel %vm5981, %v5886, %v6026
    %v6072 = vsel %vm5982, %v5891, %v6027
    %v6073 = vsel %vm5983, %v5894, %v6028
    %v6074 = vsel %vm5984, %v5899, %v6029
    %v6075 = vsel %vm5985, %v5902, %v6030
    %v6076 = vsel %vm5986, %v5907, %v6031
    %v6077 = vsel %vm5987, %v5910, %v6032
    %v6078 = vsel %vm5988, %v5915, %v6033
    %v6079 = vsel %vm5989, %v5918, %v6034
    %v6080 = vsel %vm5990, %v5923, %v6035
    %v6081 = vsel %vm5991, %v5926, %v6036
    %v6082 = vsel %vm5992, %v5931, %v6037
    %v6083 = vsel %vm5993, %v5934, %v6038
    %v6084 = vsel %vm5994, %v5939, %v6039
    %v6085 = vsel %vm5995, %v5942, %v6040
    %v6086 = vsel %vm5996, %v5947, %v6041
    %v6087 = vpack.c.bf16 %v6043, %v6042
    %v6088 = vpack.c.bf16 %v6045, %v6044
    %v6089 = vpack.c.bf16 %v6047, %v6046
    %v6090 = vpack.c.bf16 %v6049, %v6048
    %v6091 = vpack.c.bf16 %v6051, %v6050
    %v6092 = vpack.c.bf16 %v6053, %v6052
    %v6093 = vpack.c.bf16 %v6055, %v6054
    %v6094 = vpack.c.bf16 %v6057, %v6056
    %v6095 = vpack.c.bf16 %v6059, %v6058
    %v6096 = vpack.c.bf16 %v6061, %v6060
    %v6097 = vpack.c.bf16 %v6063, %v6062
    %v6098 = vpack.c.bf16 %v6065, %v6064
    %v6099 = vpack.c.bf16 %v6067, %v6066
    %v6100 = vpack.c.bf16 %v6069, %v6068
    %v6101 = vpack.c.bf16 %v6071, %v6070
    %v6102 = vpack.c.bf16 %v6073, %v6072
    %v6103 = vpack.c.bf16 %v6075, %v6074
    %v6104 = vpack.c.bf16 %v6077, %v6076
    %v6105 = vpack.c.bf16 %v6079, %v6078
    %v6106 = vpack.c.bf16 %v6081, %v6080
    %v6107 = vpack.c.bf16 %v6083, %v6082
    %v6108 = vpack.c.bf16 %v6085, %v6084
    %v6109 = vpack.c.bf16 %v6086, %v6086
    %v6110 = vld [vmem:[#allocation19] sm:$0xff]
    %v6111 = vld [vmem:[#allocation19 + $0x8] sm:$0xff]
    %v6112 = vld [vmem:[#allocation19 + $0x10] sm:$0xff]
    %v6113 = vld [vmem:[#allocation19 + $0x18] sm:$0xff]
    %v6114 = vld [vmem:[#allocation19 + $0x20] sm:$0xff]
    %v6115 = vld [vmem:[#allocation19 + $0x28] sm:$0xff]
    %v6116 = vld [vmem:[#allocation19 + $0x30] sm:$0xff]
    %v6117 = vld [vmem:[#allocation19 + $0x38] sm:$0xff]
    %v6118 = vld [vmem:[#allocation19 + $0x40] sm:$0xff]
    %v6119 = vld [vmem:[#allocation19 + $0x48] sm:$0xff]
    %v6120 = vld [vmem:[#allocation19 + $0x50] sm:$0xff]
    %v6121 = vld [vmem:[#allocation19 + $0x58] sm:$0xff]
    %v6122 = vld [vmem:[#allocation19 + $0x60] sm:$0xff]
    %v6123 = vld [vmem:[#allocation19 + $0x68] sm:$0xff]
    %v6124 = vld [vmem:[#allocation19 + $0x70] sm:$0xff]
    %v6125 = vld [vmem:[#allocation19 + $0x78] sm:$0xff]
    %v6126 = vld [vmem:[#allocation20] sm:$0x3]
    %v6128 = vlaneseq
    %v6129 = vshrl.u32 %v6128, 7
    %v6130 = vsub.s32 0, %v6129
    %v6131 = vrot.slane %v6126, %v6130
    %v6132 = vlaneseq
    %v6133 = vshrl.u32 %v6132, 7
    %v6134 = vsub.s32 1, %v6133
    %v6135 = vrot.slane %v6126, %v6134
    %v6154 = vunpack.c.l.b16 %v6110
    %v6155 = vunpack.c.h.b16 %v6110
    %v6156 = vunpack.c.l.b16 %v6111
    %v6157 = vunpack.c.h.b16 %v6111
    %v6158 = vunpack.c.l.b16 %v6112
    %v6159 = vunpack.c.h.b16 %v6112
    %v6160 = vunpack.c.l.b16 %v6113
    %v6161 = vunpack.c.h.b16 %v6113
    %v6162 = vunpack.c.l.b16 %v6114
    %v6163 = vunpack.c.h.b16 %v6114
    %v6164 = vunpack.c.l.b16 %v6115
    %v6165 = vunpack.c.h.b16 %v6115
    %v6166 = vunpack.c.l.b16 %v6116
    %v6167 = vunpack.c.h.b16 %v6116
    %v6168 = vunpack.c.l.b16 %v6117
    %v6169 = vunpack.c.h.b16 %v6117
    %v6170 = vunpack.c.l.b16 %v6118
    %v6171 = vunpack.c.h.b16 %v6118
    %v6172 = vunpack.c.l.b16 %v6119
    %v6173 = vunpack.c.h.b16 %v6119
    %v6174 = vunpack.c.l.b16 %v6120
    %v6175 = vunpack.c.h.b16 %v6120
    %v6176 = vunpack.c.l.b16 %v6121
    %v6177 = vunpack.c.h.b16 %v6121
    %v6178 = vunpack.c.l.b16 %v6122
    %v6179 = vunpack.c.h.b16 %v6122
    %v6180 = vunpack.c.l.b16 %v6123
    %v6181 = vunpack.c.h.b16 %v6123
    %v6182 = vunpack.c.l.b16 %v6124
    %v6183 = vunpack.c.h.b16 %v6124
    %v6184 = vunpack.c.l.b16 %v6125
    %v6185 = vunpack.c.h.b16 %v6125
    %v6186 = vpack.c.b16 %v6156, %v6154
    %v6187 = vpack.c.b16 %v6157, %v6155
    %v6188 = vpack.c.b16 %v6160, %v6158
    %v6189 = vpack.c.b16 %v6161, %v6159
    %v6190 = vpack.c.b16 %v6164, %v6162
    %v6191 = vpack.c.b16 %v6165, %v6163
    %v6192 = vpack.c.b16 %v6168, %v6166
    %v6193 = vpack.c.b16 %v6169, %v6167
    %v6194 = vpack.c.b16 %v6172, %v6170
    %v6195 = vpack.c.b16 %v6173, %v6171
    %v6196 = vpack.c.b16 %v6176, %v6174
    %v6197 = vpack.c.b16 %v6177, %v6175
    %v6198 = vpack.c.b16 %v6180, %v6178
    %v6199 = vpack.c.b16 %v6181, %v6179
    %v6200 = vpack.c.b16 %v6184, %v6182
    %v6201 = vpack.c.b16 %v6185, %v6183
    %6218 = vmatprep.subr.bf16.mxu0 %v6187
    %6219 = vmatpush1.bf16.msra.mxu0 %v6186
    %6220 = vmatprep.subr.bf16.mxu0 %v6189
    %6221 = vmatpush1.bf16.msra.mxu0 %v6188
    %6222 = vmatprep.subr.bf16.mxu0 %v6191
    %6223 = vmatpush1.bf16.msra.mxu0 %v6190
    %6224 = vmatprep.subr.bf16.mxu0 %v6193
    %6225 = vmatpush1.bf16.msra.mxu0 %v6192
    %6226 = vmatprep.subr.bf16.mxu0 %v6195
    %6227 = vmatpush1.bf16.msra.mxu0 %v6194
    %6228 = vmatprep.subr.bf16.mxu0 %v6197
    %6229 = vmatpush1.bf16.msra.mxu0 %v6196
    %6230 = vmatprep.subr.bf16.mxu0 %v6199
    %6231 = vmatpush1.bf16.msra.mxu0 %v6198
    %6232 = vmatprep.subr.bf16.mxu0 %v6201
    %6233 = vmatpush1.bf16.msra.mxu0 %v6200
    %6234 = vmatprep.subr.bf16.mxu0 0
    %6235 = vmatpush1.bf16.msra.mxu0 0
    %6236 = vmatprep.subr.bf16.mxu0 0
    %6237 = vmatpush1.bf16.msra.mxu0 0
    %6238 = vmatprep.subr.bf16.mxu0 0
    %6239 = vmatpush1.bf16.msra.mxu0 0
    %6240 = vmatprep.subr.bf16.mxu0 0
    %6241 = vmatpush1.bf16.msra.mxu0 0
    %6242 = vmatprep.subr.bf16.mxu0 0
    %6243 = vmatpush1.bf16.msra.mxu0 0
    %6244 = vmatprep.subr.bf16.mxu0 0
    %6245 = vmatpush1.bf16.msra.mxu0 0
    %6246 = vmatprep.subr.bf16.mxu0 0
    %6247 = vmatpush1.bf16.msra.mxu0 0
    %6248 = vmatprep.subr.bf16.mxu0 0
    %6249 = vmatpush1.bf16.msra.mxu0 0
    %6250 = vmatprep.mubr.bf16.mxu0 0
    %6251 = vmatmul.mubr.bf16.gmra.mrb[0].mxu0 %v6087
    %v6252 = vpop.f32.mrb[0].mxu0
    %v6253 = vadd.f32 %v6131, %v6252
    %v6254 = vpop.f32.mrb[0].mxu0
    %v6255 = vadd.f32 %v6135, %v6254
    %v6256 = vpop.f32.mrb[0].mxu0
    %v6257 = vadd.f32 %v6131, %v6256
    %v6258 = vpop.f32.mrb[0].mxu0
    %v6259 = vadd.f32 %v6135, %v6258
    %6260 = vmatprep.mubr.bf16.mxu0 0
    %6261 = vmatmul.mubr.bf16.gmra.mrb[0].mxu0 %v6088
    %v6262 = vpop.f32.mrb[0].mxu0
    %v6263 = vadd.f32 %v6131, %v6262
    %v6264 = vpop.f32.mrb[0].mxu0
    %v6265 = vadd.f32 %v6135, %v6264
    %v6266 = vpop.f32.mrb[0].mxu0
    %v6267 = vadd.f32 %v6131, %v6266
    %v6268 = vpop.f32.mrb[0].mxu0
    %v6269 = vadd.f32 %v6135, %v6268
    %6270 = vmatprep.mubr.bf16.mxu0 0
    %6271 = vmatmul.mubr.bf16.gmra.mrb[0].mxu0 %v6089
    %v6272 = vpop.f32.mrb[0].mxu0
    %v6273 = vadd.f32 %v6131, %v6272
    %v6274 = vpop.f32.mrb[0].mxu0
    %v6275 = vadd.f32 %v6135, %v6274
    %v6276 = vpop.f32.mrb[0].mxu0
    %v6277 = vadd.f32 %v6131, %v6276
    %v6278 = vpop.f32.mrb[0].mxu0
    %v6279 = vadd.f32 %v6135, %v6278
    %6280 = vmatprep.mubr.bf16.mxu0 0
    %6281 = vmatmul.mubr.bf16.gmra.mrb[0].mxu0 %v6090
    %v6282 = vpop.f32.mrb[0].mxu0
    %v6283 = vadd.f32 %v6131, %v6282
    %v6284 = vpop.f32.mrb[0].mxu0
    %v6285 = vadd.f32 %v6135, %v6284
    %v6286 = vpop.f32.mrb[0].mxu0
    %v6287 = vadd.f32 %v6131, %v6286
    %v6288 = vpop.f32.mrb[0].mxu0
    %v6289 = vadd.f32 %v6135, %v6288
    %6290 = vmatprep.mubr.bf16.mxu0 0
    %6291 = vmatmul.mubr.bf16.gmra.mrb[0].mxu0 %v6091
    %v6292 = vpop.f32.mrb[0].mxu0
    %v6293 = vadd.f32 %v6131, %v6292
    %v6294 = vpop.f32.mrb[0].mxu0
    %v6295 = vadd.f32 %v6135, %v6294
    %v6296 = vpop.f32.mrb[0].mxu0
    %v6297 = vadd.f32 %v6131, %v6296
    %v6298 = vpop.f32.mrb[0].mxu0
    %v6299 = vadd.f32 %v6135, %v6298
    %6300 = vmatprep.mubr.bf16.mxu0 0
    %6301 = vmatmul.mubr.bf16.gmra.mrb[0].mxu0 %v6092
    %v6302 = vpop.f32.mrb[0].mxu0
    %v6303 = vadd.f32 %v6131, %v6302
    %v6304 = vpop.f32.mrb[0].mxu0
    %v6305 = vadd.f32 %v6135, %v6304
    %v6306 = vpop.f32.mrb[0].mxu0
    %v6307 = vadd.f32 %v6131, %v6306
    %v6308 = vpop.f32.mrb[0].mxu0
    %v6309 = vadd.f32 %v6135, %v6308
    %6310 = vmatprep.mubr.bf16.mxu0 0
    %6311 = vmatmul.mubr.bf16.gmra.mrb[0].mxu0 %v6093
    %v6312 = vpop.f32.mrb[0].mxu0
    %v6313 = vadd.f32 %v6131, %v6312
    %v6314 = vpop.f32.mrb[0].mxu0
    %v6315 = vadd.f32 %v6135, %v6314
    %v6316 = vpop.f32.mrb[0].mxu0
    %v6317 = vadd.f32 %v6131, %v6316
    %v6318 = vpop.f32.mrb[0].mxu0
    %v6319 = vadd.f32 %v6135, %v6318
    %6320 = vmatprep.mubr.bf16.mxu0 0
    %6321 = vmatmul.mubr.bf16.gmra.mrb[0].mxu0 %v6094
    %v6322 = vpop.f32.mrb[0].mxu0
    %v6323 = vadd.f32 %v6131, %v6322
    %v6324 = vpop.f32.mrb[0].mxu0
    %v6325 = vadd.f32 %v6135, %v6324
    %v6326 = vpop.f32.mrb[0].mxu0
    %v6327 = vadd.f32 %v6131, %v6326
    %v6328 = vpop.f32.mrb[0].mxu0
    %v6329 = vadd.f32 %v6135, %v6328
    %6330 = vmatprep.mubr.bf16.mxu0 0
    %6331 = vmatmul.mubr.bf16.gmra.mrb[0].mxu0 %v6095
    %v6332 = vpop.f32.mrb[0].mxu0
    %v6333 = vadd.f32 %v6131, %v6332
    %v6334 = vpop.f32.mrb[0].mxu0
    %v6335 = vadd.f32 %v6135, %v6334
    %v6336 = vpop.f32.mrb[0].mxu0
    %v6337 = vadd.f32 %v6131, %v6336
    %v6338 = vpop.f32.mrb[0].mxu0
    %v6339 = vadd.f32 %v6135, %v6338
    %6340 = vmatprep.mubr.bf16.mxu0 0
    %6341 = vmatmul.mubr.bf16.gmra.mrb[0].mxu0 %v6096
    %v6342 = vpop.f32.mrb[0].mxu0
    %v6343 = vadd.f32 %v6131, %v6342
    %v6344 = vpop.f32.mrb[0].mxu0
    %v6345 = vadd.f32 %v6135, %v6344
    %v6346 = vpop.f32.mrb[0].mxu0
    %v6347 = vadd.f32 %v6131, %v6346
    %v6348 = vpop.f32.mrb[0].mxu0
    %v6349 = vadd.f32 %v6135, %v6348
    %6350 = vmatprep.mubr.bf16.mxu0 0
    %6351 = vmatmul.mubr.bf16.gmra.mrb[0].mxu0 %v6097
    %v6352 = vpop.f32.mrb[0].mxu0
    %v6353 = vadd.f32 %v6131, %v6352
    %v6354 = vpop.f32.mrb[0].mxu0
    %v6355 = vadd.f32 %v6135, %v6354
    %v6356 = vpop.f32.mrb[0].mxu0
    %v6357 = vadd.f32 %v6131, %v6356
    %v6358 = vpop.f32.mrb[0].mxu0
    %v6359 = vadd.f32 %v6135, %v6358
    %6360 = vmatprep.mubr.bf16.mxu0 0
    %6361 = vmatmul.mubr.bf16.gmra.mrb[0].mxu0 %v6098
    %v6362 = vpop.f32.mrb[0].mxu0
    %v6363 = vadd.f32 %v6131, %v6362
    %v6364 = vpop.f32.mrb[0].mxu0
    %v6365 = vadd.f32 %v6135, %v6364
    %v6366 = vpop.f32.mrb[0].mxu0
    %v6367 = vadd.f32 %v6131, %v6366
    %v6368 = vpop.f32.mrb[0].mxu0
    %v6369 = vadd.f32 %v6135, %v6368
    %6370 = vmatprep.mubr.bf16.mxu0 0
    %6371 = vmatmul.mubr.bf16.gmra.mrb[0].mxu0 %v6099
    %v6372 = vpop.f32.mrb[0].mxu0
    %v6373 = vadd.f32 %v6131, %v6372
    %v6374 = vpop.f32.mrb[0].mxu0
    %v6375 = vadd.f32 %v6135, %v6374
    %v6376 = vpop.f32.mrb[0].mxu0
    %v6377 = vadd.f32 %v6131, %v6376
    %v6378 = vpop.f32.mrb[0].mxu0
    %v6379 = vadd.f32 %v6135, %v6378
    %6380 = vmatprep.mubr.bf16.mxu0 0
    %6381 = vmatmul.mubr.bf16.gmra.mrb[0].mxu0 %v6100
    %v6382 = vpop.f32.mrb[0].mxu0
    %v6383 = vadd.f32 %v6131, %v6382
    %v6384 = vpop.f32.mrb[0].mxu0
    %v6385 = vadd.f32 %v6135, %v6384
    %v6386 = vpop.f32.mrb[0].mxu0
    %v6387 = vadd.f32 %v6131, %v6386
    %v6388 = vpop.f32.mrb[0].mxu0
    %v6389 = vadd.f32 %v6135, %v6388
    %6390 = vmatprep.mubr.bf16.mxu0 0
    %6391 = vmatmul.mubr.bf16.gmra.mrb[0].mxu0 %v6101
    %v6392 = vpop.f32.mrb[0].mxu0
    %v6393 = vadd.f32 %v6131, %v6392
    %v6394 = vpop.f32.mrb[0].mxu0
    %v6395 = vadd.f32 %v6135, %v6394
    %v6396 = vpop.f32.mrb[0].mxu0
    %v6397 = vadd.f32 %v6131, %v6396
    %v6398 = vpop.f32.mrb[0].mxu0
    %v6399 = vadd.f32 %v6135, %v6398
    %6400 = vmatprep.mubr.bf16.mxu0 0
    %6401 = vmatmul.mubr.bf16.gmra.mrb[0].mxu0 %v6102
    %v6402 = vpop.f32.mrb[0].mxu0
    %v6403 = vadd.f32 %v6131, %v6402
    %v6404 = vpop.f32.mrb[0].mxu0
    %v6405 = vadd.f32 %v6135, %v6404
    %v6406 = vpop.f32.mrb[0].mxu0
    %v6407 = vadd.f32 %v6131, %v6406
    %v6408 = vpop.f32.mrb[0].mxu0
    %v6409 = vadd.f32 %v6135, %v6408
    %6410 = vmatprep.mubr.bf16.mxu0 0
    %6411 = vmatmul.mubr.bf16.gmra.mrb[0].mxu0 %v6103
    %v6412 = vpop.f32.mrb[0].mxu0
    %v6413 = vadd.f32 %v6131, %v6412
    %v6414 = vpop.f32.mrb[0].mxu0
    %v6415 = vadd.f32 %v6135, %v6414
    %v6416 = vpop.f32.mrb[0].mxu0
    %v6417 = vadd.f32 %v6131, %v6416
    %v6418 = vpop.f32.mrb[0].mxu0
    %v6419 = vadd.f32 %v6135, %v6418
    %6420 = vmatprep.mubr.bf16.mxu0 0
    %6421 = vmatmul.mubr.bf16.gmra.mrb[0].mxu0 %v6104
    %v6422 = vpop.f32.mrb[0].mxu0
    %v6423 = vadd.f32 %v6131, %v6422
    %v6424 = vpop.f32.mrb[0].mxu0
    %v6425 = vadd.f32 %v6135, %v6424
    %v6426 = vpop.f32.mrb[0].mxu0
    %v6427 = vadd.f32 %v6131, %v6426
    %v6428 = vpop.f32.mrb[0].mxu0
    %v6429 = vadd.f32 %v6135, %v6428
    %6430 = vmatprep.mubr.bf16.mxu0 0
    %6431 = vmatmul.mubr.bf16.gmra.mrb[0].mxu0 %v6105
    %v6432 = vpop.f32.mrb[0].mxu0
    %v6433 = vadd.f32 %v6131, %v6432
    %v6434 = vpop.f32.mrb[0].mxu0
    %v6435 = vadd.f32 %v6135, %v6434
    %v6436 = vpop.f32.mrb[0].mxu0
    %v6437 = vadd.f32 %v6131, %v6436
    %v6438 = vpop.f32.mrb[0].mxu0
    %v6439 = vadd.f32 %v6135, %v6438
    %6440 = vmatprep.mubr.bf16.mxu0 0
    %6441 = vmatmul.mubr.bf16.gmra.mrb[0].mxu0 %v6106
    %v6442 = vpop.f32.mrb[0].mxu0
    %v6443 = vadd.f32 %v6131, %v6442
    %v6444 = vpop.f32.mrb[0].mxu0
    %v6445 = vadd.f32 %v6135, %v6444
    %v6446 = vpop.f32.mrb[0].mxu0
    %v6447 = vadd.f32 %v6131, %v6446
    %v6448 = vpop.f32.mrb[0].mxu0
    %v6449 = vadd.f32 %v6135, %v6448
    %6450 = vmatprep.mubr.bf16.mxu0 0
    %6451 = vmatmul.mubr.bf16.gmra.mrb[0].mxu0 %v6107
    %v6452 = vpop.f32.mrb[0].mxu0
    %v6453 = vadd.f32 %v6131, %v6452
    %v6454 = vpop.f32.mrb[0].mxu0
    %v6455 = vadd.f32 %v6135, %v6454
    %v6456 = vpop.f32.mrb[0].mxu0
    %v6457 = vadd.f32 %v6131, %v6456
    %v6458 = vpop.f32.mrb[0].mxu0
    %v6459 = vadd.f32 %v6135, %v6458
    %6460 = vmatprep.mubr.bf16.mxu0 0
    %6461 = vmatmul.mubr.bf16.gmra.mrb[0].mxu0 %v6108
    %v6462 = vpop.f32.mrb[0].mxu0
    %v6463 = vadd.f32 %v6131, %v6462
    %v6464 = vpop.f32.mrb[0].mxu0
    %v6465 = vadd.f32 %v6135, %v6464
    %v6466 = vpop.f32.mrb[0].mxu0
    %v6467 = vadd.f32 %v6131, %v6466
    %v6468 = vpop.f32.mrb[0].mxu0
    %v6469 = vadd.f32 %v6135, %v6468
    %6470 = vmatprep.mubr.bf16.mxu0 0
    %6471 = vmatmul.mubr.bf16.gmra.mrb[0].mxu0 %v6109
    %v6472 = vpop.f32.mrb[0].mxu0
    %v6473 = vadd.f32 %v6131, %v6472
    %v6474 = vpop.f32.mrb[0].mxu0
    %v6475 = vadd.f32 %v6135, %v6474
    %v6476 = vpop.f32.mrb[0].mxu0
    %v6477 = vpop.f32.mrb[0].mxu0
    %6478 = vdwg.mxu0
    %v6479 = vmul.f32 %v5399, %v6253
    %v6480 = vmul.f32 %v5400, %v6257
    %v6481 = vmul.f32 %v5401, %v6263
    %v6482 = vmul.f32 %v5402, %v6267
    %v6483 = vmul.f32 %v5403, %v6273
    %v6484 = vmul.f32 %v5404, %v6277
    %v6485 = vmul.f32 %v5405, %v6283
    %v6486 = vmul.f32 %v5406, %v6287
    %v6487 = vmul.f32 %v5407, %v6293
    %v6488 = vmul.f32 %v5408, %v6297
    %v6489 = vmul.f32 %v5409, %v6303
    %v6490 = vmul.f32 %v5410, %v6307
    %v6491 = vmul.f32 %v5411, %v6313
    %v6492 = vmul.f32 %v5412, %v6317
    %v6493 = vmul.f32 %v5413, %v6323
    %v6494 = vmul.f32 %v5414, %v6327
    %v6495 = vmul.f32 %v5415, %v6333
    %v6496 = vmul.f32 %v5416, %v6337
    %v6497 = vmul.f32 %v5417, %v6343
    %v6498 = vmul.f32 %v5418, %v6347
    %v6499 = vmul.f32 %v5419, %v6353
    %v6500 = vmul.f32 %v5420, %v6357
    %v6501 = vmul.f32 %v5421, %v6363
    %v6502 = vmul.f32 %v5422, %v6367
    %v6503 = vmul.f32 %v5423, %v6373
    %v6504 = vmul.f32 %v5424, %v6377
    %v6505 = vmul.f32 %v5425, %v6383
    %v6506 = vmul.f32 %v5426, %v6387
    %v6507 = vmul.f32 %v5427, %v6393
    %v6508 = vmul.f32 %v5428, %v6397
    %v6509 = vmul.f32 %v5429, %v6403
    %v6510 = vmul.f32 %v5430, %v6407
    %v6511 = vmul.f32 %v5431, %v6413
    %v6512 = vmul.f32 %v5432, %v6417
    %v6513 = vmul.f32 %v5433, %v6423
    %v6514 = vmul.f32 %v5434, %v6427
    %v6515 = vmul.f32 %v5435, %v6433
    %v6516 = vmul.f32 %v5436, %v6437
    %v6517 = vmul.f32 %v5437, %v6443
    %v6518 = vmul.f32 %v5438, %v6447
    %v6519 = vmul.f32 %v5439, %v6453
    %v6520 = vmul.f32 %v5440, %v6457
    %v6521 = vmul.f32 %v5441, %v6463
    %v6522 = vmul.f32 %v5442, %v6467
    %v6523 = vmul.f32 %v5443, %v6473
    %v6524 = vadd.f32 %v6479, %v6255
    %v6525 = vadd.f32 %v6480, %v6259
    %v6526 = vadd.f32 %v6481, %v6265
    %v6527 = vadd.f32 %v6482, %v6269
    %v6528 = vadd.f32 %v6483, %v6275
    %v6529 = vadd.f32 %v6484, %v6279
    %v6530 = vadd.f32 %v6485, %v6285
    %v6531 = vadd.f32 %v6486, %v6289
    %v6532 = vadd.f32 %v6487, %v6295
    %v6533 = vadd.f32 %v6488, %v6299
    %v6534 = vadd.f32 %v6489, %v6305
    %v6535 = vadd.f32 %v6490, %v6309
    %v6536 = vadd.f32 %v6491, %v6315
    %v6537 = vadd.f32 %v6492, %v6319
    %v6538 = vadd.f32 %v6493, %v6325
    %v6539 = vadd.f32 %v6494, %v6329
    %v6540 = vadd.f32 %v6495, %v6335
    %v6541 = vadd.f32 %v6496, %v6339
    %v6542 = vadd.f32 %v6497, %v6345
    %v6543 = vadd.f32 %v6498, %v6349
    %v6544 = vadd.f32 %v6499, %v6355
    %v6545 = vadd.f32 %v6500, %v6359
    %v6546 = vadd.f32 %v6501, %v6365
    %v6547 = vadd.f32 %v6502, %v6369
    %v6548 = vadd.f32 %v6503, %v6375
    %v6549 = vadd.f32 %v6504, %v6379
    %v6550 = vadd.f32 %v6505, %v6385
    %v6551 = vadd.f32 %v6506, %v6389
    %v6552 = vadd.f32 %v6507, %v6395
    %v6553 = vadd.f32 %v6508, %v6399
    %v6554 = vadd.f32 %v6509, %v6405
    %v6555 = vadd.f32 %v6510, %v6409
    %v6556 = vadd.f32 %v6511, %v6415
    %v6557 = vadd.f32 %v6512, %v6419
    %v6558 = vadd.f32 %v6513, %v6425
    %v6559 = vadd.f32 %v6514, %v6429
    %v6560 = vadd.f32 %v6515, %v6435
    %v6561 = vadd.f32 %v6516, %v6439
    %v6562 = vadd.f32 %v6517, %v6445
    %v6563 = vadd.f32 %v6518, %v6449
    %v6564 = vadd.f32 %v6519, %v6455
    %v6565 = vadd.f32 %v6520, %v6459
    %v6566 = vadd.f32 %v6521, %v6465
    %v6567 = vadd.f32 %v6522, %v6469
    %v6568 = vadd.f32 %v6523, %v6475
    %v6569 = vmax.f32 %v6524, 0.0
    %v6570 = vmax.f32 %v6525, 0.0
    %v6571 = vmax.f32 %v6526, 0.0
    %v6572 = vmax.f32 %v6527, 0.0
    %v6573 = vmax.f32 %v6528, 0.0
    %v6574 = vmax.f32 %v6529, 0.0
    %v6575 = vmax.f32 %v6530, 0.0
    %v6576 = vmax.f32 %v6531, 0.0
    %v6577 = vmax.f32 %v6532, 0.0
    %v6578 = vmax.f32 %v6533, 0.0
    %v6579 = vmax.f32 %v6534, 0.0
    %v6580 = vmax.f32 %v6535, 0.0
    %v6581 = vmax.f32 %v6536, 0.0
    %v6582 = vmax.f32 %v6537, 0.0
    %v6583 = vmax.f32 %v6538, 0.0
    %v6584 = vmax.f32 %v6539, 0.0
    %v6585 = vmax.f32 %v6540, 0.0
    %v6586 = vmax.f32 %v6541, 0.0
    %v6587 = vmax.f32 %v6542, 0.0
    %v6588 = vmax.f32 %v6543, 0.0
    %v6589 = vmax.f32 %v6544, 0.0
    %v6590 = vmax.f32 %v6545, 0.0
    %v6591 = vmax.f32 %v6546, 0.0
    %v6592 = vmax.f32 %v6547, 0.0
    %v6593 = vmax.f32 %v6548, 0.0
    %v6594 = vmax.f32 %v6549, 0.0
    %v6595 = vmax.f32 %v6550, 0.0
    %v6596 = vmax.f32 %v6551, 0.0
    %v6597 = vmax.f32 %v6552, 0.0
    %v6598 = vmax.f32 %v6553, 0.0
    %v6599 = vmax.f32 %v6554, 0.0
    %v6600 = vmax.f32 %v6555, 0.0
    %v6601 = vmax.f32 %v6556, 0.0
    %v6602 = vmax.f32 %v6557, 0.0
    %v6603 = vmax.f32 %v6558, 0.0
    %v6604 = vmax.f32 %v6559, 0.0
    %v6605 = vmax.f32 %v6560, 0.0
    %v6606 = vmax.f32 %v6561, 0.0
    %v6607 = vmax.f32 %v6562, 0.0
    %v6608 = vmax.f32 %v6563, 0.0
    %v6609 = vmax.f32 %v6564, 0.0
    %v6610 = vmax.f32 %v6565, 0.0
    %v6611 = vmax.f32 %v6566, 0.0
    %v6612 = vmax.f32 %v6567, 0.0
    %v6613 = vmax.f32 %v6568, 0.0
    %vm6660 = vcmask 1042432
    %v6661 = vrot.slane %v1430, 5
    %v6662 = vrot.slane %v1431, 5
    %v6663 = vsel %vm6660, %v6661, %v6662
    %v6664 = vrot.slane %v1432, 5
    %v6665 = vsel %vm6660, %v6662, %v6664
    %v6666 = vrot.slane %v1433, 5
    %v6667 = vsel %vm6660, %v6664, %v6666
    %v6668 = vrot.slane %v1434, 5
    %v6669 = vsel %vm6660, %v6666, %v6668
    %v6670 = vrot.slane %v1435, 5
    %v6671 = vsel %vm6660, %v6668, %v6670
    %v6672 = vrot.slane %v1436, 5
    %v6673 = vsel %vm6660, %v6670, %v6672
    %v6674 = vrot.slane %v1437, 5
    %v6675 = vsel %vm6660, %v6672, %v6674
    %v6676 = vrot.slane %v1438, 5
    %v6677 = vsel %vm6660, %v6674, %v6676
    %v6678 = vrot.slane %v1439, 5
    %v6679 = vsel %vm6660, %v6676, %v6678
    %v6680 = vrot.slane %v1440, 5
    %v6681 = vsel %vm6660, %v6678, %v6680
    %v6682 = vrot.slane %v1441, 5
    %v6683 = vsel %vm6660, %v6680, %v6682
    %v6684 = vrot.slane %v1442, 5
    %v6685 = vsel %vm6660, %v6682, %v6684
    %v6686 = vrot.slane %v1443, 5
    %v6687 = vsel %vm6660, %v6684, %v6686
    %v6688 = vrot.slane %v1444, 5
    %v6689 = vsel %vm6660, %v6686, %v6688
    %v6690 = vrot.slane %v1445, 5
    %v6691 = vsel %vm6660, %v6688, %v6690
    %v6692 = vrot.slane %v1446, 5
    %v6693 = vsel %vm6660, %v6690, %v6692
    %v6694 = vrot.slane %v1447, 5
    %v6695 = vsel %vm6660, %v6692, %v6694
    %v6696 = vrot.slane %v1448, 5
    %v6697 = vsel %vm6660, %v6694, %v6696
    %v6698 = vrot.slane %v1449, 5
    %v6699 = vsel %vm6660, %v6696, %v6698
    %v6700 = vrot.slane %v1450, 5
    %v6701 = vsel %vm6660, %v6698, %v6700
    %v6702 = vrot.slane %v1451, 5
    %v6703 = vsel %vm6660, %v6700, %v6702
    %v6704 = vrot.slane %v1452, 5
    %v6705 = vsel %vm6660, %v6702, %v6704
    %v6706 = vrot.slane %v1453, 5
    %v6707 = vsel %vm6660, %v6704, %v6706
    %v6708 = vrot.slane %v1454, 5
    %v6709 = vsel %vm6660, %v6706, %v6708
    %v6710 = vrot.slane %v1455, 5
    %v6711 = vsel %vm6660, %v6708, %v6710
    %v6712 = vrot.slane %v1456, 5
    %v6713 = vsel %vm6660, %v6710, %v6712
    %v6714 = vrot.slane %v1457, 5
    %v6715 = vsel %vm6660, %v6712, %v6714
    %v6716 = vrot.slane %v1458, 5
    %v6717 = vsel %vm6660, %v6714, %v6716
    %v6718 = vrot.slane %v1459, 5
    %v6719 = vsel %vm6660, %v6716, %v6718
    %v6720 = vrot.slane %v1460, 5
    %v6721 = vsel %vm6660, %v6718, %v6720
    %v6722 = vrot.slane %v1461, 5
    %v6723 = vsel %vm6660, %v6720, %v6722
    %v6724 = vrot.slane %v1462, 5
    %v6725 = vsel %vm6660, %v6722, %v6724
    %v6726 = vrot.slane %v1463, 5
    %v6727 = vsel %vm6660, %v6724, %v6726
    %v6728 = vrot.slane %v1464, 5
    %v6729 = vsel %vm6660, %v6726, %v6728
    %v6730 = vrot.slane %v1465, 5
    %v6731 = vsel %vm6660, %v6728, %v6730
    %v6732 = vrot.slane %v1466, 5
    %v6733 = vsel %vm6660, %v6730, %v6732
    %v6734 = vrot.slane %v1467, 5
    %v6735 = vsel %vm6660, %v6732, %v6734
    %v6736 = vrot.slane %v1468, 5
    %v6737 = vsel %vm6660, %v6734, %v6736
    %v6738 = vrot.slane %v1469, 5
    %v6739 = vsel %vm6660, %v6736, %v6738
    %v6740 = vrot.slane %v1470, 5
    %v6741 = vsel %vm6660, %v6738, %v6740
    %v6742 = vrot.slane %v1471, 5
    %v6743 = vsel %vm6660, %v6740, %v6742
    %v6744 = vrot.slane %v1472, 5
    %v6745 = vsel %vm6660, %v6742, %v6744
    %v6746 = vrot.slane %v1473, 5
    %v6747 = vsel %vm6660, %v6744, %v6746
    %v6748 = vrot.slane %v1474, 5
    %v6749 = vsel %vm6660, %v6746, %v6748
    %v6750 = vrot.slane %v1475, 5
    %v6751 = vsel %vm6660, %v6748, %v6750
    %v6797 = vmul.f32 %v6569, %v6663
    %v6798 = vmul.f32 %v6570, %v6665
    %v6799 = vmul.f32 %v6571, %v6667
    %v6800 = vmul.f32 %v6572, %v6669
    %v6801 = vmul.f32 %v6573, %v6671
    %v6802 = vmul.f32 %v6574, %v6673
    %v6803 = vmul.f32 %v6575, %v6675
    %v6804 = vmul.f32 %v6576, %v6677
    %v6805 = vmul.f32 %v6577, %v6679
    %v6806 = vmul.f32 %v6578, %v6681
    %v6807 = vmul.f32 %v6579, %v6683
    %v6808 = vmul.f32 %v6580, %v6685
    %v6809 = vmul.f32 %v6581, %v6687
    %v6810 = vmul.f32 %v6582, %v6689
    %v6811 = vmul.f32 %v6583, %v6691
    %v6812 = vmul.f32 %v6584, %v6693
    %v6813 = vmul.f32 %v6585, %v6695
    %v6814 = vmul.f32 %v6586, %v6697
    %v6815 = vmul.f32 %v6587, %v6699
    %v6816 = vmul.f32 %v6588, %v6701
    %v6817 = vmul.f32 %v6589, %v6703
    %v6818 = vmul.f32 %v6590, %v6705
    %v6819 = vmul.f32 %v6591, %v6707
    %v6820 = vmul.f32 %v6592, %v6709
    %v6821 = vmul.f32 %v6593, %v6711
    %v6822 = vmul.f32 %v6594, %v6713
    %v6823 = vmul.f32 %v6595, %v6715
    %v6824 = vmul.f32 %v6596, %v6717
    %v6825 = vmul.f32 %v6597, %v6719
    %v6826 = vmul.f32 %v6598, %v6721
    %v6827 = vmul.f32 %v6599, %v6723
    %v6828 = vmul.f32 %v6600, %v6725
    %v6829 = vmul.f32 %v6601, %v6727
    %v6830 = vmul.f32 %v6602, %v6729
    %v6831 = vmul.f32 %v6603, %v6731
    %v6832 = vmul.f32 %v6604, %v6733
    %v6833 = vmul.f32 %v6605, %v6735
    %v6834 = vmul.f32 %v6606, %v6737
    %v6835 = vmul.f32 %v6607, %v6739
    %v6836 = vmul.f32 %v6608, %v6741
    %v6837 = vmul.f32 %v6609, %v6743
    %v6838 = vmul.f32 %v6610, %v6745
    %v6839 = vmul.f32 %v6611, %v6747
    %v6840 = vmul.f32 %v6612, %v6749
    %v6841 = vmul.f32 %v6613, %v6751
    %v6842 = vpack.c.bf16 %v6798, %v6797
    %v6843 = vpack.c.bf16 %v6800, %v6799
    %v6844 = vpack.c.bf16 %v6802, %v6801
    %v6845 = vpack.c.bf16 %v6804, %v6803
    %v6846 = vpack.c.bf16 %v6806, %v6805
    %v6847 = vpack.c.bf16 %v6808, %v6807
    %v6848 = vpack.c.bf16 %v6810, %v6809
    %v6849 = vpack.c.bf16 %v6812, %v6811
    %v6850 = vpack.c.bf16 %v6814, %v6813
    %v6851 = vpack.c.bf16 %v6816, %v6815
    %v6852 = vpack.c.bf16 %v6818, %v6817
    %v6853 = vpack.c.bf16 %v6820, %v6819
    %v6854 = vpack.c.bf16 %v6822, %v6821
    %v6855 = vpack.c.bf16 %v6824, %v6823
    %v6856 = vpack.c.bf16 %v6826, %v6825
    %v6857 = vpack.c.bf16 %v6828, %v6827
    %v6858 = vpack.c.bf16 %v6830, %v6829
    %v6859 = vpack.c.bf16 %v6832, %v6831
    %v6860 = vpack.c.bf16 %v6834, %v6833
    %v6861 = vpack.c.bf16 %v6836, %v6835
    %v6862 = vpack.c.bf16 %v6838, %v6837
    %v6863 = vpack.c.bf16 %v6840, %v6839
    %v6864 = vpack.c.bf16 %v6841, %v6841
    %v6866 = vshrl.u32 %v6842, 16
    %v6868 = vshll.u32 %v6842, 16
    %v6870 = vrot.slane %v6868, 1
    %v6871 = vor.u32 %v6866, %v6870
    %v6873 = vshll.u32 %v6843, 16
    %v6875 = vrot.slane %v6873, 1
    %v6876 = vsel %vm2742, %v6871, %v6875
    %v6877 = vshrl.u32 %v6843, 16
    %v6879 = vor.u32 %v6877, %v6875
    %v6881 = vshll.u32 %v6844, 16
    %v6883 = vrot.slane %v6881, 1
    %v6884 = vsel %vm2742, %v6879, %v6883
    %v6885 = vshrl.u32 %v6844, 16
    %v6887 = vor.u32 %v6885, %v6883
    %v6889 = vshll.u32 %v6845, 16
    %v6891 = vrot.slane %v6889, 1
    %v6892 = vsel %vm2742, %v6887, %v6891
    %v6893 = vshrl.u32 %v6845, 16
    %v6895 = vor.u32 %v6893, %v6891
    %v6897 = vshll.u32 %v6846, 16
    %v6899 = vrot.slane %v6897, 1
    %v6900 = vsel %vm2742, %v6895, %v6899
    %v6901 = vshrl.u32 %v6846, 16
    %v6903 = vor.u32 %v6901, %v6899
    %v6905 = vshll.u32 %v6847, 16
    %v6907 = vrot.slane %v6905, 1
    %v6908 = vsel %vm2742, %v6903, %v6907
    %v6909 = vshrl.u32 %v6847, 16
    %v6911 = vor.u32 %v6909, %v6907
    %v6913 = vshll.u32 %v6848, 16
    %v6915 = vrot.slane %v6913, 1
    %v6916 = vsel %vm2742, %v6911, %v6915
    %v6917 = vshrl.u32 %v6848, 16
    %v6919 = vor.u32 %v6917, %v6915
    %v6921 = vshll.u32 %v6849, 16
    %v6923 = vrot.slane %v6921, 1
    %v6924 = vsel %vm2742, %v6919, %v6923
    %v6925 = vshrl.u32 %v6849, 16
    %v6927 = vor.u32 %v6925, %v6923
    %v6929 = vshll.u32 %v6850, 16
    %v6931 = vrot.slane %v6929, 1
    %v6932 = vsel %vm2742, %v6927, %v6931
    %v6933 = vshrl.u32 %v6850, 16
    %v6935 = vor.u32 %v6933, %v6931
    %v6937 = vshll.u32 %v6851, 16
    %v6939 = vrot.slane %v6937, 1
    %v6940 = vsel %vm2742, %v6935, %v6939
    %v6941 = vshrl.u32 %v6851, 16
    %v6943 = vor.u32 %v6941, %v6939
    %v6945 = vshll.u32 %v6852, 16
    %v6947 = vrot.slane %v6945, 1
    %v6948 = vsel %vm2742, %v6943, %v6947
    %v6949 = vshrl.u32 %v6852, 16
    %v6951 = vor.u32 %v6949, %v6947
    %v6953 = vshll.u32 %v6853, 16
    %v6955 = vrot.slane %v6953, 1
    %v6956 = vsel %vm2742, %v6951, %v6955
    %v6957 = vshrl.u32 %v6853, 16
    %v6959 = vor.u32 %v6957, %v6955
    %v6961 = vshll.u32 %v6854, 16
    %v6963 = vrot.slane %v6961, 1
    %v6964 = vsel %vm2742, %v6959, %v6963
    %v6965 = vshrl.u32 %v6854, 16
    %v6967 = vor.u32 %v6965, %v6963
    %v6969 = vshll.u32 %v6855, 16
    %v6971 = vrot.slane %v6969, 1
    %v6972 = vsel %vm2742, %v6967, %v6971
    %v6973 = vshrl.u32 %v6855, 16
    %v6975 = vor.u32 %v6973, %v6971
    %v6977 = vshll.u32 %v6856, 16
    %v6979 = vrot.slane %v6977, 1
    %v6980 = vsel %vm2742, %v6975, %v6979
    %v6981 = vshrl.u32 %v6856, 16
    %v6983 = vor.u32 %v6981, %v6979
    %v6985 = vshll.u32 %v6857, 16
    %v6987 = vrot.slane %v6985, 1
    %v6988 = vsel %vm2742, %v6983, %v6987
    %v6989 = vshrl.u32 %v6857, 16
    %v6991 = vor.u32 %v6989, %v6987
    %v6993 = vshll.u32 %v6858, 16
    %v6995 = vrot.slane %v6993, 1
    %v6996 = vsel %vm2742, %v6991, %v6995
    %v6997 = vshrl.u32 %v6858, 16
    %v6999 = vor.u32 %v6997, %v6995
    %v7001 = vshll.u32 %v6859, 16
    %v7003 = vrot.slane %v7001, 1
    %v7004 = vsel %vm2742, %v6999, %v7003
    %v7005 = vshrl.u32 %v6859, 16
    %v7007 = vor.u32 %v7005, %v7003
    %v7009 = vshll.u32 %v6860, 16
    %v7011 = vrot.slane %v7009, 1
    %v7012 = vsel %vm2742, %v7007, %v7011
    %v7013 = vshrl.u32 %v6860, 16
    %v7015 = vor.u32 %v7013, %v7011
    %v7017 = vshll.u32 %v6861, 16
    %v7019 = vrot.slane %v7017, 1
    %v7020 = vsel %vm2742, %v7015, %v7019
    %v7021 = vshrl.u32 %v6861, 16
    %v7023 = vor.u32 %v7021, %v7019
    %v7064 = vrot.slane %v6842, 1
    %v7065 = vrot.slane %v6843, 1
    %v7066 = vsel %vm2972, %v7064, %v7065
    %v7067 = vrot.slane %v6844, 1
    %v7068 = vsel %vm2972, %v7065, %v7067
    %v7069 = vrot.slane %v6845, 1
    %v7070 = vsel %vm2972, %v7067, %v7069
    %v7071 = vrot.slane %v6846, 1
    %v7072 = vsel %vm2972, %v7069, %v7071
    %v7073 = vrot.slane %v6847, 1
    %v7074 = vsel %vm2972, %v7071, %v7073
    %v7075 = vrot.slane %v6848, 1
    %v7076 = vsel %vm2972, %v7073, %v7075
    %v7077 = vrot.slane %v6849, 1
    %v7078 = vsel %vm2972, %v7075, %v7077
    %v7079 = vrot.slane %v6850, 1
    %v7080 = vsel %vm2972, %v7077, %v7079
    %v7081 = vrot.slane %v6851, 1
    %v7082 = vsel %vm2972, %v7079, %v7081
    %v7083 = vrot.slane %v6852, 1
    %v7084 = vsel %vm2972, %v7081, %v7083
    %v7085 = vrot.slane %v6853, 1
    %v7086 = vsel %vm2972, %v7083, %v7085
    %v7087 = vrot.slane %v6854, 1
    %v7088 = vsel %vm2972, %v7085, %v7087
    %v7089 = vrot.slane %v6855, 1
    %v7090 = vsel %vm2972, %v7087, %v7089
    %v7091 = vrot.slane %v6856, 1
    %v7092 = vsel %vm2972, %v7089, %v7091
    %v7093 = vrot.slane %v6857, 1
    %v7094 = vsel %vm2972, %v7091, %v7093
    %v7095 = vrot.slane %v6858, 1
    %v7096 = vsel %vm2972, %v7093, %v7095
    %v7097 = vrot.slane %v6859, 1
    %v7098 = vsel %vm2972, %v7095, %v7097
    %v7099 = vrot.slane %v6860, 1
    %v7100 = vsel %vm2972, %v7097, %v7099
    %v7101 = vrot.slane %v6861, 1
    %v7102 = vsel %vm2972, %v7099, %v7101
    %v7123 = vld [vmem:[#allocation22] sm:$0xf]
    %v7124 = vld [vmem:[#allocation22 + $0x4] sm:$0xf]
    %v7125 = vld [vmem:[#allocation22 + $0x8] sm:$0xf]
    %v7126 = vld [vmem:[#allocation22 + $0xc] sm:$0xf]
    %v7127 = vld [vmem:[#allocation22 + $0x10] sm:$0xf]
    %v7128 = vld [vmem:[#allocation22 + $0x14] sm:$0xf]
    %v7129 = vld [vmem:[#allocation22 + $0x18] sm:$0xf]
    %v7130 = vld [vmem:[#allocation22 + $0x1c] sm:$0xf]
    %v7131 = vld [vmem:[#allocation22 + $0x20] sm:$0xf]
    %v7132 = vld [vmem:[#allocation22 + $0x24] sm:$0xf]
    %v7133 = vld [vmem:[#allocation22 + $0x28] sm:$0xf]
    %v7134 = vld [vmem:[#allocation22 + $0x2c] sm:$0xf]
    %v7135 = vld [vmem:[#allocation22 + $0x30] sm:$0xf]
    %v7136 = vld [vmem:[#allocation22 + $0x34] sm:$0xf]
    %v7137 = vld [vmem:[#allocation22 + $0x38] sm:$0xf]
    %v7138 = vld [vmem:[#allocation22 + $0x3c] sm:$0xf]
    %v7139 = vld [vmem:[#allocation22 + $0x40] sm:$0xf]
    %v7140 = vld [vmem:[#allocation22 + $0x44] sm:$0xf]
    %v7141 = vld [vmem:[#allocation22 + $0x48] sm:$0xf]
    %v7142 = vld [vmem:[#allocation22 + $0x4c] sm:$0xf]
    %v7143 = vld [vmem:[#allocation22 + $0x50] sm:$0xf]
    %v7144 = vld [vmem:[#allocation22 + $0x54] sm:$0xf]
    %v7145 = vld [vmem:[#allocation22 + $0x58] sm:$0xf]
    %v7146 = vld [vmem:[#allocation22 + $0x5c] sm:$0xf]
    %v7147 = vld [vmem:[#allocation22 + $0x60] sm:$0xf]
    %v7148 = vld [vmem:[#allocation22 + $0x64] sm:$0xf]
    %v7149 = vld [vmem:[#allocation22 + $0x68] sm:$0xf]
    %v7150 = vld [vmem:[#allocation22 + $0x6c] sm:$0xf]
    %v7151 = vld [vmem:[#allocation22 + $0x70] sm:$0xf]
    %v7152 = vld [vmem:[#allocation22 + $0x74] sm:$0xf]
    %v7153 = vld [vmem:[#allocation22 + $0x78] sm:$0xf]
    %v7154 = vld [vmem:[#allocation22 + $0x7c] sm:$0xf]
    %v7155 = vld [vmem:[#allocation22 + $0x80] sm:$0xf]
    %v7156 = vld [vmem:[#allocation22 + $0x84] sm:$0xf]
    %v7157 = vld [vmem:[#allocation22 + $0x88] sm:$0xf]
    %v7158 = vld [vmem:[#allocation22 + $0x8c] sm:$0xf]
    %v7159 = vld [vmem:[#allocation22 + $0x90] sm:$0xf]
    %v7160 = vld [vmem:[#allocation22 + $0x94] sm:$0xf]
    %v7161 = vld [vmem:[#allocation22 + $0x98] sm:$0xf]
    %v7162 = vld [vmem:[#allocation22 + $0x9c] sm:$0xf]
    %v7163 = vld [vmem:[#allocation22 + $0xa0] sm:$0xf]
    %v7164 = vld [vmem:[#allocation22 + $0xa4] sm:$0xf]
    %v7165 = vld [vmem:[#allocation22 + $0xa8] sm:$0xf]
    %v7166 = vld [vmem:[#allocation22 + $0xac] sm:$0xf]
    %v7167 = vld [vmem:[#allocation22 + $0xb0] sm:$0xf]
    %v7168 = vld [vmem:[#allocation22 + $0xb4] sm:$0xf]
    %v7169 = vld [vmem:[#allocation22 + $0xb8] sm:$0xf]
    %v7170 = vld [vmem:[#allocation22 + $0xbc] sm:$0xf]
    %v7172 = vshll.u32 %v6862, 16
    %v7174 = vrot.slane %v7172, 1
    %v7175 = vsel %vm2742, %v7023, %v7174
    %v7176 = vshrl.u32 %v6862, 16
    %v7178 = vor.u32 %v7176, %v7174
    %v7180 = vshll.u32 %v6863, 16
    %v7182 = vrot.slane %v7180, 1
    %v7183 = vsel %vm2742, %v7178, %v7182
    %v7186 = vrot.slane %v6862, 1
    %v7187 = vsel %vm2972, %v7101, %v7186
    %v7188 = vrot.slane %v6863, 1
    %v7189 = vsel %vm2972, %v7186, %v7188
    %s7190 = scalar_lea.vmem [#allocation22], 192
    %v7191 = vld [vmem:[%s7190] sm:$0xf]
    %v7192 = vld [vmem:[%s7190 + $0x4] sm:$0xf]
    %v7193 = vld [vmem:[%s7190 + $0x8] sm:$0xf]
    %v7194 = vld [vmem:[%s7190 + $0xc] sm:$0xf]
    %v7195 = vld [vmem:[%s7190 + $0x10] sm:$0xf]
    %v7196 = vld [vmem:[%s7190 + $0x14] sm:$0xf]
    %v7197 = vld [vmem:[%s7190 + $0x18] sm:$0xf]
    %v7198 = vld [vmem:[%s7190 + $0x1c] sm:$0xf]
    %v7199 = vld [vmem:[%s7190 + $0x20] sm:$0xf]
    %v7200 = vld [vmem:[%s7190 + $0x24] sm:$0xf]
    %v7201 = vld [vmem:[%s7190 + $0x28] sm:$0xf]
    %v7202 = vld [vmem:[%s7190 + $0x2c] sm:$0xf]
    %v7203 = vld [vmem:[%s7190 + $0x30] sm:$0xf]
    %v7204 = vld [vmem:[%s7190 + $0x34] sm:$0xf]
    %v7205 = vld [vmem:[%s7190 + $0x38] sm:$0xf]
    %v7206 = vld [vmem:[%s7190 + $0x3c] sm:$0xf]
    %v7207 = vld [vmem:[%s7190 + $0x40] sm:$0xf]
    %v7208 = vld [vmem:[%s7190 + $0x44] sm:$0xf]
    %v7209 = vld [vmem:[%s7190 + $0x48] sm:$0xf]
    %v7210 = vld [vmem:[%s7190 + $0x4c] sm:$0xf]
    %v7211 = vld [vmem:[%s7190 + $0x50] sm:$0xf]
    %v7212 = vld [vmem:[%s7190 + $0x54] sm:$0xf]
    %v7213 = vld [vmem:[%s7190 + $0x58] sm:$0xf]
    %v7214 = vld [vmem:[%s7190 + $0x5c] sm:$0xf]
    %v7215 = vld [vmem:[%s7190 + $0x60] sm:$0xf]
    %v7216 = vld [vmem:[%s7190 + $0x64] sm:$0xf]
    %v7217 = vld [vmem:[%s7190 + $0x68] sm:$0xf]
    %v7218 = vld [vmem:[%s7190 + $0x6c] sm:$0xf]
    %v7219 = vld [vmem:[%s7190 + $0x70] sm:$0xf]
    %v7220 = vld [vmem:[%s7190 + $0x74] sm:$0xf]
    %v7221 = vld [vmem:[%s7190 + $0x78] sm:$0xf]
    %v7222 = vld [vmem:[%s7190 + $0x7c] sm:$0xf]
    %v7223 = vld [vmem:[%s7190 + $0x80] sm:$0xf]
    %v7224 = vld [vmem:[%s7190 + $0x84] sm:$0xf]
    %v7225 = vld [vmem:[%s7190 + $0x88] sm:$0xf]
    %v7226 = vld [vmem:[%s7190 + $0x8c] sm:$0xf]
    %v7227 = vld [vmem:[%s7190 + $0x90] sm:$0xf]
    %v7228 = vld [vmem:[%s7190 + $0x94] sm:$0xf]
    %v7229 = vld [vmem:[%s7190 + $0x98] sm:$0xf]
    %v7230 = vld [vmem:[%s7190 + $0x9c] sm:$0xf]
    %v7231 = vld [vmem:[%s7190 + $0xa0] sm:$0xf]
    %v7232 = vld [vmem:[%s7190 + $0xa4] sm:$0xf]
    %v7233 = vld [vmem:[%s7190 + $0xa8] sm:$0xf]
    %v7234 = vld [vmem:[%s7190 + $0xac] sm:$0xf]
    %v7235 = vld [vmem:[%s7190 + $0xb0] sm:$0xf]
    %v7236 = vld [vmem:[%s7190 + $0xb4] sm:$0xf]
    %v7237 = vld [vmem:[%s7190 + $0xb8] sm:$0xf]
    %v7238 = vld [vmem:[%s7190 + $0xbc] sm:$0xf]
    %v7239 = vrot.slane %v6843, 2
    %v7240 = vrot.slane %v6844, 2
    %v7241 = vsel %vm3149, %v7239, %v7240
    %v7242 = vrot.slane %v6884, 2
    %v7243 = vrot.slane %v6892, 2
    %v7244 = vsel %vm3149, %v7242, %v7243
    %v7245 = vrot.slane %v7068, 2
    %v7246 = vrot.slane %v7070, 2
    %v7247 = vsel %vm3149, %v7245, %v7246
    %v7248 = vrot.slane %v6845, 2
    %v7249 = vsel %vm3149, %v7240, %v7248
    %v7250 = vrot.slane %v6900, 2
    %v7251 = vsel %vm3149, %v7243, %v7250
    %v7252 = vrot.slane %v7072, 2
    %v7253 = vsel %vm3149, %v7246, %v7252
    %v7254 = vrot.slane %v6846, 2
    %v7255 = vsel %vm3149, %v7248, %v7254
    %v7256 = vrot.slane %v6908, 2
    %v7257 = vsel %vm3149, %v7250, %v7256
    %v7258 = vrot.slane %v7074, 2
    %v7259 = vsel %vm3149, %v7252, %v7258
    %v7260 = vrot.slane %v6847, 2
    %v7261 = vsel %vm3149, %v7254, %v7260
    %v7262 = vrot.slane %v6916, 2
    %v7263 = vsel %vm3149, %v7256, %v7262
    %v7264 = vrot.slane %v7076, 2
    %v7265 = vsel %vm3149, %v7258, %v7264
    %v7266 = vrot.slane %v6848, 2
    %v7267 = vsel %vm3149, %v7260, %v7266
    %v7268 = vrot.slane %v6924, 2
    %v7269 = vsel %vm3149, %v7262, %v7268
    %v7270 = vrot.slane %v7078, 2
    %v7271 = vsel %vm3149, %v7264, %v7270
    %v7272 = vrot.slane %v6849, 2
    %v7273 = vsel %vm3149, %v7266, %v7272
    %v7274 = vrot.slane %v6932, 2
    %v7275 = vsel %vm3149, %v7268, %v7274
    %v7276 = vrot.slane %v7080, 2
    %v7277 = vsel %vm3149, %v7270, %v7276
    %v7278 = vrot.slane %v6850, 2
    %v7279 = vsel %vm3149, %v7272, %v7278
    %v7280 = vrot.slane %v6940, 2
    %v7281 = vsel %vm3149, %v7274, %v7280
    %v7282 = vrot.slane %v7082, 2
    %v7283 = vsel %vm3149, %v7276, %v7282
    %v7284 = vrot.slane %v6851, 2
    %v7285 = vsel %vm3149, %v7278, %v7284
    %v7286 = vrot.slane %v6948, 2
    %v7287 = vsel %vm3149, %v7280, %v7286
    %v7288 = vrot.slane %v7084, 2
    %v7289 = vsel %vm3149, %v7282, %v7288
    %v7290 = vrot.slane %v6852, 2
    %v7291 = vsel %vm3149, %v7284, %v7290
    %v7292 = vrot.slane %v6956, 2
    %v7293 = vsel %vm3149, %v7286, %v7292
    %v7294 = vrot.slane %v7086, 2
    %v7295 = vsel %vm3149, %v7288, %v7294
    %v7296 = vrot.slane %v6853, 2
    %v7297 = vsel %vm3149, %v7290, %v7296
    %v7298 = vrot.slane %v6964, 2
    %v7299 = vsel %vm3149, %v7292, %v7298
    %v7300 = vrot.slane %v7088, 2
    %v7301 = vsel %vm3149, %v7294, %v7300
    %v7302 = vrot.slane %v6854, 2
    %v7303 = vsel %vm3149, %v7296, %v7302
    %v7304 = vrot.slane %v6972, 2
    %v7305 = vsel %vm3149, %v7298, %v7304
    %v7306 = vrot.slane %v7090, 2
    %v7307 = vsel %vm3149, %v7300, %v7306
    %v7308 = vrot.slane %v6855, 2
    %v7309 = vsel %vm3149, %v7302, %v7308
    %v7310 = vrot.slane %v6980, 2
    %v7311 = vsel %vm3149, %v7304, %v7310
    %v7312 = vrot.slane %v7092, 2
    %v7313 = vsel %vm3149, %v7306, %v7312
    %v7314 = vrot.slane %v6856, 2
    %v7315 = vsel %vm3149, %v7308, %v7314
    %v7316 = vrot.slane %v6988, 2
    %v7317 = vsel %vm3149, %v7310, %v7316
    %v7318 = vrot.slane %v7094, 2
    %v7319 = vsel %vm3149, %v7312, %v7318
    %v7320 = vrot.slane %v6857, 2
    %v7321 = vsel %vm3149, %v7314, %v7320
    %v7322 = vrot.slane %v6996, 2
    %v7323 = vsel %vm3149, %v7316, %v7322
    %v7324 = vrot.slane %v7096, 2
    %v7325 = vsel %vm3149, %v7318, %v7324
    %v7326 = vrot.slane %v6858, 2
    %v7327 = vsel %vm3149, %v7320, %v7326
    %v7328 = vrot.slane %v7004, 2
    %v7329 = vsel %vm3149, %v7322, %v7328
    %v7330 = vrot.slane %v7098, 2
    %v7331 = vsel %vm3149, %v7324, %v7330
    %v7332 = vrot.slane %v6859, 2
    %v7333 = vsel %vm3149, %v7326, %v7332
    %v7334 = vrot.slane %v7012, 2
    %v7335 = vsel %vm3149, %v7328, %v7334
    %v7336 = vrot.slane %v7100, 2
    %v7337 = vsel %vm3149, %v7330, %v7336
    %v7338 = vrot.slane %v6860, 2
    %v7339 = vsel %vm3149, %v7332, %v7338
    %v7340 = vrot.slane %v7020, 2
    %v7341 = vsel %vm3149, %v7334, %v7340
    %v7342 = vrot.slane %v7102, 2
    %v7343 = vsel %vm3149, %v7336, %v7342
    %v7344 = vrot.slane %v6861, 2
    %v7345 = vsel %vm3149, %v7338, %v7344
    %v7346 = vrot.slane %v7175, 2
    %v7347 = vsel %vm3149, %v7340, %v7346
    %v7348 = vrot.slane %v7187, 2
    %v7349 = vsel %vm3149, %v7342, %v7348
    %v7350 = vrot.slane %v6862, 2
    %v7351 = vsel %vm3149, %v7344, %v7350
    %v7352 = vrot.slane %v7183, 2
    %v7353 = vsel %vm3149, %v7346, %v7352
    %v7354 = vrot.slane %v7189, 2
    %v7355 = vsel %vm3149, %v7348, %v7354
    %v7464 = vunpack.c.l.b16 %v7191
    %v7465 = vunpack.c.l.b16 %v7192
    %v7466 = vunpack.c.l.b16 %v7193
    %v7467 = vunpack.c.l.b16 %v7194
    %v7468 = vunpack.c.l.b16 %v7195
    %v7469 = vunpack.c.l.b16 %v7196
    %v7470 = vunpack.c.l.b16 %v7197
    %v7471 = vunpack.c.l.b16 %v7198
    %v7472 = vunpack.c.l.b16 %v7199
    %v7473 = vunpack.c.l.b16 %v7200
    %v7474 = vunpack.c.l.b16 %v7201
    %v7475 = vunpack.c.l.b16 %v7202
    %v7476 = vunpack.c.l.b16 %v7203
    %v7477 = vunpack.c.l.b16 %v7204
    %v7478 = vunpack.c.l.b16 %v7205
    %v7479 = vunpack.c.l.b16 %v7206
    %v7480 = vunpack.c.l.b16 %v7207
    %v7481 = vunpack.c.l.b16 %v7208
    %v7482 = vunpack.c.l.b16 %v7209
    %v7483 = vunpack.c.l.b16 %v7210
    %v7484 = vunpack.c.l.b16 %v7211
    %v7485 = vunpack.c.l.b16 %v7212
    %v7486 = vunpack.c.l.b16 %v7213
    %v7487 = vunpack.c.l.b16 %v7214
    %v7488 = vunpack.c.l.b16 %v7215
    %v7489 = vunpack.c.l.b16 %v7216
    %v7490 = vunpack.c.l.b16 %v7217
    %v7491 = vunpack.c.l.b16 %v7218
    %v7492 = vunpack.c.l.b16 %v7219
    %v7493 = vunpack.c.l.b16 %v7220
    %v7494 = vunpack.c.l.b16 %v7221
    %v7495 = vunpack.c.l.b16 %v7222
    %v7496 = vunpack.c.l.b16 %v7223
    %v7497 = vunpack.c.l.b16 %v7224
    %v7498 = vunpack.c.l.b16 %v7225
    %v7499 = vunpack.c.l.b16 %v7226
    %v7500 = vunpack.c.l.b16 %v7227
    %v7501 = vunpack.c.l.b16 %v7228
    %v7502 = vunpack.c.l.b16 %v7229
    %v7503 = vunpack.c.l.b16 %v7230
    %v7504 = vunpack.c.l.b16 %v7231
    %v7505 = vunpack.c.l.b16 %v7232
    %v7506 = vunpack.c.l.b16 %v7233
    %v7507 = vunpack.c.l.b16 %v7234
    %v7508 = vunpack.c.l.b16 %v7235
    %v7509 = vunpack.c.l.b16 %v7236
    %v7510 = vunpack.c.l.b16 %v7237
    %v7511 = vunpack.c.l.b16 %v7238
    %v7512 = vpack.c.b16 %v7465, %v7464
    %v7513 = vpack.c.b16 %v7467, %v7466
    %v7514 = vpack.c.b16 %v7469, %v7468
    %v7515 = vpack.c.b16 %v7471, %v7470
    %v7516 = vpack.c.b16 %v7473, %v7472
    %v7517 = vpack.c.b16 %v7475, %v7474
    %v7518 = vpack.c.b16 %v7477, %v7476
    %v7519 = vpack.c.b16 %v7479, %v7478
    %v7520 = vpack.c.b16 %v7481, %v7480
    %v7521 = vpack.c.b16 %v7483, %v7482
    %v7522 = vpack.c.b16 %v7485, %v7484
    %v7523 = vpack.c.b16 %v7487, %v7486
    %v7524 = vpack.c.b16 %v7489, %v7488
    %v7525 = vpack.c.b16 %v7491, %v7490
    %v7526 = vpack.c.b16 %v7493, %v7492
    %v7527 = vpack.c.b16 %v7495, %v7494
    %v7528 = vpack.c.b16 %v7497, %v7496
    %v7529 = vpack.c.b16 %v7499, %v7498
    %v7530 = vpack.c.b16 %v7501, %v7500
    %v7531 = vpack.c.b16 %v7503, %v7502
    %v7532 = vpack.c.b16 %v7505, %v7504
    %v7533 = vpack.c.b16 %v7507, %v7506
    %v7534 = vpack.c.b16 %v7509, %v7508
    %v7535 = vpack.c.b16 %v7511, %v7510
    %7560 = vmatprep.subr.bf16.mxu0 0
    %7561 = vmatpush1.bf16.msra.mxu0 %v7512
    %7562 = vmatprep.subr.bf16.mxu0 0
    %7563 = vmatpush1.bf16.msra.mxu0 %v7513
    %7564 = vmatprep.subr.bf16.mxu0 0
    %7565 = vmatpush1.bf16.msra.mxu0 %v7514
    %7566 = vmatprep.subr.bf16.mxu0 0
    %7567 = vmatpush1.bf16.msra.mxu0 %v7515
    %7568 = vmatprep.subr.bf16.mxu0 0
    %7569 = vmatpush1.bf16.msra.mxu0 %v7516
    %7570 = vmatprep.subr.bf16.mxu0 0
    %7571 = vmatpush1.bf16.msra.mxu0 %v7517
    %7572 = vmatprep.subr.bf16.mxu0 0
    %7573 = vmatpush1.bf16.msra.mxu0 %v7518
    %7574 = vmatprep.subr.bf16.mxu0 0
    %7575 = vmatpush1.bf16.msra.mxu0 %v7519
    %7576 = vmatprep.subr.bf16.mxu0 0
    %7577 = vmatpush1.bf16.msra.mxu0 %v7520
    %7578 = vmatprep.subr.bf16.mxu0 0
    %7579 = vmatpush1.bf16.msra.mxu0 %v7521
    %7580 = vmatprep.subr.bf16.mxu0 0
    %7581 = vmatpush1.bf16.msra.mxu0 %v7522
    %7582 = vmatprep.subr.bf16.mxu0 0
    %7583 = vmatpush1.bf16.msra.mxu0 %v7523
    %7584 = vmatprep.subr.bf16.mxu0 0
    %7585 = vmatpush1.bf16.msra.mxu0 %v7524
    %7586 = vmatprep.subr.bf16.mxu0 0
    %7587 = vmatpush1.bf16.msra.mxu0 %v7525
    %7588 = vmatprep.subr.bf16.mxu0 0
    %7589 = vmatpush1.bf16.msra.mxu0 %v7526
    %7590 = vmatprep.subr.bf16.mxu0 0
    %7591 = vmatpush1.bf16.msra.mxu0 %v7527
    %7592 = vmatprep.mubr.bf16.mxu0 %v7244
    %7593 = vmatmul.mubr.bf16.gmra.mrb[0].mxu0 %v7241
    %v7594 = vpop.f32.mrb[0].mxu0
    %v7595 = vadd.f32 0.0, %v7594
    %v7596 = vpop.f32.mrb[0].mxu0
    %v7597 = vpop.f32.mrb[0].mxu0
    %v7598 = vadd.f32 0.0, %v7597
    %v7599 = vpop.f32.mrb[0].mxu0
    %7600 = vmatprep.mubr.bf16.mxu0 %v7251
    %7601 = vmatmul.mubr.bf16.gmra.mrb[0].mxu0 %v7249
    %v7602 = vpop.f32.mrb[0].mxu0
    %v7603 = vadd.f32 0.0, %v7602
    %v7604 = vpop.f32.mrb[0].mxu0
    %v7605 = vpop.f32.mrb[0].mxu0
    %v7606 = vadd.f32 0.0, %v7605
    %v7607 = vpop.f32.mrb[0].mxu0
    %7608 = vmatprep.mubr.bf16.mxu0 %v7257
    %7609 = vmatmul.mubr.bf16.gmra.mrb[0].mxu0 %v7255
    %v7610 = vpop.f32.mrb[0].mxu0
    %v7611 = vadd.f32 0.0, %v7610
    %v7612 = vpop.f32.mrb[0].mxu0
    %v7613 = vpop.f32.mrb[0].mxu0
    %v7614 = vadd.f32 0.0, %v7613
    %v7615 = vpop.f32.mrb[0].mxu0
    %7616 = vmatprep.mubr.bf16.mxu0 %v7263
    %7617 = vmatmul.mubr.bf16.gmra.mrb[0].mxu0 %v7261
    %v7618 = vpop.f32.mrb[0].mxu0
    %v7619 = vadd.f32 0.0, %v7618
    %v7620 = vpop.f32.mrb[0].mxu0
    %v7621 = vpop.f32.mrb[0].mxu0
    %v7622 = vadd.f32 0.0, %v7621
    %v7623 = vpop.f32.mrb[0].mxu0
    %7624 = vmatprep.mubr.bf16.mxu0 %v7269
    %7625 = vmatmul.mubr.bf16.gmra.mrb[0].mxu0 %v7267
    %v7626 = vpop.f32.mrb[0].mxu0
    %v7627 = vadd.f32 0.0, %v7626
    %v7628 = vpop.f32.mrb[0].mxu0
    %v7629 = vpop.f32.mrb[0].mxu0
    %v7630 = vadd.f32 0.0, %v7629
    %v7631 = vpop.f32.mrb[0].mxu0
    %7632 = vmatprep.mubr.bf16.mxu0 %v7275
    %7633 = vmatmul.mubr.bf16.gmra.mrb[0].mxu0 %v7273
    %v7634 = vpop.f32.mrb[0].mxu0
    %v7635 = vadd.f32 0.0, %v7634
    %v7636 = vpop.f32.mrb[0].mxu0
    %v7637 = vpop.f32.mrb[0].mxu0
    %v7638 = vadd.f32 0.0, %v7637
    %v7639 = vpop.f32.mrb[0].mxu0
    %7640 = vmatprep.mubr.bf16.mxu0 %v7281
    %7641 = vmatmul.mubr.bf16.gmra.mrb[0].mxu0 %v7279
    %v7642 = vpop.f32.mrb[0].mxu0
    %v7643 = vadd.f32 0.0, %v7642
    %v7644 = vpop.f32.mrb[0].mxu0
    %v7645 = vpop.f32.mrb[0].mxu0
    %v7646 = vadd.f32 0.0, %v7645
    %v7647 = vpop.f32.mrb[0].mxu0
    %7648 = vmatprep.mubr.bf16.mxu0 %v7287
    %7649 = vmatmul.mubr.bf16.gmra.mrb[0].mxu0 %v7285
    %v7650 = vpop.f32.mrb[0].mxu0
    %v7651 = vadd.f32 0.0, %v7650
    %v7652 = vpop.f32.mrb[0].mxu0
    %v7653 = vpop.f32.mrb[0].mxu0
    %v7654 = vadd.f32 0.0, %v7653
    %v7655 = vpop.f32.mrb[0].mxu0
    %7656 = vmatprep.mubr.bf16.mxu0 %v7293
    %7657 = vmatmul.mubr.bf16.gmra.mrb[0].mxu0 %v7291
    %v7658 = vpop.f32.mrb[0].mxu0
    %v7659 = vadd.f32 0.0, %v7658
    %v7660 = vpop.f32.mrb[0].mxu0
    %v7661 = vpop.f32.mrb[0].mxu0
    %v7662 = vadd.f32 0.0, %v7661
    %v7663 = vpop.f32.mrb[0].mxu0
    %7664 = vmatprep.mubr.bf16.mxu0 %v7299
    %7665 = vmatmul.mubr.bf16.gmra.mrb[0].mxu0 %v7297
    %v7666 = vpop.f32.mrb[0].mxu0
    %v7667 = vadd.f32 0.0, %v7666
    %v7668 = vpop.f32.mrb[0].mxu0
    %v7669 = vpop.f32.mrb[0].mxu0
    %v7670 = vadd.f32 0.0, %v7669
    %v7671 = vpop.f32.mrb[0].mxu0
    %7672 = vmatprep.mubr.bf16.mxu0 %v7305
    %7673 = vmatmul.mubr.bf16.gmra.mrb[0].mxu0 %v7303
    %v7674 = vpop.f32.mrb[0].mxu0
    %v7675 = vadd.f32 0.0, %v7674
    %v7676 = vpop.f32.mrb[0].mxu0
    %v7677 = vpop.f32.mrb[0].mxu0
    %v7678 = vadd.f32 0.0, %v7677
    %v7679 = vpop.f32.mrb[0].mxu0
    %7680 = vmatprep.mubr.bf16.mxu0 %v7311
    %7681 = vmatmul.mubr.bf16.gmra.mrb[0].mxu0 %v7309
    %v7682 = vpop.f32.mrb[0].mxu0
    %v7683 = vadd.f32 0.0, %v7682
    %v7684 = vpop.f32.mrb[0].mxu0
    %v7685 = vpop.f32.mrb[0].mxu0
    %v7686 = vadd.f32 0.0, %v7685
    %v7687 = vpop.f32.mrb[0].mxu0
    %7688 = vmatprep.mubr.bf16.mxu0 %v7317
    %7689 = vmatmul.mubr.bf16.gmra.mrb[0].mxu0 %v7315
    %v7690 = vpop.f32.mrb[0].mxu0
    %v7691 = vadd.f32 0.0, %v7690
    %v7692 = vpop.f32.mrb[0].mxu0
    %v7693 = vpop.f32.mrb[0].mxu0
    %v7694 = vadd.f32 0.0, %v7693
    %v7695 = vpop.f32.mrb[0].mxu0
    %7696 = vmatprep.mubr.bf16.mxu0 %v7323
    %7697 = vmatmul.mubr.bf16.gmra.mrb[0].mxu0 %v7321
    %v7698 = vpop.f32.mrb[0].mxu0
    %v7699 = vadd.f32 0.0, %v7698
    %v7700 = vpop.f32.mrb[0].mxu0
    %v7701 = vpop.f32.mrb[0].mxu0
    %v7702 = vadd.f32 0.0, %v7701
    %v7703 = vpop.f32.mrb[0].mxu0
    %7704 = vmatprep.mubr.bf16.mxu0 %v7329
    %7705 = vmatmul.mubr.bf16.gmra.mrb[0].mxu0 %v7327
    %v7706 = vpop.f32.mrb[0].mxu0
    %v7707 = vadd.f32 0.0, %v7706
    %v7708 = vpop.f32.mrb[0].mxu0
    %v7709 = vpop.f32.mrb[0].mxu0
    %v7710 = vadd.f32 0.0, %v7709
    %v7711 = vpop.f32.mrb[0].mxu0
    %7712 = vmatprep.mubr.bf16.mxu0 %v7335
    %7713 = vmatmul.mubr.bf16.gmra.mrb[0].mxu0 %v7333
    %v7714 = vpop.f32.mrb[0].mxu0
    %v7715 = vadd.f32 0.0, %v7714
    %v7716 = vpop.f32.mrb[0].mxu0
    %v7717 = vpop.f32.mrb[0].mxu0
    %v7718 = vadd.f32 0.0, %v7717
    %v7719 = vpop.f32.mrb[0].mxu0
    %7720 = vmatprep.mubr.bf16.mxu0 %v7341
    %7721 = vmatmul.mubr.bf16.gmra.mrb[0].mxu0 %v7339
    %v7722 = vpop.f32.mrb[0].mxu0
    %v7723 = vadd.f32 0.0, %v7722
    %v7724 = vpop.f32.mrb[0].mxu0
    %v7725 = vpop.f32.mrb[0].mxu0
    %v7726 = vadd.f32 0.0, %v7725
    %v7727 = vpop.f32.mrb[0].mxu0
    %7728 = vmatprep.mubr.bf16.mxu0 %v7347
    %7729 = vmatmul.mubr.bf16.gmra.mrb[0].mxu0 %v7345
    %v7730 = vpop.f32.mrb[0].mxu0
    %v7731 = vadd.f32 0.0, %v7730
    %v7732 = vpop.f32.mrb[0].mxu0
    %v7733 = vpop.f32.mrb[0].mxu0
    %v7734 = vadd.f32 0.0, %v7733
    %v7735 = vpop.f32.mrb[0].mxu0
    %7736 = vmatprep.mubr.bf16.mxu0 %v7353
    %7737 = vmatmul.mubr.bf16.gmra.mrb[0].mxu0 %v7351
    %v7738 = vpop.f32.mrb[0].mxu0
    %v7739 = vadd.f32 0.0, %v7738
    %v7740 = vpop.f32.mrb[0].mxu0
    %v7741 = vpop.f32.mrb[0].mxu0
    %v7742 = vadd.f32 0.0, %v7741
    %v7743 = vpop.f32.mrb[0].mxu0
    %7744 = vmatprep.mubr.bf16.mxu0 %v7352
    %7745 = vmatmul.mubr.bf16.gmra.mrb[0].mxu0 %v7350
    %v7746 = vpop.f32.mrb[0].mxu0
    %v7747 = vadd.f32 0.0, %v7746
    %v7748 = vpop.f32.mrb[0].mxu0
    %v7749 = vpop.f32.mrb[0].mxu0
    %v7750 = vadd.f32 0.0, %v7749
    %v7751 = vpop.f32.mrb[0].mxu0
    %7752 = vdwg.mxu0
    %7753 = vmatprep.subr.bf16.mxu0 0
    %7754 = vmatpush1.bf16.msra.mxu0 %v7528
    %7755 = vmatprep.subr.bf16.mxu0 0
    %7756 = vmatpush1.bf16.msra.mxu0 %v7529
    %7757 = vmatprep.subr.bf16.mxu0 0
    %7758 = vmatpush1.bf16.msra.mxu0 %v7530
    %7759 = vmatprep.subr.bf16.mxu0 0
    %7760 = vmatpush1.bf16.msra.mxu0 %v7531
    %7761 = vmatprep.subr.bf16.mxu0 0
    %7762 = vmatpush1.bf16.msra.mxu0 %v7532
    %7763 = vmatprep.subr.bf16.mxu0 0
    %7764 = vmatpush1.bf16.msra.mxu0 %v7533
    %7765 = vmatprep.subr.bf16.mxu0 0
    %7766 = vmatpush1.bf16.msra.mxu0 %v7534
    %7767 = vmatprep.subr.bf16.mxu0 0
    %7768 = vmatpush1.bf16.msra.mxu0 %v7535
    %7769 = vmatprep.subr.bf16.mxu0 0
    %7770 = vmatpush1.bf16.msra.mxu0 0
    %7771 = vmatprep.subr.bf16.mxu0 0
    %7772 = vmatpush1.bf16.msra.mxu0 0
    %7773 = vmatprep.subr.bf16.mxu0 0
    %7774 = vmatpush1.bf16.msra.mxu0 0
    %7775 = vmatprep.subr.bf16.mxu0 0
    %7776 = vmatpush1.bf16.msra.mxu0 0
    %7777 = vmatprep.subr.bf16.mxu0 0
    %7778 = vmatpush1.bf16.msra.mxu0 0
    %7779 = vmatprep.subr.bf16.mxu0 0
    %7780 = vmatpush1.bf16.msra.mxu0 0
    %7781 = vmatprep.subr.bf16.mxu0 0
    %7782 = vmatpush1.bf16.msra.mxu0 0
    %7783 = vmatprep.subr.bf16.mxu0 0
    %7784 = vmatpush1.bf16.msra.mxu0 0
    %7785 = vmatprep.mubr.bf16.mxu0 0
    %7786 = vmatmul.mubr.bf16.gmra.mrb[0].mxu0 %v7247
    %v7787 = vpop.f32.mrb[0].mxu0
    %v7788 = vadd.f32 %v7595, %v7787
    %v7789 = vpop.f32.mrb[0].mxu0
    %v7790 = vpop.f32.mrb[0].mxu0
    %v7791 = vadd.f32 %v7598, %v7790
    %v7792 = vpop.f32.mrb[0].mxu0
    %7793 = vmatprep.mubr.bf16.mxu0 0
    %7794 = vmatmul.mubr.bf16.gmra.mrb[0].mxu0 %v7253
    %v7795 = vpop.f32.mrb[0].mxu0
    %v7796 = vadd.f32 %v7603, %v7795
    %v7797 = vpop.f32.mrb[0].mxu0
    %v7798 = vpop.f32.mrb[0].mxu0
    %v7799 = vadd.f32 %v7606, %v7798
    %v7800 = vpop.f32.mrb[0].mxu0
    %7801 = vmatprep.mubr.bf16.mxu0 0
    %7802 = vmatmul.mubr.bf16.gmra.mrb[0].mxu0 %v7259
    %v7803 = vpop.f32.mrb[0].mxu0
    %v7804 = vadd.f32 %v7611, %v7803
    %v7805 = vpop.f32.mrb[0].mxu0
    %v7806 = vpop.f32.mrb[0].mxu0
    %v7807 = vadd.f32 %v7614, %v7806
    %v7808 = vpop.f32.mrb[0].mxu0
    %7809 = vmatprep.mubr.bf16.mxu0 0
    %7810 = vmatmul.mubr.bf16.gmra.mrb[0].mxu0 %v7265
    %v7811 = vpop.f32.mrb[0].mxu0
    %v7812 = vadd.f32 %v7619, %v7811
    %v7813 = vpop.f32.mrb[0].mxu0
    %v7814 = vpop.f32.mrb[0].mxu0
    %v7815 = vadd.f32 %v7622, %v7814
    %v7816 = vpop.f32.mrb[0].mxu0
    %7817 = vmatprep.mubr.bf16.mxu0 0
    %7818 = vmatmul.mubr.bf16.gmra.mrb[0].mxu0 %v7271
    %v7819 = vpop.f32.mrb[0].mxu0
    %v7820 = vadd.f32 %v7627, %v7819
    %v7821 = vpop.f32.mrb[0].mxu0
    %v7822 = vpop.f32.mrb[0].mxu0
    %v7823 = vadd.f32 %v7630, %v7822
    %v7824 = vpop.f32.mrb[0].mxu0
    %7825 = vmatprep.mubr.bf16.mxu0 0
    %7826 = vmatmul.mubr.bf16.gmra.mrb[0].mxu0 %v7277
    %v7827 = vpop.f32.mrb[0].mxu0
    %v7828 = vadd.f32 %v7635, %v7827
    %v7829 = vpop.f32.mrb[0].mxu0
    %v7830 = vpop.f32.mrb[0].mxu0
    %v7831 = vadd.f32 %v7638, %v7830
    %v7832 = vpop.f32.mrb[0].mxu0
    %7833 = vmatprep.mubr.bf16.mxu0 0
    %7834 = vmatmul.mubr.bf16.gmra.mrb[0].mxu0 %v7283
    %v7835 = vpop.f32.mrb[0].mxu0
    %v7836 = vadd.f32 %v7643, %v7835
    %v7837 = vpop.f32.mrb[0].mxu0
    %v7838 = vpop.f32.mrb[0].mxu0
    %v7839 = vadd.f32 %v7646, %v7838
    %v7840 = vpop.f32.mrb[0].mxu0
    %7841 = vmatprep.mubr.bf16.mxu0 0
    %7842 = vmatmul.mubr.bf16.gmra.mrb[0].mxu0 %v7289
    %v7843 = vpop.f32.mrb[0].mxu0
    %v7844 = vadd.f32 %v7651, %v7843
    %v7845 = vpop.f32.mrb[0].mxu0
    %v7846 = vpop.f32.mrb[0].mxu0
    %v7847 = vadd.f32 %v7654, %v7846
    %v7848 = vpop.f32.mrb[0].mxu0
    %7849 = vmatprep.mubr.bf16.mxu0 0
    %7850 = vmatmul.mubr.bf16.gmra.mrb[0].mxu0 %v7295
    %v7851 = vpop.f32.mrb[0].mxu0
    %v7852 = vadd.f32 %v7659, %v7851
    %v7853 = vpop.f32.mrb[0].mxu0
    %v7854 = vpop.f32.mrb[0].mxu0
    %v7855 = vadd.f32 %v7662, %v7854
    %v7856 = vpop.f32.mrb[0].mxu0
    %7857 = vmatprep.mubr.bf16.mxu0 0
    %7858 = vmatmul.mubr.bf16.gmra.mrb[0].mxu0 %v7301
    %v7859 = vpop.f32.mrb[0].mxu0
    %v7860 = vadd.f32 %v7667, %v7859
    %v7861 = vpop.f32.mrb[0].mxu0
    %v7862 = vpop.f32.mrb[0].mxu0
    %v7863 = vadd.f32 %v7670, %v7862
    %v7864 = vpop.f32.mrb[0].mxu0
    %7865 = vmatprep.mubr.bf16.mxu0 0
    %7866 = vmatmul.mubr.bf16.gmra.mrb[0].mxu0 %v7307
    %v7867 = vpop.f32.mrb[0].mxu0
    %v7868 = vadd.f32 %v7675, %v7867
    %v7869 = vpop.f32.mrb[0].mxu0
    %v7870 = vpop.f32.mrb[0].mxu0
    %v7871 = vadd.f32 %v7678, %v7870
    %v7872 = vpop.f32.mrb[0].mxu0
    %7873 = vmatprep.mubr.bf16.mxu0 0
    %7874 = vmatmul.mubr.bf16.gmra.mrb[0].mxu0 %v7313
    %v7875 = vpop.f32.mrb[0].mxu0
    %v7876 = vadd.f32 %v7683, %v7875
    %v7877 = vpop.f32.mrb[0].mxu0
    %v7878 = vpop.f32.mrb[0].mxu0
    %v7879 = vadd.f32 %v7686, %v7878
    %v7880 = vpop.f32.mrb[0].mxu0
    %7881 = vmatprep.mubr.bf16.mxu0 0
    %7882 = vmatmul.mubr.bf16.gmra.mrb[0].mxu0 %v7319
    %v7883 = vpop.f32.mrb[0].mxu0
    %v7884 = vadd.f32 %v7691, %v7883
    %v7885 = vpop.f32.mrb[0].mxu0
    %v7886 = vpop.f32.mrb[0].mxu0
    %v7887 = vadd.f32 %v7694, %v7886
    %v7888 = vpop.f32.mrb[0].mxu0
    %7889 = vmatprep.mubr.bf16.mxu0 0
    %7890 = vmatmul.mubr.bf16.gmra.mrb[0].mxu0 %v7325
    %v7891 = vpop.f32.mrb[0].mxu0
    %v7892 = vadd.f32 %v7699, %v7891
    %v7893 = vpop.f32.mrb[0].mxu0
    %v7894 = vpop.f32.mrb[0].mxu0
    %v7895 = vadd.f32 %v7702, %v7894
    %v7896 = vpop.f32.mrb[0].mxu0
    %7897 = vmatprep.mubr.bf16.mxu0 0
    %7898 = vmatmul.mubr.bf16.gmra.mrb[0].mxu0 %v7331
    %v7899 = vpop.f32.mrb[0].mxu0
    %v7900 = vadd.f32 %v7707, %v7899
    %v7901 = vpop.f32.mrb[0].mxu0
    %v7902 = vpop.f32.mrb[0].mxu0
    %v7903 = vadd.f32 %v7710, %v7902
    %v7904 = vpop.f32.mrb[0].mxu0
    %7905 = vmatprep.mubr.bf16.mxu0 0
    %7906 = vmatmul.mubr.bf16.gmra.mrb[0].mxu0 %v7337
    %v7907 = vpop.f32.mrb[0].mxu0
    %v7908 = vadd.f32 %v7715, %v7907
    %v7909 = vpop.f32.mrb[0].mxu0
    %v7910 = vpop.f32.mrb[0].mxu0
    %v7911 = vadd.f32 %v7718, %v7910
    %v7912 = vpop.f32.mrb[0].mxu0
    %7913 = vmatprep.mubr.bf16.mxu0 0
    %7914 = vmatmul.mubr.bf16.gmra.mrb[0].mxu0 %v7343
    %v7915 = vpop.f32.mrb[0].mxu0
    %v7916 = vadd.f32 %v7723, %v7915
    %v7917 = vpop.f32.mrb[0].mxu0
    %v7918 = vpop.f32.mrb[0].mxu0
    %v7919 = vadd.f32 %v7726, %v7918
    %v7920 = vpop.f32.mrb[0].mxu0
    %7921 = vmatprep.mubr.bf16.mxu0 0
    %7922 = vmatmul.mubr.bf16.gmra.mrb[0].mxu0 %v7349
    %v7923 = vpop.f32.mrb[0].mxu0
    %v7924 = vadd.f32 %v7731, %v7923
    %v7925 = vpop.f32.mrb[0].mxu0
    %v7926 = vpop.f32.mrb[0].mxu0
    %v7927 = vadd.f32 %v7734, %v7926
    %v7928 = vpop.f32.mrb[0].mxu0
    %7929 = vmatprep.mubr.bf16.mxu0 0
    %7930 = vmatmul.mubr.bf16.gmra.mrb[0].mxu0 %v7355
    %v7931 = vpop.f32.mrb[0].mxu0
    %v7932 = vadd.f32 %v7739, %v7931
    %v7933 = vpop.f32.mrb[0].mxu0
    %v7934 = vpop.f32.mrb[0].mxu0
    %v7935 = vadd.f32 %v7742, %v7934
    %v7936 = vpop.f32.mrb[0].mxu0
    %7937 = vmatprep.mubr.bf16.mxu0 0
    %7938 = vmatmul.mubr.bf16.gmra.mrb[0].mxu0 %v7354
    %v7939 = vpop.f32.mrb[0].mxu0
    %v7940 = vadd.f32 %v7747, %v7939
    %v7941 = vpop.f32.mrb[0].mxu0
    %v7942 = vpop.f32.mrb[0].mxu0
    %v7943 = vadd.f32 %v7750, %v7942
    %v7944 = vpop.f32.mrb[0].mxu0
    %7945 = vdwg.mxu0
    %v7994 = vunpack.c.l.b16 %v7123
    %v7995 = vunpack.c.l.b16 %v7124
    %v7996 = vunpack.c.l.b16 %v7125
    %v7997 = vunpack.c.l.b16 %v7126
    %v7998 = vunpack.c.l.b16 %v7127
    %v7999 = vunpack.c.l.b16 %v7128
    %v8000 = vunpack.c.l.b16 %v7129
    %v8001 = vunpack.c.l.b16 %v7130
    %v8002 = vunpack.c.l.b16 %v7131
    %v8003 = vunpack.c.l.b16 %v7132
    %v8004 = vunpack.c.l.b16 %v7133
    %v8005 = vunpack.c.l.b16 %v7134
    %v8006 = vunpack.c.l.b16 %v7135
    %v8007 = vunpack.c.l.b16 %v7136
    %v8008 = vunpack.c.l.b16 %v7137
    %v8009 = vunpack.c.l.b16 %v7138
    %v8010 = vunpack.c.l.b16 %v7139
    %v8011 = vunpack.c.l.b16 %v7140
    %v8012 = vunpack.c.l.b16 %v7141
    %v8013 = vunpack.c.l.b16 %v7142
    %v8014 = vunpack.c.l.b16 %v7143
    %v8015 = vunpack.c.l.b16 %v7144
    %v8016 = vunpack.c.l.b16 %v7145
    %v8017 = vunpack.c.l.b16 %v7146
    %v8018 = vunpack.c.l.b16 %v7147
    %v8019 = vunpack.c.l.b16 %v7148
    %v8020 = vunpack.c.l.b16 %v7149
    %v8021 = vunpack.c.l.b16 %v7150
    %v8022 = vunpack.c.l.b16 %v7151
    %v8023 = vunpack.c.l.b16 %v7152
    %v8024 = vunpack.c.l.b16 %v7153
    %v8025 = vunpack.c.l.b16 %v7154
    %v8026 = vunpack.c.l.b16 %v7155
    %v8027 = vunpack.c.l.b16 %v7156
    %v8028 = vunpack.c.l.b16 %v7157
    %v8029 = vunpack.c.l.b16 %v7158
    %v8030 = vunpack.c.l.b16 %v7159
    %v8031 = vunpack.c.l.b16 %v7160
    %v8032 = vunpack.c.l.b16 %v7161
    %v8033 = vunpack.c.l.b16 %v7162
    %v8034 = vunpack.c.l.b16 %v7163
    %v8035 = vunpack.c.l.b16 %v7164
    %v8036 = vunpack.c.l.b16 %v7165
    %v8037 = vunpack.c.l.b16 %v7166
    %v8038 = vunpack.c.l.b16 %v7167
    %v8039 = vunpack.c.l.b16 %v7168
    %v8040 = vunpack.c.l.b16 %v7169
    %v8041 = vunpack.c.l.b16 %v7170
    %v8042 = vpack.c.b16 %v7995, %v7994
    %v8043 = vpack.c.b16 %v7997, %v7996
    %v8044 = vpack.c.b16 %v7999, %v7998
    %v8045 = vpack.c.b16 %v8001, %v8000
    %v8046 = vpack.c.b16 %v8003, %v8002
    %v8047 = vpack.c.b16 %v8005, %v8004
    %v8048 = vpack.c.b16 %v8007, %v8006
    %v8049 = vpack.c.b16 %v8009, %v8008
    %v8050 = vpack.c.b16 %v8011, %v8010
    %v8051 = vpack.c.b16 %v8013, %v8012
    %v8052 = vpack.c.b16 %v8015, %v8014
    %v8053 = vpack.c.b16 %v8017, %v8016
    %v8054 = vpack.c.b16 %v8019, %v8018
    %v8055 = vpack.c.b16 %v8021, %v8020
    %v8056 = vpack.c.b16 %v8023, %v8022
    %v8057 = vpack.c.b16 %v8025, %v8024
    %v8058 = vpack.c.b16 %v8027, %v8026
    %v8059 = vpack.c.b16 %v8029, %v8028
    %v8060 = vpack.c.b16 %v8031, %v8030
    %v8061 = vpack.c.b16 %v8033, %v8032
    %v8062 = vpack.c.b16 %v8035, %v8034
    %v8063 = vpack.c.b16 %v8037, %v8036
    %v8064 = vpack.c.b16 %v8039, %v8038
    %v8065 = vpack.c.b16 %v8041, %v8040
    %8090 = vmatprep.subr.bf16.mxu0 0
    %8091 = vmatpush1.bf16.msra.mxu0 %v8042
    %8092 = vmatprep.subr.bf16.mxu0 0
    %8093 = vmatpush1.bf16.msra.mxu0 %v8043
    %8094 = vmatprep.subr.bf16.mxu0 0
    %8095 = vmatpush1.bf16.msra.mxu0 %v8044
    %8096 = vmatprep.subr.bf16.mxu0 0
    %8097 = vmatpush1.bf16.msra.mxu0 %v8045
    %8098 = vmatprep.subr.bf16.mxu0 0
    %8099 = vmatpush1.bf16.msra.mxu0 %v8046
    %8100 = vmatprep.subr.bf16.mxu0 0
    %8101 = vmatpush1.bf16.msra.mxu0 %v8047
    %8102 = vmatprep.subr.bf16.mxu0 0
    %8103 = vmatpush1.bf16.msra.mxu0 %v8048
    %8104 = vmatprep.subr.bf16.mxu0 0
    %8105 = vmatpush1.bf16.msra.mxu0 %v8049
    %8106 = vmatprep.subr.bf16.mxu0 0
    %8107 = vmatpush1.bf16.msra.mxu0 %v8050
    %8108 = vmatprep.subr.bf16.mxu0 0
    %8109 = vmatpush1.bf16.msra.mxu0 %v8051
    %8110 = vmatprep.subr.bf16.mxu0 0
    %8111 = vmatpush1.bf16.msra.mxu0 %v8052
    %8112 = vmatprep.subr.bf16.mxu0 0
    %8113 = vmatpush1.bf16.msra.mxu0 %v8053
    %8114 = vmatprep.subr.bf16.mxu0 0
    %8115 = vmatpush1.bf16.msra.mxu0 %v8054
    %8116 = vmatprep.subr.bf16.mxu0 0
    %8117 = vmatpush1.bf16.msra.mxu0 %v8055
    %8118 = vmatprep.subr.bf16.mxu0 0
    %8119 = vmatpush1.bf16.msra.mxu0 %v8056
    %8120 = vmatprep.subr.bf16.mxu0 0
    %8121 = vmatpush1.bf16.msra.mxu0 %v8057
    %8122 = vmatprep.mubr.bf16.mxu0 %v6876
    %8123 = vmatmul.mubr.bf16.gmra.mrb[0].mxu0 %v6842
    %v8124 = vpop.f32.mrb[0].mxu0
    %v8125 = vadd.f32 %v7788, %v8124
    %v8126 = vpop.f32.mrb[0].mxu0
    %v8127 = vpop.f32.mrb[0].mxu0
    %v8128 = vadd.f32 %v7791, %v8127
    %v8129 = vpop.f32.mrb[0].mxu0
    %8130 = vmatprep.mubr.bf16.mxu0 %v6884
    %8131 = vmatmul.mubr.bf16.gmra.mrb[0].mxu0 %v6843
    %v8132 = vpop.f32.mrb[0].mxu0
    %v8133 = vadd.f32 %v7796, %v8132
    %v8134 = vpop.f32.mrb[0].mxu0
    %v8135 = vpop.f32.mrb[0].mxu0
    %v8136 = vadd.f32 %v7799, %v8135
    %v8137 = vpop.f32.mrb[0].mxu0
    %8138 = vmatprep.mubr.bf16.mxu0 %v6892
    %8139 = vmatmul.mubr.bf16.gmra.mrb[0].mxu0 %v6844
    %v8140 = vpop.f32.mrb[0].mxu0
    %v8141 = vadd.f32 %v7804, %v8140
    %v8142 = vpop.f32.mrb[0].mxu0
    %v8143 = vpop.f32.mrb[0].mxu0
    %v8144 = vadd.f32 %v7807, %v8143
    %v8145 = vpop.f32.mrb[0].mxu0
    %8146 = vmatprep.mubr.bf16.mxu0 %v6900
    %8147 = vmatmul.mubr.bf16.gmra.mrb[0].mxu0 %v6845
    %v8148 = vpop.f32.mrb[0].mxu0
    %v8149 = vadd.f32 %v7812, %v8148
    %v8150 = vpop.f32.mrb[0].mxu0
    %v8151 = vpop.f32.mrb[0].mxu0
    %v8152 = vadd.f32 %v7815, %v8151
    %v8153 = vpop.f32.mrb[0].mxu0
    %8154 = vmatprep.mubr.bf16.mxu0 %v6908
    %8155 = vmatmul.mubr.bf16.gmra.mrb[0].mxu0 %v6846
    %v8156 = vpop.f32.mrb[0].mxu0
    %v8157 = vadd.f32 %v7820, %v8156
    %v8158 = vpop.f32.mrb[0].mxu0
    %v8159 = vpop.f32.mrb[0].mxu0
    %v8160 = vadd.f32 %v7823, %v8159
    %v8161 = vpop.f32.mrb[0].mxu0
    %8162 = vmatprep.mubr.bf16.mxu0 %v6916
    %8163 = vmatmul.mubr.bf16.gmra.mrb[0].mxu0 %v6847
    %v8164 = vpop.f32.mrb[0].mxu0
    %v8165 = vadd.f32 %v7828, %v8164
    %v8166 = vpop.f32.mrb[0].mxu0
    %v8167 = vpop.f32.mrb[0].mxu0
    %v8168 = vadd.f32 %v7831, %v8167
    %v8169 = vpop.f32.mrb[0].mxu0
    %8170 = vmatprep.mubr.bf16.mxu0 %v6924
    %8171 = vmatmul.mubr.bf16.gmra.mrb[0].mxu0 %v6848
    %v8172 = vpop.f32.mrb[0].mxu0
    %v8173 = vadd.f32 %v7836, %v8172
    %v8174 = vpop.f32.mrb[0].mxu0
    %v8175 = vpop.f32.mrb[0].mxu0
    %v8176 = vadd.f32 %v7839, %v8175
    %v8177 = vpop.f32.mrb[0].mxu0
    %8178 = vmatprep.mubr.bf16.mxu0 %v6932
    %8179 = vmatmul.mubr.bf16.gmra.mrb[0].mxu0 %v6849
    %v8180 = vpop.f32.mrb[0].mxu0
    %v8181 = vadd.f32 %v7844, %v8180
    %v8182 = vpop.f32.mrb[0].mxu0
    %v8183 = vpop.f32.mrb[0].mxu0
    %v8184 = vadd.f32 %v7847, %v8183
    %v8185 = vpop.f32.mrb[0].mxu0
    %8186 = vmatprep.mubr.bf16.mxu0 %v6940
    %8187 = vmatmul.mubr.bf16.gmra.mrb[0].mxu0 %v6850
    %v8188 = vpop.f32.mrb[0].mxu0
    %v8189 = vadd.f32 %v7852, %v8188
    %v8190 = vpop.f32.mrb[0].mxu0
    %v8191 = vpop.f32.mrb[0].mxu0
    %v8192 = vadd.f32 %v7855, %v8191
    %v8193 = vpop.f32.mrb[0].mxu0
    %8194 = vmatprep.mubr.bf16.mxu0 %v6948
    %8195 = vmatmul.mubr.bf16.gmra.mrb[0].mxu0 %v6851
    %v8196 = vpop.f32.mrb[0].mxu0
    %v8197 = vadd.f32 %v7860, %v8196
    %v8198 = vpop.f32.mrb[0].mxu0
    %v8199 = vpop.f32.mrb[0].mxu0
    %v8200 = vadd.f32 %v7863, %v8199
    %v8201 = vpop.f32.mrb[0].mxu0
    %8202 = vmatprep.mubr.bf16.mxu0 %v6956
    %8203 = vmatmul.mubr.bf16.gmra.mrb[0].mxu0 %v6852
    %v8204 = vpop.f32.mrb[0].mxu0
    %v8205 = vadd.f32 %v7868, %v8204
    %v8206 = vpop.f32.mrb[0].mxu0
    %v8207 = vpop.f32.mrb[0].mxu0
    %v8208 = vadd.f32 %v7871, %v8207
    %v8209 = vpop.f32.mrb[0].mxu0
    %8210 = vmatprep.mubr.bf16.mxu0 %v6964
    %8211 = vmatmul.mubr.bf16.gmra.mrb[0].mxu0 %v6853
    %v8212 = vpop.f32.mrb[0].mxu0
    %v8213 = vadd.f32 %v7876, %v8212
    %v8214 = vpop.f32.mrb[0].mxu0
    %v8215 = vpop.f32.mrb[0].mxu0
    %v8216 = vadd.f32 %v7879, %v8215
    %v8217 = vpop.f32.mrb[0].mxu0
    %8218 = vmatprep.mubr.bf16.mxu0 %v6972
    %8219 = vmatmul.mubr.bf16.gmra.mrb[0].mxu0 %v6854
    %v8220 = vpop.f32.mrb[0].mxu0
    %v8221 = vadd.f32 %v7884, %v8220
    %v8222 = vpop.f32.mrb[0].mxu0
    %v8223 = vpop.f32.mrb[0].mxu0
    %v8224 = vadd.f32 %v7887, %v8223
    %v8225 = vpop.f32.mrb[0].mxu0
    %8226 = vmatprep.mubr.bf16.mxu0 %v6980
    %8227 = vmatmul.mubr.bf16.gmra.mrb[0].mxu0 %v6855
    %v8228 = vpop.f32.mrb[0].mxu0
    %v8229 = vadd.f32 %v7892, %v8228
    %v8230 = vpop.f32.mrb[0].mxu0
    %v8231 = vpop.f32.mrb[0].mxu0
    %v8232 = vadd.f32 %v7895, %v8231
    %v8233 = vpop.f32.mrb[0].mxu0
    %8234 = vmatprep.mubr.bf16.mxu0 %v6988
    %8235 = vmatmul.mubr.bf16.gmra.mrb[0].mxu0 %v6856
    %v8236 = vpop.f32.mrb[0].mxu0
    %v8237 = vadd.f32 %v7900, %v8236
    %v8238 = vpop.f32.mrb[0].mxu0
    %v8239 = vpop.f32.mrb[0].mxu0
    %v8240 = vadd.f32 %v7903, %v8239
    %v8241 = vpop.f32.mrb[0].mxu0
    %8242 = vmatprep.mubr.bf16.mxu0 %v6996
    %8243 = vmatmul.mubr.bf16.gmra.mrb[0].mxu0 %v6857
    %v8244 = vpop.f32.mrb[0].mxu0
    %v8245 = vadd.f32 %v7908, %v8244
    %v8246 = vpop.f32.mrb[0].mxu0
    %v8247 = vpop.f32.mrb[0].mxu0
    %v8248 = vadd.f32 %v7911, %v8247
    %v8249 = vpop.f32.mrb[0].mxu0
    %8250 = vmatprep.mubr.bf16.mxu0 %v7004
    %8251 = vmatmul.mubr.bf16.gmra.mrb[0].mxu0 %v6858
    %v8252 = vpop.f32.mrb[0].mxu0
    %v8253 = vadd.f32 %v7916, %v8252
    %v8254 = vpop.f32.mrb[0].mxu0
    %v8255 = vpop.f32.mrb[0].mxu0
    %v8256 = vadd.f32 %v7919, %v8255
    %v8257 = vpop.f32.mrb[0].mxu0
    %8258 = vmatprep.mubr.bf16.mxu0 %v7012
    %8259 = vmatmul.mubr.bf16.gmra.mrb[0].mxu0 %v6859
    %v8260 = vpop.f32.mrb[0].mxu0
    %v8261 = vadd.f32 %v7924, %v8260
    %v8262 = vpop.f32.mrb[0].mxu0
    %v8263 = vpop.f32.mrb[0].mxu0
    %v8264 = vadd.f32 %v7927, %v8263
    %v8265 = vpop.f32.mrb[0].mxu0
    %8266 = vmatprep.mubr.bf16.mxu0 %v7020
    %8267 = vmatmul.mubr.bf16.gmra.mrb[0].mxu0 %v6860
    %v8268 = vpop.f32.mrb[0].mxu0
    %v8269 = vadd.f32 %v7932, %v8268
    %v8270 = vpop.f32.mrb[0].mxu0
    %v8271 = vpop.f32.mrb[0].mxu0
    %v8272 = vadd.f32 %v7935, %v8271
    %v8273 = vpop.f32.mrb[0].mxu0
    %8274 = vmatprep.mubr.bf16.mxu0 %v7023
    %8275 = vmatmul.mubr.bf16.gmra.mrb[0].mxu0 %v6861
    %v8276 = vpop.f32.mrb[0].mxu0
    %v8277 = vadd.f32 %v7940, %v8276
    %v8278 = vpop.f32.mrb[0].mxu0
    %v8279 = vpop.f32.mrb[0].mxu0
    %v8280 = vadd.f32 %v7943, %v8279
    %v8281 = vpop.f32.mrb[0].mxu0
    %8282 = vdwg.mxu0
    %8283 = vmatprep.subr.bf16.mxu0 0
    %8284 = vmatpush1.bf16.msra.mxu0 %v8058
    %8285 = vmatprep.subr.bf16.mxu0 0
    %8286 = vmatpush1.bf16.msra.mxu0 %v8059
    %8287 = vmatprep.subr.bf16.mxu0 0
    %8288 = vmatpush1.bf16.msra.mxu0 %v8060
    %8289 = vmatprep.subr.bf16.mxu0 0
    %8290 = vmatpush1.bf16.msra.mxu0 %v8061
    %8291 = vmatprep.subr.bf16.mxu0 0
    %8292 = vmatpush1.bf16.msra.mxu0 %v8062
    %8293 = vmatprep.subr.bf16.mxu0 0
    %8294 = vmatpush1.bf16.msra.mxu0 %v8063
    %8295 = vmatprep.subr.bf16.mxu0 0
    %8296 = vmatpush1.bf16.msra.mxu0 %v8064
    %8297 = vmatprep.subr.bf16.mxu0 0
    %8298 = vmatpush1.bf16.msra.mxu0 %v8065
    %8299 = vmatprep.subr.bf16.mxu0 0
    %8300 = vmatpush1.bf16.msra.mxu0 0
    %8301 = vmatprep.subr.bf16.mxu0 0
    %8302 = vmatpush1.bf16.msra.mxu0 0
    %8303 = vmatprep.subr.bf16.mxu0 0
    %8304 = vmatpush1.bf16.msra.mxu0 0
    %8305 = vmatprep.subr.bf16.mxu0 0
    %8306 = vmatpush1.bf16.msra.mxu0 0
    %8307 = vmatprep.subr.bf16.mxu0 0
    %8308 = vmatpush1.bf16.msra.mxu0 0
    %8309 = vmatprep.subr.bf16.mxu0 0
    %8310 = vmatpush1.bf16.msra.mxu0 0
    %8311 = vmatprep.subr.bf16.mxu0 0
    %8312 = vmatpush1.bf16.msra.mxu0 0
    %8313 = vmatprep.subr.bf16.mxu0 0
    %8314 = vmatpush1.bf16.msra.mxu0 0
    %8315 = vmatprep.mubr.bf16.mxu0 0
    %8316 = vmatmul.mubr.bf16.gmra.mrb[0].mxu0 %v7066
    %v8317 = vpop.f32.mrb[0].mxu0
    %v8318 = vadd.f32 %v8125, %v8317
    %v8319 = vpop.f32.mrb[0].mxu0
    %v8320 = vpop.f32.mrb[0].mxu0
    %v8321 = vadd.f32 %v8128, %v8320
    %v8322 = vpop.f32.mrb[0].mxu0
    %8323 = vmatprep.mubr.bf16.mxu0 0
    %8324 = vmatmul.mubr.bf16.gmra.mrb[0].mxu0 %v7068
    %v8325 = vpop.f32.mrb[0].mxu0
    %v8326 = vadd.f32 %v8133, %v8325
    %v8327 = vpop.f32.mrb[0].mxu0
    %v8328 = vpop.f32.mrb[0].mxu0
    %v8329 = vadd.f32 %v8136, %v8328
    %v8330 = vpop.f32.mrb[0].mxu0
    %8331 = vmatprep.mubr.bf16.mxu0 0
    %8332 = vmatmul.mubr.bf16.gmra.mrb[0].mxu0 %v7070
    %v8333 = vpop.f32.mrb[0].mxu0
    %v8334 = vadd.f32 %v8141, %v8333
    %v8335 = vpop.f32.mrb[0].mxu0
    %v8336 = vpop.f32.mrb[0].mxu0
    %v8337 = vadd.f32 %v8144, %v8336
    %v8338 = vpop.f32.mrb[0].mxu0
    %8339 = vmatprep.mubr.bf16.mxu0 0
    %8340 = vmatmul.mubr.bf16.gmra.mrb[0].mxu0 %v7072
    %v8341 = vpop.f32.mrb[0].mxu0
    %v8342 = vadd.f32 %v8149, %v8341
    %v8343 = vpop.f32.mrb[0].mxu0
    %v8344 = vpop.f32.mrb[0].mxu0
    %v8345 = vadd.f32 %v8152, %v8344
    %v8346 = vpop.f32.mrb[0].mxu0
    %8347 = vmatprep.mubr.bf16.mxu0 0
    %8348 = vmatmul.mubr.bf16.gmra.mrb[0].mxu0 %v7074
    %v8349 = vpop.f32.mrb[0].mxu0
    %v8350 = vadd.f32 %v8157, %v8349
    %v8351 = vpop.f32.mrb[0].mxu0
    %v8352 = vpop.f32.mrb[0].mxu0
    %v8353 = vadd.f32 %v8160, %v8352
    %v8354 = vpop.f32.mrb[0].mxu0
    %8355 = vmatprep.mubr.bf16.mxu0 0
    %8356 = vmatmul.mubr.bf16.gmra.mrb[0].mxu0 %v7076
    %v8357 = vpop.f32.mrb[0].mxu0
    %v8358 = vadd.f32 %v8165, %v8357
    %v8359 = vpop.f32.mrb[0].mxu0
    %v8360 = vpop.f32.mrb[0].mxu0
    %v8361 = vadd.f32 %v8168, %v8360
    %v8362 = vpop.f32.mrb[0].mxu0
    %8363 = vmatprep.mubr.bf16.mxu0 0
    %8364 = vmatmul.mubr.bf16.gmra.mrb[0].mxu0 %v7078
    %v8365 = vpop.f32.mrb[0].mxu0
    %v8366 = vadd.f32 %v8173, %v8365
    %v8367 = vpop.f32.mrb[0].mxu0
    %v8368 = vpop.f32.mrb[0].mxu0
    %v8369 = vadd.f32 %v8176, %v8368
    %v8370 = vpop.f32.mrb[0].mxu0
    %8371 = vmatprep.mubr.bf16.mxu0 0
    %8372 = vmatmul.mubr.bf16.gmra.mrb[0].mxu0 %v7080
    %v8373 = vpop.f32.mrb[0].mxu0
    %v8374 = vadd.f32 %v8181, %v8373
    %v8375 = vpop.f32.mrb[0].mxu0
    %v8376 = vpop.f32.mrb[0].mxu0
    %v8377 = vadd.f32 %v8184, %v8376
    %v8378 = vpop.f32.mrb[0].mxu0
    %8379 = vmatprep.mubr.bf16.mxu0 0
    %8380 = vmatmul.mubr.bf16.gmra.mrb[0].mxu0 %v7082
    %v8381 = vpop.f32.mrb[0].mxu0
    %v8382 = vadd.f32 %v8189, %v8381
    %v8383 = vpop.f32.mrb[0].mxu0
    %v8384 = vpop.f32.mrb[0].mxu0
    %v8385 = vadd.f32 %v8192, %v8384
    %v8386 = vpop.f32.mrb[0].mxu0
    %8387 = vmatprep.mubr.bf16.mxu0 0
    %8388 = vmatmul.mubr.bf16.gmra.mrb[0].mxu0 %v7084
    %v8389 = vpop.f32.mrb[0].mxu0
    %v8390 = vadd.f32 %v8197, %v8389
    %v8391 = vpop.f32.mrb[0].mxu0
    %v8392 = vpop.f32.mrb[0].mxu0
    %v8393 = vadd.f32 %v8200, %v8392
    %v8394 = vpop.f32.mrb[0].mxu0
    %8395 = vmatprep.mubr.bf16.mxu0 0
    %8396 = vmatmul.mubr.bf16.gmra.mrb[0].mxu0 %v7086
    %v8397 = vpop.f32.mrb[0].mxu0
    %v8398 = vadd.f32 %v8205, %v8397
    %v8399 = vpop.f32.mrb[0].mxu0
    %v8400 = vpop.f32.mrb[0].mxu0
    %v8401 = vadd.f32 %v8208, %v8400
    %v8402 = vpop.f32.mrb[0].mxu0
    %8403 = vmatprep.mubr.bf16.mxu0 0
    %8404 = vmatmul.mubr.bf16.gmra.mrb[0].mxu0 %v7088
    %v8405 = vpop.f32.mrb[0].mxu0
    %v8406 = vadd.f32 %v8213, %v8405
    %v8407 = vpop.f32.mrb[0].mxu0
    %v8408 = vpop.f32.mrb[0].mxu0
    %v8409 = vadd.f32 %v8216, %v8408
    %v8410 = vpop.f32.mrb[0].mxu0
    %8411 = vmatprep.mubr.bf16.mxu0 0
    %8412 = vmatmul.mubr.bf16.gmra.mrb[0].mxu0 %v7090
    %v8413 = vpop.f32.mrb[0].mxu0
    %v8414 = vadd.f32 %v8221, %v8413
    %v8415 = vpop.f32.mrb[0].mxu0
    %v8416 = vpop.f32.mrb[0].mxu0
    %v8417 = vadd.f32 %v8224, %v8416
    %v8418 = vpop.f32.mrb[0].mxu0
    %8419 = vmatprep.mubr.bf16.mxu0 0
    %8420 = vmatmul.mubr.bf16.gmra.mrb[0].mxu0 %v7092
    %v8421 = vpop.f32.mrb[0].mxu0
    %v8422 = vadd.f32 %v8229, %v8421
    %v8423 = vpop.f32.mrb[0].mxu0
    %v8424 = vpop.f32.mrb[0].mxu0
    %v8425 = vadd.f32 %v8232, %v8424
    %v8426 = vpop.f32.mrb[0].mxu0
    %8427 = vmatprep.mubr.bf16.mxu0 0
    %8428 = vmatmul.mubr.bf16.gmra.mrb[0].mxu0 %v7094
    %v8429 = vpop.f32.mrb[0].mxu0
    %v8430 = vadd.f32 %v8237, %v8429
    %v8431 = vpop.f32.mrb[0].mxu0
    %v8432 = vpop.f32.mrb[0].mxu0
    %v8433 = vadd.f32 %v8240, %v8432
    %v8434 = vpop.f32.mrb[0].mxu0
    %8435 = vmatprep.mubr.bf16.mxu0 0
    %8436 = vmatmul.mubr.bf16.gmra.mrb[0].mxu0 %v7096
    %v8437 = vpop.f32.mrb[0].mxu0
    %v8438 = vadd.f32 %v8245, %v8437
    %v8439 = vpop.f32.mrb[0].mxu0
    %v8440 = vpop.f32.mrb[0].mxu0
    %v8441 = vadd.f32 %v8248, %v8440
    %v8442 = vpop.f32.mrb[0].mxu0
    %8443 = vmatprep.mubr.bf16.mxu0 0
    %8444 = vmatmul.mubr.bf16.gmra.mrb[0].mxu0 %v7098
    %v8445 = vpop.f32.mrb[0].mxu0
    %v8446 = vadd.f32 %v8253, %v8445
    %v8447 = vpop.f32.mrb[0].mxu0
    %v8448 = vpop.f32.mrb[0].mxu0
    %v8449 = vadd.f32 %v8256, %v8448
    %v8450 = vpop.f32.mrb[0].mxu0
    %8451 = vmatprep.mubr.bf16.mxu0 0
    %8452 = vmatmul.mubr.bf16.gmra.mrb[0].mxu0 %v7100
    %v8453 = vpop.f32.mrb[0].mxu0
    %v8454 = vadd.f32 %v8261, %v8453
    %v8455 = vpop.f32.mrb[0].mxu0
    %v8456 = vpop.f32.mrb[0].mxu0
    %v8457 = vadd.f32 %v8264, %v8456
    %v8458 = vpop.f32.mrb[0].mxu0
    %8459 = vmatprep.mubr.bf16.mxu0 0
    %8460 = vmatmul.mubr.bf16.gmra.mrb[0].mxu0 %v7102
    %v8461 = vpop.f32.mrb[0].mxu0
    %v8462 = vadd.f32 %v8269, %v8461
    %v8463 = vpop.f32.mrb[0].mxu0
    %v8464 = vpop.f32.mrb[0].mxu0
    %v8465 = vadd.f32 %v8272, %v8464
    %v8466 = vpop.f32.mrb[0].mxu0
    %8467 = vmatprep.mubr.bf16.mxu0 0
    %8468 = vmatmul.mubr.bf16.gmra.mrb[0].mxu0 %v7101
    %v8469 = vpop.f32.mrb[0].mxu0
    %v8470 = vadd.f32 %v8277, %v8469
    %v8471 = vpop.f32.mrb[0].mxu0
    %v8472 = vpop.f32.mrb[0].mxu0
    %v8473 = vadd.f32 %v8280, %v8472
    %v8474 = vpop.f32.mrb[0].mxu0
    %8475 = vdwg.mxu0
    %v8476 = vshrl.u32 %v6863, 16
    %v8478 = vor.u32 %v8476, %v7182
    %v8480 = vshll.u32 %v6864, 16
    %v8482 = vrot.slane %v8480, 1
    %v8483 = vsel %vm2742, %v8478, %v8482
    %v8484 = vshrl.u32 %v6864, 16
    %v8486 = vor.u32 %v8484, %v8482
    %v8488 = vrot.slane %v6864, 1
    %v8489 = vsel %vm2972, %v7188, %v8488
    %s8490 = scalar_lea.vmem [#allocation22], 384
    %v8491 = vld [vmem:[%s8490] sm:$0xf]
    %v8492 = vld [vmem:[%s8490 + $0x4] sm:$0xf]
    %v8493 = vld [vmem:[%s8490 + $0x8] sm:$0xf]
    %v8494 = vld [vmem:[%s8490 + $0xc] sm:$0xf]
    %v8495 = vld [vmem:[%s8490 + $0x10] sm:$0xf]
    %v8496 = vld [vmem:[%s8490 + $0x14] sm:$0xf]
    %v8497 = vld [vmem:[%s8490 + $0x18] sm:$0xf]
    %v8498 = vld [vmem:[%s8490 + $0x1c] sm:$0xf]
    %v8499 = vld [vmem:[%s8490 + $0x20] sm:$0xf]
    %v8500 = vld [vmem:[%s8490 + $0x24] sm:$0xf]
    %v8501 = vld [vmem:[%s8490 + $0x28] sm:$0xf]
    %v8502 = vld [vmem:[%s8490 + $0x2c] sm:$0xf]
    %v8503 = vld [vmem:[%s8490 + $0x30] sm:$0xf]
    %v8504 = vld [vmem:[%s8490 + $0x34] sm:$0xf]
    %v8505 = vld [vmem:[%s8490 + $0x38] sm:$0xf]
    %v8506 = vld [vmem:[%s8490 + $0x3c] sm:$0xf]
    %v8507 = vld [vmem:[%s8490 + $0x40] sm:$0xf]
    %v8508 = vld [vmem:[%s8490 + $0x44] sm:$0xf]
    %v8509 = vld [vmem:[%s8490 + $0x48] sm:$0xf]
    %v8510 = vld [vmem:[%s8490 + $0x4c] sm:$0xf]
    %v8511 = vld [vmem:[%s8490 + $0x50] sm:$0xf]
    %v8512 = vld [vmem:[%s8490 + $0x54] sm:$0xf]
    %v8513 = vld [vmem:[%s8490 + $0x58] sm:$0xf]
    %v8514 = vld [vmem:[%s8490 + $0x5c] sm:$0xf]
    %v8515 = vld [vmem:[%s8490 + $0x60] sm:$0xf]
    %v8516 = vld [vmem:[%s8490 + $0x64] sm:$0xf]
    %v8517 = vld [vmem:[%s8490 + $0x68] sm:$0xf]
    %v8518 = vld [vmem:[%s8490 + $0x6c] sm:$0xf]
    %v8519 = vld [vmem:[%s8490 + $0x70] sm:$0xf]
    %v8520 = vld [vmem:[%s8490 + $0x74] sm:$0xf]
    %v8521 = vld [vmem:[%s8490 + $0x78] sm:$0xf]
    %v8522 = vld [vmem:[%s8490 + $0x7c] sm:$0xf]
    %v8523 = vld [vmem:[%s8490 + $0x80] sm:$0xf]
    %v8524 = vld [vmem:[%s8490 + $0x84] sm:$0xf]
    %v8525 = vld [vmem:[%s8490 + $0x88] sm:$0xf]
    %v8526 = vld [vmem:[%s8490 + $0x8c] sm:$0xf]
    %v8527 = vld [vmem:[%s8490 + $0x90] sm:$0xf]
    %v8528 = vld [vmem:[%s8490 + $0x94] sm:$0xf]
    %v8529 = vld [vmem:[%s8490 + $0x98] sm:$0xf]
    %v8530 = vld [vmem:[%s8490 + $0x9c] sm:$0xf]
    %v8531 = vld [vmem:[%s8490 + $0xa0] sm:$0xf]
    %v8532 = vld [vmem:[%s8490 + $0xa4] sm:$0xf]
    %v8533 = vld [vmem:[%s8490 + $0xa8] sm:$0xf]
    %v8534 = vld [vmem:[%s8490 + $0xac] sm:$0xf]
    %v8535 = vld [vmem:[%s8490 + $0xb0] sm:$0xf]
    %v8536 = vld [vmem:[%s8490 + $0xb4] sm:$0xf]
    %v8537 = vld [vmem:[%s8490 + $0xb8] sm:$0xf]
    %v8538 = vld [vmem:[%s8490 + $0xbc] sm:$0xf]
    %v8539 = vrot.slane %v6844, 4
    %v8540 = vrot.slane %v6845, 4
    %v8541 = vsel %vm4566, %v8539, %v8540
    %v8542 = vrot.slane %v6892, 4
    %v8543 = vrot.slane %v6900, 4
    %v8544 = vsel %vm4566, %v8542, %v8543
    %v8545 = vrot.slane %v7070, 4
    %v8546 = vrot.slane %v7072, 4
    %v8547 = vsel %vm4566, %v8545, %v8546
    %v8548 = vrot.slane %v6846, 4
    %v8549 = vsel %vm4566, %v8540, %v8548
    %v8550 = vrot.slane %v6908, 4
    %v8551 = vsel %vm4566, %v8543, %v8550
    %v8552 = vrot.slane %v7074, 4
    %v8553 = vsel %vm4566, %v8546, %v8552
    %v8554 = vrot.slane %v6847, 4
    %v8555 = vsel %vm4566, %v8548, %v8554
    %v8556 = vrot.slane %v6916, 4
    %v8557 = vsel %vm4566, %v8550, %v8556
    %v8558 = vrot.slane %v7076, 4
    %v8559 = vsel %vm4566, %v8552, %v8558
    %v8560 = vrot.slane %v6848, 4
    %v8561 = vsel %vm4566, %v8554, %v8560
    %v8562 = vrot.slane %v6924, 4
    %v8563 = vsel %vm4566, %v8556, %v8562
    %v8564 = vrot.slane %v7078, 4
    %v8565 = vsel %vm4566, %v8558, %v8564
    %v8566 = vrot.slane %v6849, 4
    %v8567 = vsel %vm4566, %v8560, %v8566
    %v8568 = vrot.slane %v6932, 4
    %v8569 = vsel %vm4566, %v8562, %v8568
    %v8570 = vrot.slane %v7080, 4
    %v8571 = vsel %vm4566, %v8564, %v8570
    %v8572 = vrot.slane %v6850, 4
    %v8573 = vsel %vm4566, %v8566, %v8572
    %v8574 = vrot.slane %v6940, 4
    %v8575 = vsel %vm4566, %v8568, %v8574
    %v8576 = vrot.slane %v7082, 4
    %v8577 = vsel %vm4566, %v8570, %v8576
    %v8578 = vrot.slane %v6851, 4
    %v8579 = vsel %vm4566, %v8572, %v8578
    %v8580 = vrot.slane %v6948, 4
    %v8581 = vsel %vm4566, %v8574, %v8580
    %v8582 = vrot.slane %v7084, 4
    %v8583 = vsel %vm4566, %v8576, %v8582
    %v8584 = vrot.slane %v6852, 4
    %v8585 = vsel %vm4566, %v8578, %v8584
    %v8586 = vrot.slane %v6956, 4
    %v8587 = vsel %vm4566, %v8580, %v8586
    %v8588 = vrot.slane %v7086, 4
    %v8589 = vsel %vm4566, %v8582, %v8588
    %v8590 = vrot.slane %v6853, 4
    %v8591 = vsel %vm4566, %v8584, %v8590
    %v8592 = vrot.slane %v6964, 4
    %v8593 = vsel %vm4566, %v8586, %v8592
    %v8594 = vrot.slane %v7088, 4
    %v8595 = vsel %vm4566, %v8588, %v8594
    %v8596 = vrot.slane %v6854, 4
    %v8597 = vsel %vm4566, %v8590, %v8596
    %v8598 = vrot.slane %v6972, 4
    %v8599 = vsel %vm4566, %v8592, %v8598
    %v8600 = vrot.slane %v7090, 4
    %v8601 = vsel %vm4566, %v8594, %v8600
    %v8602 = vrot.slane %v6855, 4
    %v8603 = vsel %vm4566, %v8596, %v8602
    %v8604 = vrot.slane %v6980, 4
    %v8605 = vsel %vm4566, %v8598, %v8604
    %v8606 = vrot.slane %v7092, 4
    %v8607 = vsel %vm4566, %v8600, %v8606
    %v8608 = vrot.slane %v6856, 4
    %v8609 = vsel %vm4566, %v8602, %v8608
    %v8610 = vrot.slane %v6988, 4
    %v8611 = vsel %vm4566, %v8604, %v8610
    %v8612 = vrot.slane %v7094, 4
    %v8613 = vsel %vm4566, %v8606, %v8612
    %v8614 = vrot.slane %v6857, 4
    %v8615 = vsel %vm4566, %v8608, %v8614
    %v8616 = vrot.slane %v6996, 4
    %v8617 = vsel %vm4566, %v8610, %v8616
    %v8618 = vrot.slane %v7096, 4
    %v8619 = vsel %vm4566, %v8612, %v8618
    %v8620 = vrot.slane %v6858, 4
    %v8621 = vsel %vm4566, %v8614, %v8620
    %v8622 = vrot.slane %v7004, 4
    %v8623 = vsel %vm4566, %v8616, %v8622
    %v8624 = vrot.slane %v7098, 4
    %v8625 = vsel %vm4566, %v8618, %v8624
    %v8626 = vrot.slane %v6859, 4
    %v8627 = vsel %vm4566, %v8620, %v8626
    %v8628 = vrot.slane %v7012, 4
    %v8629 = vsel %vm4566, %v8622, %v8628
    %v8630 = vrot.slane %v7100, 4
    %v8631 = vsel %vm4566, %v8624, %v8630
    %v8632 = vrot.slane %v6860, 4
    %v8633 = vsel %vm4566, %v8626, %v8632
    %v8634 = vrot.slane %v7020, 4
    %v8635 = vsel %vm4566, %v8628, %v8634
    %v8636 = vrot.slane %v7102, 4
    %v8637 = vsel %vm4566, %v8630, %v8636
    %v8638 = vrot.slane %v6861, 4
    %v8639 = vsel %vm4566, %v8632, %v8638
    %v8640 = vrot.slane %v7175, 4
    %v8641 = vsel %vm4566, %v8634, %v8640
    %v8642 = vrot.slane %v7187, 4
    %v8643 = vsel %vm4566, %v8636, %v8642
    %v8644 = vrot.slane %v6862, 4
    %v8645 = vsel %vm4566, %v8638, %v8644
    %v8646 = vrot.slane %v7183, 4
    %v8647 = vsel %vm4566, %v8640, %v8646
    %v8648 = vrot.slane %v7189, 4
    %v8649 = vsel %vm4566, %v8642, %v8648
    %v8650 = vrot.slane %v6863, 4
    %v8651 = vsel %vm4566, %v8644, %v8650
    %v8652 = vrot.slane %v8483, 4
    %v8653 = vsel %vm4566, %v8646, %v8652
    %v8654 = vrot.slane %v8489, 4
    %v8655 = vsel %vm4566, %v8648, %v8654
    %v8656 = vrot.slane %v6864, 4
    %v8657 = vsel %vm4566, %v8650, %v8656
    %v8658 = vrot.slane %v8486, 4
    %v8659 = vsel %vm4566, %v8652, %v8658
    %v8660 = vrot.slane %v8488, 4
    %v8661 = vsel %vm4566, %v8654, %v8660
    %v8770 = vunpack.c.l.b16 %v8491
    %v8771 = vunpack.c.l.b16 %v8492
    %v8772 = vunpack.c.l.b16 %v8493
    %v8773 = vunpack.c.l.b16 %v8494
    %v8774 = vunpack.c.l.b16 %v8495
    %v8775 = vunpack.c.l.b16 %v8496
    %v8776 = vunpack.c.l.b16 %v8497
    %v8777 = vunpack.c.l.b16 %v8498
    %v8778 = vunpack.c.l.b16 %v8499
    %v8779 = vunpack.c.l.b16 %v8500
    %v8780 = vunpack.c.l.b16 %v8501
    %v8781 = vunpack.c.l.b16 %v8502
    %v8782 = vunpack.c.l.b16 %v8503
    %v8783 = vunpack.c.l.b16 %v8504
    %v8784 = vunpack.c.l.b16 %v8505
    %v8785 = vunpack.c.l.b16 %v8506
    %v8786 = vunpack.c.l.b16 %v8507
    %v8787 = vunpack.c.l.b16 %v8508
    %v8788 = vunpack.c.l.b16 %v8509
    %v8789 = vunpack.c.l.b16 %v8510
    %v8790 = vunpack.c.l.b16 %v8511
    %v8791 = vunpack.c.l.b16 %v8512
    %v8792 = vunpack.c.l.b16 %v8513
    %v8793 = vunpack.c.l.b16 %v8514
    %v8794 = vunpack.c.l.b16 %v8515
    %v8795 = vunpack.c.l.b16 %v8516
    %v8796 = vunpack.c.l.b16 %v8517
    %v8797 = vunpack.c.l.b16 %v8518
    %v8798 = vunpack.c.l.b16 %v8519
    %v8799 = vunpack.c.l.b16 %v8520
    %v8800 = vunpack.c.l.b16 %v8521
    %v8801 = vunpack.c.l.b16 %v8522
    %v8802 = vunpack.c.l.b16 %v8523
    %v8803 = vunpack.c.l.b16 %v8524
    %v8804 = vunpack.c.l.b16 %v8525
    %v8805 = vunpack.c.l.b16 %v8526
    %v8806 = vunpack.c.l.b16 %v8527
    %v8807 = vunpack.c.l.b16 %v8528
    %v8808 = vunpack.c.l.b16 %v8529
    %v8809 = vunpack.c.l.b16 %v8530
    %v8810 = vunpack.c.l.b16 %v8531
    %v8811 = vunpack.c.l.b16 %v8532
    %v8812 = vunpack.c.l.b16 %v8533
    %v8813 = vunpack.c.l.b16 %v8534
    %v8814 = vunpack.c.l.b16 %v8535
    %v8815 = vunpack.c.l.b16 %v8536
    %v8816 = vunpack.c.l.b16 %v8537
    %v8817 = vunpack.c.l.b16 %v8538
    %v8818 = vpack.c.b16 %v8771, %v8770
    %v8819 = vpack.c.b16 %v8773, %v8772
    %v8820 = vpack.c.b16 %v8775, %v8774
    %v8821 = vpack.c.b16 %v8777, %v8776
    %v8822 = vpack.c.b16 %v8779, %v8778
    %v8823 = vpack.c.b16 %v8781, %v8780
    %v8824 = vpack.c.b16 %v8783, %v8782
    %v8825 = vpack.c.b16 %v8785, %v8784
    %v8826 = vpack.c.b16 %v8787, %v8786
    %v8827 = vpack.c.b16 %v8789, %v8788
    %v8828 = vpack.c.b16 %v8791, %v8790
    %v8829 = vpack.c.b16 %v8793, %v8792
    %v8830 = vpack.c.b16 %v8795, %v8794
    %v8831 = vpack.c.b16 %v8797, %v8796
    %v8832 = vpack.c.b16 %v8799, %v8798
    %v8833 = vpack.c.b16 %v8801, %v8800
    %v8834 = vpack.c.b16 %v8803, %v8802
    %v8835 = vpack.c.b16 %v8805, %v8804
    %v8836 = vpack.c.b16 %v8807, %v8806
    %v8837 = vpack.c.b16 %v8809, %v8808
    %v8838 = vpack.c.b16 %v8811, %v8810
    %v8839 = vpack.c.b16 %v8813, %v8812
    %v8840 = vpack.c.b16 %v8815, %v8814
    %v8841 = vpack.c.b16 %v8817, %v8816
    %8866 = vmatprep.subr.bf16.mxu0 0
    %8867 = vmatpush1.bf16.msra.mxu0 %v8818
    %8868 = vmatprep.subr.bf16.mxu0 0
    %8869 = vmatpush1.bf16.msra.mxu0 %v8819
    %8870 = vmatprep.subr.bf16.mxu0 0
    %8871 = vmatpush1.bf16.msra.mxu0 %v8820
    %8872 = vmatprep.subr.bf16.mxu0 0
    %8873 = vmatpush1.bf16.msra.mxu0 %v8821
    %8874 = vmatprep.subr.bf16.mxu0 0
    %8875 = vmatpush1.bf16.msra.mxu0 %v8822
    %8876 = vmatprep.subr.bf16.mxu0 0
    %8877 = vmatpush1.bf16.msra.mxu0 %v8823
    %8878 = vmatprep.subr.bf16.mxu0 0
    %8879 = vmatpush1.bf16.msra.mxu0 %v8824
    %8880 = vmatprep.subr.bf16.mxu0 0
    %8881 = vmatpush1.bf16.msra.mxu0 %v8825
    %8882 = vmatprep.subr.bf16.mxu0 0
    %8883 = vmatpush1.bf16.msra.mxu0 %v8826
    %8884 = vmatprep.subr.bf16.mxu0 0
    %8885 = vmatpush1.bf16.msra.mxu0 %v8827
    %8886 = vmatprep.subr.bf16.mxu0 0
    %8887 = vmatpush1.bf16.msra.mxu0 %v8828
    %8888 = vmatprep.subr.bf16.mxu0 0
    %8889 = vmatpush1.bf16.msra.mxu0 %v8829
    %8890 = vmatprep.subr.bf16.mxu0 0
    %8891 = vmatpush1.bf16.msra.mxu0 %v8830
    %8892 = vmatprep.subr.bf16.mxu0 0
    %8893 = vmatpush1.bf16.msra.mxu0 %v8831
    %8894 = vmatprep.subr.bf16.mxu0 0
    %8895 = vmatpush1.bf16.msra.mxu0 %v8832
    %8896 = vmatprep.subr.bf16.mxu0 0
    %8897 = vmatpush1.bf16.msra.mxu0 %v8833
    %8898 = vmatprep.mubr.bf16.mxu0 %v8544
    %8899 = vmatmul.mubr.bf16.gmra.mrb[0].mxu0 %v8541
    %v8900 = vpop.f32.mrb[0].mxu0
    %v8901 = vadd.f32 0.0, %v8900
    %v8902 = vpop.f32.mrb[0].mxu0
    %v8903 = vpop.f32.mrb[0].mxu0
    %v8904 = vadd.f32 0.0, %v8903
    %v8905 = vpop.f32.mrb[0].mxu0
    %8906 = vmatprep.mubr.bf16.mxu0 %v8551
    %8907 = vmatmul.mubr.bf16.gmra.mrb[0].mxu0 %v8549
    %v8908 = vpop.f32.mrb[0].mxu0
    %v8909 = vadd.f32 0.0, %v8908
    %v8910 = vpop.f32.mrb[0].mxu0
    %v8911 = vpop.f32.mrb[0].mxu0
    %v8912 = vadd.f32 0.0, %v8911
    %v8913 = vpop.f32.mrb[0].mxu0
    %8914 = vmatprep.mubr.bf16.mxu0 %v8557
    %8915 = vmatmul.mubr.bf16.gmra.mrb[0].mxu0 %v8555
    %v8916 = vpop.f32.mrb[0].mxu0
    %v8917 = vadd.f32 0.0, %v8916
    %v8918 = vpop.f32.mrb[0].mxu0
    %v8919 = vpop.f32.mrb[0].mxu0
    %v8920 = vadd.f32 0.0, %v8919
    %v8921 = vpop.f32.mrb[0].mxu0
    %8922 = vmatprep.mubr.bf16.mxu0 %v8563
    %8923 = vmatmul.mubr.bf16.gmra.mrb[0].mxu0 %v8561
    %v8924 = vpop.f32.mrb[0].mxu0
    %v8925 = vadd.f32 0.0, %v8924
    %v8926 = vpop.f32.mrb[0].mxu0
    %v8927 = vpop.f32.mrb[0].mxu0
    %v8928 = vadd.f32 0.0, %v8927
    %v8929 = vpop.f32.mrb[0].mxu0
    %8930 = vmatprep.mubr.bf16.mxu0 %v8569
    %8931 = vmatmul.mubr.bf16.gmra.mrb[0].mxu0 %v8567
    %v8932 = vpop.f32.mrb[0].mxu0
    %v8933 = vadd.f32 0.0, %v8932
    %v8934 = vpop.f32.mrb[0].mxu0
    %v8935 = vpop.f32.mrb[0].mxu0
    %v8936 = vadd.f32 0.0, %v8935
    %v8937 = vpop.f32.mrb[0].mxu0
    %8938 = vmatprep.mubr.bf16.mxu0 %v8575
    %8939 = vmatmul.mubr.bf16.gmra.mrb[0].mxu0 %v8573
    %v8940 = vpop.f32.mrb[0].mxu0
    %v8941 = vadd.f32 0.0, %v8940
    %v8942 = vpop.f32.mrb[0].mxu0
    %v8943 = vpop.f32.mrb[0].mxu0
    %v8944 = vadd.f32 0.0, %v8943
    %v8945 = vpop.f32.mrb[0].mxu0
    %8946 = vmatprep.mubr.bf16.mxu0 %v8581
    %8947 = vmatmul.mubr.bf16.gmra.mrb[0].mxu0 %v8579
    %v8948 = vpop.f32.mrb[0].mxu0
    %v8949 = vadd.f32 0.0, %v8948
    %v8950 = vpop.f32.mrb[0].mxu0
    %v8951 = vpop.f32.mrb[0].mxu0
    %v8952 = vadd.f32 0.0, %v8951
    %v8953 = vpop.f32.mrb[0].mxu0
    %8954 = vmatprep.mubr.bf16.mxu0 %v8587
    %8955 = vmatmul.mubr.bf16.gmra.mrb[0].mxu0 %v8585
    %v8956 = vpop.f32.mrb[0].mxu0
    %v8957 = vadd.f32 0.0, %v8956
    %v8958 = vpop.f32.mrb[0].mxu0
    %v8959 = vpop.f32.mrb[0].mxu0
    %v8960 = vadd.f32 0.0, %v8959
    %v8961 = vpop.f32.mrb[0].mxu0
    %8962 = vmatprep.mubr.bf16.mxu0 %v8593
    %8963 = vmatmul.mubr.bf16.gmra.mrb[0].mxu0 %v8591
    %v8964 = vpop.f32.mrb[0].mxu0
    %v8965 = vadd.f32 0.0, %v8964
    %v8966 = vpop.f32.mrb[0].mxu0
    %v8967 = vpop.f32.mrb[0].mxu0
    %v8968 = vadd.f32 0.0, %v8967
    %v8969 = vpop.f32.mrb[0].mxu0
    %8970 = vmatprep.mubr.bf16.mxu0 %v8599
    %8971 = vmatmul.mubr.bf16.gmra.mrb[0].mxu0 %v8597
    %v8972 = vpop.f32.mrb[0].mxu0
    %v8973 = vadd.f32 0.0, %v8972
    %v8974 = vpop.f32.mrb[0].mxu0
    %v8975 = vpop.f32.mrb[0].mxu0
    %v8976 = vadd.f32 0.0, %v8975
    %v8977 = vpop.f32.mrb[0].mxu0
    %8978 = vmatprep.mubr.bf16.mxu0 %v8605
    %8979 = vmatmul.mubr.bf16.gmra.mrb[0].mxu0 %v8603
    %v8980 = vpop.f32.mrb[0].mxu0
    %v8981 = vadd.f32 0.0, %v8980
    %v8982 = vpop.f32.mrb[0].mxu0
    %v8983 = vpop.f32.mrb[0].mxu0
    %v8984 = vadd.f32 0.0, %v8983
    %v8985 = vpop.f32.mrb[0].mxu0
    %8986 = vmatprep.mubr.bf16.mxu0 %v8611
    %8987 = vmatmul.mubr.bf16.gmra.mrb[0].mxu0 %v8609
    %v8988 = vpop.f32.mrb[0].mxu0
    %v8989 = vadd.f32 0.0, %v8988
    %v8990 = vpop.f32.mrb[0].mxu0
    %v8991 = vpop.f32.mrb[0].mxu0
    %v8992 = vadd.f32 0.0, %v8991
    %v8993 = vpop.f32.mrb[0].mxu0
    %8994 = vmatprep.mubr.bf16.mxu0 %v8617
    %8995 = vmatmul.mubr.bf16.gmra.mrb[0].mxu0 %v8615
    %v8996 = vpop.f32.mrb[0].mxu0
    %v8997 = vadd.f32 0.0, %v8996
    %v8998 = vpop.f32.mrb[0].mxu0
    %v8999 = vpop.f32.mrb[0].mxu0
    %v9000 = vadd.f32 0.0, %v8999
    %v9001 = vpop.f32.mrb[0].mxu0
    %9002 = vmatprep.mubr.bf16.mxu0 %v8623
    %9003 = vmatmul.mubr.bf16.gmra.mrb[0].mxu0 %v8621
    %v9004 = vpop.f32.mrb[0].mxu0
    %v9005 = vadd.f32 0.0, %v9004
    %v9006 = vpop.f32.mrb[0].mxu0
    %v9007 = vpop.f32.mrb[0].mxu0
    %v9008 = vadd.f32 0.0, %v9007
    %v9009 = vpop.f32.mrb[0].mxu0
    %9010 = vmatprep.mubr.bf16.mxu0 %v8629
    %9011 = vmatmul.mubr.bf16.gmra.mrb[0].mxu0 %v8627
    %v9012 = vpop.f32.mrb[0].mxu0
    %v9013 = vadd.f32 0.0, %v9012
    %v9014 = vpop.f32.mrb[0].mxu0
    %v9015 = vpop.f32.mrb[0].mxu0
    %v9016 = vadd.f32 0.0, %v9015
    %v9017 = vpop.f32.mrb[0].mxu0
    %9018 = vmatprep.mubr.bf16.mxu0 %v8635
    %9019 = vmatmul.mubr.bf16.gmra.mrb[0].mxu0 %v8633
    %v9020 = vpop.f32.mrb[0].mxu0
    %v9021 = vadd.f32 0.0, %v9020
    %v9022 = vpop.f32.mrb[0].mxu0
    %v9023 = vpop.f32.mrb[0].mxu0
    %v9024 = vadd.f32 0.0, %v9023
    %v9025 = vpop.f32.mrb[0].mxu0
    %9026 = vmatprep.mubr.bf16.mxu0 %v8641
    %9027 = vmatmul.mubr.bf16.gmra.mrb[0].mxu0 %v8639
    %v9028 = vpop.f32.mrb[0].mxu0
    %v9029 = vadd.f32 0.0, %v9028
    %v9030 = vpop.f32.mrb[0].mxu0
    %v9031 = vpop.f32.mrb[0].mxu0
    %v9032 = vadd.f32 0.0, %v9031
    %v9033 = vpop.f32.mrb[0].mxu0
    %9034 = vmatprep.mubr.bf16.mxu0 %v8647
    %9035 = vmatmul.mubr.bf16.gmra.mrb[0].mxu0 %v8645
    %v9036 = vpop.f32.mrb[0].mxu0
    %v9037 = vadd.f32 0.0, %v9036
    %v9038 = vpop.f32.mrb[0].mxu0
    %v9039 = vpop.f32.mrb[0].mxu0
    %v9040 = vadd.f32 0.0, %v9039
    %v9041 = vpop.f32.mrb[0].mxu0
    %9042 = vmatprep.mubr.bf16.mxu0 %v8653
    %9043 = vmatmul.mubr.bf16.gmra.mrb[0].mxu0 %v8651
    %v9044 = vpop.f32.mrb[0].mxu0
    %v9045 = vadd.f32 0.0, %v9044
    %v9046 = vpop.f32.mrb[0].mxu0
    %v9047 = vpop.f32.mrb[0].mxu0
    %v9048 = vadd.f32 0.0, %v9047
    %v9049 = vpop.f32.mrb[0].mxu0
    %9050 = vmatprep.mubr.bf16.mxu0 %v8659
    %9051 = vmatmul.mubr.bf16.gmra.mrb[0].mxu0 %v8657
    %v9052 = vpop.f32.mrb[0].mxu0
    %v9053 = vadd.f32 0.0, %v9052
    %v9054 = vpop.f32.mrb[0].mxu0
    %v9055 = vpop.f32.mrb[0].mxu0
    %v9056 = vadd.f32 0.0, %v9055
    %v9057 = vpop.f32.mrb[0].mxu0
    %9058 = vdwg.mxu0
    %9059 = vmatprep.subr.bf16.mxu0 0
    %9060 = vmatpush1.bf16.msra.mxu0 %v8834
    %9061 = vmatprep.subr.bf16.mxu0 0
    %9062 = vmatpush1.bf16.msra.mxu0 %v8835
    %9063 = vmatprep.subr.bf16.mxu0 0
    %9064 = vmatpush1.bf16.msra.mxu0 %v8836
    %9065 = vmatprep.subr.bf16.mxu0 0
    %9066 = vmatpush1.bf16.msra.mxu0 %v8837
    %9067 = vmatprep.subr.bf16.mxu0 0
    %9068 = vmatpush1.bf16.msra.mxu0 %v8838
    %9069 = vmatprep.subr.bf16.mxu0 0
    %9070 = vmatpush1.bf16.msra.mxu0 %v8839
    %9071 = vmatprep.subr.bf16.mxu0 0
    %9072 = vmatpush1.bf16.msra.mxu0 %v8840
    %9073 = vmatprep.subr.bf16.mxu0 0
    %9074 = vmatpush1.bf16.msra.mxu0 %v8841
    %9075 = vmatprep.subr.bf16.mxu0 0
    %9076 = vmatpush1.bf16.msra.mxu0 0
    %9077 = vmatprep.subr.bf16.mxu0 0
    %9078 = vmatpush1.bf16.msra.mxu0 0
    %9079 = vmatprep.subr.bf16.mxu0 0
    %9080 = vmatpush1.bf16.msra.mxu0 0
    %9081 = vmatprep.subr.bf16.mxu0 0
    %9082 = vmatpush1.bf16.msra.mxu0 0
    %9083 = vmatprep.subr.bf16.mxu0 0
    %9084 = vmatpush1.bf16.msra.mxu0 0
    %9085 = vmatprep.subr.bf16.mxu0 0
    %9086 = vmatpush1.bf16.msra.mxu0 0
    %9087 = vmatprep.subr.bf16.mxu0 0
    %9088 = vmatpush1.bf16.msra.mxu0 0
    %9089 = vmatprep.subr.bf16.mxu0 0
    %9090 = vmatpush1.bf16.msra.mxu0 0
    %9091 = vmatprep.mubr.bf16.mxu0 0
    %9092 = vmatmul.mubr.bf16.gmra.mrb[0].mxu0 %v8547
    %v9093 = vpop.f32.mrb[0].mxu0
    %v9094 = vadd.f32 %v8901, %v9093
    %v9095 = vpop.f32.mrb[0].mxu0
    %v9096 = vpop.f32.mrb[0].mxu0
    %v9097 = vadd.f32 %v8904, %v9096
    %v9098 = vpop.f32.mrb[0].mxu0
    %9099 = vmatprep.mubr.bf16.mxu0 0
    %9100 = vmatmul.mubr.bf16.gmra.mrb[0].mxu0 %v8553
    %v9101 = vpop.f32.mrb[0].mxu0
    %v9102 = vadd.f32 %v8909, %v9101
    %v9103 = vpop.f32.mrb[0].mxu0
    %v9104 = vpop.f32.mrb[0].mxu0
    %v9105 = vadd.f32 %v8912, %v9104
    %v9106 = vpop.f32.mrb[0].mxu0
    %9107 = vmatprep.mubr.bf16.mxu0 0
    %9108 = vmatmul.mubr.bf16.gmra.mrb[0].mxu0 %v8559
    %v9109 = vpop.f32.mrb[0].mxu0
    %v9110 = vadd.f32 %v8917, %v9109
    %v9111 = vpop.f32.mrb[0].mxu0
    %v9112 = vpop.f32.mrb[0].mxu0
    %v9113 = vadd.f32 %v8920, %v9112
    %v9114 = vpop.f32.mrb[0].mxu0
    %9115 = vmatprep.mubr.bf16.mxu0 0
    %9116 = vmatmul.mubr.bf16.gmra.mrb[0].mxu0 %v8565
    %v9117 = vpop.f32.mrb[0].mxu0
    %v9118 = vadd.f32 %v8925, %v9117
    %v9119 = vpop.f32.mrb[0].mxu0
    %v9120 = vpop.f32.mrb[0].mxu0
    %v9121 = vadd.f32 %v8928, %v9120
    %v9122 = vpop.f32.mrb[0].mxu0
    %9123 = vmatprep.mubr.bf16.mxu0 0
    %9124 = vmatmul.mubr.bf16.gmra.mrb[0].mxu0 %v8571
    %v9125 = vpop.f32.mrb[0].mxu0
    %v9126 = vadd.f32 %v8933, %v9125
    %v9127 = vpop.f32.mrb[0].mxu0
    %v9128 = vpop.f32.mrb[0].mxu0
    %v9129 = vadd.f32 %v8936, %v9128
    %v9130 = vpop.f32.mrb[0].mxu0
    %9131 = vmatprep.mubr.bf16.mxu0 0
    %9132 = vmatmul.mubr.bf16.gmra.mrb[0].mxu0 %v8577
    %v9133 = vpop.f32.mrb[0].mxu0
    %v9134 = vadd.f32 %v8941, %v9133
    %v9135 = vpop.f32.mrb[0].mxu0
    %v9136 = vpop.f32.mrb[0].mxu0
    %v9137 = vadd.f32 %v8944, %v9136
    %v9138 = vpop.f32.mrb[0].mxu0
    %9139 = vmatprep.mubr.bf16.mxu0 0
    %9140 = vmatmul.mubr.bf16.gmra.mrb[0].mxu0 %v8583
    %v9141 = vpop.f32.mrb[0].mxu0
    %v9142 = vadd.f32 %v8949, %v9141
    %v9143 = vpop.f32.mrb[0].mxu0
    %v9144 = vpop.f32.mrb[0].mxu0
    %v9145 = vadd.f32 %v8952, %v9144
    %v9146 = vpop.f32.mrb[0].mxu0
    %9147 = vmatprep.mubr.bf16.mxu0 0
    %9148 = vmatmul.mubr.bf16.gmra.mrb[0].mxu0 %v8589
    %v9149 = vpop.f32.mrb[0].mxu0
    %v9150 = vadd.f32 %v8957, %v9149
    %v9151 = vpop.f32.mrb[0].mxu0
    %v9152 = vpop.f32.mrb[0].mxu0
    %v9153 = vadd.f32 %v8960, %v9152
    %v9154 = vpop.f32.mrb[0].mxu0
    %9155 = vmatprep.mubr.bf16.mxu0 0
    %9156 = vmatmul.mubr.bf16.gmra.mrb[0].mxu0 %v8595
    %v9157 = vpop.f32.mrb[0].mxu0
    %v9158 = vadd.f32 %v8965, %v9157
    %v9159 = vpop.f32.mrb[0].mxu0
    %v9160 = vpop.f32.mrb[0].mxu0
    %v9161 = vadd.f32 %v8968, %v9160
    %v9162 = vpop.f32.mrb[0].mxu0
    %9163 = vmatprep.mubr.bf16.mxu0 0
    %9164 = vmatmul.mubr.bf16.gmra.mrb[0].mxu0 %v8601
    %v9165 = vpop.f32.mrb[0].mxu0
    %v9166 = vadd.f32 %v8973, %v9165
    %v9167 = vpop.f32.mrb[0].mxu0
    %v9168 = vpop.f32.mrb[0].mxu0
    %v9169 = vadd.f32 %v8976, %v9168
    %v9170 = vpop.f32.mrb[0].mxu0
    %9171 = vmatprep.mubr.bf16.mxu0 0
    %9172 = vmatmul.mubr.bf16.gmra.mrb[0].mxu0 %v8607
    %v9173 = vpop.f32.mrb[0].mxu0
    %v9174 = vadd.f32 %v8981, %v9173
    %v9175 = vpop.f32.mrb[0].mxu0
    %v9176 = vpop.f32.mrb[0].mxu0
    %v9177 = vadd.f32 %v8984, %v9176
    %v9178 = vpop.f32.mrb[0].mxu0
    %9179 = vmatprep.mubr.bf16.mxu0 0
    %9180 = vmatmul.mubr.bf16.gmra.mrb[0].mxu0 %v8613
    %v9181 = vpop.f32.mrb[0].mxu0
    %v9182 = vadd.f32 %v8989, %v9181
    %v9183 = vpop.f32.mrb[0].mxu0
    %v9184 = vpop.f32.mrb[0].mxu0
    %v9185 = vadd.f32 %v8992, %v9184
    %v9186 = vpop.f32.mrb[0].mxu0
    %9187 = vmatprep.mubr.bf16.mxu0 0
    %9188 = vmatmul.mubr.bf16.gmra.mrb[0].mxu0 %v8619
    %v9189 = vpop.f32.mrb[0].mxu0
    %v9190 = vadd.f32 %v8997, %v9189
    %v9191 = vpop.f32.mrb[0].mxu0
    %v9192 = vpop.f32.mrb[0].mxu0
    %v9193 = vadd.f32 %v9000, %v9192
    %v9194 = vpop.f32.mrb[0].mxu0
    %9195 = vmatprep.mubr.bf16.mxu0 0
    %9196 = vmatmul.mubr.bf16.gmra.mrb[0].mxu0 %v8625
    %v9197 = vpop.f32.mrb[0].mxu0
    %v9198 = vadd.f32 %v9005, %v9197
    %v9199 = vpop.f32.mrb[0].mxu0
    %v9200 = vpop.f32.mrb[0].mxu0
    %v9201 = vadd.f32 %v9008, %v9200
    %v9202 = vpop.f32.mrb[0].mxu0
    %9203 = vmatprep.mubr.bf16.mxu0 0
    %9204 = vmatmul.mubr.bf16.gmra.mrb[0].mxu0 %v8631
    %v9205 = vpop.f32.mrb[0].mxu0
    %v9206 = vadd.f32 %v9013, %v9205
    %v9207 = vpop.f32.mrb[0].mxu0
    %v9208 = vpop.f32.mrb[0].mxu0
    %v9209 = vadd.f32 %v9016, %v9208
    %v9210 = vpop.f32.mrb[0].mxu0
    %9211 = vmatprep.mubr.bf16.mxu0 0
    %9212 = vmatmul.mubr.bf16.gmra.mrb[0].mxu0 %v8637
    %v9213 = vpop.f32.mrb[0].mxu0
    %v9214 = vadd.f32 %v9021, %v9213
    %v9215 = vpop.f32.mrb[0].mxu0
    %v9216 = vpop.f32.mrb[0].mxu0
    %v9217 = vadd.f32 %v9024, %v9216
    %v9218 = vpop.f32.mrb[0].mxu0
    %9219 = vmatprep.mubr.bf16.mxu0 0
    %9220 = vmatmul.mubr.bf16.gmra.mrb[0].mxu0 %v8643
    %v9221 = vpop.f32.mrb[0].mxu0
    %v9222 = vadd.f32 %v9029, %v9221
    %v9223 = vpop.f32.mrb[0].mxu0
    %v9224 = vpop.f32.mrb[0].mxu0
    %v9225 = vadd.f32 %v9032, %v9224
    %v9226 = vpop.f32.mrb[0].mxu0
    %9227 = vmatprep.mubr.bf16.mxu0 0
    %9228 = vmatmul.mubr.bf16.gmra.mrb[0].mxu0 %v8649
    %v9229 = vpop.f32.mrb[0].mxu0
    %v9230 = vadd.f32 %v9037, %v9229
    %v9231 = vpop.f32.mrb[0].mxu0
    %v9232 = vpop.f32.mrb[0].mxu0
    %v9233 = vadd.f32 %v9040, %v9232
    %v9234 = vpop.f32.mrb[0].mxu0
    %9235 = vmatprep.mubr.bf16.mxu0 0
    %9236 = vmatmul.mubr.bf16.gmra.mrb[0].mxu0 %v8655
    %v9237 = vpop.f32.mrb[0].mxu0
    %v9238 = vadd.f32 %v9045, %v9237
    %v9239 = vpop.f32.mrb[0].mxu0
    %v9240 = vpop.f32.mrb[0].mxu0
    %v9241 = vadd.f32 %v9048, %v9240
    %v9242 = vpop.f32.mrb[0].mxu0
    %9243 = vmatprep.mubr.bf16.mxu0 0
    %9244 = vmatmul.mubr.bf16.gmra.mrb[0].mxu0 %v8661
    %v9245 = vpop.f32.mrb[0].mxu0
    %v9246 = vadd.f32 %v9053, %v9245
    %v9247 = vpop.f32.mrb[0].mxu0
    %v9248 = vpop.f32.mrb[0].mxu0
    %v9249 = vadd.f32 %v9056, %v9248
    %v9250 = vpop.f32.mrb[0].mxu0
    %9251 = vdwg.mxu0
    %v9252 = vadd.f32 %v8318, %v9094
    %v9253 = vadd.f32 %v8321, %v9097
    %v9254 = vadd.f32 %v8326, %v9102
    %v9255 = vadd.f32 %v8329, %v9105
    %v9256 = vadd.f32 %v8334, %v9110
    %v9257 = vadd.f32 %v8337, %v9113
    %v9258 = vadd.f32 %v8342, %v9118
    %v9259 = vadd.f32 %v8345, %v9121
    %v9260 = vadd.f32 %v8350, %v9126
    %v9261 = vadd.f32 %v8353, %v9129
    %v9262 = vadd.f32 %v8358, %v9134
    %v9263 = vadd.f32 %v8361, %v9137
    %v9264 = vadd.f32 %v8366, %v9142
    %v9265 = vadd.f32 %v8369, %v9145
    %v9266 = vadd.f32 %v8374, %v9150
    %v9267 = vadd.f32 %v8377, %v9153
    %v9268 = vadd.f32 %v8382, %v9158
    %v9269 = vadd.f32 %v8385, %v9161
    %v9270 = vadd.f32 %v8390, %v9166
    %v9271 = vadd.f32 %v8393, %v9169
    %v9272 = vadd.f32 %v8398, %v9174
    %v9273 = vadd.f32 %v8401, %v9177
    %v9274 = vadd.f32 %v8406, %v9182
    %v9275 = vadd.f32 %v8409, %v9185
    %v9276 = vadd.f32 %v8414, %v9190
    %v9277 = vadd.f32 %v8417, %v9193
    %v9278 = vadd.f32 %v8422, %v9198
    %v9279 = vadd.f32 %v8425, %v9201
    %v9280 = vadd.f32 %v8430, %v9206
    %v9281 = vadd.f32 %v8433, %v9209
    %v9282 = vadd.f32 %v8438, %v9214
    %v9283 = vadd.f32 %v8441, %v9217
    %v9284 = vadd.f32 %v8446, %v9222
    %v9285 = vadd.f32 %v8449, %v9225
    %v9286 = vadd.f32 %v8454, %v9230
    %v9287 = vadd.f32 %v8457, %v9233
    %v9288 = vadd.f32 %v8462, %v9238
    %v9289 = vadd.f32 %v8465, %v9241
    %v9290 = vadd.f32 %v8470, %v9246
    %v9291 = vadd.f32 %v8473, %v9249
    %v9292 = vld [vmem:[#allocation23] sm:$0x1]
    %v9294 = vlaneseq
    %v9295 = vshrl.u32 %v9294, 7
    %v9296 = vsub.s32 0, %v9295
    %v9297 = vrot.slane %v9292, %v9296
    %v9299 = vadd.f32 %v9252, %v9297
    %v9300 = vadd.f32 %v9253, %v9297
    %v9301 = vadd.f32 %v9254, %v9297
    %v9302 = vadd.f32 %v9255, %v9297
    %v9303 = vadd.f32 %v9256, %v9297
    %v9304 = vadd.f32 %v9257, %v9297
    %v9305 = vadd.f32 %v9258, %v9297
    %v9306 = vadd.f32 %v9259, %v9297
    %v9307 = vadd.f32 %v9260, %v9297
    %v9308 = vadd.f32 %v9261, %v9297
    %v9309 = vadd.f32 %v9262, %v9297
    %v9310 = vadd.f32 %v9263, %v9297
    %v9311 = vadd.f32 %v9264, %v9297
    %v9312 = vadd.f32 %v9265, %v9297
    %v9313 = vadd.f32 %v9266, %v9297
    %v9314 = vadd.f32 %v9267, %v9297
    %v9315 = vadd.f32 %v9268, %v9297
    %v9316 = vadd.f32 %v9269, %v9297
    %v9317 = vadd.f32 %v9270, %v9297
    %v9318 = vadd.f32 %v9271, %v9297
    %v9319 = vadd.f32 %v9272, %v9297
    %v9320 = vadd.f32 %v9273, %v9297
    %v9321 = vadd.f32 %v9274, %v9297
    %v9322 = vadd.f32 %v9275, %v9297
    %v9323 = vadd.f32 %v9276, %v9297
    %v9324 = vadd.f32 %v9277, %v9297
    %v9325 = vadd.f32 %v9278, %v9297
    %v9326 = vadd.f32 %v9279, %v9297
    %v9327 = vadd.f32 %v9280, %v9297
    %v9328 = vadd.f32 %v9281, %v9297
    %v9329 = vadd.f32 %v9282, %v9297
    %v9330 = vadd.f32 %v9283, %v9297
    %v9331 = vadd.f32 %v9284, %v9297
    %v9332 = vadd.f32 %v9285, %v9297
    %v9333 = vadd.f32 %v9286, %v9297
    %v9334 = vadd.f32 %v9287, %v9297
    %v9335 = vadd.f32 %v9288, %v9297
    %v9336 = vadd.f32 %v9289, %v9297
    %v9337 = vadd.f32 %v9290, %v9297
    %v9338 = vadd.f32 %v9291, %v9297
    %vm9379 = vcmask 1041408
    %v9380 = vrot.slane %v9299, 6
    %v9381 = vrot.slane %v9300, 6
    %v9382 = vsel %vm9379, %v9380, %v9381
    %v9383 = vrot.slane %v9301, 6
    %v9384 = vsel %vm9379, %v9381, %v9383
    %v9385 = vrot.slane %v9302, 6
    %v9386 = vsel %vm9379, %v9383, %v9385
    %v9387 = vrot.slane %v9303, 6
    %v9388 = vsel %vm9379, %v9385, %v9387
    %v9389 = vrot.slane %v9304, 6
    %v9390 = vsel %vm9379, %v9387, %v9389
    %v9391 = vrot.slane %v9305, 6
    %v9392 = vsel %vm9379, %v9389, %v9391
    %v9393 = vrot.slane %v9306, 6
    %v9394 = vsel %vm9379, %v9391, %v9393
    %v9395 = vrot.slane %v9307, 6
    %v9396 = vsel %vm9379, %v9393, %v9395
    %v9397 = vrot.slane %v9308, 6
    %v9398 = vsel %vm9379, %v9395, %v9397
    %v9399 = vrot.slane %v9309, 6
    %v9400 = vsel %vm9379, %v9397, %v9399
    %v9401 = vrot.slane %v9310, 6
    %v9402 = vsel %vm9379, %v9399, %v9401
    %v9403 = vrot.slane %v9311, 6
    %v9404 = vsel %vm9379, %v9401, %v9403
    %v9405 = vrot.slane %v9312, 6
    %v9406 = vsel %vm9379, %v9403, %v9405
    %v9407 = vrot.slane %v9313, 6
    %v9408 = vsel %vm9379, %v9405, %v9407
    %v9409 = vrot.slane %v9314, 6
    %v9410 = vsel %vm9379, %v9407, %v9409
    %v9411 = vrot.slane %v9315, 6
    %v9412 = vsel %vm9379, %v9409, %v9411
    %v9413 = vrot.slane %v9316, 6
    %v9414 = vsel %vm9379, %v9411, %v9413
    %v9415 = vrot.slane %v9317, 6
    %v9416 = vsel %vm9379, %v9413, %v9415
    %v9417 = vrot.slane %v9318, 6
    %v9418 = vsel %vm9379, %v9415, %v9417
    %v9419 = vrot.slane %v9319, 6
    %v9420 = vsel %vm9379, %v9417, %v9419
    %v9421 = vrot.slane %v9320, 6
    %v9422 = vsel %vm9379, %v9419, %v9421
    %v9423 = vrot.slane %v9321, 6
    %v9424 = vsel %vm9379, %v9421, %v9423
    %v9425 = vrot.slane %v9322, 6
    %v9426 = vsel %vm9379, %v9423, %v9425
    %v9427 = vrot.slane %v9323, 6
    %v9428 = vsel %vm9379, %v9425, %v9427
    %v9429 = vrot.slane %v9324, 6
    %v9430 = vsel %vm9379, %v9427, %v9429
    %v9431 = vrot.slane %v9325, 6
    %v9432 = vsel %vm9379, %v9429, %v9431
    %v9433 = vrot.slane %v9326, 6
    %v9434 = vsel %vm9379, %v9431, %v9433
    %v9435 = vrot.slane %v9327, 6
    %v9436 = vsel %vm9379, %v9433, %v9435
    %v9437 = vrot.slane %v9328, 6
    %v9438 = vsel %vm9379, %v9435, %v9437
    %v9439 = vrot.slane %v9329, 6
    %v9440 = vsel %vm9379, %v9437, %v9439
    %v9441 = vrot.slane %v9330, 6
    %v9442 = vsel %vm9379, %v9439, %v9441
    %v9443 = vrot.slane %v9331, 6
    %v9444 = vsel %vm9379, %v9441, %v9443
    %v9445 = vrot.slane %v9332, 6
    %v9446 = vsel %vm9379, %v9443, %v9445
    %v9447 = vrot.slane %v9333, 6
    %v9448 = vsel %vm9379, %v9445, %v9447
    %v9449 = vrot.slane %v9334, 6
    %v9450 = vsel %vm9379, %v9447, %v9449
    %v9451 = vrot.slane %v9335, 6
    %v9452 = vsel %vm9379, %v9449, %v9451
    %v9453 = vrot.slane %v9336, 6
    %v9454 = vsel %vm9379, %v9451, %v9453
    %v9455 = vrot.slane %v9337, 6
    %v9456 = vsel %vm9379, %v9453, %v9455
    %v9457 = vrot.slane %v9338, 6
    %v9458 = vsel %vm9379, %v9455, %v9457
    %v9499 = vadd.f32 %v232, %v9380
    %v9500 = vadd.f32 %v233, %v9382
    %v9501 = vadd.f32 %v234, %v9384
    %v9502 = vadd.f32 %v235, %v9386
    %v9503 = vadd.f32 %v236, %v9388
    %v9504 = vadd.f32 %v237, %v9390
    %v9505 = vadd.f32 %v238, %v9392
    %v9506 = vadd.f32 %v239, %v9394
    %v9507 = vadd.f32 %v240, %v9396
    %v9508 = vadd.f32 %v241, %v9398
    %v9509 = vadd.f32 %v242, %v9400
    %v9510 = vadd.f32 %v243, %v9402
    %v9511 = vadd.f32 %v244, %v9404
    %v9512 = vadd.f32 %v245, %v9406
    %v9513 = vadd.f32 %v246, %v9408
    %v9514 = vadd.f32 %v247, %v9410
    %v9515 = vadd.f32 %v248, %v9412
    %v9516 = vadd.f32 %v249, %v9414
    %v9517 = vadd.f32 %v250, %v9416
    %v9518 = vadd.f32 %v251, %v9418
    %v9519 = vadd.f32 %v252, %v9420
    %v9520 = vadd.f32 %v253, %v9422
    %v9521 = vadd.f32 %v254, %v9424
    %v9522 = vadd.f32 %v255, %v9426
    %v9523 = vadd.f32 %v256, %v9428
    %v9524 = vadd.f32 %v257, %v9430
    %v9525 = vadd.f32 %v258, %v9432
    %v9526 = vadd.f32 %v259, %v9434
    %v9527 = vadd.f32 %v260, %v9436
    %v9528 = vadd.f32 %v261, %v9438
    %v9529 = vadd.f32 %v262, %v9440
    %v9530 = vadd.f32 %v263, %v9442
    %v9531 = vadd.f32 %v264, %v9444
    %v9532 = vadd.f32 %v265, %v9446
    %v9533 = vadd.f32 %v266, %v9448
    %v9534 = vadd.f32 %v267, %v9450
    %v9535 = vadd.f32 %v268, %v9452
    %v9536 = vadd.f32 %v269, %v9454
    %v9537 = vadd.f32 %v270, %v9456
    %v9538 = vadd.f32 %v271, %v9458
    %9539 = vst [vmem:[#allocation25 - $0x2] sm:$0xfc] %v9499
    %9540 = vst [vmem:[#allocation25 + $0x6] sm:$0xff] %v9500
    %9541 = vst [vmem:[#allocation25 + $0xe] sm:$0xff] %v9501
    %9542 = vst [vmem:[#allocation25 + $0x16] sm:$0xff] %v9502
    %9543 = vst [vmem:[#allocation25 + $0x1e] sm:$0xff] %v9503
    %9544 = vst [vmem:[#allocation25 + $0x26] sm:$0xff] %v9504
    %9545 = vst [vmem:[#allocation25 + $0x2e] sm:$0xff] %v9505
    %9546 = vst [vmem:[#allocation25 + $0x36] sm:$0xff] %v9506
    %9547 = vst [vmem:[#allocation25 + $0x3e] sm:$0xff] %v9507
    %9548 = vst [vmem:[#allocation25 + $0x46] sm:$0xff] %v9508
    %9549 = vst [vmem:[#allocation25 + $0x4e] sm:$0xff] %v9509
    %9550 = vst [vmem:[#allocation25 + $0x56] sm:$0xff] %v9510
    %9551 = vst [vmem:[#allocation25 + $0x5e] sm:$0xff] %v9511
    %9552 = vst [vmem:[#allocation25 + $0x66] sm:$0xff] %v9512
    %9553 = vst [vmem:[#allocation25 + $0x6e] sm:$0xff] %v9513
    %9554 = vst [vmem:[#allocation25 + $0x76] sm:$0xff] %v9514
    %9555 = vst [vmem:[#allocation25 + $0x7e] sm:$0xff] %v9515
    %9556 = vst [vmem:[#allocation25 + $0x86] sm:$0xff] %v9516
    %9557 = vst [vmem:[#allocation25 + $0x8e] sm:$0xff] %v9517
    %9558 = vst [vmem:[#allocation25 + $0x96] sm:$0xff] %v9518
    %9559 = vst [vmem:[#allocation25 + $0x9e] sm:$0xff] %v9519
    %9560 = vst [vmem:[#allocation25 + $0xa6] sm:$0xff] %v9520
    %9561 = vst [vmem:[#allocation25 + $0xae] sm:$0xff] %v9521
    %9562 = vst [vmem:[#allocation25 + $0xb6] sm:$0xff] %v9522
    %9563 = vst [vmem:[#allocation25 + $0xbe] sm:$0xff] %v9523
    %9564 = vst [vmem:[#allocation25 + $0xc6] sm:$0xff] %v9524
    %9565 = vst [vmem:[#allocation25 + $0xce] sm:$0xff] %v9525
    %9566 = vst [vmem:[#allocation25 + $0xd6] sm:$0xff] %v9526
    %9567 = vst [vmem:[#allocation25 + $0xde] sm:$0xff] %v9527
    %9568 = vst [vmem:[#allocation25 + $0xe6] sm:$0xff] %v9528
    %9569 = vst [vmem:[#allocation25 + $0xee] sm:$0xff] %v9529
    %9570 = vst [vmem:[#allocation25 + $0xf6] sm:$0xff] %v9530
    %9571 = vst [vmem:[#allocation25 + $0xfe] sm:$0xff] %v9531
    %9572 = vst [vmem:[#allocation25 + $0x106] sm:$0xff] %v9532
    %9573 = vst [vmem:[#allocation25 + $0x10e] sm:$0xff] %v9533
    %9574 = vst [vmem:[#allocation25 + $0x116] sm:$0xff] %v9534
    %9575 = vst [vmem:[#allocation25 + $0x11e] sm:$0xff] %v9535
    %9576 = vst [vmem:[#allocation25 + $0x126] sm:$0xff] %v9536
    %9577 = vst [vmem:[#allocation25 + $0x12e] sm:$0xff] %v9537
    %9578 = vst [vmem:[#allocation25 + $0x136] sm:$0x3f] %v9538
    // Predicated region
    $region114: #{resblock_sft_forward.1} parent=1 // pred_check
      _
    $region115: #{resblock_sft_forward.1} parent=1 // pred_check_branch
      %9580 = sbr.rel (0) target = $region117
    $region116: #{resblock_sft_forward.1} parent=1 // pred_region
      %s9582 = ssub.s32 5120, 5120
      %9583 = vsyncadd [#allocation4], %s9582
      %s9584 = sshll.u32 [#allocation25], 4
      %s9585 = int_to_ptr.vmem [resolvable:$true] %s9584
      %9590 = dma.vmem_to_hbm [thread:$0]  %s9585, 5120, %s14, [#allocation4], 128, 128, 8
    $region117: #{resblock_sft_forward.1} parent=1 // pred_fallthru
      _
    // Predicated region
    $region118: #{resblock_sft_forward.1} parent=1 // pred_check
      _
    $region119: #{resblock_sft_forward.1} parent=1 // pred_check_branch
      %9592 = sbr.rel (0) target = $region121
    $region120: #{resblock_sft_forward.1} parent=1 // pred_region
      %9593 = dma.done [#allocation4], 5120
    $region121: #{resblock_sft_forward.1} parent=1 // pred_fallthru
      _
    %9594 = vsyncpa [#allocation3], 1
    %9595 = vsyncpa [#allocation6], 1
    %9596 = vsyncpa [#allocation9], 1
    %9597 = vsyncpa [#allocation12], 1
    %9598 = vsyncpa [#allocation15], 1
    %9599 = vsyncpa [#allocation18], 1
    %9600 = vsyncpa [#allocation21], 1
    %9601 = vsyncpa [#allocation24], 1
    %9602 = vsyncpa [#allocation4], 1

</llo_original>
